<compile_context>
chip_gen: v5e
topology: v5e:2x2
jax: 0.10.0
libtpu: 0.0.40
codegen_flags: <defaults>
</compile_context>

<pallas_src>
import functools

import jax
import jax.numpy as jnp
from jax.experimental import pallas as pl
from jax.experimental.pallas import tpu as pltpu

# ----------------------------- config (small) --------------------------------
B = 2            # batch
T = 3            # image sequence length  -> T-1 = 2 transitions
C = 3            # image channels
H_IMG = 16       # image height/width
IMU_F = 6        # imu feature size
V_F = 32         # visual feature length
I_F = 32         # inertial feature length
HIDDEN = 32      # LSTM hidden size
POSE_DIM = 6     # 6-DoF pose

NP = 8           # batch padded to 8 sublanes inside the kernel
LANE = 128       # lane width (pose output padded to this)
IMU_WIN = 11     # IMU samples per transition window
IMU_IN_PAD = 128                 # flattened IMU window 11*6=66 padded to 128
IMU_MID = IMU_WIN * 32           # 352
IMU_MID_PAD = 384                # 352 padded to a lane multiple


# ===================== the single fused DeepVIO kernel =======================
def _deepvio_fused_kernel(
        ximg_ref, img_m1_ref, img_b1_ref, img_m2_ref, img_b2_ref, img_wv_ref,
        ximu_ref, imu_m1_ref, imu_b1_ref, imu_m2_ref, imu_b2_ref, imu_wi_ref,
        b_vi_ref,
        wih1_ref, whh1_ref, bg1_ref, wih2_ref, whh2_ref, bg2_ref,
        wo_ref, bo_ref,
        pose_ref, hT_ref, cT_ref,
        *, n_steps, np_pad, hidden):
    f32 = jnp.float32
    bf16 = jnp.bfloat16

    def leaky(v):                    # LeakyReLU(0.1), kept in f32 (v5e-safe)
        return jnp.where(v >= 0.0, v, 0.1 * v)

    # ---- ImageEncoder: conv3x3/s2(6->16) -> conv3x3/s2(16->32) -> Linear ----
    # Conv stack applied as pre-folded dense channels-last matrices: pure MXU
    # matmuls (bf16 operands, f32 accumulation), no in-kernel im2col/reshape.
    y = jnp.dot(ximg_ref[...], img_m1_ref[...], preferred_element_type=f32)
    y = leaky(y + img_b1_ref[...])                                   # (S, 1024)
    y = jnp.dot(y.astype(bf16), img_m2_ref[...], preferred_element_type=f32)
    y = leaky(y + img_b2_ref[...])                                   # (S, 512)
    f_v = jnp.dot(y, img_wv_ref[...], preferred_element_type=f32)    # (S, 64) lanes 0:32

    # ---- InertialEncoder: conv1d k3(6->32) -> conv1d k3(32->32) -> Linear ---
    z = jnp.dot(ximu_ref[...], imu_m1_ref[...], preferred_element_type=f32)
    z = leaky(z + imu_b1_ref[...])                                   # (S, 384)
    z = jnp.dot(z.astype(bf16), imu_m2_ref[...], preferred_element_type=f32)
    z = leaky(z + imu_b2_ref[...])                                   # (S, 384)
    f_i = jnp.dot(z, imu_wi_ref[...], preferred_element_type=f32)    # (S, 64) lanes 32:64

    # LSTM input [fv | fi] for every step, built with adds (no lane concat).
    xin = f_v + f_i + b_vi_ref[...]                                  # (S, 64)
    # Hoist layer-1 input->gates matmul (+ combined bias) out of the time loop.
    xg = jnp.dot(xin, wih1_ref[...], preferred_element_type=f32) + bg1_ref[...]  # (S, 4H)

    whh1 = whh1_ref[...]
    wih2 = wih2_ref[...]
    whh2 = whh2_ref[...]
    bg2 = bg2_ref[...]
    wo = wo_ref[...]
    bo = bo_ref[...]

    H = hidden
    h1 = jnp.zeros((np_pad, H), f32)
    c1 = jnp.zeros((np_pad, H), f32)
    h2 = jnp.zeros((np_pad, H), f32)
    c2 = jnp.zeros((np_pad, H), f32)

    def lstm_update(gates, c_prev):
        # sigmoid on the full (np_pad, 4H) slab (EUP), tanh only on the
        # candidate-gate slice (gate order i, f, g, o — forget bias at H:2H).
        sg = jax.nn.sigmoid(gates)
        i_g = sg[:, 0 * H:1 * H]
        f_g = sg[:, 1 * H:2 * H]
        o_g = sg[:, 3 * H:4 * H]
        g_g = jnp.tanh(gates[:, 2 * H:3 * H])
        c_new = f_g * c_prev + i_g * g_g
        h_new = o_g * jnp.tanh(c_new)
        return h_new, c_new

    # Fully-unrolled in-kernel time loop: h/c never leave registers/VMEM and
    # there is no per-step grid pipeline overhead.
    for t in range(n_steps):
        g1 = xg[t * np_pad:(t + 1) * np_pad, :] + jnp.dot(
            h1, whh1, preferred_element_type=f32)
        h1, c1 = lstm_update(g1, c1)
        g2 = (jnp.dot(h1, wih2, preferred_element_type=f32)
              + jnp.dot(h2, whh2, preferred_element_type=f32) + bg2)
        h2, c2 = lstm_update(g2, c2)
        # Lane-dense (np_pad, 128) pose slab; the wrapper slices the 6 DoF.
        pose_ref[t] = jnp.dot(h2, wo, preferred_element_type=f32) + bo

    hT_ref[0] = h1
    hT_ref[1] = h2
    cT_ref[0] = c1
    cT_ref[1] = c2


# ---------------- weight preprocessing: conv stacks -> dense matrices --------
def _conv2d_as_matrix(w_hwio, h, w, stride, pad):
    """Dense M s.t. flatten_hwc(conv2d(x)) == flatten_hwc(x) @ M (zero bias)."""
    kh, kw, cin, cout = w_hwio.shape
    n = h * w * cin
    basis = jnp.eye(n, dtype=jnp.float32).reshape(n, h, w, cin)
    y = jax.lax.conv_general_dilated(
        basis, w_hwio, window_strides=(stride, stride),
        padding=[(pad, pad), (pad, pad)],
        dimension_numbers=("NHWC", "HWIO", "NHWC"))
    _, ho, wo, co = y.shape
    return y.reshape(n, ho * wo * co), (ho, wo, co)


def _conv1d_as_matrix(w_kio, length, pad):
    """Dense M s.t. flatten_lc(conv1d(x)) == flatten_lc(x) @ M (zero bias)."""
    k, cin, cout = w_kio.shape
    n = length * cin
    basis = jnp.eye(n, dtype=jnp.float32).reshape(n, 1, length, cin)
    y = jax.lax.conv_general_dilated(
        basis, w_kio.reshape(1, k, cin, cout), window_strides=(1, 1),
        padding=[(0, 0), (pad, pad)],
        dimension_numbers=("NHWC", "HWIO", "NHWC"))
    return y.reshape(n, length * cout)


def prepare_params(p):
    """One-time weight preprocessing (outside the jitted forward).
    TODO(synk): at real DeepVIO resolutions the conv-as-dense-matrix folding
    should be replaced by in-kernel tiled im2col with a megacore-parallel
    (M//tm, N//tn, K//tk) grid; at this toy size densification keeps everything
    VMEM-resident and lane/sublane aligned."""
    # image encoder
    m1, (h1o, w1o, c1o) = _conv2d_as_matrix(p["img_w1"], H_IMG, H_IMG, stride=2, pad=1)
    m2, (h2o, w2o, c2o) = _conv2d_as_matrix(p["img_w2"], h1o, w1o, stride=2, pad=1)
    img_b1 = jnp.broadcast_to(p["img_b1"], (h1o, w1o, c1o)).reshape(1, -1)
    img_b2 = jnp.broadcast_to(p["img_b2"], (h2o, w2o, c2o)).reshape(1, -1)
    # visual linear written into lanes 0:32 of the [fv|fi] slab
    img_wv = jnp.zeros((m2.shape[1], 2 * V_F), jnp.float32).at[:, :V_F].set(p["img_wv"])

    # inertial encoder (flattened window 66 -> 128 cols, mid 352 -> 384 cols)
    n1 = _conv1d_as_matrix(p["imu_w1"], IMU_WIN, pad=1)              # (66, 352)
    n2 = _conv1d_as_matrix(p["imu_w2"], IMU_WIN, pad=1)              # (352, 352)
    imu_m1 = jnp.zeros((IMU_IN_PAD, IMU_MID_PAD), jnp.float32
                       ).at[:n1.shape[0], :IMU_MID].set(n1)
    imu_m2 = jnp.zeros((IMU_MID_PAD, IMU_MID_PAD), jnp.float32
                       ).at[:IMU_MID, :IMU_MID].set(n2)
    imu_b1 = jnp.zeros((1, IMU_MID_PAD), jnp.float32).at[0, :IMU_MID].set(
        jnp.broadcast_to(p["imu_b1"], (IMU_WIN, 32)).reshape(-1))
    imu_b2 = jnp.zeros((1, IMU_MID_PAD), jnp.float32).at[0, :IMU_MID].set(
        jnp.broadcast_to(p["imu_b2"], (IMU_WIN, 32)).reshape(-1))
    # inertial linear written into lanes 32:64 of the [fv|fi] slab
    imu_wi = jnp.zeros((IMU_MID_PAD, 2 * V_F), jnp.float32
                       ).at[:IMU_MID, V_F:].set(p["imu_wi"])

    b_vi = jnp.concatenate([p["img_bv"], p["imu_bi"]]).reshape(1, 2 * V_F)

    # pose LSTM: combined bias (b_ih + b_hh), forget gate +1 (initialization())
    bg = jnp.zeros((1, 4 * HIDDEN), jnp.float32).at[0, HIDDEN:2 * HIDDEN].set(1.0)
    # pose regressor padded to a 128-lane output slab
    wo = jnp.zeros((HIDDEN, LANE), jnp.float32).at[:, :POSE_DIM].set(p["wo"])
    bo = jnp.zeros((1, LANE), jnp.float32).at[0, :POSE_DIM].set(p["bo"])

    return dict(
        img_m1=m1.astype(jnp.bfloat16), img_b1=img_b1,
        img_m2=m2.astype(jnp.bfloat16), img_b2=img_b2, img_wv=img_wv,
        imu_m1=imu_m1.astype(jnp.bfloat16), imu_b1=imu_b1,
        imu_m2=imu_m2.astype(jnp.bfloat16), imu_b2=imu_b2, imu_wi=imu_wi,
        b_vi=b_vi, wih1=p["wih1"], whh1=p["whh1"], bg1=bg,
        wih2=p["wih2"], whh2=p["whh2"], bg2=bg, wo=wo, bo=bo)


# ----------------------------- DeepVIO forward --------------------------------
def deepvio_forward(prep, img, imu, timestamps, hc=None):
    """fv, fi = Image_net(img), Inertial_net(imu); poses, h_T = Pose_net(fv, fi)."""
    # TODO(synk): timestamps are only consumed by the ODE/CDE pose variants; the
    # RNN pose head implemented here (model_type='rnn') ignores them.
    # TODO(synk): warm-starting from a caller-provided hc is not wired in
    # (hc=None -> zero initial hidden/cell state, matching the default call).
    Bsz, Ts, Cc, Hh, Ww = img.shape
    Tm1 = Ts - 1

    # --- layout plumbing (tiny, plain JAX): channels-last flatten, time-major
    #     (t, b) row order, batch padded to 8 sublanes, bf16 for the MXU. ---
    pairs = jnp.concatenate([img[:, :-1], img[:, 1:]], axis=2)            # (B, T-1, 2C, H, W)
    pairs = jnp.transpose(pairs, (1, 0, 3, 4, 2)).reshape(Tm1, Bsz, -1)   # (T-1, B, H*W*2C)
    ximg = jnp.zeros((Tm1, NP, pairs.shape[-1]), jnp.float32).at[:, :Bsz].set(pairs)
    ximg = ximg.reshape(Tm1 * NP, -1).astype(jnp.bfloat16)

    win = jnp.stack([imu[:, 10 * t:10 * t + IMU_WIN] for t in range(Tm1)], axis=1)
    win = jnp.transpose(win, (1, 0, 2, 3)).reshape(Tm1, Bsz, IMU_WIN * IMU_F)
    ximu = jnp.zeros((Tm1, NP, IMU_IN_PAD), jnp.float32)
    ximu = ximu.at[:, :Bsz, :IMU_WIN * IMU_F].set(win)
    ximu = ximu.reshape(Tm1 * NP, IMU_IN_PAD).astype(jnp.bfloat16)

    poses_p, h_t, c_t = pl.pallas_call(
        functools.partial(_deepvio_fused_kernel,
                          n_steps=Tm1, np_pad=NP, hidden=HIDDEN),
        out_shape=(
            jax.ShapeDtypeStruct((Tm1, NP, LANE), jnp.float32),   # lane-dense poses
            jax.ShapeDtypeStruct((2, NP, HIDDEN), jnp.float32),   # h_T (layers 1,2)
            jax.ShapeDtypeStruct((2, NP, HIDDEN), jnp.float32),   # c_T (layers 1,2)
        ),
        compiler_params=pltpu.CompilerParams(vmem_limit_bytes=32 * 1024 * 1024),
    )(ximg, prep["img_m1"], prep["img_b1"], prep["img_m2"], prep["img_b2"],
      prep["img_wv"],
      ximu, prep["imu_m1"], prep["imu_b1"], prep["imu_m2"], prep["imu_b2"],
      prep["imu_wi"], prep["b_vi"],
      prep["wih1"], prep["whh1"], prep["bg1"],
      prep["wih2"], prep["whh2"], prep["bg2"],
      prep["wo"], prep["bo"])

    poses = jnp.transpose(poses_p[:, :Bsz, :POSE_DIM], (1, 0, 2))         # (B, T-1, 6)
    return poses, (h_t[:, :Bsz], c_t[:, :Bsz])


# ----------------------------- parameter init ---------------------------------
def _kaiming(key, shape, fan_in):
    return (jax.random.normal(key, shape, dtype=jnp.float32)
            * jnp.sqrt(2.0 / fan_in)).astype(jnp.float32)


def init_params(key):
    ks = jax.random.split(key, 12)
    img_flat = 32 * (H_IMG // 4) * (H_IMG // 4)                      # 512
    return {
        # ImageEncoder: conv3x3/s2 (2C->16), conv3x3/s2 (16->32), Linear -> V_F
        "img_w1": _kaiming(ks[0], (3, 3, 2 * C, 16), 9 * 2 * C),
        "img_b1": jnp.zeros((16,), jnp.float32),
        "img_w2": _kaiming(ks[1], (3, 3, 16, 32), 9 * 16),
        "img_b2": jnp.zeros((32,), jnp.float32),
        "img_wv": _kaiming(ks[2], (img_flat, V_F), img_flat),
        "img_bv": jnp.zeros((V_F,), jnp.float32),
        # InertialEncoder: conv1d k3 (6->32), conv1d k3 (32->32), Linear -> I_F
        "imu_w1": _kaiming(ks[3], (3, IMU_F, 32), 3 * IMU_F),
        "imu_b1": jnp.zeros((32,), jnp.float32),
        "imu_w2": _kaiming(ks[4], (3, 32, 32), 3 * 32),
        "imu_b2": jnp.zeros((32,), jnp.float32),
        "imu_wi": _kaiming(ks[5], (32 * IMU_WIN, I_F), 32 * IMU_WIN),
        "imu_bi": jnp.zeros((I_F,), jnp.float32),
        # PoseRNN: 2-layer LSTM (In = V_F + I_F, gate order i,f,g,o) + regressor
        "wih1": _kaiming(ks[6], (V_F + I_F, 4 * HIDDEN), V_F + I_F),
        "whh1": _kaiming(ks[7], (HIDDEN, 4 * HIDDEN), HIDDEN),
        "wih2": _kaiming(ks[8], (HIDDEN, 4 * HIDDEN), HIDDEN),
        "whh2": _kaiming(ks[9], (HIDDEN, 4 * HIDDEN), HIDDEN),
        "wo": _kaiming(ks[10], (HIDDEN, POSE_DIM), HIDDEN),
        "bo": jnp.zeros((POSE_DIM,), jnp.float32),
    }


# ----------------------------- main -------------------------------------------
if __name__ == "__main__":
    key = jax.random.PRNGKey(0)
    k_img, k_imu, k_ts, k_p = jax.random.split(key, 4)

    img = jax.random.normal(k_img, (B, T, C, H_IMG, H_IMG), dtype=jnp.float32)
    imu = jax.random.normal(k_imu, (B, 10 * (T - 1) + 1, IMU_F), dtype=jnp.float32)
    timestamps = jnp.cumsum(
        jnp.abs(jax.random.normal(k_ts, (B, T), dtype=jnp.float32)), axis=1)

    params = init_params(k_p)
    prep = prepare_params(params)            # one-time weight preprocessing

    fwd = jax.jit(deepvio_forward)
    poses, (h_T, c_T) = fwd(prep, img, imu, timestamps)
    jax.block_until_ready((poses, h_T, c_T))

    assert poses.shape == (B, T - 1, POSE_DIM)
    assert h_T.shape == (2, B, HIDDEN) and c_T.shape == (2, B, HIDDEN)
    assert bool(jnp.all(jnp.isfinite(poses)))
    assert bool(jnp.all(jnp.isfinite(h_T))) and bool(jnp.all(jnp.isfinite(c_T)))
    print("KERNEL_OK")
</pallas_src>

<mosaic_0001>
module attributes {stable_mosaic.version = 11 : i64} {
  func.func @_deepvio_fused_kernel(%arg0: memref<16x1536xbf16, #tpu.memory_space<vmem>>, %arg1: memref<1536x1024xbf16, #tpu.memory_space<vmem>>, %arg2: memref<1x1024xf32, #tpu.memory_space<vmem>>, %arg3: memref<1024x512xbf16, #tpu.memory_space<vmem>>, %arg4: memref<1x512xf32, #tpu.memory_space<vmem>>, %arg5: memref<512x64xf32, #tpu.memory_space<vmem>>, %arg6: memref<16x128xbf16, #tpu.memory_space<vmem>>, %arg7: memref<128x384xbf16, #tpu.memory_space<vmem>>, %arg8: memref<1x384xf32, #tpu.memory_space<vmem>>, %arg9: memref<384x384xbf16, #tpu.memory_space<vmem>>, %arg10: memref<1x384xf32, #tpu.memory_space<vmem>>, %arg11: memref<384x64xf32, #tpu.memory_space<vmem>>, %arg12: memref<1x64xf32, #tpu.memory_space<vmem>>, %arg13: memref<64x128xf32, #tpu.memory_space<vmem>>, %arg14: memref<32x128xf32, #tpu.memory_space<vmem>>, %arg15: memref<1x128xf32, #tpu.memory_space<vmem>>, %arg16: memref<32x128xf32, #tpu.memory_space<vmem>>, %arg17: memref<32x128xf32, #tpu.memory_space<vmem>>, %arg18: memref<1x128xf32, #tpu.memory_space<vmem>>, %arg19: memref<32x128xf32, #tpu.memory_space<vmem>>, %arg20: memref<1x128xf32, #tpu.memory_space<vmem>>, %arg21: memref<2x8x128xf32, #tpu.memory_space<vmem>>, %arg22: memref<2x8x32xf32, #tpu.memory_space<vmem>>, %arg23: memref<2x8x32xf32, #tpu.memory_space<vmem>>) attributes {dimension_semantics = [], scalar_prefetch = 0 : i64, scratch_operands = 0 : i64, tpu.core_type = #tpu.core_type<tc>} {
    %c0 = arith.constant 0 : index
    %c0_0 = arith.constant 0 : index
    %0 = vector.load %arg0[%c0, %c0_0] : memref<16x1536xbf16, #tpu.memory_space<vmem>>, vector<16x1536xbf16>
    %c0_1 = arith.constant 0 : index
    %c0_2 = arith.constant 0 : index
    %1 = vector.load %arg1[%c0_1, %c0_2] : memref<1536x1024xbf16, #tpu.memory_space<vmem>>, vector<1536x1024xbf16>
    %cst = arith.constant dense<0.000000e+00> : vector<16x1024xf32>
    %2 = tpu.matmul %0, %1, %cst {dimension_numbers = #tpu.dot_dimension_numbers<[1], [0], [0], [1], [0, 0, 1, 1], [], []>} : vector<16x1536xbf16>, vector<1536x1024xbf16>, vector<16x1024xf32> -> vector<16x1024xf32>
    %c0_3 = arith.constant 0 : index
    %c0_4 = arith.constant 0 : index
    %3 = vector.load %arg2[%c0_3, %c0_4] : memref<1x1024xf32, #tpu.memory_space<vmem>>, vector<1x1024xf32>
    %4 = vector.broadcast %3 : vector<1x1024xf32> to vector<16x1024xf32>
    %5 = arith.addf %2, %4 : vector<16x1024xf32>
    %cst_5 = arith.constant 0.000000e+00 : f32
    %6 = vector.broadcast %cst_5 : f32 to vector<16x1024xf32>
    %7 = arith.cmpf oge, %5, %6 : vector<16x1024xf32>
    %cst_6 = arith.constant 1.000000e-01 : f32
    %8 = vector.broadcast %cst_6 : f32 to vector<16x1024xf32>
    %9 = arith.mulf %8, %5 : vector<16x1024xf32>
    %10 = arith.select %7, %5, %9 : vector<16x1024xi1>, vector<16x1024xf32>
    %11 = arith.truncf %10 : vector<16x1024xf32> to vector<16x1024xbf16>
    %c0_7 = arith.constant 0 : index
    %c0_8 = arith.constant 0 : index
    %12 = vector.load %arg3[%c0_7, %c0_8] : memref<1024x512xbf16, #tpu.memory_space<vmem>>, vector<1024x512xbf16>
    %cst_9 = arith.constant dense<0.000000e+00> : vector<16x512xf32>
    %13 = tpu.matmul %11, %12, %cst_9 {dimension_numbers = #tpu.dot_dimension_numbers<[1], [0], [0], [1], [0, 0, 1, 1], [], []>} : vector<16x1024xbf16>, vector<1024x512xbf16>, vector<16x512xf32> -> vector<16x512xf32>
    %c0_10 = arith.constant 0 : index
    %c0_11 = arith.constant 0 : index
    %14 = vector.load %arg4[%c0_10, %c0_11] : memref<1x512xf32, #tpu.memory_space<vmem>>, vector<1x512xf32>
    %15 = vector.broadcast %14 : vector<1x512xf32> to vector<16x512xf32>
    %16 = arith.addf %13, %15 : vector<16x512xf32>
    %cst_12 = arith.constant 0.000000e+00 : f32
    %17 = vector.broadcast %cst_12 : f32 to vector<16x512xf32>
    %18 = arith.cmpf oge, %16, %17 : vector<16x512xf32>
    %cst_13 = arith.constant 1.000000e-01 : f32
    %19 = vector.broadcast %cst_13 : f32 to vector<16x512xf32>
    %20 = arith.mulf %19, %16 : vector<16x512xf32>
    %21 = arith.select %18, %16, %20 : vector<16x512xi1>, vector<16x512xf32>
    %c0_14 = arith.constant 0 : index
    %c0_15 = arith.constant 0 : index
    %22 = vector.load %arg5[%c0_14, %c0_15] : memref<512x64xf32, #tpu.memory_space<vmem>>, vector<512x64xf32>
    %cst_16 = arith.constant dense<0.000000e+00> : vector<16x64xf32>
    %23 = tpu.matmul %21, %22, %cst_16 {dimension_numbers = #tpu.dot_dimension_numbers<[1], [0], [0], [1], [0, 0, 1, 1], [], []>} : vector<16x512xf32>, vector<512x64xf32>, vector<16x64xf32> -> vector<16x64xf32>
    %c0_17 = arith.constant 0 : index
    %c0_18 = arith.constant 0 : index
    %24 = vector.load %arg6[%c0_17, %c0_18] : memref<16x128xbf16, #tpu.memory_space<vmem>>, vector<16x128xbf16>
    %c0_19 = arith.constant 0 : index
    %c0_20 = arith.constant 0 : index
    %25 = vector.load %arg7[%c0_19, %c0_20] : memref<128x384xbf16, #tpu.memory_space<vmem>>, vector<128x384xbf16>
    %cst_21 = arith.constant dense<0.000000e+00> : vector<16x384xf32>
    %26 = tpu.matmul %24, %25, %cst_21 {dimension_numbers = #tpu.dot_dimension_numbers<[1], [0], [0], [1], [0, 0, 1, 1], [], []>} : vector<16x128xbf16>, vector<128x384xbf16>, vector<16x384xf32> -> vector<16x384xf32>
    %c0_22 = arith.constant 0 : index
    %c0_23 = arith.constant 0 : index
    %27 = vector.load %arg8[%c0_22, %c0_23] : memref<1x384xf32, #tpu.memory_space<vmem>>, vector<1x384xf32>
    %28 = vector.broadcast %27 : vector<1x384xf32> to vector<16x384xf32>
    %29 = arith.addf %26, %28 : vector<16x384xf32>
    %cst_24 = arith.constant 0.000000e+00 : f32
    %30 = vector.broadcast %cst_24 : f32 to vector<16x384xf32>
    %31 = arith.cmpf oge, %29, %30 : vector<16x384xf32>
    %cst_25 = arith.constant 1.000000e-01 : f32
    %32 = vector.broadcast %cst_25 : f32 to vector<16x384xf32>
    %33 = arith.mulf %32, %29 : vector<16x384xf32>
    %34 = arith.select %31, %29, %33 : vector<16x384xi1>, vector<16x384xf32>
    %35 = arith.truncf %34 : vector<16x384xf32> to vector<16x384xbf16>
    %c0_26 = arith.constant 0 : index
    %c0_27 = arith.constant 0 : index
    %36 = vector.load %arg9[%c0_26, %c0_27] : memref<384x384xbf16, #tpu.memory_space<vmem>>, vector<384x384xbf16>
    %cst_28 = arith.constant dense<0.000000e+00> : vector<16x384xf32>
    %37 = tpu.matmul %35, %36, %cst_28 {dimension_numbers = #tpu.dot_dimension_numbers<[1], [0], [0], [1], [0, 0, 1, 1], [], []>} : vector<16x384xbf16>, vector<384x384xbf16>, vector<16x384xf32> -> vector<16x384xf32>
    %c0_29 = arith.constant 0 : index
    %c0_30 = arith.constant 0 : index
    %38 = vector.load %arg10[%c0_29, %c0_30] : memref<1x384xf32, #tpu.memory_space<vmem>>, vector<1x384xf32>
    %39 = vector.broadcast %38 : vector<1x384xf32> to vector<16x384xf32>
    %40 = arith.addf %37, %39 : vector<16x384xf32>
    %cst_31 = arith.constant 0.000000e+00 : f32
    %41 = vector.broadcast %cst_31 : f32 to vector<16x384xf32>
    %42 = arith.cmpf oge, %40, %41 : vector<16x384xf32>
    %cst_32 = arith.constant 1.000000e-01 : f32
    %43 = vector.broadcast %cst_32 : f32 to vector<16x384xf32>
    %44 = arith.mulf %43, %40 : vector<16x384xf32>
    %45 = arith.select %42, %40, %44 : vector<16x384xi1>, vector<16x384xf32>
    %c0_33 = arith.constant 0 : index
    %c0_34 = arith.constant 0 : index
    %46 = vector.load %arg11[%c0_33, %c0_34] : memref<384x64xf32, #tpu.memory_space<vmem>>, vector<384x64xf32>
    %cst_35 = arith.constant dense<0.000000e+00> : vector<16x64xf32>
    %47 = tpu.matmul %45, %46, %cst_35 {dimension_numbers = #tpu.dot_dimension_numbers<[1], [0], [0], [1], [0, 0, 1, 1], [], []>} : vector<16x384xf32>, vector<384x64xf32>, vector<16x64xf32> -> vector<16x64xf32>
    %48 = arith.addf %23, %47 : vector<16x64xf32>
    %c0_36 = arith.constant 0 : index
    %c0_37 = arith.constant 0 : index
    %49 = vector.load %arg12[%c0_36, %c0_37] : memref<1x64xf32, #tpu.memory_space<vmem>>, vector<1x64xf32>
    %50 = vector.broadcast %49 : vector<1x64xf32> to vector<16x64xf32>
    %51 = arith.addf %48, %50 : vector<16x64xf32>
    %c0_38 = arith.constant 0 : index
    %c0_39 = arith.constant 0 : index
    %52 = vector.load %arg13[%c0_38, %c0_39] : memref<64x128xf32, #tpu.memory_space<vmem>>, vector<64x128xf32>
    %cst_40 = arith.constant dense<0.000000e+00> : vector<16x128xf32>
    %53 = tpu.matmul %51, %52, %cst_40 {dimension_numbers = #tpu.dot_dimension_numbers<[1], [0], [0], [1], [0, 0, 1, 1], [], []>} : vector<16x64xf32>, vector<64x128xf32>, vector<16x128xf32> -> vector<16x128xf32>
    %c0_41 = arith.constant 0 : index
    %c0_42 = arith.constant 0 : index
    %54 = vector.load %arg15[%c0_41, %c0_42] : memref<1x128xf32, #tpu.memory_space<vmem>>, vector<1x128xf32>
    %55 = vector.broadcast %54 : vector<1x128xf32> to vector<16x128xf32>
    %56 = arith.addf %53, %55 : vector<16x128xf32>
    %c0_43 = arith.constant 0 : index
    %c0_44 = arith.constant 0 : index
    %57 = vector.load %arg14[%c0_43, %c0_44] : memref<32x128xf32, #tpu.memory_space<vmem>>, vector<32x128xf32>
    %c0_45 = arith.constant 0 : index
    %c0_46 = arith.constant 0 : index
    %58 = vector.load %arg16[%c0_45, %c0_46] : memref<32x128xf32, #tpu.memory_space<vmem>>, vector<32x128xf32>
    %c0_47 = arith.constant 0 : index
    %c0_48 = arith.constant 0 : index
    %59 = vector.load %arg17[%c0_47, %c0_48] : memref<32x128xf32, #tpu.memory_space<vmem>>, vector<32x128xf32>
    %c0_49 = arith.constant 0 : index
    %c0_50 = arith.constant 0 : index
    %60 = vector.load %arg18[%c0_49, %c0_50] : memref<1x128xf32, #tpu.memory_space<vmem>>, vector<1x128xf32>
    %c0_51 = arith.constant 0 : index
    %c0_52 = arith.constant 0 : index
    %61 = vector.load %arg19[%c0_51, %c0_52] : memref<32x128xf32, #tpu.memory_space<vmem>>, vector<32x128xf32>
    %c0_53 = arith.constant 0 : index
    %c0_54 = arith.constant 0 : index
    %62 = vector.load %arg20[%c0_53, %c0_54] : memref<1x128xf32, #tpu.memory_space<vmem>>, vector<1x128xf32>
    %cst_55 = arith.constant 0.000000e+00 : f32
    %63 = vector.broadcast %cst_55 : f32 to vector<8x32xf32>
    %cst_56 = arith.constant 0.000000e+00 : f32
    %64 = vector.broadcast %cst_56 : f32 to vector<8x32xf32>
    %cst_57 = arith.constant 0.000000e+00 : f32
    %65 = vector.broadcast %cst_57 : f32 to vector<8x32xf32>
    %cst_58 = arith.constant 0.000000e+00 : f32
    %66 = vector.broadcast %cst_58 : f32 to vector<8x32xf32>
    %67 = vector.extract_strided_slice %56 {offsets = [0, 0], sizes = [8, 128], strides = [1, 1]} : vector<16x128xf32> to vector<8x128xf32>
    %cst_59 = arith.constant dense<0.000000e+00> : vector<8x128xf32>
    %68 = tpu.matmul %63, %57, %cst_59 {dimension_numbers = #tpu.dot_dimension_numbers<[1], [0], [0], [1], [0, 0, 1, 1], [], []>} : vector<8x32xf32>, vector<32x128xf32>, vector<8x128xf32> -> vector<8x128xf32>
    %69 = arith.addf %67, %68 : vector<8x128xf32>
    %70 = arith.negf %69 : vector<8x128xf32>
    %71 = math.exp %70 : vector<8x128xf32>
    %cst_60 = arith.constant 1.000000e+00 : f32
    %72 = vector.broadcast %cst_60 : f32 to vector<8x128xf32>
    %73 = arith.addf %72, %71 : vector<8x128xf32>
    %74 = arith.divf %72, %73 : vector<8x128xf32>
    %75 = vector.extract_strided_slice %74 {offsets = [0, 0], sizes = [8, 32], strides = [1, 1]} : vector<8x128xf32> to vector<8x32xf32>
    %76 = vector.extract_strided_slice %74 {offsets = [0, 32], sizes = [8, 32], strides = [1, 1]} : vector<8x128xf32> to vector<8x32xf32>
    %77 = vector.extract_strided_slice %74 {offsets = [0, 96], sizes = [8, 32], strides = [1, 1]} : vector<8x128xf32> to vector<8x32xf32>
    %78 = vector.extract_strided_slice %69 {offsets = [0, 64], sizes = [8, 32], strides = [1, 1]} : vector<8x128xf32> to vector<8x32xf32>
    %79 = math.tanh %78 : vector<8x32xf32>
    %80 = arith.mulf %76, %64 : vector<8x32xf32>
    %81 = arith.mulf %75, %79 : vector<8x32xf32>
    %82 = arith.addf %80, %81 : vector<8x32xf32>
    %83 = math.tanh %82 : vector<8x32xf32>
    %84 = arith.mulf %77, %83 : vector<8x32xf32>
    %cst_61 = arith.constant dense<0.000000e+00> : vector<8x128xf32>
    %85 = tpu.matmul %84, %58, %cst_61 {dimension_numbers = #tpu.dot_dimension_numbers<[1], [0], [0], [1], [0, 0, 1, 1], [], []>} : vector<8x32xf32>, vector<32x128xf32>, vector<8x128xf32> -> vector<8x128xf32>
    %cst_62 = arith.constant dense<0.000000e+00> : vector<8x128xf32>
    %86 = tpu.matmul %65, %59, %cst_62 {dimension_numbers = #tpu.dot_dimension_numbers<[1], [0], [0], [1], [0, 0, 1, 1], [], []>} : vector<8x32xf32>, vector<32x128xf32>, vector<8x128xf32> -> vector<8x128xf32>
    %87 = arith.addf %85, %86 : vector<8x128xf32>
    %88 = vector.broadcast %60 : vector<1x128xf32> to vector<8x128xf32>
    %89 = arith.addf %87, %88 : vector<8x128xf32>
    %90 = arith.negf %89 : vector<8x128xf32>
    %91 = math.exp %90 : vector<8x128xf32>
    %cst_63 = arith.constant 1.000000e+00 : f32
    %92 = vector.broadcast %cst_63 : f32 to vector<8x128xf32>
    %93 = arith.addf %92, %91 : vector<8x128xf32>
    %94 = arith.divf %92, %93 : vector<8x128xf32>
    %95 = vector.extract_strided_slice %94 {offsets = [0, 0], sizes = [8, 32], strides = [1, 1]} : vector<8x128xf32> to vector<8x32xf32>
    %96 = vector.extract_strided_slice %94 {offsets = [0, 32], sizes = [8, 32], strides = [1, 1]} : vector<8x128xf32> to vector<8x32xf32>
    %97 = vector.extract_strided_slice %94 {offsets = [0, 96], sizes = [8, 32], strides = [1, 1]} : vector<8x128xf32> to vector<8x32xf32>
    %98 = vector.extract_strided_slice %89 {offsets = [0, 64], sizes = [8, 32], strides = [1, 1]} : vector<8x128xf32> to vector<8x32xf32>
    %99 = math.tanh %98 : vector<8x32xf32>
    %100 = arith.mulf %96, %66 : vector<8x32xf32>
    %101 = arith.mulf %95, %99 : vector<8x32xf32>
    %102 = arith.addf %100, %101 : vector<8x32xf32>
    %103 = math.tanh %102 : vector<8x32xf32>
    %104 = arith.mulf %97, %103 : vector<8x32xf32>
    %cst_64 = arith.constant dense<0.000000e+00> : vector<8x128xf32>
    %105 = tpu.matmul %104, %61, %cst_64 {dimension_numbers = #tpu.dot_dimension_numbers<[1], [0], [0], [1], [0, 0, 1, 1], [], []>} : vector<8x32xf32>, vector<32x128xf32>, vector<8x128xf32> -> vector<8x128xf32>
    %106 = vector.broadcast %62 : vector<1x128xf32> to vector<8x128xf32>
    %107 = arith.addf %105, %106 : vector<8x128xf32>
    %c0_65 = arith.constant 0 : index
    %c0_66 = arith.constant 0 : index
    %c0_67 = arith.constant 0 : index
    %108 = vector.load %arg21[%c0_65, %c0_66, %c0_67] : memref<2x8x128xf32, #tpu.memory_space<vmem>>, vector<1x8x128xf32>
    %109 = vector.shape_cast %108 : vector<1x8x128xf32> to vector<8x128xf32>
    %110 = vector.shape_cast %107 : vector<8x128xf32> to vector<1x8x128xf32>
    tpu.vector_store %arg21[%c0_65, %c0_66, %c0_67], %110 {strides = array<i32>} : memref<2x8x128xf32, #tpu.memory_space<vmem>>, vector<1x8x128xf32>,
    %111 = vector.extract_strided_slice %56 {offsets = [8, 0], sizes = [8, 128], strides = [1, 1]} : vector<16x128xf32> to vector<8x128xf32>
    %cst_68 = arith.constant dense<0.000000e+00> : vector<8x128xf32>
    %112 = tpu.matmul %84, %57, %cst_68 {dimension_numbers = #tpu.dot_dimension_numbers<[1], [0], [0], [1], [0, 0, 1, 1], [], []>} : vector<8x32xf32>, vector<32x128xf32>, vector<8x128xf32> -> vector<8x128xf32>
    %113 = arith.addf %111, %112 : vector<8x128xf32>
    %114 = arith.negf %113 : vector<8x128xf32>
    %115 = math.exp %114 : vector<8x128xf32>
    %cst_69 = arith.constant 1.000000e+00 : f32
    %116 = vector.broadcast %cst_69 : f32 to vector<8x128xf32>
    %117 = arith.addf %116, %115 : vector<8x128xf32>
    %118 = arith.divf %116, %117 : vector<8x128xf32>
    %119 = vector.extract_strided_slice %118 {offsets = [0, 0], sizes = [8, 32], strides = [1, 1]} : vector<8x128xf32> to vector<8x32xf32>
    %120 = vector.extract_strided_slice %118 {offsets = [0, 32], sizes = [8, 32], strides = [1, 1]} : vector<8x128xf32> to vector<8x32xf32>
    %121 = vector.extract_strided_slice %118 {offsets = [0, 96], sizes = [8, 32], strides = [1, 1]} : vector<8x128xf32> to vector<8x32xf32>
    %122 = vector.extract_strided_slice %113 {offsets = [0, 64], sizes = [8, 32], strides = [1, 1]} : vector<8x128xf32> to vector<8x32xf32>
    %123 = math.tanh %122 : vector<8x32xf32>
    %124 = arith.mulf %120, %82 : vector<8x32xf32>
    %125 = arith.mulf %119, %123 : vector<8x32xf32>
    %126 = arith.addf %124, %125 : vector<8x32xf32>
    %127 = math.tanh %126 : vector<8x32xf32>
    %128 = arith.mulf %121, %127 : vector<8x32xf32>
    %cst_70 = arith.constant dense<0.000000e+00> : vector<8x128xf32>
    %129 = tpu.matmul %128, %58, %cst_70 {dimension_numbers = #tpu.dot_dimension_numbers<[1], [0], [0], [1], [0, 0, 1, 1], [], []>} : vector<8x32xf32>, vector<32x128xf32>, vector<8x128xf32> -> vector<8x128xf32>
    %cst_71 = arith.constant dense<0.000000e+00> : vector<8x128xf32>
    %130 = tpu.matmul %104, %59, %cst_71 {dimension_numbers = #tpu.dot_dimension_numbers<[1], [0], [0], [1], [0, 0, 1, 1], [], []>} : vector<8x32xf32>, vector<32x128xf32>, vector<8x128xf32> -> vector<8x128xf32>
    %131 = arith.addf %129, %130 : vector<8x128xf32>
    %132 = vector.broadcast %60 : vector<1x128xf32> to vector<8x128xf32>
    %133 = arith.addf %131, %132 : vector<8x128xf32>
    %134 = arith.negf %133 : vector<8x128xf32>
    %135 = math.exp %134 : vector<8x128xf32>
    %cst_72 = arith.constant 1.000000e+00 : f32
    %136 = vector.broadcast %cst_72 : f32 to vector<8x128xf32>
    %137 = arith.addf %136, %135 : vector<8x128xf32>
    %138 = arith.divf %136, %137 : vector<8x128xf32>
    %139 = vector.extract_strided_slice %138 {offsets = [0, 0], sizes = [8, 32], strides = [1, 1]} : vector<8x128xf32> to vector<8x32xf32>
    %140 = vector.extract_strided_slice %138 {offsets = [0, 32], sizes = [8, 32], strides = [1, 1]} : vector<8x128xf32> to vector<8x32xf32>
    %141 = vector.extract_strided_slice %138 {offsets = [0, 96], sizes = [8, 32], strides = [1, 1]} : vector<8x128xf32> to vector<8x32xf32>
    %142 = vector.extract_strided_slice %133 {offsets = [0, 64], sizes = [8, 32], strides = [1, 1]} : vector<8x128xf32> to vector<8x32xf32>
    %143 = math.tanh %142 : vector<8x32xf32>
    %144 = arith.mulf %140, %102 : vector<8x32xf32>
    %145 = arith.mulf %139, %143 : vector<8x32xf32>
    %146 = arith.addf %144, %145 : vector<8x32xf32>
    %147 = math.tanh %146 : vector<8x32xf32>
    %148 = arith.mulf %141, %147 : vector<8x32xf32>
    %cst_73 = arith.constant dense<0.000000e+00> : vector<8x128xf32>
    %149 = tpu.matmul %148, %61, %cst_73 {dimension_numbers = #tpu.dot_dimension_numbers<[1], [0], [0], [1], [0, 0, 1, 1], [], []>} : vector<8x32xf32>, vector<32x128xf32>, vector<8x128xf32> -> vector<8x128xf32>
    %150 = vector.broadcast %62 : vector<1x128xf32> to vector<8x128xf32>
    %151 = arith.addf %149, %150 : vector<8x128xf32>
    %c1 = arith.constant 1 : index
    %c0_74 = arith.constant 0 : index
    %c0_75 = arith.constant 0 : index
    %152 = vector.load %arg21[%c1, %c0_74, %c0_75] : memref<2x8x128xf32, #tpu.memory_space<vmem>>, vector<1x8x128xf32>
    %153 = vector.shape_cast %152 : vector<1x8x128xf32> to vector<8x128xf32>
    %154 = vector.shape_cast %151 : vector<8x128xf32> to vector<1x8x128xf32>
    tpu.vector_store %arg21[%c1, %c0_74, %c0_75], %154 {strides = array<i32>} : memref<2x8x128xf32, #tpu.memory_space<vmem>>, vector<1x8x128xf32>,
    %c0_76 = arith.constant 0 : index
    %c0_77 = arith.constant 0 : index
    %c0_78 = arith.constant 0 : index
    %155 = vector.load %arg22[%c0_76, %c0_77, %c0_78] : memref<2x8x32xf32, #tpu.memory_space<vmem>>, vector<1x8x32xf32>
    %156 = vector.shape_cast %155 : vector<1x8x32xf32> to vector<8x32xf32>
    %157 = vector.shape_cast %128 : vector<8x32xf32> to vector<1x8x32xf32>
    tpu.vector_store %arg22[%c0_76, %c0_77, %c0_78], %157 {strides = array<i32>} : memref<2x8x32xf32, #tpu.memory_space<vmem>>, vector<1x8x32xf32>,
    %c1_79 = arith.constant 1 : index
    %c0_80 = arith.constant 0 : index
    %c0_81 = arith.constant 0 : index
    %158 = vector.load %arg22[%c1_79, %c0_80, %c0_81] : memref<2x8x32xf32, #tpu.memory_space<vmem>>, vector<1x8x32xf32>
    %159 = vector.shape_cast %158 : vector<1x8x32xf32> to vector<8x32xf32>
    %160 = vector.shape_cast %148 : vector<8x32xf32> to vector<1x8x32xf32>
    tpu.vector_store %arg22[%c1_79, %c0_80, %c0_81], %160 {strides = array<i32>} : memref<2x8x32xf32, #tpu.memory_space<vmem>>, vector<1x8x32xf32>,
    %c0_82 = arith.constant 0 : index
    %c0_83 = arith.constant 0 : index
    %c0_84 = arith.constant 0 : index
    %161 = vector.load %arg23[%c0_82, %c0_83, %c0_84] : memref<2x8x32xf32, #tpu.memory_space<vmem>>, vector<1x8x32xf32>
    %162 = vector.shape_cast %161 : vector<1x8x32xf32> to vector<8x32xf32>
    %163 = vector.shape_cast %126 : vector<8x32xf32> to vector<1x8x32xf32>
    tpu.vector_store %arg23[%c0_82, %c0_83, %c0_84], %163 {strides = array<i32>} : memref<2x8x32xf32, #tpu.memory_space<vmem>>, vector<1x8x32xf32>,
    %c1_85 = arith.constant 1 : index
    %c0_86 = arith.constant 0 : index
    %c0_87 = arith.constant 0 : index
    %164 = vector.load %arg23[%c1_85, %c0_86, %c0_87] : memref<2x8x32xf32, #tpu.memory_space<vmem>>, vector<1x8x32xf32>
    %165 = vector.shape_cast %164 : vector<1x8x32xf32> to vector<8x32xf32>
    %166 = vector.shape_cast %146 : vector<8x32xf32> to vector<1x8x32xf32>
    tpu.vector_store %arg23[%c1_85, %c0_86, %c0_87], %166 {strides = array<i32>} : memref<2x8x32xf32, #tpu.memory_space<vmem>>, vector<1x8x32xf32>,
    return
  }
}

</mosaic_0001>

<llo_original>
// kernel: deepvio_forward.1
$region0: #{deepvio_forward.1}
  #allocation0 [shape = 'u32[]', space=smem, size = 0x4, offset = 0x4, fixed_abs, tag = 'smem constant byte address 0x4 - core index']
  #allocation1 [shape = 'u32[72,128]{1,0:T(1,128)}', space=vmem, size = 0x9000, scoped, tag = 'internal scratch']
  %s0 = inlined_call_operand.vmem [shape: bf16[16,1536], index: 0, kind: input, shape index: {}]
  %s1 = inlined_call_operand.hbm [shape: bf16[1536,1024], index: 1, kind: input, shape index: {}]
  %s2 = inlined_call_operand.hbm [shape: f32[1,1024], index: 2, kind: input, shape index: {}]
  %s3 = inlined_call_operand.hbm [shape: bf16[1024,512], index: 3, kind: input, shape index: {}]
  %s4 = inlined_call_operand.hbm [shape: f32[1,512], index: 4, kind: input, shape index: {}]
  %s5 = inlined_call_operand.vmem [shape: f32[512,64], index: 5, kind: input, shape index: {}]
  %s6 = inlined_call_operand.vmem [shape: bf16[16,128], index: 6, kind: input, shape index: {}]
  %s7 = inlined_call_operand.hbm [shape: bf16[128,384], index: 7, kind: input, shape index: {}]
  %s8 = inlined_call_operand.hbm [shape: f32[1,384], index: 8, kind: input, shape index: {}]
  %s9 = inlined_call_operand.hbm [shape: bf16[384,384], index: 9, kind: input, shape index: {}]
  %s10 = inlined_call_operand.hbm [shape: f32[1,384], index: 10, kind: input, shape index: {}]
  %s11 = inlined_call_operand.vmem [shape: f32[384,64], index: 11, kind: input, shape index: {}]
  %s12 = inlined_call_operand.hbm [shape: f32[1,64], index: 12, kind: input, shape index: {}]
  %s13 = inlined_call_operand.hbm [shape: f32[64,128], index: 13, kind: input, shape index: {}]
  %s14 = inlined_call_operand.hbm [shape: f32[32,128], index: 14, kind: input, shape index: {}]
  %s15 = inlined_call_operand.hbm [shape: f32[1,128], index: 15, kind: input, shape index: {}]
  %s16 = inlined_call_operand.hbm [shape: f32[32,128], index: 16, kind: input, shape index: {}]
  %s17 = inlined_call_operand.hbm [shape: f32[32,128], index: 17, kind: input, shape index: {}]
  %s18 = inlined_call_operand.hbm [shape: f32[1,128], index: 18, kind: input, shape index: {}]
  %s19 = inlined_call_operand.hbm [shape: f32[32,128], index: 19, kind: input, shape index: {}]
  %s20 = inlined_call_operand.hbm [shape: f32[1,128], index: 20, kind: input, shape index: {}]
  %s21 = inlined_call_operand.vmem [shape: f32[2,8,128], index: 21, kind: output, shape index: {0}]
  %s22 = inlined_call_operand.vmem [shape: f32[2,8,32], index: 22, kind: output, shape index: {1}]
  %s23 = inlined_call_operand.vmem [shape: f32[2,8,32], index: 23, kind: output, shape index: {2}]
  %24 = xla_tuple %s21, %s22, %s23
  %s25 = sld [smem:[#allocation0]]
  $region178: #{deepvio_forward.1} parent=0
    _
  %s27 = ssub.s32 1, %s25
  %s28 = scalar_select 0, %s27, %s25
  $region1: #{deepvio_forward.1} parent=0
    #allocation2 [shape = 'u8[3145728]{0}', space=vmem, size = 0x300000, scoped, tag = 'input window, operand 1, single buffered']
    #allocation3 [shape = 's32[1]{0}', space=sflag, size = 0x4, scoped, tag = 'scoped memory for deepvio_forward.1']
    #allocation4 [shape = 'u8[4096]{0}', space=vmem, size = 0x1000, scoped, tag = 'input window, operand 2, single buffered']
    #allocation5 [shape = 's32[1]{0}', space=sflag, size = 0x4, scoped, tag = 'scoped memory for deepvio_forward.1']
    #allocation6 [shape = 'u8[1048576]{0}', space=vmem, size = 0x100000, scoped, tag = 'input window, operand 3, single buffered']
    #allocation7 [shape = 'u8[2048]{0}', space=vmem, size = 0x800, scoped, tag = 'input window, operand 4, single buffered']
    #allocation8 [shape = 's32[1]{0}', space=sflag, size = 0x4, scoped, tag = 'scoped memory for deepvio_forward.1']
    #allocation9 [shape = 'u8[98304]{0}', space=vmem, size = 0x18000, scoped, tag = 'input window, operand 7, single buffered']
    #allocation10 [shape = 'u8[1536]{0}', space=vmem, size = 0x800, scoped, tag = 'input window, operand 8, single buffered']
    #allocation11 [shape = 's32[1]{0}', space=sflag, size = 0x4, scoped, tag = 'scoped memory for deepvio_forward.1']
    #allocation12 [shape = 'u8[294912]{0}', space=vmem, size = 0x48000, scoped, tag = 'input window, operand 9, single buffered']
    #allocation13 [shape = 'u8[1536]{0}', space=vmem, size = 0x800, scoped, tag = 'input window, operand 10, single buffered']
    #allocation14 [shape = 's32[1]{0}', space=sflag, size = 0x4, scoped, tag = 'scoped memory for deepvio_forward.1']
    #allocation15 [shape = 'u8[512]{0}', space=vmem, size = 0x400, scoped, tag = 'input window, operand 12, single buffered']
    #allocation16 [shape = 'u8[32768]{0}', space=vmem, size = 0x8000, scoped, tag = 'input window, operand 13, single buffered']
    #allocation17 [shape = 's32[1]{0}', space=sflag, size = 0x4, scoped, tag = 'scoped memory for deepvio_forward.1']
    #allocation18 [shape = 'u8[16384]{0}', space=vmem, size = 0x4000, scoped, tag = 'input window, operand 14, single buffered']
    #allocation19 [shape = 'u8[512]{0}', space=vmem, size = 0x400, scoped, tag = 'input window, operand 15, single buffered']
    #allocation20 [shape = 's32[1]{0}', space=sflag, size = 0x4, scoped, tag = 'scoped memory for deepvio_forward.1']
    #allocation21 [shape = 'u8[16384]{0}', space=vmem, size = 0x4000, scoped, tag = 'input window, operand 16, single buffered']
    #allocation22 [shape = 'u8[16384]{0}', space=vmem, size = 0x4000, scoped, tag = 'input window, operand 17, single buffered']
    #allocation23 [shape = 's32[1]{0}', space=sflag, size = 0x4, scoped, tag = 'scoped memory for deepvio_forward.1']
    #allocation24 [shape = 'u8[512]{0}', space=vmem, size = 0x400, scoped, tag = 'input window, operand 18, single buffered']
    #allocation25 [shape = 'u8[16384]{0}', space=vmem, size = 0x4000, scoped, tag = 'input window, operand 19, single buffered']
    #allocation26 [shape = 's32[1]{0}', space=sflag, size = 0x4, scoped, tag = 'scoped memory for deepvio_forward.1']
    #allocation27 [shape = 'u8[512]{0}', space=vmem, size = 0x400, scoped, tag = 'input window, operand 20, single buffered']
    %29 = vsyncpa [#allocation3], 0
    %30 = vsyncpa [#allocation5], 0
    %31 = vsyncpa [#allocation8], 0
    %32 = vsyncpa [#allocation11], 0
    %33 = vsyncpa [#allocation14], 0
    %34 = vsyncpa [#allocation17], 0
    %35 = vsyncpa [#allocation20], 0
    %36 = vsyncpa [#allocation23], 0
    %37 = vsyncpa [#allocation26], 0
    // Predicated region
    $region2: #{deepvio_forward.1} parent=1 // pred_check
      _
    $region3: #{deepvio_forward.1} parent=1 // pred_check_branch
      %39 = sbr.rel (0) target = $region5
    $region4: #{deepvio_forward.1} parent=1 // pred_region
      _
    $region5: #{deepvio_forward.1} parent=1 // pred_fallthru
      _
    // Predicated region
    $region6: #{deepvio_forward.1} parent=1 // pred_check
      _
    $region7: #{deepvio_forward.1} parent=1 // pred_check_branch
      %41 = sbr.rel (0) target = $region9
    $region8: #{deepvio_forward.1} parent=1 // pred_region
      %43 = vsyncadd [#allocation3], 0
      %s44 = sshll.u32 %s1, 4
      %s45 = int_to_ptr.hbm [resolvable:$true] %s44
      %s46 = sshll.u32 [#allocation2], 4
      %s47 = int_to_ptr.vmem [resolvable:$true] %s46
      %52 = dma.hbm_to_vmem [thread:$0]  %s45, 98304, %s47, [#allocation3], 512, 512, 32
    $region9: #{deepvio_forward.1} parent=1 // pred_fallthru
      _
    // Predicated region
    $region10: #{deepvio_forward.1} parent=1 // pred_check
      _
    $region11: #{deepvio_forward.1} parent=1 // pred_check_branch
      %54 = sbr.rel (0) target = $region13
    $region12: #{deepvio_forward.1} parent=1 // pred_region
      %56 = vsyncadd [#allocation5], 0
      %s58 = sshll.u32 %s2, 4
      %s59 = int_to_ptr.hbm [resolvable:$true] %s58
      %s60 = sshll.u32 [#allocation4], 4
      %s61 = int_to_ptr.vmem [resolvable:$true] %s60
      %63 = dma.hbm_to_vmem [thread:$0]  %s59, 128, %s61, [#allocation5]
    $region13: #{deepvio_forward.1} parent=1 // pred_fallthru
      _
    // Predicated region
    $region14: #{deepvio_forward.1} parent=1 // pred_check
      _
    $region15: #{deepvio_forward.1} parent=1 // pred_check_branch
      %65 = sbr.rel (0) target = $region17
    $region16: #{deepvio_forward.1} parent=1 // pred_region
      %67 = vsyncadd [#allocation5], 0
      %s68 = sshll.u32 %s3, 4
      %s69 = int_to_ptr.hbm [resolvable:$true] %s68
      %s70 = sshll.u32 [#allocation6], 4
      %s71 = int_to_ptr.vmem [resolvable:$true] %s70
      %76 = dma.hbm_to_vmem [thread:$0]  %s69, 32768, %s71, [#allocation5], 256, 256, 16
    $region17: #{deepvio_forward.1} parent=1 // pred_fallthru
      _
    // Predicated region
    $region18: #{deepvio_forward.1} parent=1 // pred_check
      _
    $region19: #{deepvio_forward.1} parent=1 // pred_check_branch
      %78 = sbr.rel (0) target = $region21
    $region20: #{deepvio_forward.1} parent=1 // pred_region
      %80 = vsyncadd [#allocation8], 0
      %s82 = sshll.u32 %s4, 4
      %s83 = int_to_ptr.hbm [resolvable:$true] %s82
      %s84 = sshll.u32 [#allocation7], 4
      %s85 = int_to_ptr.vmem [resolvable:$true] %s84
      %87 = dma.hbm_to_vmem [thread:$0]  %s83, 64, %s85, [#allocation8]
    $region21: #{deepvio_forward.1} parent=1 // pred_fallthru
      _
    // Predicated region
    $region22: #{deepvio_forward.1} parent=1 // pred_check
      _
    $region23: #{deepvio_forward.1} parent=1 // pred_check_branch
      %89 = sbr.rel (0) target = $region25
    $region24: #{deepvio_forward.1} parent=1 // pred_region
      _
    $region25: #{deepvio_forward.1} parent=1 // pred_fallthru
      _
    // Predicated region
    $region26: #{deepvio_forward.1} parent=1 // pred_check
      _
    $region27: #{deepvio_forward.1} parent=1 // pred_check_branch
      %91 = sbr.rel (0) target = $region29
    $region28: #{deepvio_forward.1} parent=1 // pred_region
      _
    $region29: #{deepvio_forward.1} parent=1 // pred_fallthru
      _
    // Predicated region
    $region30: #{deepvio_forward.1} parent=1 // pred_check
      _
    $region31: #{deepvio_forward.1} parent=1 // pred_check_branch
      %93 = sbr.rel (0) target = $region33
    $region32: #{deepvio_forward.1} parent=1 // pred_region
      %95 = vsyncadd [#allocation8], 0
      %s96 = sshll.u32 %s7, 4
      %s97 = int_to_ptr.hbm [resolvable:$true] %s96
      %s98 = sshll.u32 [#allocation9], 4
      %s99 = int_to_ptr.vmem [resolvable:$true] %s98
      %104 = dma.hbm_to_vmem [thread:$0]  %s97, 3072, %s99, [#allocation8], 192, 192, 12
    $region33: #{deepvio_forward.1} parent=1 // pred_fallthru
      _
    // Predicated region
    $region34: #{deepvio_forward.1} parent=1 // pred_check
      _
    $region35: #{deepvio_forward.1} parent=1 // pred_check_branch
      %106 = sbr.rel (0) target = $region37
    $region36: #{deepvio_forward.1} parent=1 // pred_region
      %108 = vsyncadd [#allocation11], 0
      %s110 = sshll.u32 %s8, 4
      %s111 = int_to_ptr.hbm [resolvable:$true] %s110
      %s112 = sshll.u32 [#allocation10], 4
      %s113 = int_to_ptr.vmem [resolvable:$true] %s112
      %115 = dma.hbm_to_vmem [thread:$0]  %s111, 48, %s113, [#allocation11]
    $region37: #{deepvio_forward.1} parent=1 // pred_fallthru
      _
    // Predicated region
    $region38: #{deepvio_forward.1} parent=1 // pred_check
      _
    $region39: #{deepvio_forward.1} parent=1 // pred_check_branch
      %117 = sbr.rel (0) target = $region41
    $region40: #{deepvio_forward.1} parent=1 // pred_region
      %119 = vsyncadd [#allocation11], 0
      %s120 = sshll.u32 %s9, 4
      %s121 = int_to_ptr.hbm [resolvable:$true] %s120
      %s122 = sshll.u32 [#allocation12], 4
      %s123 = int_to_ptr.vmem [resolvable:$true] %s122
      %128 = dma.hbm_to_vmem [thread:$0]  %s121, 9216, %s123, [#allocation11], 192, 192, 12
    $region41: #{deepvio_forward.1} parent=1 // pred_fallthru
      _
    // Predicated region
    $region42: #{deepvio_forward.1} parent=1 // pred_check
      _
    $region43: #{deepvio_forward.1} parent=1 // pred_check_branch
      %130 = sbr.rel (0) target = $region45
    $region44: #{deepvio_forward.1} parent=1 // pred_region
      %132 = vsyncadd [#allocation14], 0
      %s134 = sshll.u32 %s10, 4
      %s135 = int_to_ptr.hbm [resolvable:$true] %s134
      %s136 = sshll.u32 [#allocation13], 4
      %s137 = int_to_ptr.vmem [resolvable:$true] %s136
      %139 = dma.hbm_to_vmem [thread:$0]  %s135, 48, %s137, [#allocation14]
    $region45: #{deepvio_forward.1} parent=1 // pred_fallthru
      _
    // Predicated region
    $region46: #{deepvio_forward.1} parent=1 // pred_check
      _
    $region47: #{deepvio_forward.1} parent=1 // pred_check_branch
      %141 = sbr.rel (0) target = $region49
    $region48: #{deepvio_forward.1} parent=1 // pred_region
      _
    $region49: #{deepvio_forward.1} parent=1 // pred_fallthru
      _
    // Predicated region
    $region50: #{deepvio_forward.1} parent=1 // pred_check
      _
    $region51: #{deepvio_forward.1} parent=1 // pred_check_branch
      %143 = sbr.rel (0) target = $region53
    $region52: #{deepvio_forward.1} parent=1 // pred_region
      %145 = vsyncadd [#allocation14], 0
      %s147 = sshll.u32 %s12, 4
      %s148 = int_to_ptr.hbm [resolvable:$true] %s147
      %s149 = sshll.u32 [#allocation15], 4
      %s150 = int_to_ptr.vmem [resolvable:$true] %s149
      %152 = dma.hbm_to_vmem [thread:$0]  %s148, 16, %s150, [#allocation14]
    $region53: #{deepvio_forward.1} parent=1 // pred_fallthru
      _
    // Predicated region
    $region54: #{deepvio_forward.1} parent=1 // pred_check
      _
    $region55: #{deepvio_forward.1} parent=1 // pred_check_branch
      %154 = sbr.rel (0) target = $region57
    $region56: #{deepvio_forward.1} parent=1 // pred_region
      %156 = vsyncadd [#allocation17], 0
      %s157 = sshll.u32 %s13, 4
      %s158 = int_to_ptr.hbm [resolvable:$true] %s157
      %s159 = sshll.u32 [#allocation16], 4
      %s160 = int_to_ptr.vmem [resolvable:$true] %s159
      %165 = dma.hbm_to_vmem [thread:$0]  %s158, 1024, %s160, [#allocation17], 128, 128, 8
    $region57: #{deepvio_forward.1} parent=1 // pred_fallthru
      _
    // Predicated region
    $region58: #{deepvio_forward.1} parent=1 // pred_check
      _
    $region59: #{deepvio_forward.1} parent=1 // pred_check_branch
      %167 = sbr.rel (0) target = $region61
    $region60: #{deepvio_forward.1} parent=1 // pred_region
      %169 = vsyncadd [#allocation17], 0
      %s170 = sshll.u32 %s14, 4
      %s171 = int_to_ptr.hbm [resolvable:$true] %s170
      %s172 = sshll.u32 [#allocation18], 4
      %s173 = int_to_ptr.vmem [resolvable:$true] %s172
      %178 = dma.hbm_to_vmem [thread:$0]  %s171, 512, %s173, [#allocation17], 128, 128, 8
    $region61: #{deepvio_forward.1} parent=1 // pred_fallthru
      _
    // Predicated region
    $region62: #{deepvio_forward.1} parent=1 // pred_check
      _
    $region63: #{deepvio_forward.1} parent=1 // pred_check_branch
      %180 = sbr.rel (0) target = $region65
    $region64: #{deepvio_forward.1} parent=1 // pred_region
      %182 = vsyncadd [#allocation20], 0
      %s184 = sshll.u32 %s15, 4
      %s185 = int_to_ptr.hbm [resolvable:$true] %s184
      %s186 = sshll.u32 [#allocation19], 4
      %s187 = int_to_ptr.vmem [resolvable:$true] %s186
      %189 = dma.hbm_to_vmem [thread:$0]  %s185, 16, %s187, [#allocation20]
    $region65: #{deepvio_forward.1} parent=1 // pred_fallthru
      _
    // Predicated region
    $region66: #{deepvio_forward.1} parent=1 // pred_check
      _
    $region67: #{deepvio_forward.1} parent=1 // pred_check_branch
      %191 = sbr.rel (0) target = $region69
    $region68: #{deepvio_forward.1} parent=1 // pred_region
      %193 = vsyncadd [#allocation20], 0
      %s194 = sshll.u32 %s16, 4
      %s195 = int_to_ptr.hbm [resolvable:$true] %s194
      %s196 = sshll.u32 [#allocation21], 4
      %s197 = int_to_ptr.vmem [resolvable:$true] %s196
      %202 = dma.hbm_to_vmem [thread:$0]  %s195, 512, %s197, [#allocation20], 128, 128, 8
    $region69: #{deepvio_forward.1} parent=1 // pred_fallthru
      _
    // Predicated region
    $region70: #{deepvio_forward.1} parent=1 // pred_check
      _
    $region71: #{deepvio_forward.1} parent=1 // pred_check_branch
      %204 = sbr.rel (0) target = $region73
    $region72: #{deepvio_forward.1} parent=1 // pred_region
      %206 = vsyncadd [#allocation23], 0
      %s207 = sshll.u32 %s17, 4
      %s208 = int_to_ptr.hbm [resolvable:$true] %s207
      %s209 = sshll.u32 [#allocation22], 4
      %s210 = int_to_ptr.vmem [resolvable:$true] %s209
      %215 = dma.hbm_to_vmem [thread:$0]  %s208, 512, %s210, [#allocation23], 128, 128, 8
    $region73: #{deepvio_forward.1} parent=1 // pred_fallthru
      _
    // Predicated region
    $region74: #{deepvio_forward.1} parent=1 // pred_check
      _
    $region75: #{deepvio_forward.1} parent=1 // pred_check_branch
      %217 = sbr.rel (0) target = $region77
    $region76: #{deepvio_forward.1} parent=1 // pred_region
      %219 = vsyncadd [#allocation23], 0
      %s221 = sshll.u32 %s18, 4
      %s222 = int_to_ptr.hbm [resolvable:$true] %s221
      %s223 = sshll.u32 [#allocation24], 4
      %s224 = int_to_ptr.vmem [resolvable:$true] %s223
      %226 = dma.hbm_to_vmem [thread:$0]  %s222, 16, %s224, [#allocation23]
    $region77: #{deepvio_forward.1} parent=1 // pred_fallthru
      _
    // Predicated region
    $region78: #{deepvio_forward.1} parent=1 // pred_check
      _
    $region79: #{deepvio_forward.1} parent=1 // pred_check_branch
      %228 = sbr.rel (0) target = $region81
    $region80: #{deepvio_forward.1} parent=1 // pred_region
      %230 = vsyncadd [#allocation26], 0
      %s231 = sshll.u32 %s19, 4
      %s232 = int_to_ptr.hbm [resolvable:$true] %s231
      %s233 = sshll.u32 [#allocation25], 4
      %s234 = int_to_ptr.vmem [resolvable:$true] %s233
      %239 = dma.hbm_to_vmem [thread:$0]  %s232, 512, %s234, [#allocation26], 128, 128, 8
    $region81: #{deepvio_forward.1} parent=1 // pred_fallthru
      _
    // Predicated region
    $region82: #{deepvio_forward.1} parent=1 // pred_check
      _
    $region83: #{deepvio_forward.1} parent=1 // pred_check_branch
      %241 = sbr.rel (0) target = $region85
    $region84: #{deepvio_forward.1} parent=1 // pred_region
      %243 = vsyncadd [#allocation26], 0
      %s245 = sshll.u32 %s20, 4
      %s246 = int_to_ptr.hbm [resolvable:$true] %s245
      %s247 = sshll.u32 [#allocation27], 4
      %s248 = int_to_ptr.vmem [resolvable:$true] %s247
      %250 = dma.hbm_to_vmem [thread:$0]  %s246, 16, %s248, [#allocation26]
    $region85: #{deepvio_forward.1} parent=1 // pred_fallthru
      _
    // Predicated region
    $region86: #{deepvio_forward.1} parent=1 // pred_check
      _
    $region87: #{deepvio_forward.1} parent=1 // pred_check_branch
      %252 = sbr.rel (0) target = $region89
    $region88: #{deepvio_forward.1} parent=1 // pred_region
      %254 = dma.done [#allocation3], 98304
    $region89: #{deepvio_forward.1} parent=1 // pred_fallthru
      _
    // Predicated region
    $region90: #{deepvio_forward.1} parent=1 // pred_check
      _
    $region91: #{deepvio_forward.1} parent=1 // pred_check_branch
      %256 = sbr.rel (0) target = $region93
    $region92: #{deepvio_forward.1} parent=1 // pred_region
      %258 = dma.done [#allocation5], 128
    $region93: #{deepvio_forward.1} parent=1 // pred_fallthru
      _
    // Predicated region
    $region94: #{deepvio_forward.1} parent=1 // pred_check
      _
    $region95: #{deepvio_forward.1} parent=1 // pred_check_branch
      %260 = sbr.rel (0) target = $region97
    $region96: #{deepvio_forward.1} parent=1 // pred_region
      %262 = dma.done [#allocation5], 32768
    $region97: #{deepvio_forward.1} parent=1 // pred_fallthru
      _
    // Predicated region
    $region98: #{deepvio_forward.1} parent=1 // pred_check
      _
    $region99: #{deepvio_forward.1} parent=1 // pred_check_branch
      %264 = sbr.rel (0) target = $region101
    $region100: #{deepvio_forward.1} parent=1 // pred_region
      %266 = dma.done [#allocation8], 64
    $region101: #{deepvio_forward.1} parent=1 // pred_fallthru
      _
    // Predicated region
    $region102: #{deepvio_forward.1} parent=1 // pred_check
      _
    $region103: #{deepvio_forward.1} parent=1 // pred_check_branch
      %268 = sbr.rel (0) target = $region105
    $region104: #{deepvio_forward.1} parent=1 // pred_region
      %270 = dma.done [#allocation8], 3072
    $region105: #{deepvio_forward.1} parent=1 // pred_fallthru
      _
    // Predicated region
    $region106: #{deepvio_forward.1} parent=1 // pred_check
      _
    $region107: #{deepvio_forward.1} parent=1 // pred_check_branch
      %272 = sbr.rel (0) target = $region109
    $region108: #{deepvio_forward.1} parent=1 // pred_region
      %274 = dma.done [#allocation11], 48
    $region109: #{deepvio_forward.1} parent=1 // pred_fallthru
      _
    // Predicated region
    $region110: #{deepvio_forward.1} parent=1 // pred_check
      _
    $region111: #{deepvio_forward.1} parent=1 // pred_check_branch
      %276 = sbr.rel (0) target = $region113
    $region112: #{deepvio_forward.1} parent=1 // pred_region
      %278 = dma.done [#allocation11], 9216
    $region113: #{deepvio_forward.1} parent=1 // pred_fallthru
      _
    // Predicated region
    $region114: #{deepvio_forward.1} parent=1 // pred_check
      _
    $region115: #{deepvio_forward.1} parent=1 // pred_check_branch
      %280 = sbr.rel (0) target = $region117
    $region116: #{deepvio_forward.1} parent=1 // pred_region
      %282 = dma.done [#allocation14], 48
    $region117: #{deepvio_forward.1} parent=1 // pred_fallthru
      _
    // Predicated region
    $region118: #{deepvio_forward.1} parent=1 // pred_check
      _
    $region119: #{deepvio_forward.1} parent=1 // pred_check_branch
      %284 = sbr.rel (0) target = $region121
    $region120: #{deepvio_forward.1} parent=1 // pred_region
      %286 = dma.done [#allocation14], 16
    $region121: #{deepvio_forward.1} parent=1 // pred_fallthru
      _
    // Predicated region
    $region122: #{deepvio_forward.1} parent=1 // pred_check
      _
    $region123: #{deepvio_forward.1} parent=1 // pred_check_branch
      %288 = sbr.rel (0) target = $region125
    $region124: #{deepvio_forward.1} parent=1 // pred_region
      %290 = dma.done [#allocation17], 1024
    $region125: #{deepvio_forward.1} parent=1 // pred_fallthru
      _
    // Predicated region
    $region126: #{deepvio_forward.1} parent=1 // pred_check
      _
    $region127: #{deepvio_forward.1} parent=1 // pred_check_branch
      %292 = sbr.rel (0) target = $region129
    $region128: #{deepvio_forward.1} parent=1 // pred_region
      %294 = dma.done [#allocation17], 512
    $region129: #{deepvio_forward.1} parent=1 // pred_fallthru
      _
    // Predicated region
    $region130: #{deepvio_forward.1} parent=1 // pred_check
      _
    $region131: #{deepvio_forward.1} parent=1 // pred_check_branch
      %296 = sbr.rel (0) target = $region133
    $region132: #{deepvio_forward.1} parent=1 // pred_region
      %298 = dma.done [#allocation20], 16
    $region133: #{deepvio_forward.1} parent=1 // pred_fallthru
      _
    // Predicated region
    $region134: #{deepvio_forward.1} parent=1 // pred_check
      _
    $region135: #{deepvio_forward.1} parent=1 // pred_check_branch
      %300 = sbr.rel (0) target = $region137
    $region136: #{deepvio_forward.1} parent=1 // pred_region
      %302 = dma.done [#allocation20], 512
    $region137: #{deepvio_forward.1} parent=1 // pred_fallthru
      _
    // Predicated region
    $region138: #{deepvio_forward.1} parent=1 // pred_check
      _
    $region139: #{deepvio_forward.1} parent=1 // pred_check_branch
      %304 = sbr.rel (0) target = $region141
    $region140: #{deepvio_forward.1} parent=1 // pred_region
      %306 = dma.done [#allocation23], 512
    $region141: #{deepvio_forward.1} parent=1 // pred_fallthru
      _
    // Predicated region
    $region142: #{deepvio_forward.1} parent=1 // pred_check
      _
    $region143: #{deepvio_forward.1} parent=1 // pred_check_branch
      %308 = sbr.rel (0) target = $region145
    $region144: #{deepvio_forward.1} parent=1 // pred_region
      %310 = dma.done [#allocation23], 16
    $region145: #{deepvio_forward.1} parent=1 // pred_fallthru
      _
    // Predicated region
    $region146: #{deepvio_forward.1} parent=1 // pred_check
      _
    $region147: #{deepvio_forward.1} parent=1 // pred_check_branch
      %312 = sbr.rel (0) target = $region149
    $region148: #{deepvio_forward.1} parent=1 // pred_region
      %314 = dma.done [#allocation26], 512
    $region149: #{deepvio_forward.1} parent=1 // pred_fallthru
      _
    // Predicated region
    $region150: #{deepvio_forward.1} parent=1 // pred_check
      _
    $region151: #{deepvio_forward.1} parent=1 // pred_check_branch
      %316 = sbr.rel (0) target = $region153
    $region152: #{deepvio_forward.1} parent=1 // pred_region
      %318 = dma.done [#allocation26], 16
    $region153: #{deepvio_forward.1} parent=1 // pred_fallthru
      _
    %v319 = vld [vmem:[%s0] sm:$0xff]
    %v320 = vld [vmem:[%s0 + $0x8] sm:$0xff]
    %v321 = vld [vmem:[%s0 + $0x10] sm:$0xff]
    %v322 = vld [vmem:[%s0 + $0x18] sm:$0xff]
    %v323 = vld [vmem:[%s0 + $0x20] sm:$0xff]
    %v324 = vld [vmem:[%s0 + $0x28] sm:$0xff]
    %v325 = vld [vmem:[%s0 + $0x30] sm:$0xff]
    %v326 = vld [vmem:[%s0 + $0x38] sm:$0xff]
    %v327 = vld [vmem:[%s0 + $0x40] sm:$0xff]
    %v328 = vld [vmem:[%s0 + $0x48] sm:$0xff]
    %v329 = vld [vmem:[%s0 + $0x50] sm:$0xff]
    %v330 = vld [vmem:[%s0 + $0x58] sm:$0xff]
    %v331 = vld [vmem:[#allocation2] sm:$0xff]
    %v332 = vld [vmem:[#allocation2 + $0x8] sm:$0xff]
    %v333 = vld [vmem:[#allocation2 + $0x10] sm:$0xff]
    %v334 = vld [vmem:[#allocation2 + $0x18] sm:$0xff]
    %v335 = vld [vmem:[#allocation2 + $0x20] sm:$0xff]
    %v336 = vld [vmem:[#allocation2 + $0x28] sm:$0xff]
    %v337 = vld [vmem:[#allocation2 + $0x30] sm:$0xff]
    %v338 = vld [vmem:[#allocation2 + $0x38] sm:$0xff]
    %v339 = vld [vmem:[#allocation2 + $0x40] sm:$0xff]
    %v340 = vld [vmem:[#allocation2 + $0x48] sm:$0xff]
    %v341 = vld [vmem:[#allocation2 + $0x50] sm:$0xff]
    %v342 = vld [vmem:[#allocation2 + $0x58] sm:$0xff]
    %v343 = vld [vmem:[#allocation2 + $0x60] sm:$0xff]
    %v344 = vld [vmem:[#allocation2 + $0x68] sm:$0xff]
    %v345 = vld [vmem:[#allocation2 + $0x70] sm:$0xff]
    %v346 = vld [vmem:[#allocation2 + $0x78] sm:$0xff]
    %v347 = vld [vmem:[#allocation2 + $0x80] sm:$0xff]
    %v348 = vld [vmem:[#allocation2 + $0x88] sm:$0xff]
    %v349 = vld [vmem:[#allocation2 + $0x90] sm:$0xff]
    %v350 = vld [vmem:[#allocation2 + $0x98] sm:$0xff]
    %v351 = vld [vmem:[#allocation2 + $0xa0] sm:$0xff]
    %v352 = vld [vmem:[#allocation2 + $0xa8] sm:$0xff]
    %v353 = vld [vmem:[#allocation2 + $0xb0] sm:$0xff]
    %v354 = vld [vmem:[#allocation2 + $0xb8] sm:$0xff]
    %v355 = vld [vmem:[#allocation2 + $0xc0] sm:$0xff]
    %v356 = vld [vmem:[#allocation2 + $0xc8] sm:$0xff]
    %v357 = vld [vmem:[#allocation2 + $0xd0] sm:$0xff]
    %v358 = vld [vmem:[#allocation2 + $0xd8] sm:$0xff]
    %v359 = vld [vmem:[#allocation2 + $0xe0] sm:$0xff]
    %v360 = vld [vmem:[#allocation2 + $0xe8] sm:$0xff]
    %v361 = vld [vmem:[#allocation2 + $0xf0] sm:$0xff]
    %v362 = vld [vmem:[#allocation2 + $0xf8] sm:$0xff]
    %v363 = vld [vmem:[#allocation2 + $0x100] sm:$0xff]
    %v364 = vld [vmem:[#allocation2 + $0x108] sm:$0xff]
    %v365 = vld [vmem:[#allocation2 + $0x110] sm:$0xff]
    %v366 = vld [vmem:[#allocation2 + $0x118] sm:$0xff]
    %v367 = vld [vmem:[#allocation2 + $0x120] sm:$0xff]
    %v368 = vld [vmem:[#allocation2 + $0x128] sm:$0xff]
    %v369 = vld [vmem:[#allocation2 + $0x130] sm:$0xff]
    %v370 = vld [vmem:[#allocation2 + $0x138] sm:$0xff]
    %v371 = vld [vmem:[#allocation2 + $0x140] sm:$0xff]
    %v372 = vld [vmem:[#allocation2 + $0x148] sm:$0xff]
    %v373 = vld [vmem:[#allocation2 + $0x150] sm:$0xff]
    %v374 = vld [vmem:[#allocation2 + $0x158] sm:$0xff]
    %v375 = vld [vmem:[#allocation2 + $0x160] sm:$0xff]
    %v376 = vld [vmem:[#allocation2 + $0x168] sm:$0xff]
    %v377 = vld [vmem:[#allocation2 + $0x170] sm:$0xff]
    %v378 = vld [vmem:[#allocation2 + $0x178] sm:$0xff]
    %v379 = vld [vmem:[#allocation2 + $0x180] sm:$0xff]
    %v380 = vld [vmem:[#allocation2 + $0x188] sm:$0xff]
    %v381 = vld [vmem:[#allocation2 + $0x190] sm:$0xff]
    %v382 = vld [vmem:[#allocation2 + $0x198] sm:$0xff]
    %v383 = vld [vmem:[#allocation2 + $0x1a0] sm:$0xff]
    %v384 = vld [vmem:[#allocation2 + $0x1a8] sm:$0xff]
    %v385 = vld [vmem:[#allocation2 + $0x1b0] sm:$0xff]
    %v386 = vld [vmem:[#allocation2 + $0x1b8] sm:$0xff]
    %v387 = vld [vmem:[#allocation2 + $0x1c0] sm:$0xff]
    %v388 = vld [vmem:[#allocation2 + $0x1c8] sm:$0xff]
    %v389 = vld [vmem:[#allocation2 + $0x1d0] sm:$0xff]
    %v390 = vld [vmem:[#allocation2 + $0x1d8] sm:$0xff]
    %v391 = vld [vmem:[#allocation2 + $0x1e0] sm:$0xff]
    %v392 = vld [vmem:[#allocation2 + $0x1e8] sm:$0xff]
    %v393 = vld [vmem:[#allocation2 + $0x1f0] sm:$0xff]
    %v394 = vld [vmem:[#allocation2 + $0x1f8] sm:$0xff]
    %v395 = vld [vmem:[#allocation2 + $0x200] sm:$0xff]
    %v396 = vld [vmem:[#allocation2 + $0x208] sm:$0xff]
    %v397 = vld [vmem:[#allocation2 + $0x210] sm:$0xff]
    %v398 = vld [vmem:[#allocation2 + $0x218] sm:$0xff]
    %v399 = vld [vmem:[#allocation2 + $0x220] sm:$0xff]
    %v400 = vld [vmem:[#allocation2 + $0x228] sm:$0xff]
    %v401 = vld [vmem:[#allocation2 + $0x230] sm:$0xff]
    %v402 = vld [vmem:[#allocation2 + $0x238] sm:$0xff]
    %v403 = vld [vmem:[#allocation2 + $0x240] sm:$0xff]
    %v404 = vld [vmem:[#allocation2 + $0x248] sm:$0xff]
    %v405 = vld [vmem:[#allocation2 + $0x250] sm:$0xff]
    %v406 = vld [vmem:[#allocation2 + $0x258] sm:$0xff]
    %v407 = vld [vmem:[#allocation2 + $0x260] sm:$0xff]
    %v408 = vld [vmem:[#allocation2 + $0x268] sm:$0xff]
    %v409 = vld [vmem:[#allocation2 + $0x270] sm:$0xff]
    %v410 = vld [vmem:[#allocation2 + $0x278] sm:$0xff]
    %v411 = vld [vmem:[#allocation2 + $0x280] sm:$0xff]
    %v412 = vld [vmem:[#allocation2 + $0x288] sm:$0xff]
    %v413 = vld [vmem:[#allocation2 + $0x290] sm:$0xff]
    %v414 = vld [vmem:[#allocation2 + $0x298] sm:$0xff]
    %v415 = vld [vmem:[#allocation2 + $0x2a0] sm:$0xff]
    %v416 = vld [vmem:[#allocation2 + $0x2a8] sm:$0xff]
    %v417 = vld [vmem:[#allocation2 + $0x2b0] sm:$0xff]
    %v418 = vld [vmem:[#allocation2 + $0x2b8] sm:$0xff]
    %v419 = vld [vmem:[#allocation2 + $0x2c0] sm:$0xff]
    %v420 = vld [vmem:[#allocation2 + $0x2c8] sm:$0xff]
    %v421 = vld [vmem:[#allocation2 + $0x2d0] sm:$0xff]
    %v422 = vld [vmem:[#allocation2 + $0x2d8] sm:$0xff]
    %v423 = vld [vmem:[#allocation2 + $0x2e0] sm:$0xff]
    %v424 = vld [vmem:[#allocation2 + $0x2e8] sm:$0xff]
    %v425 = vld [vmem:[#allocation2 + $0x2f0] sm:$0xff]
    %v426 = vld [vmem:[#allocation2 + $0x2f8] sm:$0xff]
    %v427 = vld [vmem:[#allocation2 + $0x300] sm:$0xff]
    %v428 = vld [vmem:[#allocation2 + $0x308] sm:$0xff]
    %v429 = vld [vmem:[#allocation2 + $0x310] sm:$0xff]
    %v430 = vld [vmem:[#allocation2 + $0x318] sm:$0xff]
    %v431 = vld [vmem:[#allocation2 + $0x320] sm:$0xff]
    %v432 = vld [vmem:[#allocation2 + $0x328] sm:$0xff]
    %v433 = vld [vmem:[#allocation2 + $0x330] sm:$0xff]
    %v434 = vld [vmem:[#allocation2 + $0x338] sm:$0xff]
    %v435 = vld [vmem:[#allocation2 + $0x340] sm:$0xff]
    %v436 = vld [vmem:[#allocation2 + $0x348] sm:$0xff]
    %v437 = vld [vmem:[#allocation2 + $0x350] sm:$0xff]
    %v438 = vld [vmem:[#allocation2 + $0x358] sm:$0xff]
    %v439 = vld [vmem:[#allocation2 + $0x360] sm:$0xff]
    %v440 = vld [vmem:[#allocation2 + $0x368] sm:$0xff]
    %v441 = vld [vmem:[#allocation2 + $0x370] sm:$0xff]
    %v442 = vld [vmem:[#allocation2 + $0x378] sm:$0xff]
    %v443 = vld [vmem:[#allocation2 + $0x380] sm:$0xff]
    %v444 = vld [vmem:[#allocation2 + $0x388] sm:$0xff]
    %v445 = vld [vmem:[#allocation2 + $0x390] sm:$0xff]
    %v446 = vld [vmem:[#allocation2 + $0x398] sm:$0xff]
    %v447 = vld [vmem:[#allocation2 + $0x3a0] sm:$0xff]
    %v448 = vld [vmem:[#allocation2 + $0x3a8] sm:$0xff]
    %v449 = vld [vmem:[#allocation2 + $0x3b0] sm:$0xff]
    %v450 = vld [vmem:[#allocation2 + $0x3b8] sm:$0xff]
    %v451 = vld [vmem:[#allocation2 + $0x3c0] sm:$0xff]
    %v452 = vld [vmem:[#allocation2 + $0x3c8] sm:$0xff]
    %v453 = vld [vmem:[#allocation2 + $0x3d0] sm:$0xff]
    %v454 = vld [vmem:[#allocation2 + $0x3d8] sm:$0xff]
    %v455 = vld [vmem:[#allocation2 + $0x3e0] sm:$0xff]
    %v456 = vld [vmem:[#allocation2 + $0x3e8] sm:$0xff]
    %v457 = vld [vmem:[#allocation2 + $0x3f0] sm:$0xff]
    %v458 = vld [vmem:[#allocation2 + $0x3f8] sm:$0xff]
    %v459 = vld [vmem:[#allocation2 + $0x400] sm:$0xff]
    %v460 = vld [vmem:[#allocation2 + $0x408] sm:$0xff]
    %v461 = vld [vmem:[#allocation2 + $0x410] sm:$0xff]
    %v462 = vld [vmem:[#allocation2 + $0x418] sm:$0xff]
    %v463 = vld [vmem:[#allocation2 + $0x420] sm:$0xff]
    %v464 = vld [vmem:[#allocation2 + $0x428] sm:$0xff]
    %v465 = vld [vmem:[#allocation2 + $0x430] sm:$0xff]
    %v466 = vld [vmem:[#allocation2 + $0x438] sm:$0xff]
    %v467 = vld [vmem:[#allocation2 + $0x440] sm:$0xff]
    %v468 = vld [vmem:[#allocation2 + $0x448] sm:$0xff]
    %v469 = vld [vmem:[#allocation2 + $0x450] sm:$0xff]
    %v470 = vld [vmem:[#allocation2 + $0x458] sm:$0xff]
    %v471 = vld [vmem:[#allocation2 + $0x460] sm:$0xff]
    %v472 = vld [vmem:[#allocation2 + $0x468] sm:$0xff]
    %v473 = vld [vmem:[#allocation2 + $0x470] sm:$0xff]
    %v474 = vld [vmem:[#allocation2 + $0x478] sm:$0xff]
    %v475 = vld [vmem:[#allocation2 + $0x480] sm:$0xff]
    %v476 = vld [vmem:[#allocation2 + $0x488] sm:$0xff]
    %v477 = vld [vmem:[#allocation2 + $0x490] sm:$0xff]
    %v478 = vld [vmem:[#allocation2 + $0x498] sm:$0xff]
    %v479 = vld [vmem:[#allocation2 + $0x4a0] sm:$0xff]
    %v480 = vld [vmem:[#allocation2 + $0x4a8] sm:$0xff]
    %v481 = vld [vmem:[#allocation2 + $0x4b0] sm:$0xff]
    %v482 = vld [vmem:[#allocation2 + $0x4b8] sm:$0xff]
    %v483 = vld [vmem:[#allocation2 + $0x4c0] sm:$0xff]
    %v484 = vld [vmem:[#allocation2 + $0x4c8] sm:$0xff]
    %v485 = vld [vmem:[#allocation2 + $0x4d0] sm:$0xff]
    %v486 = vld [vmem:[#allocation2 + $0x4d8] sm:$0xff]
    %v487 = vld [vmem:[#allocation2 + $0x4e0] sm:$0xff]
    %v488 = vld [vmem:[#allocation2 + $0x4e8] sm:$0xff]
    %v489 = vld [vmem:[#allocation2 + $0x4f0] sm:$0xff]
    %v490 = vld [vmem:[#allocation2 + $0x4f8] sm:$0xff]
    %v491 = vld [vmem:[#allocation2 + $0x500] sm:$0xff]
    %v492 = vld [vmem:[#allocation2 + $0x508] sm:$0xff]
    %v493 = vld [vmem:[#allocation2 + $0x510] sm:$0xff]
    %v494 = vld [vmem:[#allocation2 + $0x518] sm:$0xff]
    %v495 = vld [vmem:[#allocation2 + $0x520] sm:$0xff]
    %v496 = vld [vmem:[#allocation2 + $0x528] sm:$0xff]
    %v497 = vld [vmem:[#allocation2 + $0x530] sm:$0xff]
    %v498 = vld [vmem:[#allocation2 + $0x538] sm:$0xff]
    %v499 = vld [vmem:[#allocation2 + $0x540] sm:$0xff]
    %v500 = vld [vmem:[#allocation2 + $0x548] sm:$0xff]
    %v501 = vld [vmem:[#allocation2 + $0x550] sm:$0xff]
    %v502 = vld [vmem:[#allocation2 + $0x558] sm:$0xff]
    %v503 = vld [vmem:[#allocation2 + $0x560] sm:$0xff]
    %v504 = vld [vmem:[#allocation2 + $0x568] sm:$0xff]
    %v505 = vld [vmem:[#allocation2 + $0x570] sm:$0xff]
    %v506 = vld [vmem:[#allocation2 + $0x578] sm:$0xff]
    %v507 = vld [vmem:[#allocation2 + $0x580] sm:$0xff]
    %v508 = vld [vmem:[#allocation2 + $0x588] sm:$0xff]
    %v509 = vld [vmem:[#allocation2 + $0x590] sm:$0xff]
    %v510 = vld [vmem:[#allocation2 + $0x598] sm:$0xff]
    %v511 = vld [vmem:[#allocation2 + $0x5a0] sm:$0xff]
    %v512 = vld [vmem:[#allocation2 + $0x5a8] sm:$0xff]
    %v513 = vld [vmem:[#allocation2 + $0x5b0] sm:$0xff]
    %v514 = vld [vmem:[#allocation2 + $0x5b8] sm:$0xff]
    %v515 = vld [vmem:[#allocation2 + $0x5c0] sm:$0xff]
    %v516 = vld [vmem:[#allocation2 + $0x5c8] sm:$0xff]
    %v517 = vld [vmem:[#allocation2 + $0x5d0] sm:$0xff]
    %v518 = vld [vmem:[#allocation2 + $0x5d8] sm:$0xff]
    %v519 = vld [vmem:[#allocation2 + $0x5e0] sm:$0xff]
    %v520 = vld [vmem:[#allocation2 + $0x5e8] sm:$0xff]
    %v521 = vld [vmem:[#allocation2 + $0x5f0] sm:$0xff]
    %v522 = vld [vmem:[#allocation2 + $0x5f8] sm:$0xff]
    %v523 = vld [vmem:[#allocation2 + $0x600] sm:$0xff]
    %v524 = vld [vmem:[#allocation2 + $0x608] sm:$0xff]
    %v525 = vld [vmem:[#allocation2 + $0x610] sm:$0xff]
    %v526 = vld [vmem:[#allocation2 + $0x618] sm:$0xff]
    %v527 = vld [vmem:[#allocation2 + $0x620] sm:$0xff]
    %v528 = vld [vmem:[#allocation2 + $0x628] sm:$0xff]
    %v529 = vld [vmem:[#allocation2 + $0x630] sm:$0xff]
    %v530 = vld [vmem:[#allocation2 + $0x638] sm:$0xff]
    %v531 = vld [vmem:[#allocation2 + $0x640] sm:$0xff]
    %v532 = vld [vmem:[#allocation2 + $0x648] sm:$0xff]
    %v533 = vld [vmem:[#allocation2 + $0x650] sm:$0xff]
    %v534 = vld [vmem:[#allocation2 + $0x658] sm:$0xff]
    %v535 = vld [vmem:[#allocation2 + $0x660] sm:$0xff]
    %v536 = vld [vmem:[#allocation2 + $0x668] sm:$0xff]
    %v537 = vld [vmem:[#allocation2 + $0x670] sm:$0xff]
    %v538 = vld [vmem:[#allocation2 + $0x678] sm:$0xff]
    %v539 = vld [vmem:[#allocation2 + $0x680] sm:$0xff]
    %v540 = vld [vmem:[#allocation2 + $0x688] sm:$0xff]
    %v541 = vld [vmem:[#allocation2 + $0x690] sm:$0xff]
    %v542 = vld [vmem:[#allocation2 + $0x698] sm:$0xff]
    %v543 = vld [vmem:[#allocation2 + $0x6a0] sm:$0xff]
    %v544 = vld [vmem:[#allocation2 + $0x6a8] sm:$0xff]
    %v545 = vld [vmem:[#allocation2 + $0x6b0] sm:$0xff]
    %v546 = vld [vmem:[#allocation2 + $0x6b8] sm:$0xff]
    %v547 = vld [vmem:[#allocation2 + $0x6c0] sm:$0xff]
    %v548 = vld [vmem:[#allocation2 + $0x6c8] sm:$0xff]
    %v549 = vld [vmem:[#allocation2 + $0x6d0] sm:$0xff]
    %v550 = vld [vmem:[#allocation2 + $0x6d8] sm:$0xff]
    %v551 = vld [vmem:[#allocation2 + $0x6e0] sm:$0xff]
    %v552 = vld [vmem:[#allocation2 + $0x6e8] sm:$0xff]
    %v553 = vld [vmem:[#allocation2 + $0x6f0] sm:$0xff]
    %v554 = vld [vmem:[#allocation2 + $0x6f8] sm:$0xff]
    %v555 = vld [vmem:[#allocation2 + $0x700] sm:$0xff]
    %v556 = vld [vmem:[#allocation2 + $0x708] sm:$0xff]
    %v557 = vld [vmem:[#allocation2 + $0x710] sm:$0xff]
    %v558 = vld [vmem:[#allocation2 + $0x718] sm:$0xff]
    %v559 = vld [vmem:[#allocation2 + $0x720] sm:$0xff]
    %v560 = vld [vmem:[#allocation2 + $0x728] sm:$0xff]
    %v561 = vld [vmem:[#allocation2 + $0x730] sm:$0xff]
    %v562 = vld [vmem:[#allocation2 + $0x738] sm:$0xff]
    %v563 = vld [vmem:[#allocation2 + $0x740] sm:$0xff]
    %v564 = vld [vmem:[#allocation2 + $0x748] sm:$0xff]
    %v565 = vld [vmem:[#allocation2 + $0x750] sm:$0xff]
    %v566 = vld [vmem:[#allocation2 + $0x758] sm:$0xff]
    %v567 = vld [vmem:[#allocation2 + $0x760] sm:$0xff]
    %v568 = vld [vmem:[#allocation2 + $0x768] sm:$0xff]
    %v569 = vld [vmem:[#allocation2 + $0x770] sm:$0xff]
    %v570 = vld [vmem:[#allocation2 + $0x778] sm:$0xff]
    %v571 = vld [vmem:[#allocation2 + $0x780] sm:$0xff]
    %v572 = vld [vmem:[#allocation2 + $0x788] sm:$0xff]
    %v573 = vld [vmem:[#allocation2 + $0x790] sm:$0xff]
    %v574 = vld [vmem:[#allocation2 + $0x798] sm:$0xff]
    %v575 = vld [vmem:[#allocation2 + $0x7a0] sm:$0xff]
    %v576 = vld [vmem:[#allocation2 + $0x7a8] sm:$0xff]
    %v577 = vld [vmem:[#allocation2 + $0x7b0] sm:$0xff]
    %v578 = vld [vmem:[#allocation2 + $0x7b8] sm:$0xff]
    %v579 = vld [vmem:[#allocation2 + $0x7c0] sm:$0xff]
    %v580 = vld [vmem:[#allocation2 + $0x7c8] sm:$0xff]
    %v581 = vld [vmem:[#allocation2 + $0x7d0] sm:$0xff]
    %v582 = vld [vmem:[#allocation2 + $0x7d8] sm:$0xff]
    %v583 = vld [vmem:[#allocation2 + $0x7e0] sm:$0xff]
    %v584 = vld [vmem:[#allocation2 + $0x7e8] sm:$0xff]
    %v585 = vld [vmem:[#allocation2 + $0x7f0] sm:$0xff]
    %v586 = vld [vmem:[#allocation2 + $0x7f8] sm:$0xff]
    %v587 = vld [vmem:[#allocation2 + $0x800] sm:$0xff]
    %v588 = vld [vmem:[#allocation2 + $0x808] sm:$0xff]
    %v589 = vld [vmem:[#allocation2 + $0x810] sm:$0xff]
    %v590 = vld [vmem:[#allocation2 + $0x818] sm:$0xff]
    %v591 = vld [vmem:[#allocation2 + $0x820] sm:$0xff]
    %v592 = vld [vmem:[#allocation2 + $0x828] sm:$0xff]
    %v593 = vld [vmem:[#allocation2 + $0x830] sm:$0xff]
    %v594 = vld [vmem:[#allocation2 + $0x838] sm:$0xff]
    %v595 = vld [vmem:[#allocation2 + $0x840] sm:$0xff]
    %v596 = vld [vmem:[#allocation2 + $0x848] sm:$0xff]
    %v597 = vld [vmem:[#allocation2 + $0x850] sm:$0xff]
    %v598 = vld [vmem:[#allocation2 + $0x858] sm:$0xff]
    %v599 = vld [vmem:[#allocation2 + $0x860] sm:$0xff]
    %v600 = vld [vmem:[#allocation2 + $0x868] sm:$0xff]
    %v601 = vld [vmem:[#allocation2 + $0x870] sm:$0xff]
    %v602 = vld [vmem:[#allocation2 + $0x878] sm:$0xff]
    %v603 = vld [vmem:[#allocation2 + $0x880] sm:$0xff]
    %v604 = vld [vmem:[#allocation2 + $0x888] sm:$0xff]
    %v605 = vld [vmem:[#allocation2 + $0x890] sm:$0xff]
    %v606 = vld [vmem:[#allocation2 + $0x898] sm:$0xff]
    %v607 = vld [vmem:[#allocation2 + $0x8a0] sm:$0xff]
    %v608 = vld [vmem:[#allocation2 + $0x8a8] sm:$0xff]
    %v609 = vld [vmem:[#allocation2 + $0x8b0] sm:$0xff]
    %v610 = vld [vmem:[#allocation2 + $0x8b8] sm:$0xff]
    %v611 = vld [vmem:[#allocation2 + $0x8c0] sm:$0xff]
    %v612 = vld [vmem:[#allocation2 + $0x8c8] sm:$0xff]
    %v613 = vld [vmem:[#allocation2 + $0x8d0] sm:$0xff]
    %v614 = vld [vmem:[#allocation2 + $0x8d8] sm:$0xff]
    %v615 = vld [vmem:[#allocation2 + $0x8e0] sm:$0xff]
    %v616 = vld [vmem:[#allocation2 + $0x8e8] sm:$0xff]
    %v617 = vld [vmem:[#allocation2 + $0x8f0] sm:$0xff]
    %v618 = vld [vmem:[#allocation2 + $0x8f8] sm:$0xff]
    %v619 = vld [vmem:[#allocation2 + $0x900] sm:$0xff]
    %v620 = vld [vmem:[#allocation2 + $0x908] sm:$0xff]
    %v621 = vld [vmem:[#allocation2 + $0x910] sm:$0xff]
    %v622 = vld [vmem:[#allocation2 + $0x918] sm:$0xff]
    %v623 = vld [vmem:[#allocation2 + $0x920] sm:$0xff]
    %v624 = vld [vmem:[#allocation2 + $0x928] sm:$0xff]
    %v625 = vld [vmem:[#allocation2 + $0x930] sm:$0xff]
    %v626 = vld [vmem:[#allocation2 + $0x938] sm:$0xff]
    %v627 = vld [vmem:[#allocation2 + $0x940] sm:$0xff]
    %v628 = vld [vmem:[#allocation2 + $0x948] sm:$0xff]
    %v629 = vld [vmem:[#allocation2 + $0x950] sm:$0xff]
    %v630 = vld [vmem:[#allocation2 + $0x958] sm:$0xff]
    %v631 = vld [vmem:[#allocation2 + $0x960] sm:$0xff]
    %v632 = vld [vmem:[#allocation2 + $0x968] sm:$0xff]
    %v633 = vld [vmem:[#allocation2 + $0x970] sm:$0xff]
    %v634 = vld [vmem:[#allocation2 + $0x978] sm:$0xff]
    %v635 = vld [vmem:[#allocation2 + $0x980] sm:$0xff]
    %v636 = vld [vmem:[#allocation2 + $0x988] sm:$0xff]
    %v637 = vld [vmem:[#allocation2 + $0x990] sm:$0xff]
    %v638 = vld [vmem:[#allocation2 + $0x998] sm:$0xff]
    %v639 = vld [vmem:[#allocation2 + $0x9a0] sm:$0xff]
    %v640 = vld [vmem:[#allocation2 + $0x9a8] sm:$0xff]
    %v641 = vld [vmem:[#allocation2 + $0x9b0] sm:$0xff]
    %v642 = vld [vmem:[#allocation2 + $0x9b8] sm:$0xff]
    %v643 = vld [vmem:[#allocation2 + $0x9c0] sm:$0xff]
    %v644 = vld [vmem:[#allocation2 + $0x9c8] sm:$0xff]
    %v645 = vld [vmem:[#allocation2 + $0x9d0] sm:$0xff]
    %v646 = vld [vmem:[#allocation2 + $0x9d8] sm:$0xff]
    %v647 = vld [vmem:[#allocation2 + $0x9e0] sm:$0xff]
    %v648 = vld [vmem:[#allocation2 + $0x9e8] sm:$0xff]
    %v649 = vld [vmem:[#allocation2 + $0x9f0] sm:$0xff]
    %v650 = vld [vmem:[#allocation2 + $0x9f8] sm:$0xff]
    %v651 = vld [vmem:[#allocation2 + $0xa00] sm:$0xff]
    %v652 = vld [vmem:[#allocation2 + $0xa08] sm:$0xff]
    %v653 = vld [vmem:[#allocation2 + $0xa10] sm:$0xff]
    %v654 = vld [vmem:[#allocation2 + $0xa18] sm:$0xff]
    %v655 = vld [vmem:[#allocation2 + $0xa20] sm:$0xff]
    %v656 = vld [vmem:[#allocation2 + $0xa28] sm:$0xff]
    %v657 = vld [vmem:[#allocation2 + $0xa30] sm:$0xff]
    %v658 = vld [vmem:[#allocation2 + $0xa38] sm:$0xff]
    %v659 = vld [vmem:[#allocation2 + $0xa40] sm:$0xff]
    %v660 = vld [vmem:[#allocation2 + $0xa48] sm:$0xff]
    %v661 = vld [vmem:[#allocation2 + $0xa50] sm:$0xff]
    %v662 = vld [vmem:[#allocation2 + $0xa58] sm:$0xff]
    %v663 = vld [vmem:[#allocation2 + $0xa60] sm:$0xff]
    %v664 = vld [vmem:[#allocation2 + $0xa68] sm:$0xff]
    %v665 = vld [vmem:[#allocation2 + $0xa70] sm:$0xff]
    %v666 = vld [vmem:[#allocation2 + $0xa78] sm:$0xff]
    %v667 = vld [vmem:[#allocation2 + $0xa80] sm:$0xff]
    %v668 = vld [vmem:[#allocation2 + $0xa88] sm:$0xff]
    %v669 = vld [vmem:[#allocation2 + $0xa90] sm:$0xff]
    %v670 = vld [vmem:[#allocation2 + $0xa98] sm:$0xff]
    %v671 = vld [vmem:[#allocation2 + $0xaa0] sm:$0xff]
    %v672 = vld [vmem:[#allocation2 + $0xaa8] sm:$0xff]
    %v673 = vld [vmem:[#allocation2 + $0xab0] sm:$0xff]
    %v674 = vld [vmem:[#allocation2 + $0xab8] sm:$0xff]
    %v675 = vld [vmem:[#allocation2 + $0xac0] sm:$0xff]
    %v676 = vld [vmem:[#allocation2 + $0xac8] sm:$0xff]
    %v677 = vld [vmem:[#allocation2 + $0xad0] sm:$0xff]
    %v678 = vld [vmem:[#allocation2 + $0xad8] sm:$0xff]
    %v679 = vld [vmem:[#allocation2 + $0xae0] sm:$0xff]
    %v680 = vld [vmem:[#allocation2 + $0xae8] sm:$0xff]
    %v681 = vld [vmem:[#allocation2 + $0xaf0] sm:$0xff]
    %v682 = vld [vmem:[#allocation2 + $0xaf8] sm:$0xff]
    %v683 = vld [vmem:[#allocation2 + $0xb00] sm:$0xff]
    %v684 = vld [vmem:[#allocation2 + $0xb08] sm:$0xff]
    %v685 = vld [vmem:[#allocation2 + $0xb10] sm:$0xff]
    %v686 = vld [vmem:[#allocation2 + $0xb18] sm:$0xff]
    %v687 = vld [vmem:[#allocation2 + $0xb20] sm:$0xff]
    %v688 = vld [vmem:[#allocation2 + $0xb28] sm:$0xff]
    %v689 = vld [vmem:[#allocation2 + $0xb30] sm:$0xff]
    %v690 = vld [vmem:[#allocation2 + $0xb38] sm:$0xff]
    %v691 = vld [vmem:[#allocation2 + $0xb40] sm:$0xff]
    %v692 = vld [vmem:[#allocation2 + $0xb48] sm:$0xff]
    %v693 = vld [vmem:[#allocation2 + $0xb50] sm:$0xff]
    %v694 = vld [vmem:[#allocation2 + $0xb58] sm:$0xff]
    %v695 = vld [vmem:[#allocation2 + $0xb60] sm:$0xff]
    %v696 = vld [vmem:[#allocation2 + $0xb68] sm:$0xff]
    %v697 = vld [vmem:[#allocation2 + $0xb70] sm:$0xff]
    %v698 = vld [vmem:[#allocation2 + $0xb78] sm:$0xff]
    %v699 = vld [vmem:[#allocation2 + $0xb80] sm:$0xff]
    %v700 = vld [vmem:[#allocation2 + $0xb88] sm:$0xff]
    %v701 = vld [vmem:[#allocation2 + $0xb90] sm:$0xff]
    %v702 = vld [vmem:[#allocation2 + $0xb98] sm:$0xff]
    %v703 = vld [vmem:[#allocation2 + $0xba0] sm:$0xff]
    %v704 = vld [vmem:[#allocation2 + $0xba8] sm:$0xff]
    %v705 = vld [vmem:[#allocation2 + $0xbb0] sm:$0xff]
    %v706 = vld [vmem:[#allocation2 + $0xbb8] sm:$0xff]
    %v707 = vld [vmem:[#allocation2 + $0xbc0] sm:$0xff]
    %v708 = vld [vmem:[#allocation2 + $0xbc8] sm:$0xff]
    %v709 = vld [vmem:[#allocation2 + $0xbd0] sm:$0xff]
    %v710 = vld [vmem:[#allocation2 + $0xbd8] sm:$0xff]
    %v711 = vld [vmem:[#allocation2 + $0xbe0] sm:$0xff]
    %v712 = vld [vmem:[#allocation2 + $0xbe8] sm:$0xff]
    %v713 = vld [vmem:[#allocation2 + $0xbf0] sm:$0xff]
    %v714 = vld [vmem:[#allocation2 + $0xbf8] sm:$0xff]
    %v715 = vld [vmem:[#allocation2 + $0xc00] sm:$0xff]
    %v716 = vld [vmem:[#allocation2 + $0xc08] sm:$0xff]
    %v717 = vld [vmem:[#allocation2 + $0xc10] sm:$0xff]
    %v718 = vld [vmem:[#allocation2 + $0xc18] sm:$0xff]
    %v719 = vld [vmem:[#allocation2 + $0xc20] sm:$0xff]
    %v720 = vld [vmem:[#allocation2 + $0xc28] sm:$0xff]
    %v721 = vld [vmem:[#allocation2 + $0xc30] sm:$0xff]
    %v722 = vld [vmem:[#allocation2 + $0xc38] sm:$0xff]
    %v723 = vld [vmem:[#allocation2 + $0xc40] sm:$0xff]
    %v724 = vld [vmem:[#allocation2 + $0xc48] sm:$0xff]
    %v725 = vld [vmem:[#allocation2 + $0xc50] sm:$0xff]
    %v726 = vld [vmem:[#allocation2 + $0xc58] sm:$0xff]
    %v727 = vld [vmem:[#allocation2 + $0xc60] sm:$0xff]
    %v728 = vld [vmem:[#allocation2 + $0xc68] sm:$0xff]
    %v729 = vld [vmem:[#allocation2 + $0xc70] sm:$0xff]
    %v730 = vld [vmem:[#allocation2 + $0xc78] sm:$0xff]
    %v731 = vld [vmem:[#allocation2 + $0xc80] sm:$0xff]
    %v732 = vld [vmem:[#allocation2 + $0xc88] sm:$0xff]
    %v733 = vld [vmem:[#allocation2 + $0xc90] sm:$0xff]
    %v734 = vld [vmem:[#allocation2 + $0xc98] sm:$0xff]
    %v735 = vld [vmem:[#allocation2 + $0xca0] sm:$0xff]
    %v736 = vld [vmem:[#allocation2 + $0xca8] sm:$0xff]
    %v737 = vld [vmem:[#allocation2 + $0xcb0] sm:$0xff]
    %v738 = vld [vmem:[#allocation2 + $0xcb8] sm:$0xff]
    %v739 = vld [vmem:[#allocation2 + $0xcc0] sm:$0xff]
    %v740 = vld [vmem:[#allocation2 + $0xcc8] sm:$0xff]
    %v741 = vld [vmem:[#allocation2 + $0xcd0] sm:$0xff]
    %v742 = vld [vmem:[#allocation2 + $0xcd8] sm:$0xff]
    %v743 = vld [vmem:[#allocation2 + $0xce0] sm:$0xff]
    %v744 = vld [vmem:[#allocation2 + $0xce8] sm:$0xff]
    %v745 = vld [vmem:[#allocation2 + $0xcf0] sm:$0xff]
    %v746 = vld [vmem:[#allocation2 + $0xcf8] sm:$0xff]
    %v747 = vld [vmem:[#allocation2 + $0xd00] sm:$0xff]
    %v748 = vld [vmem:[#allocation2 + $0xd08] sm:$0xff]
    %v749 = vld [vmem:[#allocation2 + $0xd10] sm:$0xff]
    %v750 = vld [vmem:[#allocation2 + $0xd18] sm:$0xff]
    %v751 = vld [vmem:[#allocation2 + $0xd20] sm:$0xff]
    %v752 = vld [vmem:[#allocation2 + $0xd28] sm:$0xff]
    %v753 = vld [vmem:[#allocation2 + $0xd30] sm:$0xff]
    %v754 = vld [vmem:[#allocation2 + $0xd38] sm:$0xff]
    %v755 = vld [vmem:[#allocation2 + $0xd40] sm:$0xff]
    %v756 = vld [vmem:[#allocation2 + $0xd48] sm:$0xff]
    %v757 = vld [vmem:[#allocation2 + $0xd50] sm:$0xff]
    %v758 = vld [vmem:[#allocation2 + $0xd58] sm:$0xff]
    %v759 = vld [vmem:[#allocation2 + $0xd60] sm:$0xff]
    %v760 = vld [vmem:[#allocation2 + $0xd68] sm:$0xff]
    %v761 = vld [vmem:[#allocation2 + $0xd70] sm:$0xff]
    %v762 = vld [vmem:[#allocation2 + $0xd78] sm:$0xff]
    %v763 = vld [vmem:[#allocation2 + $0xd80] sm:$0xff]
    %v764 = vld [vmem:[#allocation2 + $0xd88] sm:$0xff]
    %v765 = vld [vmem:[#allocation2 + $0xd90] sm:$0xff]
    %v766 = vld [vmem:[#allocation2 + $0xd98] sm:$0xff]
    %v767 = vld [vmem:[#allocation2 + $0xda0] sm:$0xff]
    %v768 = vld [vmem:[#allocation2 + $0xda8] sm:$0xff]
    %v769 = vld [vmem:[#allocation2 + $0xdb0] sm:$0xff]
    %v770 = vld [vmem:[#allocation2 + $0xdb8] sm:$0xff]
    %v771 = vld [vmem:[#allocation2 + $0xdc0] sm:$0xff]
    %v772 = vld [vmem:[#allocation2 + $0xdc8] sm:$0xff]
    %v773 = vld [vmem:[#allocation2 + $0xdd0] sm:$0xff]
    %v774 = vld [vmem:[#allocation2 + $0xdd8] sm:$0xff]
    %v775 = vld [vmem:[#allocation2 + $0xde0] sm:$0xff]
    %v776 = vld [vmem:[#allocation2 + $0xde8] sm:$0xff]
    %v777 = vld [vmem:[#allocation2 + $0xdf0] sm:$0xff]
    %v778 = vld [vmem:[#allocation2 + $0xdf8] sm:$0xff]
    %v779 = vld [vmem:[#allocation2 + $0xe00] sm:$0xff]
    %v780 = vld [vmem:[#allocation2 + $0xe08] sm:$0xff]
    %v781 = vld [vmem:[#allocation2 + $0xe10] sm:$0xff]
    %v782 = vld [vmem:[#allocation2 + $0xe18] sm:$0xff]
    %v783 = vld [vmem:[#allocation2 + $0xe20] sm:$0xff]
    %v784 = vld [vmem:[#allocation2 + $0xe28] sm:$0xff]
    %v785 = vld [vmem:[#allocation2 + $0xe30] sm:$0xff]
    %v786 = vld [vmem:[#allocation2 + $0xe38] sm:$0xff]
    %v787 = vld [vmem:[#allocation2 + $0xe40] sm:$0xff]
    %v788 = vld [vmem:[#allocation2 + $0xe48] sm:$0xff]
    %v789 = vld [vmem:[#allocation2 + $0xe50] sm:$0xff]
    %v790 = vld [vmem:[#allocation2 + $0xe58] sm:$0xff]
    %v791 = vld [vmem:[#allocation2 + $0xe60] sm:$0xff]
    %v792 = vld [vmem:[#allocation2 + $0xe68] sm:$0xff]
    %v793 = vld [vmem:[#allocation2 + $0xe70] sm:$0xff]
    %v794 = vld [vmem:[#allocation2 + $0xe78] sm:$0xff]
    %v795 = vld [vmem:[#allocation2 + $0xe80] sm:$0xff]
    %v796 = vld [vmem:[#allocation2 + $0xe88] sm:$0xff]
    %v797 = vld [vmem:[#allocation2 + $0xe90] sm:$0xff]
    %v798 = vld [vmem:[#allocation2 + $0xe98] sm:$0xff]
    %v799 = vld [vmem:[#allocation2 + $0xea0] sm:$0xff]
    %v800 = vld [vmem:[#allocation2 + $0xea8] sm:$0xff]
    %v801 = vld [vmem:[#allocation2 + $0xeb0] sm:$0xff]
    %v802 = vld [vmem:[#allocation2 + $0xeb8] sm:$0xff]
    %v803 = vld [vmem:[#allocation2 + $0xec0] sm:$0xff]
    %v804 = vld [vmem:[#allocation2 + $0xec8] sm:$0xff]
    %v805 = vld [vmem:[#allocation2 + $0xed0] sm:$0xff]
    %v806 = vld [vmem:[#allocation2 + $0xed8] sm:$0xff]
    %v807 = vld [vmem:[#allocation2 + $0xee0] sm:$0xff]
    %v808 = vld [vmem:[#allocation2 + $0xee8] sm:$0xff]
    %v809 = vld [vmem:[#allocation2 + $0xef0] sm:$0xff]
    %v810 = vld [vmem:[#allocation2 + $0xef8] sm:$0xff]
    %v811 = vld [vmem:[#allocation2 + $0xf00] sm:$0xff]
    %v812 = vld [vmem:[#allocation2 + $0xf08] sm:$0xff]
    %v813 = vld [vmem:[#allocation2 + $0xf10] sm:$0xff]
    %v814 = vld [vmem:[#allocation2 + $0xf18] sm:$0xff]
    %v815 = vld [vmem:[#allocation2 + $0xf20] sm:$0xff]
    %v816 = vld [vmem:[#allocation2 + $0xf28] sm:$0xff]
    %v817 = vld [vmem:[#allocation2 + $0xf30] sm:$0xff]
    %v818 = vld [vmem:[#allocation2 + $0xf38] sm:$0xff]
    %v819 = vld [vmem:[#allocation2 + $0xf40] sm:$0xff]
    %v820 = vld [vmem:[#allocation2 + $0xf48] sm:$0xff]
    %v821 = vld [vmem:[#allocation2 + $0xf50] sm:$0xff]
    %v822 = vld [vmem:[#allocation2 + $0xf58] sm:$0xff]
    %v823 = vld [vmem:[#allocation2 + $0xf60] sm:$0xff]
    %v824 = vld [vmem:[#allocation2 + $0xf68] sm:$0xff]
    %v825 = vld [vmem:[#allocation2 + $0xf70] sm:$0xff]
    %v826 = vld [vmem:[#allocation2 + $0xf78] sm:$0xff]
    %v827 = vld [vmem:[#allocation2 + $0xf80] sm:$0xff]
    %v828 = vld [vmem:[#allocation2 + $0xf88] sm:$0xff]
    %v829 = vld [vmem:[#allocation2 + $0xf90] sm:$0xff]
    %v830 = vld [vmem:[#allocation2 + $0xf98] sm:$0xff]
    %v831 = vld [vmem:[#allocation2 + $0xfa0] sm:$0xff]
    %v832 = vld [vmem:[#allocation2 + $0xfa8] sm:$0xff]
    %v833 = vld [vmem:[#allocation2 + $0xfb0] sm:$0xff]
    %v834 = vld [vmem:[#allocation2 + $0xfb8] sm:$0xff]
    %v835 = vld [vmem:[#allocation2 + $0xfc0] sm:$0xff]
    %v836 = vld [vmem:[#allocation2 + $0xfc8] sm:$0xff]
    %v837 = vld [vmem:[#allocation2 + $0xfd0] sm:$0xff]
    %v838 = vld [vmem:[#allocation2 + $0xfd8] sm:$0xff]
    %v839 = vld [vmem:[#allocation2 + $0xfe0] sm:$0xff]
    %v840 = vld [vmem:[#allocation2 + $0xfe8] sm:$0xff]
    %v841 = vld [vmem:[#allocation2 + $0xff0] sm:$0xff]
    %v842 = vld [vmem:[#allocation2 + $0xff8] sm:$0xff]
    %v843 = vld [vmem:[#allocation2 + $0x1000] sm:$0xff]
    %v844 = vld [vmem:[#allocation2 + $0x1008] sm:$0xff]
    %v845 = vld [vmem:[#allocation2 + $0x1010] sm:$0xff]
    %v846 = vld [vmem:[#allocation2 + $0x1018] sm:$0xff]
    %v847 = vld [vmem:[#allocation2 + $0x1020] sm:$0xff]
    %v848 = vld [vmem:[#allocation2 + $0x1028] sm:$0xff]
    %v849 = vld [vmem:[#allocation2 + $0x1030] sm:$0xff]
    %v850 = vld [vmem:[#allocation2 + $0x1038] sm:$0xff]
    %v851 = vld [vmem:[#allocation2 + $0x1040] sm:$0xff]
    %v852 = vld [vmem:[#allocation2 + $0x1048] sm:$0xff]
    %v853 = vld [vmem:[#allocation2 + $0x1050] sm:$0xff]
    %v854 = vld [vmem:[#allocation2 + $0x1058] sm:$0xff]
    %v855 = vld [vmem:[#allocation2 + $0x1060] sm:$0xff]
    %v856 = vld [vmem:[#allocation2 + $0x1068] sm:$0xff]
    %v857 = vld [vmem:[#allocation2 + $0x1070] sm:$0xff]
    %v858 = vld [vmem:[#allocation2 + $0x1078] sm:$0xff]
    %v859 = vld [vmem:[#allocation2 + $0x1080] sm:$0xff]
    %v860 = vld [vmem:[#allocation2 + $0x1088] sm:$0xff]
    %v861 = vld [vmem:[#allocation2 + $0x1090] sm:$0xff]
    %v862 = vld [vmem:[#allocation2 + $0x1098] sm:$0xff]
    %v863 = vld [vmem:[#allocation2 + $0x10a0] sm:$0xff]
    %v864 = vld [vmem:[#allocation2 + $0x10a8] sm:$0xff]
    %v865 = vld [vmem:[#allocation2 + $0x10b0] sm:$0xff]
    %v866 = vld [vmem:[#allocation2 + $0x10b8] sm:$0xff]
    %v867 = vld [vmem:[#allocation2 + $0x10c0] sm:$0xff]
    %v868 = vld [vmem:[#allocation2 + $0x10c8] sm:$0xff]
    %v869 = vld [vmem:[#allocation2 + $0x10d0] sm:$0xff]
    %v870 = vld [vmem:[#allocation2 + $0x10d8] sm:$0xff]
    %v871 = vld [vmem:[#allocation2 + $0x10e0] sm:$0xff]
    %v872 = vld [vmem:[#allocation2 + $0x10e8] sm:$0xff]
    %v873 = vld [vmem:[#allocation2 + $0x10f0] sm:$0xff]
    %v874 = vld [vmem:[#allocation2 + $0x10f8] sm:$0xff]
    %v875 = vld [vmem:[#allocation2 + $0x1100] sm:$0xff]
    %v876 = vld [vmem:[#allocation2 + $0x1108] sm:$0xff]
    %v877 = vld [vmem:[#allocation2 + $0x1110] sm:$0xff]
    %v878 = vld [vmem:[#allocation2 + $0x1118] sm:$0xff]
    %v879 = vld [vmem:[#allocation2 + $0x1120] sm:$0xff]
    %v880 = vld [vmem:[#allocation2 + $0x1128] sm:$0xff]
    %v881 = vld [vmem:[#allocation2 + $0x1130] sm:$0xff]
    %v882 = vld [vmem:[#allocation2 + $0x1138] sm:$0xff]
    %v883 = vld [vmem:[#allocation2 + $0x1140] sm:$0xff]
    %v884 = vld [vmem:[#allocation2 + $0x1148] sm:$0xff]
    %v885 = vld [vmem:[#allocation2 + $0x1150] sm:$0xff]
    %v886 = vld [vmem:[#allocation2 + $0x1158] sm:$0xff]
    %v887 = vld [vmem:[#allocation2 + $0x1160] sm:$0xff]
    %v888 = vld [vmem:[#allocation2 + $0x1168] sm:$0xff]
    %v889 = vld [vmem:[#allocation2 + $0x1170] sm:$0xff]
    %v890 = vld [vmem:[#allocation2 + $0x1178] sm:$0xff]
    %v891 = vld [vmem:[#allocation2 + $0x1180] sm:$0xff]
    %v892 = vld [vmem:[#allocation2 + $0x1188] sm:$0xff]
    %v893 = vld [vmem:[#allocation2 + $0x1190] sm:$0xff]
    %v894 = vld [vmem:[#allocation2 + $0x1198] sm:$0xff]
    %v895 = vld [vmem:[#allocation2 + $0x11a0] sm:$0xff]
    %v896 = vld [vmem:[#allocation2 + $0x11a8] sm:$0xff]
    %v897 = vld [vmem:[#allocation2 + $0x11b0] sm:$0xff]
    %v898 = vld [vmem:[#allocation2 + $0x11b8] sm:$0xff]
    %v899 = vld [vmem:[#allocation2 + $0x11c0] sm:$0xff]
    %v900 = vld [vmem:[#allocation2 + $0x11c8] sm:$0xff]
    %v901 = vld [vmem:[#allocation2 + $0x11d0] sm:$0xff]
    %v902 = vld [vmem:[#allocation2 + $0x11d8] sm:$0xff]
    %v903 = vld [vmem:[#allocation2 + $0x11e0] sm:$0xff]
    %v904 = vld [vmem:[#allocation2 + $0x11e8] sm:$0xff]
    %v905 = vld [vmem:[#allocation2 + $0x11f0] sm:$0xff]
    %v906 = vld [vmem:[#allocation2 + $0x11f8] sm:$0xff]
    %v907 = vld [vmem:[#allocation2 + $0x1200] sm:$0xff]
    %v908 = vld [vmem:[#allocation2 + $0x1208] sm:$0xff]
    %v909 = vld [vmem:[#allocation2 + $0x1210] sm:$0xff]
    %v910 = vld [vmem:[#allocation2 + $0x1218] sm:$0xff]
    %v911 = vld [vmem:[#allocation2 + $0x1220] sm:$0xff]
    %v912 = vld [vmem:[#allocation2 + $0x1228] sm:$0xff]
    %v913 = vld [vmem:[#allocation2 + $0x1230] sm:$0xff]
    %v914 = vld [vmem:[#allocation2 + $0x1238] sm:$0xff]
    %v915 = vld [vmem:[#allocation2 + $0x1240] sm:$0xff]
    %v916 = vld [vmem:[#allocation2 + $0x1248] sm:$0xff]
    %v917 = vld [vmem:[#allocation2 + $0x1250] sm:$0xff]
    %v918 = vld [vmem:[#allocation2 + $0x1258] sm:$0xff]
    %v919 = vld [vmem:[#allocation2 + $0x1260] sm:$0xff]
    %v920 = vld [vmem:[#allocation2 + $0x1268] sm:$0xff]
    %v921 = vld [vmem:[#allocation2 + $0x1270] sm:$0xff]
    %v922 = vld [vmem:[#allocation2 + $0x1278] sm:$0xff]
    %v923 = vld [vmem:[#allocation2 + $0x1280] sm:$0xff]
    %v924 = vld [vmem:[#allocation2 + $0x1288] sm:$0xff]
    %v925 = vld [vmem:[#allocation2 + $0x1290] sm:$0xff]
    %v926 = vld [vmem:[#allocation2 + $0x1298] sm:$0xff]
    %v927 = vld [vmem:[#allocation2 + $0x12a0] sm:$0xff]
    %v928 = vld [vmem:[#allocation2 + $0x12a8] sm:$0xff]
    %v929 = vld [vmem:[#allocation2 + $0x12b0] sm:$0xff]
    %v930 = vld [vmem:[#allocation2 + $0x12b8] sm:$0xff]
    %v931 = vld [vmem:[#allocation2 + $0x12c0] sm:$0xff]
    %v932 = vld [vmem:[#allocation2 + $0x12c8] sm:$0xff]
    %v933 = vld [vmem:[#allocation2 + $0x12d0] sm:$0xff]
    %v934 = vld [vmem:[#allocation2 + $0x12d8] sm:$0xff]
    %v935 = vld [vmem:[#allocation2 + $0x12e0] sm:$0xff]
    %v936 = vld [vmem:[#allocation2 + $0x12e8] sm:$0xff]
    %v937 = vld [vmem:[#allocation2 + $0x12f0] sm:$0xff]
    %v938 = vld [vmem:[#allocation2 + $0x12f8] sm:$0xff]
    %v939 = vld [vmem:[#allocation2 + $0x1300] sm:$0xff]
    %v940 = vld [vmem:[#allocation2 + $0x1308] sm:$0xff]
    %v941 = vld [vmem:[#allocation2 + $0x1310] sm:$0xff]
    %v942 = vld [vmem:[#allocation2 + $0x1318] sm:$0xff]
    %v943 = vld [vmem:[#allocation2 + $0x1320] sm:$0xff]
    %v944 = vld [vmem:[#allocation2 + $0x1328] sm:$0xff]
    %v945 = vld [vmem:[#allocation2 + $0x1330] sm:$0xff]
    %v946 = vld [vmem:[#allocation2 + $0x1338] sm:$0xff]
    %v947 = vld [vmem:[#allocation2 + $0x1340] sm:$0xff]
    %v948 = vld [vmem:[#allocation2 + $0x1348] sm:$0xff]
    %v949 = vld [vmem:[#allocation2 + $0x1350] sm:$0xff]
    %v950 = vld [vmem:[#allocation2 + $0x1358] sm:$0xff]
    %v951 = vld [vmem:[#allocation2 + $0x1360] sm:$0xff]
    %v952 = vld [vmem:[#allocation2 + $0x1368] sm:$0xff]
    %v953 = vld [vmem:[#allocation2 + $0x1370] sm:$0xff]
    %v954 = vld [vmem:[#allocation2 + $0x1378] sm:$0xff]
    %v955 = vld [vmem:[#allocation2 + $0x1380] sm:$0xff]
    %v956 = vld [vmem:[#allocation2 + $0x1388] sm:$0xff]
    %v957 = vld [vmem:[#allocation2 + $0x1390] sm:$0xff]
    %v958 = vld [vmem:[#allocation2 + $0x1398] sm:$0xff]
    %v959 = vld [vmem:[#allocation2 + $0x13a0] sm:$0xff]
    %v960 = vld [vmem:[#allocation2 + $0x13a8] sm:$0xff]
    %v961 = vld [vmem:[#allocation2 + $0x13b0] sm:$0xff]
    %v962 = vld [vmem:[#allocation2 + $0x13b8] sm:$0xff]
    %v963 = vld [vmem:[#allocation2 + $0x13c0] sm:$0xff]
    %v964 = vld [vmem:[#allocation2 + $0x13c8] sm:$0xff]
    %v965 = vld [vmem:[#allocation2 + $0x13d0] sm:$0xff]
    %v966 = vld [vmem:[#allocation2 + $0x13d8] sm:$0xff]
    %v967 = vld [vmem:[#allocation2 + $0x13e0] sm:$0xff]
    %v968 = vld [vmem:[#allocation2 + $0x13e8] sm:$0xff]
    %v969 = vld [vmem:[#allocation2 + $0x13f0] sm:$0xff]
    %v970 = vld [vmem:[#allocation2 + $0x13f8] sm:$0xff]
    %v971 = vld [vmem:[#allocation2 + $0x1400] sm:$0xff]
    %v972 = vld [vmem:[#allocation2 + $0x1408] sm:$0xff]
    %v973 = vld [vmem:[#allocation2 + $0x1410] sm:$0xff]
    %v974 = vld [vmem:[#allocation2 + $0x1418] sm:$0xff]
    %v975 = vld [vmem:[#allocation2 + $0x1420] sm:$0xff]
    %v976 = vld [vmem:[#allocation2 + $0x1428] sm:$0xff]
    %v977 = vld [vmem:[#allocation2 + $0x1430] sm:$0xff]
    %v978 = vld [vmem:[#allocation2 + $0x1438] sm:$0xff]
    %v979 = vld [vmem:[#allocation2 + $0x1440] sm:$0xff]
    %v980 = vld [vmem:[#allocation2 + $0x1448] sm:$0xff]
    %v981 = vld [vmem:[#allocation2 + $0x1450] sm:$0xff]
    %v982 = vld [vmem:[#allocation2 + $0x1458] sm:$0xff]
    %v983 = vld [vmem:[#allocation2 + $0x1460] sm:$0xff]
    %v984 = vld [vmem:[#allocation2 + $0x1468] sm:$0xff]
    %v985 = vld [vmem:[#allocation2 + $0x1470] sm:$0xff]
    %v986 = vld [vmem:[#allocation2 + $0x1478] sm:$0xff]
    %v987 = vld [vmem:[#allocation2 + $0x1480] sm:$0xff]
    %v988 = vld [vmem:[#allocation2 + $0x1488] sm:$0xff]
    %v989 = vld [vmem:[#allocation2 + $0x1490] sm:$0xff]
    %v990 = vld [vmem:[#allocation2 + $0x1498] sm:$0xff]
    %v991 = vld [vmem:[#allocation2 + $0x14a0] sm:$0xff]
    %v992 = vld [vmem:[#allocation2 + $0x14a8] sm:$0xff]
    %v993 = vld [vmem:[#allocation2 + $0x14b0] sm:$0xff]
    %v994 = vld [vmem:[#allocation2 + $0x14b8] sm:$0xff]
    %v995 = vld [vmem:[#allocation2 + $0x14c0] sm:$0xff]
    %v996 = vld [vmem:[#allocation2 + $0x14c8] sm:$0xff]
    %v997 = vld [vmem:[#allocation2 + $0x14d0] sm:$0xff]
    %v998 = vld [vmem:[#allocation2 + $0x14d8] sm:$0xff]
    %v999 = vld [vmem:[#allocation2 + $0x14e0] sm:$0xff]
    %v1000 = vld [vmem:[#allocation2 + $0x14e8] sm:$0xff]
    %v1001 = vld [vmem:[#allocation2 + $0x14f0] sm:$0xff]
    %v1002 = vld [vmem:[#allocation2 + $0x14f8] sm:$0xff]
    %v1003 = vld [vmem:[#allocation2 + $0x1500] sm:$0xff]
    %v1004 = vld [vmem:[#allocation2 + $0x1508] sm:$0xff]
    %v1005 = vld [vmem:[#allocation2 + $0x1510] sm:$0xff]
    %v1006 = vld [vmem:[#allocation2 + $0x1518] sm:$0xff]
    %v1007 = vld [vmem:[#allocation2 + $0x1520] sm:$0xff]
    %v1008 = vld [vmem:[#allocation2 + $0x1528] sm:$0xff]
    %v1009 = vld [vmem:[#allocation2 + $0x1530] sm:$0xff]
    %v1010 = vld [vmem:[#allocation2 + $0x1538] sm:$0xff]
    %v1011 = vld [vmem:[#allocation2 + $0x1540] sm:$0xff]
    %v1012 = vld [vmem:[#allocation2 + $0x1548] sm:$0xff]
    %v1013 = vld [vmem:[#allocation2 + $0x1550] sm:$0xff]
    %v1014 = vld [vmem:[#allocation2 + $0x1558] sm:$0xff]
    %v1015 = vld [vmem:[#allocation2 + $0x1560] sm:$0xff]
    %v1016 = vld [vmem:[#allocation2 + $0x1568] sm:$0xff]
    %v1017 = vld [vmem:[#allocation2 + $0x1570] sm:$0xff]
    %v1018 = vld [vmem:[#allocation2 + $0x1578] sm:$0xff]
    %v1019 = vld [vmem:[#allocation2 + $0x1580] sm:$0xff]
    %v1020 = vld [vmem:[#allocation2 + $0x1588] sm:$0xff]
    %v1021 = vld [vmem:[#allocation2 + $0x1590] sm:$0xff]
    %v1022 = vld [vmem:[#allocation2 + $0x1598] sm:$0xff]
    %v1023 = vld [vmem:[#allocation2 + $0x15a0] sm:$0xff]
    %v1024 = vld [vmem:[#allocation2 + $0x15a8] sm:$0xff]
    %v1025 = vld [vmem:[#allocation2 + $0x15b0] sm:$0xff]
    %v1026 = vld [vmem:[#allocation2 + $0x15b8] sm:$0xff]
    %v1027 = vld [vmem:[#allocation2 + $0x15c0] sm:$0xff]
    %v1028 = vld [vmem:[#allocation2 + $0x15c8] sm:$0xff]
    %v1029 = vld [vmem:[#allocation2 + $0x15d0] sm:$0xff]
    %v1030 = vld [vmem:[#allocation2 + $0x15d8] sm:$0xff]
    %v1031 = vld [vmem:[#allocation2 + $0x15e0] sm:$0xff]
    %v1032 = vld [vmem:[#allocation2 + $0x15e8] sm:$0xff]
    %v1033 = vld [vmem:[#allocation2 + $0x15f0] sm:$0xff]
    %v1034 = vld [vmem:[#allocation2 + $0x15f8] sm:$0xff]
    %v1035 = vld [vmem:[#allocation2 + $0x1600] sm:$0xff]
    %v1036 = vld [vmem:[#allocation2 + $0x1608] sm:$0xff]
    %v1037 = vld [vmem:[#allocation2 + $0x1610] sm:$0xff]
    %v1038 = vld [vmem:[#allocation2 + $0x1618] sm:$0xff]
    %v1039 = vld [vmem:[#allocation2 + $0x1620] sm:$0xff]
    %v1040 = vld [vmem:[#allocation2 + $0x1628] sm:$0xff]
    %v1041 = vld [vmem:[#allocation2 + $0x1630] sm:$0xff]
    %v1042 = vld [vmem:[#allocation2 + $0x1638] sm:$0xff]
    %v1043 = vld [vmem:[#allocation2 + $0x1640] sm:$0xff]
    %v1044 = vld [vmem:[#allocation2 + $0x1648] sm:$0xff]
    %v1045 = vld [vmem:[#allocation2 + $0x1650] sm:$0xff]
    %v1046 = vld [vmem:[#allocation2 + $0x1658] sm:$0xff]
    %v1047 = vld [vmem:[#allocation2 + $0x1660] sm:$0xff]
    %v1048 = vld [vmem:[#allocation2 + $0x1668] sm:$0xff]
    %v1049 = vld [vmem:[#allocation2 + $0x1670] sm:$0xff]
    %v1050 = vld [vmem:[#allocation2 + $0x1678] sm:$0xff]
    %v1051 = vld [vmem:[#allocation2 + $0x1680] sm:$0xff]
    %v1052 = vld [vmem:[#allocation2 + $0x1688] sm:$0xff]
    %v1053 = vld [vmem:[#allocation2 + $0x1690] sm:$0xff]
    %v1054 = vld [vmem:[#allocation2 + $0x1698] sm:$0xff]
    %v1055 = vld [vmem:[#allocation2 + $0x16a0] sm:$0xff]
    %v1056 = vld [vmem:[#allocation2 + $0x16a8] sm:$0xff]
    %v1057 = vld [vmem:[#allocation2 + $0x16b0] sm:$0xff]
    %v1058 = vld [vmem:[#allocation2 + $0x16b8] sm:$0xff]
    %v1059 = vld [vmem:[#allocation2 + $0x16c0] sm:$0xff]
    %v1060 = vld [vmem:[#allocation2 + $0x16c8] sm:$0xff]
    %v1061 = vld [vmem:[#allocation2 + $0x16d0] sm:$0xff]
    %v1062 = vld [vmem:[#allocation2 + $0x16d8] sm:$0xff]
    %v1063 = vld [vmem:[#allocation2 + $0x16e0] sm:$0xff]
    %v1064 = vld [vmem:[#allocation2 + $0x16e8] sm:$0xff]
    %v1065 = vld [vmem:[#allocation2 + $0x16f0] sm:$0xff]
    %v1066 = vld [vmem:[#allocation2 + $0x16f8] sm:$0xff]
    %v1067 = vld [vmem:[#allocation2 + $0x1700] sm:$0xff]
    %v1068 = vld [vmem:[#allocation2 + $0x1708] sm:$0xff]
    %v1069 = vld [vmem:[#allocation2 + $0x1710] sm:$0xff]
    %v1070 = vld [vmem:[#allocation2 + $0x1718] sm:$0xff]
    %v1071 = vld [vmem:[#allocation2 + $0x1720] sm:$0xff]
    %v1072 = vld [vmem:[#allocation2 + $0x1728] sm:$0xff]
    %v1073 = vld [vmem:[#allocation2 + $0x1730] sm:$0xff]
    %v1074 = vld [vmem:[#allocation2 + $0x1738] sm:$0xff]
    %v1075 = vld [vmem:[#allocation2 + $0x1740] sm:$0xff]
    %v1076 = vld [vmem:[#allocation2 + $0x1748] sm:$0xff]
    %v1077 = vld [vmem:[#allocation2 + $0x1750] sm:$0xff]
    %v1078 = vld [vmem:[#allocation2 + $0x1758] sm:$0xff]
    %v1079 = vld [vmem:[#allocation2 + $0x1760] sm:$0xff]
    %v1080 = vld [vmem:[#allocation2 + $0x1768] sm:$0xff]
    %v1081 = vld [vmem:[#allocation2 + $0x1770] sm:$0xff]
    %v1082 = vld [vmem:[#allocation2 + $0x1778] sm:$0xff]
    %v1083 = vld [vmem:[#allocation2 + $0x1780] sm:$0xff]
    %v1084 = vld [vmem:[#allocation2 + $0x1788] sm:$0xff]
    %v1085 = vld [vmem:[#allocation2 + $0x1790] sm:$0xff]
    %v1086 = vld [vmem:[#allocation2 + $0x1798] sm:$0xff]
    %v1087 = vld [vmem:[#allocation2 + $0x17a0] sm:$0xff]
    %v1088 = vld [vmem:[#allocation2 + $0x17a8] sm:$0xff]
    %v1089 = vld [vmem:[#allocation2 + $0x17b0] sm:$0xff]
    %v1090 = vld [vmem:[#allocation2 + $0x17b8] sm:$0xff]
    %v1091 = vld [vmem:[#allocation2 + $0x17c0] sm:$0xff]
    %v1092 = vld [vmem:[#allocation2 + $0x17c8] sm:$0xff]
    %v1093 = vld [vmem:[#allocation2 + $0x17d0] sm:$0xff]
    %v1094 = vld [vmem:[#allocation2 + $0x17d8] sm:$0xff]
    %v1095 = vld [vmem:[#allocation2 + $0x17e0] sm:$0xff]
    %v1096 = vld [vmem:[#allocation2 + $0x17e8] sm:$0xff]
    %v1097 = vld [vmem:[#allocation2 + $0x17f0] sm:$0xff]
    %v1098 = vld [vmem:[#allocation2 + $0x17f8] sm:$0xff]
    %v1099 = vld [vmem:[#allocation4] sm:$0xff]
    %v1101 = vperm.slane %v1099, 0
    %v1102 = vperm.slane %v1099, 1
    %v1103 = vperm.slane %v1099, 2
    %v1104 = vperm.slane %v1099, 3
    %v1105 = vperm.slane %v1099, 4
    %v1106 = vperm.slane %v1099, 5
    %v1107 = vperm.slane %v1099, 6
    %v1108 = vperm.slane %v1099, 7
    %v1129 = vunpack.c.l.b16 %v319
    %v1130 = vunpack.c.h.b16 %v319
    %v1131 = vunpack.c.l.b16 %v320
    %v1132 = vunpack.c.h.b16 %v320
    %v1133 = vunpack.c.l.b16 %v321
    %v1134 = vunpack.c.h.b16 %v321
    %v1135 = vunpack.c.l.b16 %v322
    %v1136 = vunpack.c.h.b16 %v322
    %v1137 = vunpack.c.l.b16 %v323
    %v1138 = vunpack.c.h.b16 %v323
    %v1139 = vunpack.c.l.b16 %v324
    %v1140 = vunpack.c.h.b16 %v324
    %v1141 = vunpack.c.l.b16 %v325
    %v1142 = vunpack.c.h.b16 %v325
    %v1143 = vunpack.c.l.b16 %v326
    %v1144 = vunpack.c.h.b16 %v326
    %v1145 = vunpack.c.l.b16 %v327
    %v1146 = vunpack.c.h.b16 %v327
    %v1147 = vunpack.c.l.b16 %v328
    %v1148 = vunpack.c.h.b16 %v328
    %v1149 = vunpack.c.l.b16 %v329
    %v1150 = vunpack.c.h.b16 %v329
    %v1151 = vunpack.c.l.b16 %v330
    %v1152 = vunpack.c.h.b16 %v330
    %v1153 = vpack.c.b16 %v1141, %v1129
    %v1154 = vpack.c.b16 %v1142, %v1130
    %v1155 = vpack.c.b16 %v1143, %v1131
    %v1156 = vpack.c.b16 %v1144, %v1132
    %v1157 = vpack.c.b16 %v1145, %v1133
    %v1158 = vpack.c.b16 %v1146, %v1134
    %v1159 = vpack.c.b16 %v1147, %v1135
    %v1160 = vpack.c.b16 %v1148, %v1136
    %v1161 = vpack.c.b16 %v1149, %v1137
    %v1162 = vpack.c.b16 %v1150, %v1138
    %v1163 = vpack.c.b16 %v1151, %v1139
    %v1164 = vpack.c.b16 %v1152, %v1140
    %v1945 = vunpack.c.l.b16 %v331
    %v1946 = vunpack.c.h.b16 %v331
    %v1947 = vunpack.c.l.b16 %v332
    %v1948 = vunpack.c.h.b16 %v332
    %v1949 = vunpack.c.l.b16 %v333
    %v1950 = vunpack.c.h.b16 %v333
    %v1951 = vunpack.c.l.b16 %v334
    %v1952 = vunpack.c.h.b16 %v334
    %v1953 = vunpack.c.l.b16 %v335
    %v1954 = vunpack.c.h.b16 %v335
    %v1955 = vunpack.c.l.b16 %v336
    %v1956 = vunpack.c.h.b16 %v336
    %v1957 = vunpack.c.l.b16 %v337
    %v1958 = vunpack.c.h.b16 %v337
    %v1959 = vunpack.c.l.b16 %v338
    %v1960 = vunpack.c.h.b16 %v338
    %v1961 = vunpack.c.l.b16 %v339
    %v1962 = vunpack.c.h.b16 %v339
    %v1963 = vunpack.c.l.b16 %v340
    %v1964 = vunpack.c.h.b16 %v340
    %v1965 = vunpack.c.l.b16 %v341
    %v1966 = vunpack.c.h.b16 %v341
    %v1967 = vunpack.c.l.b16 %v342
    %v1968 = vunpack.c.h.b16 %v342
    %v1969 = vunpack.c.l.b16 %v343
    %v1970 = vunpack.c.h.b16 %v343
    %v1971 = vunpack.c.l.b16 %v344
    %v1972 = vunpack.c.h.b16 %v344
    %v1973 = vunpack.c.l.b16 %v345
    %v1974 = vunpack.c.h.b16 %v345
    %v1975 = vunpack.c.l.b16 %v346
    %v1976 = vunpack.c.h.b16 %v346
    %v1977 = vunpack.c.l.b16 %v347
    %v1978 = vunpack.c.h.b16 %v347
    %v1979 = vunpack.c.l.b16 %v348
    %v1980 = vunpack.c.h.b16 %v348
    %v1981 = vunpack.c.l.b16 %v349
    %v1982 = vunpack.c.h.b16 %v349
    %v1983 = vunpack.c.l.b16 %v350
    %v1984 = vunpack.c.h.b16 %v350
    %v1985 = vunpack.c.l.b16 %v351
    %v1986 = vunpack.c.h.b16 %v351
    %v1987 = vunpack.c.l.b16 %v352
    %v1988 = vunpack.c.h.b16 %v352
    %v1989 = vunpack.c.l.b16 %v353
    %v1990 = vunpack.c.h.b16 %v353
    %v1991 = vunpack.c.l.b16 %v354
    %v1992 = vunpack.c.h.b16 %v354
    %v1993 = vunpack.c.l.b16 %v355
    %v1994 = vunpack.c.h.b16 %v355
    %v1995 = vunpack.c.l.b16 %v356
    %v1996 = vunpack.c.h.b16 %v356
    %v1997 = vunpack.c.l.b16 %v357
    %v1998 = vunpack.c.h.b16 %v357
    %v1999 = vunpack.c.l.b16 %v358
    %v2000 = vunpack.c.h.b16 %v358
    %v2001 = vunpack.c.l.b16 %v359
    %v2002 = vunpack.c.h.b16 %v359
    %v2003 = vunpack.c.l.b16 %v360
    %v2004 = vunpack.c.h.b16 %v360
    %v2005 = vunpack.c.l.b16 %v361
    %v2006 = vunpack.c.h.b16 %v361
    %v2007 = vunpack.c.l.b16 %v362
    %v2008 = vunpack.c.h.b16 %v362
    %v2009 = vunpack.c.l.b16 %v363
    %v2010 = vunpack.c.h.b16 %v363
    %v2011 = vunpack.c.l.b16 %v364
    %v2012 = vunpack.c.h.b16 %v364
    %v2013 = vunpack.c.l.b16 %v365
    %v2014 = vunpack.c.h.b16 %v365
    %v2015 = vunpack.c.l.b16 %v366
    %v2016 = vunpack.c.h.b16 %v366
    %v2017 = vunpack.c.l.b16 %v367
    %v2018 = vunpack.c.h.b16 %v367
    %v2019 = vunpack.c.l.b16 %v368
    %v2020 = vunpack.c.h.b16 %v368
    %v2021 = vunpack.c.l.b16 %v369
    %v2022 = vunpack.c.h.b16 %v369
    %v2023 = vunpack.c.l.b16 %v370
    %v2024 = vunpack.c.h.b16 %v370
    %v2025 = vunpack.c.l.b16 %v371
    %v2026 = vunpack.c.h.b16 %v371
    %v2027 = vunpack.c.l.b16 %v372
    %v2028 = vunpack.c.h.b16 %v372
    %v2029 = vunpack.c.l.b16 %v373
    %v2030 = vunpack.c.h.b16 %v373
    %v2031 = vunpack.c.l.b16 %v374
    %v2032 = vunpack.c.h.b16 %v374
    %v2033 = vunpack.c.l.b16 %v375
    %v2034 = vunpack.c.h.b16 %v375
    %v2035 = vunpack.c.l.b16 %v376
    %v2036 = vunpack.c.h.b16 %v376
    %v2037 = vunpack.c.l.b16 %v377
    %v2038 = vunpack.c.h.b16 %v377
    %v2039 = vunpack.c.l.b16 %v378
    %v2040 = vunpack.c.h.b16 %v378
    %v2041 = vunpack.c.l.b16 %v379
    %v2042 = vunpack.c.h.b16 %v379
    %v2043 = vunpack.c.l.b16 %v380
    %v2044 = vunpack.c.h.b16 %v380
    %v2045 = vunpack.c.l.b16 %v381
    %v2046 = vunpack.c.h.b16 %v381
    %v2047 = vunpack.c.l.b16 %v382
    %v2048 = vunpack.c.h.b16 %v382
    %v2049 = vunpack.c.l.b16 %v383
    %v2050 = vunpack.c.h.b16 %v383
    %v2051 = vunpack.c.l.b16 %v384
    %v2052 = vunpack.c.h.b16 %v384
    %v2053 = vunpack.c.l.b16 %v385
    %v2054 = vunpack.c.h.b16 %v385
    %v2055 = vunpack.c.l.b16 %v386
    %v2056 = vunpack.c.h.b16 %v386
    %v2057 = vunpack.c.l.b16 %v387
    %v2058 = vunpack.c.h.b16 %v387
    %v2059 = vunpack.c.l.b16 %v388
    %v2060 = vunpack.c.h.b16 %v388
    %v2061 = vunpack.c.l.b16 %v389
    %v2062 = vunpack.c.h.b16 %v389
    %v2063 = vunpack.c.l.b16 %v390
    %v2064 = vunpack.c.h.b16 %v390
    %v2065 = vunpack.c.l.b16 %v391
    %v2066 = vunpack.c.h.b16 %v391
    %v2067 = vunpack.c.l.b16 %v392
    %v2068 = vunpack.c.h.b16 %v392
    %v2069 = vunpack.c.l.b16 %v393
    %v2070 = vunpack.c.h.b16 %v393
    %v2071 = vunpack.c.l.b16 %v394
    %v2072 = vunpack.c.h.b16 %v394
    %v2073 = vunpack.c.l.b16 %v395
    %v2074 = vunpack.c.h.b16 %v395
    %v2075 = vunpack.c.l.b16 %v396
    %v2076 = vunpack.c.h.b16 %v396
    %v2077 = vunpack.c.l.b16 %v397
    %v2078 = vunpack.c.h.b16 %v397
    %v2079 = vunpack.c.l.b16 %v398
    %v2080 = vunpack.c.h.b16 %v398
    %v2081 = vunpack.c.l.b16 %v399
    %v2082 = vunpack.c.h.b16 %v399
    %v2083 = vunpack.c.l.b16 %v400
    %v2084 = vunpack.c.h.b16 %v400
    %v2085 = vunpack.c.l.b16 %v401
    %v2086 = vunpack.c.h.b16 %v401
    %v2087 = vunpack.c.l.b16 %v402
    %v2088 = vunpack.c.h.b16 %v402
    %v2089 = vunpack.c.l.b16 %v403
    %v2090 = vunpack.c.h.b16 %v403
    %v2091 = vunpack.c.l.b16 %v404
    %v2092 = vunpack.c.h.b16 %v404
    %v2093 = vunpack.c.l.b16 %v405
    %v2094 = vunpack.c.h.b16 %v405
    %v2095 = vunpack.c.l.b16 %v406
    %v2096 = vunpack.c.h.b16 %v406
    %v2097 = vunpack.c.l.b16 %v407
    %v2098 = vunpack.c.h.b16 %v407
    %v2099 = vunpack.c.l.b16 %v408
    %v2100 = vunpack.c.h.b16 %v408
    %v2101 = vunpack.c.l.b16 %v409
    %v2102 = vunpack.c.h.b16 %v409
    %v2103 = vunpack.c.l.b16 %v410
    %v2104 = vunpack.c.h.b16 %v410
    %v2105 = vunpack.c.l.b16 %v411
    %v2106 = vunpack.c.h.b16 %v411
    %v2107 = vunpack.c.l.b16 %v412
    %v2108 = vunpack.c.h.b16 %v412
    %v2109 = vunpack.c.l.b16 %v413
    %v2110 = vunpack.c.h.b16 %v413
    %v2111 = vunpack.c.l.b16 %v414
    %v2112 = vunpack.c.h.b16 %v414
    %v2113 = vunpack.c.l.b16 %v415
    %v2114 = vunpack.c.h.b16 %v415
    %v2115 = vunpack.c.l.b16 %v416
    %v2116 = vunpack.c.h.b16 %v416
    %v2117 = vunpack.c.l.b16 %v417
    %v2118 = vunpack.c.h.b16 %v417
    %v2119 = vunpack.c.l.b16 %v418
    %v2120 = vunpack.c.h.b16 %v418
    %v2121 = vunpack.c.l.b16 %v419
    %v2122 = vunpack.c.h.b16 %v419
    %v2123 = vunpack.c.l.b16 %v420
    %v2124 = vunpack.c.h.b16 %v420
    %v2125 = vunpack.c.l.b16 %v421
    %v2126 = vunpack.c.h.b16 %v421
    %v2127 = vunpack.c.l.b16 %v422
    %v2128 = vunpack.c.h.b16 %v422
    %v2129 = vunpack.c.l.b16 %v423
    %v2130 = vunpack.c.h.b16 %v423
    %v2131 = vunpack.c.l.b16 %v424
    %v2132 = vunpack.c.h.b16 %v424
    %v2133 = vunpack.c.l.b16 %v425
    %v2134 = vunpack.c.h.b16 %v425
    %v2135 = vunpack.c.l.b16 %v426
    %v2136 = vunpack.c.h.b16 %v426
    %v2137 = vunpack.c.l.b16 %v427
    %v2138 = vunpack.c.h.b16 %v427
    %v2139 = vunpack.c.l.b16 %v428
    %v2140 = vunpack.c.h.b16 %v428
    %v2141 = vunpack.c.l.b16 %v429
    %v2142 = vunpack.c.h.b16 %v429
    %v2143 = vunpack.c.l.b16 %v430
    %v2144 = vunpack.c.h.b16 %v430
    %v2145 = vunpack.c.l.b16 %v431
    %v2146 = vunpack.c.h.b16 %v431
    %v2147 = vunpack.c.l.b16 %v432
    %v2148 = vunpack.c.h.b16 %v432
    %v2149 = vunpack.c.l.b16 %v433
    %v2150 = vunpack.c.h.b16 %v433
    %v2151 = vunpack.c.l.b16 %v434
    %v2152 = vunpack.c.h.b16 %v434
    %v2153 = vunpack.c.l.b16 %v435
    %v2154 = vunpack.c.h.b16 %v435
    %v2155 = vunpack.c.l.b16 %v436
    %v2156 = vunpack.c.h.b16 %v436
    %v2157 = vunpack.c.l.b16 %v437
    %v2158 = vunpack.c.h.b16 %v437
    %v2159 = vunpack.c.l.b16 %v438
    %v2160 = vunpack.c.h.b16 %v438
    %v2161 = vunpack.c.l.b16 %v439
    %v2162 = vunpack.c.h.b16 %v439
    %v2163 = vunpack.c.l.b16 %v440
    %v2164 = vunpack.c.h.b16 %v440
    %v2165 = vunpack.c.l.b16 %v441
    %v2166 = vunpack.c.h.b16 %v441
    %v2167 = vunpack.c.l.b16 %v442
    %v2168 = vunpack.c.h.b16 %v442
    %v2169 = vunpack.c.l.b16 %v443
    %v2170 = vunpack.c.h.b16 %v443
    %v2171 = vunpack.c.l.b16 %v444
    %v2172 = vunpack.c.h.b16 %v444
    %v2173 = vunpack.c.l.b16 %v445
    %v2174 = vunpack.c.h.b16 %v445
    %v2175 = vunpack.c.l.b16 %v446
    %v2176 = vunpack.c.h.b16 %v446
    %v2177 = vunpack.c.l.b16 %v447
    %v2178 = vunpack.c.h.b16 %v447
    %v2179 = vunpack.c.l.b16 %v448
    %v2180 = vunpack.c.h.b16 %v448
    %v2181 = vunpack.c.l.b16 %v449
    %v2182 = vunpack.c.h.b16 %v449
    %v2183 = vunpack.c.l.b16 %v450
    %v2184 = vunpack.c.h.b16 %v450
    %v2185 = vunpack.c.l.b16 %v451
    %v2186 = vunpack.c.h.b16 %v451
    %v2187 = vunpack.c.l.b16 %v452
    %v2188 = vunpack.c.h.b16 %v452
    %v2189 = vunpack.c.l.b16 %v453
    %v2190 = vunpack.c.h.b16 %v453
    %v2191 = vunpack.c.l.b16 %v454
    %v2192 = vunpack.c.h.b16 %v454
    %v2193 = vunpack.c.l.b16 %v455
    %v2194 = vunpack.c.h.b16 %v455
    %v2195 = vunpack.c.l.b16 %v456
    %v2196 = vunpack.c.h.b16 %v456
    %v2197 = vunpack.c.l.b16 %v457
    %v2198 = vunpack.c.h.b16 %v457
    %v2199 = vunpack.c.l.b16 %v458
    %v2200 = vunpack.c.h.b16 %v458
    %v2201 = vunpack.c.l.b16 %v459
    %v2202 = vunpack.c.h.b16 %v459
    %v2203 = vunpack.c.l.b16 %v460
    %v2204 = vunpack.c.h.b16 %v460
    %v2205 = vunpack.c.l.b16 %v461
    %v2206 = vunpack.c.h.b16 %v461
    %v2207 = vunpack.c.l.b16 %v462
    %v2208 = vunpack.c.h.b16 %v462
    %v2209 = vunpack.c.l.b16 %v463
    %v2210 = vunpack.c.h.b16 %v463
    %v2211 = vunpack.c.l.b16 %v464
    %v2212 = vunpack.c.h.b16 %v464
    %v2213 = vunpack.c.l.b16 %v465
    %v2214 = vunpack.c.h.b16 %v465
    %v2215 = vunpack.c.l.b16 %v466
    %v2216 = vunpack.c.h.b16 %v466
    %v2217 = vunpack.c.l.b16 %v467
    %v2218 = vunpack.c.h.b16 %v467
    %v2219 = vunpack.c.l.b16 %v468
    %v2220 = vunpack.c.h.b16 %v468
    %v2221 = vunpack.c.l.b16 %v469
    %v2222 = vunpack.c.h.b16 %v469
    %v2223 = vunpack.c.l.b16 %v470
    %v2224 = vunpack.c.h.b16 %v470
    %v2225 = vunpack.c.l.b16 %v471
    %v2226 = vunpack.c.h.b16 %v471
    %v2227 = vunpack.c.l.b16 %v472
    %v2228 = vunpack.c.h.b16 %v472
    %v2229 = vunpack.c.l.b16 %v473
    %v2230 = vunpack.c.h.b16 %v473
    %v2231 = vunpack.c.l.b16 %v474
    %v2232 = vunpack.c.h.b16 %v474
    %v2233 = vunpack.c.l.b16 %v475
    %v2234 = vunpack.c.h.b16 %v475
    %v2235 = vunpack.c.l.b16 %v476
    %v2236 = vunpack.c.h.b16 %v476
    %v2237 = vunpack.c.l.b16 %v477
    %v2238 = vunpack.c.h.b16 %v477
    %v2239 = vunpack.c.l.b16 %v478
    %v2240 = vunpack.c.h.b16 %v478
    %v2241 = vunpack.c.l.b16 %v479
    %v2242 = vunpack.c.h.b16 %v479
    %v2243 = vunpack.c.l.b16 %v480
    %v2244 = vunpack.c.h.b16 %v480
    %v2245 = vunpack.c.l.b16 %v481
    %v2246 = vunpack.c.h.b16 %v481
    %v2247 = vunpack.c.l.b16 %v482
    %v2248 = vunpack.c.h.b16 %v482
    %v2249 = vunpack.c.l.b16 %v483
    %v2250 = vunpack.c.h.b16 %v483
    %v2251 = vunpack.c.l.b16 %v484
    %v2252 = vunpack.c.h.b16 %v484
    %v2253 = vunpack.c.l.b16 %v485
    %v2254 = vunpack.c.h.b16 %v485
    %v2255 = vunpack.c.l.b16 %v486
    %v2256 = vunpack.c.h.b16 %v486
    %v2257 = vunpack.c.l.b16 %v487
    %v2258 = vunpack.c.h.b16 %v487
    %v2259 = vunpack.c.l.b16 %v488
    %v2260 = vunpack.c.h.b16 %v488
    %v2261 = vunpack.c.l.b16 %v489
    %v2262 = vunpack.c.h.b16 %v489
    %v2263 = vunpack.c.l.b16 %v490
    %v2264 = vunpack.c.h.b16 %v490
    %v2265 = vunpack.c.l.b16 %v491
    %v2266 = vunpack.c.h.b16 %v491
    %v2267 = vunpack.c.l.b16 %v492
    %v2268 = vunpack.c.h.b16 %v492
    %v2269 = vunpack.c.l.b16 %v493
    %v2270 = vunpack.c.h.b16 %v493
    %v2271 = vunpack.c.l.b16 %v494
    %v2272 = vunpack.c.h.b16 %v494
    %v2273 = vunpack.c.l.b16 %v495
    %v2274 = vunpack.c.h.b16 %v495
    %v2275 = vunpack.c.l.b16 %v496
    %v2276 = vunpack.c.h.b16 %v496
    %v2277 = vunpack.c.l.b16 %v497
    %v2278 = vunpack.c.h.b16 %v497
    %v2279 = vunpack.c.l.b16 %v498
    %v2280 = vunpack.c.h.b16 %v498
    %v2281 = vunpack.c.l.b16 %v499
    %v2282 = vunpack.c.h.b16 %v499
    %v2283 = vunpack.c.l.b16 %v500
    %v2284 = vunpack.c.h.b16 %v500
    %v2285 = vunpack.c.l.b16 %v501
    %v2286 = vunpack.c.h.b16 %v501
    %v2287 = vunpack.c.l.b16 %v502
    %v2288 = vunpack.c.h.b16 %v502
    %v2289 = vunpack.c.l.b16 %v503
    %v2290 = vunpack.c.h.b16 %v503
    %v2291 = vunpack.c.l.b16 %v504
    %v2292 = vunpack.c.h.b16 %v504
    %v2293 = vunpack.c.l.b16 %v505
    %v2294 = vunpack.c.h.b16 %v505
    %v2295 = vunpack.c.l.b16 %v506
    %v2296 = vunpack.c.h.b16 %v506
    %v2297 = vunpack.c.l.b16 %v507
    %v2298 = vunpack.c.h.b16 %v507
    %v2299 = vunpack.c.l.b16 %v508
    %v2300 = vunpack.c.h.b16 %v508
    %v2301 = vunpack.c.l.b16 %v509
    %v2302 = vunpack.c.h.b16 %v509
    %v2303 = vunpack.c.l.b16 %v510
    %v2304 = vunpack.c.h.b16 %v510
    %v2305 = vunpack.c.l.b16 %v511
    %v2306 = vunpack.c.h.b16 %v511
    %v2307 = vunpack.c.l.b16 %v512
    %v2308 = vunpack.c.h.b16 %v512
    %v2309 = vunpack.c.l.b16 %v513
    %v2310 = vunpack.c.h.b16 %v513
    %v2311 = vunpack.c.l.b16 %v514
    %v2312 = vunpack.c.h.b16 %v514
    %v2313 = vunpack.c.l.b16 %v515
    %v2314 = vunpack.c.h.b16 %v515
    %v2315 = vunpack.c.l.b16 %v516
    %v2316 = vunpack.c.h.b16 %v516
    %v2317 = vunpack.c.l.b16 %v517
    %v2318 = vunpack.c.h.b16 %v517
    %v2319 = vunpack.c.l.b16 %v518
    %v2320 = vunpack.c.h.b16 %v518
    %v2321 = vunpack.c.l.b16 %v519
    %v2322 = vunpack.c.h.b16 %v519
    %v2323 = vunpack.c.l.b16 %v520
    %v2324 = vunpack.c.h.b16 %v520
    %v2325 = vunpack.c.l.b16 %v521
    %v2326 = vunpack.c.h.b16 %v521
    %v2327 = vunpack.c.l.b16 %v522
    %v2328 = vunpack.c.h.b16 %v522
    %v2329 = vunpack.c.l.b16 %v523
    %v2330 = vunpack.c.h.b16 %v523
    %v2331 = vunpack.c.l.b16 %v524
    %v2332 = vunpack.c.h.b16 %v524
    %v2333 = vunpack.c.l.b16 %v525
    %v2334 = vunpack.c.h.b16 %v525
    %v2335 = vunpack.c.l.b16 %v526
    %v2336 = vunpack.c.h.b16 %v526
    %v2337 = vunpack.c.l.b16 %v527
    %v2338 = vunpack.c.h.b16 %v527
    %v2339 = vunpack.c.l.b16 %v528
    %v2340 = vunpack.c.h.b16 %v528
    %v2341 = vunpack.c.l.b16 %v529
    %v2342 = vunpack.c.h.b16 %v529
    %v2343 = vunpack.c.l.b16 %v530
    %v2344 = vunpack.c.h.b16 %v530
    %v2345 = vunpack.c.l.b16 %v531
    %v2346 = vunpack.c.h.b16 %v531
    %v2347 = vunpack.c.l.b16 %v532
    %v2348 = vunpack.c.h.b16 %v532
    %v2349 = vunpack.c.l.b16 %v533
    %v2350 = vunpack.c.h.b16 %v533
    %v2351 = vunpack.c.l.b16 %v534
    %v2352 = vunpack.c.h.b16 %v534
    %v2353 = vunpack.c.l.b16 %v535
    %v2354 = vunpack.c.h.b16 %v535
    %v2355 = vunpack.c.l.b16 %v536
    %v2356 = vunpack.c.h.b16 %v536
    %v2357 = vunpack.c.l.b16 %v537
    %v2358 = vunpack.c.h.b16 %v537
    %v2359 = vunpack.c.l.b16 %v538
    %v2360 = vunpack.c.h.b16 %v538
    %v2361 = vunpack.c.l.b16 %v539
    %v2362 = vunpack.c.h.b16 %v539
    %v2363 = vunpack.c.l.b16 %v540
    %v2364 = vunpack.c.h.b16 %v540
    %v2365 = vunpack.c.l.b16 %v541
    %v2366 = vunpack.c.h.b16 %v541
    %v2367 = vunpack.c.l.b16 %v542
    %v2368 = vunpack.c.h.b16 %v542
    %v2369 = vunpack.c.l.b16 %v543
    %v2370 = vunpack.c.h.b16 %v543
    %v2371 = vunpack.c.l.b16 %v544
    %v2372 = vunpack.c.h.b16 %v544
    %v2373 = vunpack.c.l.b16 %v545
    %v2374 = vunpack.c.h.b16 %v545
    %v2375 = vunpack.c.l.b16 %v546
    %v2376 = vunpack.c.h.b16 %v546
    %v2377 = vunpack.c.l.b16 %v547
    %v2378 = vunpack.c.h.b16 %v547
    %v2379 = vunpack.c.l.b16 %v548
    %v2380 = vunpack.c.h.b16 %v548
    %v2381 = vunpack.c.l.b16 %v549
    %v2382 = vunpack.c.h.b16 %v549
    %v2383 = vunpack.c.l.b16 %v550
    %v2384 = vunpack.c.h.b16 %v550
    %v2385 = vunpack.c.l.b16 %v551
    %v2386 = vunpack.c.h.b16 %v551
    %v2387 = vunpack.c.l.b16 %v552
    %v2388 = vunpack.c.h.b16 %v552
    %v2389 = vunpack.c.l.b16 %v553
    %v2390 = vunpack.c.h.b16 %v553
    %v2391 = vunpack.c.l.b16 %v554
    %v2392 = vunpack.c.h.b16 %v554
    %v2393 = vunpack.c.l.b16 %v555
    %v2394 = vunpack.c.h.b16 %v555
    %v2395 = vunpack.c.l.b16 %v556
    %v2396 = vunpack.c.h.b16 %v556
    %v2397 = vunpack.c.l.b16 %v557
    %v2398 = vunpack.c.h.b16 %v557
    %v2399 = vunpack.c.l.b16 %v558
    %v2400 = vunpack.c.h.b16 %v558
    %v2401 = vunpack.c.l.b16 %v559
    %v2402 = vunpack.c.h.b16 %v559
    %v2403 = vunpack.c.l.b16 %v560
    %v2404 = vunpack.c.h.b16 %v560
    %v2405 = vunpack.c.l.b16 %v561
    %v2406 = vunpack.c.h.b16 %v561
    %v2407 = vunpack.c.l.b16 %v562
    %v2408 = vunpack.c.h.b16 %v562
    %v2409 = vunpack.c.l.b16 %v563
    %v2410 = vunpack.c.h.b16 %v563
    %v2411 = vunpack.c.l.b16 %v564
    %v2412 = vunpack.c.h.b16 %v564
    %v2413 = vunpack.c.l.b16 %v565
    %v2414 = vunpack.c.h.b16 %v565
    %v2415 = vunpack.c.l.b16 %v566
    %v2416 = vunpack.c.h.b16 %v566
    %v2417 = vunpack.c.l.b16 %v567
    %v2418 = vunpack.c.h.b16 %v567
    %v2419 = vunpack.c.l.b16 %v568
    %v2420 = vunpack.c.h.b16 %v568
    %v2421 = vunpack.c.l.b16 %v569
    %v2422 = vunpack.c.h.b16 %v569
    %v2423 = vunpack.c.l.b16 %v570
    %v2424 = vunpack.c.h.b16 %v570
    %v2425 = vunpack.c.l.b16 %v571
    %v2426 = vunpack.c.h.b16 %v571
    %v2427 = vunpack.c.l.b16 %v572
    %v2428 = vunpack.c.h.b16 %v572
    %v2429 = vunpack.c.l.b16 %v573
    %v2430 = vunpack.c.h.b16 %v573
    %v2431 = vunpack.c.l.b16 %v574
    %v2432 = vunpack.c.h.b16 %v574
    %v2433 = vunpack.c.l.b16 %v575
    %v2434 = vunpack.c.h.b16 %v575
    %v2435 = vunpack.c.l.b16 %v576
    %v2436 = vunpack.c.h.b16 %v576
    %v2437 = vunpack.c.l.b16 %v577
    %v2438 = vunpack.c.h.b16 %v577
    %v2439 = vunpack.c.l.b16 %v578
    %v2440 = vunpack.c.h.b16 %v578
    %v2441 = vunpack.c.l.b16 %v579
    %v2442 = vunpack.c.h.b16 %v579
    %v2443 = vunpack.c.l.b16 %v580
    %v2444 = vunpack.c.h.b16 %v580
    %v2445 = vunpack.c.l.b16 %v581
    %v2446 = vunpack.c.h.b16 %v581
    %v2447 = vunpack.c.l.b16 %v582
    %v2448 = vunpack.c.h.b16 %v582
    %v2449 = vunpack.c.l.b16 %v583
    %v2450 = vunpack.c.h.b16 %v583
    %v2451 = vunpack.c.l.b16 %v584
    %v2452 = vunpack.c.h.b16 %v584
    %v2453 = vunpack.c.l.b16 %v585
    %v2454 = vunpack.c.h.b16 %v585
    %v2455 = vunpack.c.l.b16 %v586
    %v2456 = vunpack.c.h.b16 %v586
    %v2457 = vunpack.c.l.b16 %v587
    %v2458 = vunpack.c.h.b16 %v587
    %v2459 = vunpack.c.l.b16 %v588
    %v2460 = vunpack.c.h.b16 %v588
    %v2461 = vunpack.c.l.b16 %v589
    %v2462 = vunpack.c.h.b16 %v589
    %v2463 = vunpack.c.l.b16 %v590
    %v2464 = vunpack.c.h.b16 %v590
    %v2465 = vunpack.c.l.b16 %v591
    %v2466 = vunpack.c.h.b16 %v591
    %v2467 = vunpack.c.l.b16 %v592
    %v2468 = vunpack.c.h.b16 %v592
    %v2469 = vunpack.c.l.b16 %v593
    %v2470 = vunpack.c.h.b16 %v593
    %v2471 = vunpack.c.l.b16 %v594
    %v2472 = vunpack.c.h.b16 %v594
    %v2473 = vunpack.c.l.b16 %v595
    %v2474 = vunpack.c.h.b16 %v595
    %v2475 = vunpack.c.l.b16 %v596
    %v2476 = vunpack.c.h.b16 %v596
    %v2477 = vunpack.c.l.b16 %v597
    %v2478 = vunpack.c.h.b16 %v597
    %v2479 = vunpack.c.l.b16 %v598
    %v2480 = vunpack.c.h.b16 %v598
    %v2481 = vunpack.c.l.b16 %v599
    %v2482 = vunpack.c.h.b16 %v599
    %v2483 = vunpack.c.l.b16 %v600
    %v2484 = vunpack.c.h.b16 %v600
    %v2485 = vunpack.c.l.b16 %v601
    %v2486 = vunpack.c.h.b16 %v601
    %v2487 = vunpack.c.l.b16 %v602
    %v2488 = vunpack.c.h.b16 %v602
    %v2489 = vunpack.c.l.b16 %v603
    %v2490 = vunpack.c.h.b16 %v603
    %v2491 = vunpack.c.l.b16 %v604
    %v2492 = vunpack.c.h.b16 %v604
    %v2493 = vunpack.c.l.b16 %v605
    %v2494 = vunpack.c.h.b16 %v605
    %v2495 = vunpack.c.l.b16 %v606
    %v2496 = vunpack.c.h.b16 %v606
    %v2497 = vunpack.c.l.b16 %v607
    %v2498 = vunpack.c.h.b16 %v607
    %v2499 = vunpack.c.l.b16 %v608
    %v2500 = vunpack.c.h.b16 %v608
    %v2501 = vunpack.c.l.b16 %v609
    %v2502 = vunpack.c.h.b16 %v609
    %v2503 = vunpack.c.l.b16 %v610
    %v2504 = vunpack.c.h.b16 %v610
    %v2505 = vunpack.c.l.b16 %v611
    %v2506 = vunpack.c.h.b16 %v611
    %v2507 = vunpack.c.l.b16 %v612
    %v2508 = vunpack.c.h.b16 %v612
    %v2509 = vunpack.c.l.b16 %v613
    %v2510 = vunpack.c.h.b16 %v613
    %v2511 = vunpack.c.l.b16 %v614
    %v2512 = vunpack.c.h.b16 %v614
    %v2513 = vunpack.c.l.b16 %v615
    %v2514 = vunpack.c.h.b16 %v615
    %v2515 = vunpack.c.l.b16 %v616
    %v2516 = vunpack.c.h.b16 %v616
    %v2517 = vunpack.c.l.b16 %v617
    %v2518 = vunpack.c.h.b16 %v617
    %v2519 = vunpack.c.l.b16 %v618
    %v2520 = vunpack.c.h.b16 %v618
    %v2521 = vunpack.c.l.b16 %v619
    %v2522 = vunpack.c.h.b16 %v619
    %v2523 = vunpack.c.l.b16 %v620
    %v2524 = vunpack.c.h.b16 %v620
    %v2525 = vunpack.c.l.b16 %v621
    %v2526 = vunpack.c.h.b16 %v621
    %v2527 = vunpack.c.l.b16 %v622
    %v2528 = vunpack.c.h.b16 %v622
    %v2529 = vunpack.c.l.b16 %v623
    %v2530 = vunpack.c.h.b16 %v623
    %v2531 = vunpack.c.l.b16 %v624
    %v2532 = vunpack.c.h.b16 %v624
    %v2533 = vunpack.c.l.b16 %v625
    %v2534 = vunpack.c.h.b16 %v625
    %v2535 = vunpack.c.l.b16 %v626
    %v2536 = vunpack.c.h.b16 %v626
    %v2537 = vunpack.c.l.b16 %v627
    %v2538 = vunpack.c.h.b16 %v627
    %v2539 = vunpack.c.l.b16 %v628
    %v2540 = vunpack.c.h.b16 %v628
    %v2541 = vunpack.c.l.b16 %v629
    %v2542 = vunpack.c.h.b16 %v629
    %v2543 = vunpack.c.l.b16 %v630
    %v2544 = vunpack.c.h.b16 %v630
    %v2545 = vunpack.c.l.b16 %v631
    %v2546 = vunpack.c.h.b16 %v631
    %v2547 = vunpack.c.l.b16 %v632
    %v2548 = vunpack.c.h.b16 %v632
    %v2549 = vunpack.c.l.b16 %v633
    %v2550 = vunpack.c.h.b16 %v633
    %v2551 = vunpack.c.l.b16 %v634
    %v2552 = vunpack.c.h.b16 %v634
    %v2553 = vunpack.c.l.b16 %v635
    %v2554 = vunpack.c.h.b16 %v635
    %v2555 = vunpack.c.l.b16 %v636
    %v2556 = vunpack.c.h.b16 %v636
    %v2557 = vunpack.c.l.b16 %v637
    %v2558 = vunpack.c.h.b16 %v637
    %v2559 = vunpack.c.l.b16 %v638
    %v2560 = vunpack.c.h.b16 %v638
    %v2561 = vunpack.c.l.b16 %v639
    %v2562 = vunpack.c.h.b16 %v639
    %v2563 = vunpack.c.l.b16 %v640
    %v2564 = vunpack.c.h.b16 %v640
    %v2565 = vunpack.c.l.b16 %v641
    %v2566 = vunpack.c.h.b16 %v641
    %v2567 = vunpack.c.l.b16 %v642
    %v2568 = vunpack.c.h.b16 %v642
    %v2569 = vunpack.c.l.b16 %v643
    %v2570 = vunpack.c.h.b16 %v643
    %v2571 = vunpack.c.l.b16 %v644
    %v2572 = vunpack.c.h.b16 %v644
    %v2573 = vunpack.c.l.b16 %v645
    %v2574 = vunpack.c.h.b16 %v645
    %v2575 = vunpack.c.l.b16 %v646
    %v2576 = vunpack.c.h.b16 %v646
    %v2577 = vunpack.c.l.b16 %v647
    %v2578 = vunpack.c.h.b16 %v647
    %v2579 = vunpack.c.l.b16 %v648
    %v2580 = vunpack.c.h.b16 %v648
    %v2581 = vunpack.c.l.b16 %v649
    %v2582 = vunpack.c.h.b16 %v649
    %v2583 = vunpack.c.l.b16 %v650
    %v2584 = vunpack.c.h.b16 %v650
    %v2585 = vunpack.c.l.b16 %v651
    %v2586 = vunpack.c.h.b16 %v651
    %v2587 = vunpack.c.l.b16 %v652
    %v2588 = vunpack.c.h.b16 %v652
    %v2589 = vunpack.c.l.b16 %v653
    %v2590 = vunpack.c.h.b16 %v653
    %v2591 = vunpack.c.l.b16 %v654
    %v2592 = vunpack.c.h.b16 %v654
    %v2593 = vunpack.c.l.b16 %v655
    %v2594 = vunpack.c.h.b16 %v655
    %v2595 = vunpack.c.l.b16 %v656
    %v2596 = vunpack.c.h.b16 %v656
    %v2597 = vunpack.c.l.b16 %v657
    %v2598 = vunpack.c.h.b16 %v657
    %v2599 = vunpack.c.l.b16 %v658
    %v2600 = vunpack.c.h.b16 %v658
    %v2601 = vunpack.c.l.b16 %v659
    %v2602 = vunpack.c.h.b16 %v659
    %v2603 = vunpack.c.l.b16 %v660
    %v2604 = vunpack.c.h.b16 %v660
    %v2605 = vunpack.c.l.b16 %v661
    %v2606 = vunpack.c.h.b16 %v661
    %v2607 = vunpack.c.l.b16 %v662
    %v2608 = vunpack.c.h.b16 %v662
    %v2609 = vunpack.c.l.b16 %v663
    %v2610 = vunpack.c.h.b16 %v663
    %v2611 = vunpack.c.l.b16 %v664
    %v2612 = vunpack.c.h.b16 %v664
    %v2613 = vunpack.c.l.b16 %v665
    %v2614 = vunpack.c.h.b16 %v665
    %v2615 = vunpack.c.l.b16 %v666
    %v2616 = vunpack.c.h.b16 %v666
    %v2617 = vunpack.c.l.b16 %v667
    %v2618 = vunpack.c.h.b16 %v667
    %v2619 = vunpack.c.l.b16 %v668
    %v2620 = vunpack.c.h.b16 %v668
    %v2621 = vunpack.c.l.b16 %v669
    %v2622 = vunpack.c.h.b16 %v669
    %v2623 = vunpack.c.l.b16 %v670
    %v2624 = vunpack.c.h.b16 %v670
    %v2625 = vunpack.c.l.b16 %v671
    %v2626 = vunpack.c.h.b16 %v671
    %v2627 = vunpack.c.l.b16 %v672
    %v2628 = vunpack.c.h.b16 %v672
    %v2629 = vunpack.c.l.b16 %v673
    %v2630 = vunpack.c.h.b16 %v673
    %v2631 = vunpack.c.l.b16 %v674
    %v2632 = vunpack.c.h.b16 %v674
    %v2633 = vunpack.c.l.b16 %v675
    %v2634 = vunpack.c.h.b16 %v675
    %v2635 = vunpack.c.l.b16 %v676
    %v2636 = vunpack.c.h.b16 %v676
    %v2637 = vunpack.c.l.b16 %v677
    %v2638 = vunpack.c.h.b16 %v677
    %v2639 = vunpack.c.l.b16 %v678
    %v2640 = vunpack.c.h.b16 %v678
    %v2641 = vunpack.c.l.b16 %v679
    %v2642 = vunpack.c.h.b16 %v679
    %v2643 = vunpack.c.l.b16 %v680
    %v2644 = vunpack.c.h.b16 %v680
    %v2645 = vunpack.c.l.b16 %v681
    %v2646 = vunpack.c.h.b16 %v681
    %v2647 = vunpack.c.l.b16 %v682
    %v2648 = vunpack.c.h.b16 %v682
    %v2649 = vunpack.c.l.b16 %v683
    %v2650 = vunpack.c.h.b16 %v683
    %v2651 = vunpack.c.l.b16 %v684
    %v2652 = vunpack.c.h.b16 %v684
    %v2653 = vunpack.c.l.b16 %v685
    %v2654 = vunpack.c.h.b16 %v685
    %v2655 = vunpack.c.l.b16 %v686
    %v2656 = vunpack.c.h.b16 %v686
    %v2657 = vunpack.c.l.b16 %v687
    %v2658 = vunpack.c.h.b16 %v687
    %v2659 = vunpack.c.l.b16 %v688
    %v2660 = vunpack.c.h.b16 %v688
    %v2661 = vunpack.c.l.b16 %v689
    %v2662 = vunpack.c.h.b16 %v689
    %v2663 = vunpack.c.l.b16 %v690
    %v2664 = vunpack.c.h.b16 %v690
    %v2665 = vunpack.c.l.b16 %v691
    %v2666 = vunpack.c.h.b16 %v691
    %v2667 = vunpack.c.l.b16 %v692
    %v2668 = vunpack.c.h.b16 %v692
    %v2669 = vunpack.c.l.b16 %v693
    %v2670 = vunpack.c.h.b16 %v693
    %v2671 = vunpack.c.l.b16 %v694
    %v2672 = vunpack.c.h.b16 %v694
    %v2673 = vunpack.c.l.b16 %v695
    %v2674 = vunpack.c.h.b16 %v695
    %v2675 = vunpack.c.l.b16 %v696
    %v2676 = vunpack.c.h.b16 %v696
    %v2677 = vunpack.c.l.b16 %v697
    %v2678 = vunpack.c.h.b16 %v697
    %v2679 = vunpack.c.l.b16 %v698
    %v2680 = vunpack.c.h.b16 %v698
    %v2681 = vunpack.c.l.b16 %v699
    %v2682 = vunpack.c.h.b16 %v699
    %v2683 = vunpack.c.l.b16 %v700
    %v2684 = vunpack.c.h.b16 %v700
    %v2685 = vunpack.c.l.b16 %v701
    %v2686 = vunpack.c.h.b16 %v701
    %v2687 = vunpack.c.l.b16 %v702
    %v2688 = vunpack.c.h.b16 %v702
    %v2689 = vunpack.c.l.b16 %v703
    %v2690 = vunpack.c.h.b16 %v703
    %v2691 = vunpack.c.l.b16 %v704
    %v2692 = vunpack.c.h.b16 %v704
    %v2693 = vunpack.c.l.b16 %v705
    %v2694 = vunpack.c.h.b16 %v705
    %v2695 = vunpack.c.l.b16 %v706
    %v2696 = vunpack.c.h.b16 %v706
    %v2697 = vunpack.c.l.b16 %v707
    %v2698 = vunpack.c.h.b16 %v707
    %v2699 = vunpack.c.l.b16 %v708
    %v2700 = vunpack.c.h.b16 %v708
    %v2701 = vunpack.c.l.b16 %v709
    %v2702 = vunpack.c.h.b16 %v709
    %v2703 = vunpack.c.l.b16 %v710
    %v2704 = vunpack.c.h.b16 %v710
    %v2705 = vunpack.c.l.b16 %v711
    %v2706 = vunpack.c.h.b16 %v711
    %v2707 = vunpack.c.l.b16 %v712
    %v2708 = vunpack.c.h.b16 %v712
    %v2709 = vunpack.c.l.b16 %v713
    %v2710 = vunpack.c.h.b16 %v713
    %v2711 = vunpack.c.l.b16 %v714
    %v2712 = vunpack.c.h.b16 %v714
    %v2713 = vunpack.c.l.b16 %v715
    %v2714 = vunpack.c.h.b16 %v715
    %v2715 = vunpack.c.l.b16 %v716
    %v2716 = vunpack.c.h.b16 %v716
    %v2717 = vunpack.c.l.b16 %v717
    %v2718 = vunpack.c.h.b16 %v717
    %v2719 = vunpack.c.l.b16 %v718
    %v2720 = vunpack.c.h.b16 %v718
    %v2721 = vunpack.c.l.b16 %v719
    %v2722 = vunpack.c.h.b16 %v719
    %v2723 = vunpack.c.l.b16 %v720
    %v2724 = vunpack.c.h.b16 %v720
    %v2725 = vunpack.c.l.b16 %v721
    %v2726 = vunpack.c.h.b16 %v721
    %v2727 = vunpack.c.l.b16 %v722
    %v2728 = vunpack.c.h.b16 %v722
    %v2729 = vunpack.c.l.b16 %v723
    %v2730 = vunpack.c.h.b16 %v723
    %v2731 = vunpack.c.l.b16 %v724
    %v2732 = vunpack.c.h.b16 %v724
    %v2733 = vunpack.c.l.b16 %v725
    %v2734 = vunpack.c.h.b16 %v725
    %v2735 = vunpack.c.l.b16 %v726
    %v2736 = vunpack.c.h.b16 %v726
    %v2737 = vunpack.c.l.b16 %v727
    %v2738 = vunpack.c.h.b16 %v727
    %v2739 = vunpack.c.l.b16 %v728
    %v2740 = vunpack.c.h.b16 %v728
    %v2741 = vunpack.c.l.b16 %v729
    %v2742 = vunpack.c.h.b16 %v729
    %v2743 = vunpack.c.l.b16 %v730
    %v2744 = vunpack.c.h.b16 %v730
    %v2745 = vunpack.c.l.b16 %v731
    %v2746 = vunpack.c.h.b16 %v731
    %v2747 = vunpack.c.l.b16 %v732
    %v2748 = vunpack.c.h.b16 %v732
    %v2749 = vunpack.c.l.b16 %v733
    %v2750 = vunpack.c.h.b16 %v733
    %v2751 = vunpack.c.l.b16 %v734
    %v2752 = vunpack.c.h.b16 %v734
    %v2753 = vunpack.c.l.b16 %v735
    %v2754 = vunpack.c.h.b16 %v735
    %v2755 = vunpack.c.l.b16 %v736
    %v2756 = vunpack.c.h.b16 %v736
    %v2757 = vunpack.c.l.b16 %v737
    %v2758 = vunpack.c.h.b16 %v737
    %v2759 = vunpack.c.l.b16 %v738
    %v2760 = vunpack.c.h.b16 %v738
    %v2761 = vunpack.c.l.b16 %v739
    %v2762 = vunpack.c.h.b16 %v739
    %v2763 = vunpack.c.l.b16 %v740
    %v2764 = vunpack.c.h.b16 %v740
    %v2765 = vunpack.c.l.b16 %v741
    %v2766 = vunpack.c.h.b16 %v741
    %v2767 = vunpack.c.l.b16 %v742
    %v2768 = vunpack.c.h.b16 %v742
    %v2769 = vunpack.c.l.b16 %v743
    %v2770 = vunpack.c.h.b16 %v743
    %v2771 = vunpack.c.l.b16 %v744
    %v2772 = vunpack.c.h.b16 %v744
    %v2773 = vunpack.c.l.b16 %v745
    %v2774 = vunpack.c.h.b16 %v745
    %v2775 = vunpack.c.l.b16 %v746
    %v2776 = vunpack.c.h.b16 %v746
    %v2777 = vunpack.c.l.b16 %v747
    %v2778 = vunpack.c.h.b16 %v747
    %v2779 = vunpack.c.l.b16 %v748
    %v2780 = vunpack.c.h.b16 %v748
    %v2781 = vunpack.c.l.b16 %v749
    %v2782 = vunpack.c.h.b16 %v749
    %v2783 = vunpack.c.l.b16 %v750
    %v2784 = vunpack.c.h.b16 %v750
    %v2785 = vunpack.c.l.b16 %v751
    %v2786 = vunpack.c.h.b16 %v751
    %v2787 = vunpack.c.l.b16 %v752
    %v2788 = vunpack.c.h.b16 %v752
    %v2789 = vunpack.c.l.b16 %v753
    %v2790 = vunpack.c.h.b16 %v753
    %v2791 = vunpack.c.l.b16 %v754
    %v2792 = vunpack.c.h.b16 %v754
    %v2793 = vunpack.c.l.b16 %v755
    %v2794 = vunpack.c.h.b16 %v755
    %v2795 = vunpack.c.l.b16 %v756
    %v2796 = vunpack.c.h.b16 %v756
    %v2797 = vunpack.c.l.b16 %v757
    %v2798 = vunpack.c.h.b16 %v757
    %v2799 = vunpack.c.l.b16 %v758
    %v2800 = vunpack.c.h.b16 %v758
    %v2801 = vunpack.c.l.b16 %v759
    %v2802 = vunpack.c.h.b16 %v759
    %v2803 = vunpack.c.l.b16 %v760
    %v2804 = vunpack.c.h.b16 %v760
    %v2805 = vunpack.c.l.b16 %v761
    %v2806 = vunpack.c.h.b16 %v761
    %v2807 = vunpack.c.l.b16 %v762
    %v2808 = vunpack.c.h.b16 %v762
    %v2809 = vunpack.c.l.b16 %v763
    %v2810 = vunpack.c.h.b16 %v763
    %v2811 = vunpack.c.l.b16 %v764
    %v2812 = vunpack.c.h.b16 %v764
    %v2813 = vunpack.c.l.b16 %v765
    %v2814 = vunpack.c.h.b16 %v765
    %v2815 = vunpack.c.l.b16 %v766
    %v2816 = vunpack.c.h.b16 %v766
    %v2817 = vunpack.c.l.b16 %v767
    %v2818 = vunpack.c.h.b16 %v767
    %v2819 = vunpack.c.l.b16 %v768
    %v2820 = vunpack.c.h.b16 %v768
    %v2821 = vunpack.c.l.b16 %v769
    %v2822 = vunpack.c.h.b16 %v769
    %v2823 = vunpack.c.l.b16 %v770
    %v2824 = vunpack.c.h.b16 %v770
    %v2825 = vunpack.c.l.b16 %v771
    %v2826 = vunpack.c.h.b16 %v771
    %v2827 = vunpack.c.l.b16 %v772
    %v2828 = vunpack.c.h.b16 %v772
    %v2829 = vunpack.c.l.b16 %v773
    %v2830 = vunpack.c.h.b16 %v773
    %v2831 = vunpack.c.l.b16 %v774
    %v2832 = vunpack.c.h.b16 %v774
    %v2833 = vunpack.c.l.b16 %v775
    %v2834 = vunpack.c.h.b16 %v775
    %v2835 = vunpack.c.l.b16 %v776
    %v2836 = vunpack.c.h.b16 %v776
    %v2837 = vunpack.c.l.b16 %v777
    %v2838 = vunpack.c.h.b16 %v777
    %v2839 = vunpack.c.l.b16 %v778
    %v2840 = vunpack.c.h.b16 %v778
    %v2841 = vunpack.c.l.b16 %v779
    %v2842 = vunpack.c.h.b16 %v779
    %v2843 = vunpack.c.l.b16 %v780
    %v2844 = vunpack.c.h.b16 %v780
    %v2845 = vunpack.c.l.b16 %v781
    %v2846 = vunpack.c.h.b16 %v781
    %v2847 = vunpack.c.l.b16 %v782
    %v2848 = vunpack.c.h.b16 %v782
    %v2849 = vunpack.c.l.b16 %v783
    %v2850 = vunpack.c.h.b16 %v783
    %v2851 = vunpack.c.l.b16 %v784
    %v2852 = vunpack.c.h.b16 %v784
    %v2853 = vunpack.c.l.b16 %v785
    %v2854 = vunpack.c.h.b16 %v785
    %v2855 = vunpack.c.l.b16 %v786
    %v2856 = vunpack.c.h.b16 %v786
    %v2857 = vunpack.c.l.b16 %v787
    %v2858 = vunpack.c.h.b16 %v787
    %v2859 = vunpack.c.l.b16 %v788
    %v2860 = vunpack.c.h.b16 %v788
    %v2861 = vunpack.c.l.b16 %v789
    %v2862 = vunpack.c.h.b16 %v789
    %v2863 = vunpack.c.l.b16 %v790
    %v2864 = vunpack.c.h.b16 %v790
    %v2865 = vunpack.c.l.b16 %v791
    %v2866 = vunpack.c.h.b16 %v791
    %v2867 = vunpack.c.l.b16 %v792
    %v2868 = vunpack.c.h.b16 %v792
    %v2869 = vunpack.c.l.b16 %v793
    %v2870 = vunpack.c.h.b16 %v793
    %v2871 = vunpack.c.l.b16 %v794
    %v2872 = vunpack.c.h.b16 %v794
    %v2873 = vunpack.c.l.b16 %v795
    %v2874 = vunpack.c.h.b16 %v795
    %v2875 = vunpack.c.l.b16 %v796
    %v2876 = vunpack.c.h.b16 %v796
    %v2877 = vunpack.c.l.b16 %v797
    %v2878 = vunpack.c.h.b16 %v797
    %v2879 = vunpack.c.l.b16 %v798
    %v2880 = vunpack.c.h.b16 %v798
    %v2881 = vunpack.c.l.b16 %v799
    %v2882 = vunpack.c.h.b16 %v799
    %v2883 = vunpack.c.l.b16 %v800
    %v2884 = vunpack.c.h.b16 %v800
    %v2885 = vunpack.c.l.b16 %v801
    %v2886 = vunpack.c.h.b16 %v801
    %v2887 = vunpack.c.l.b16 %v802
    %v2888 = vunpack.c.h.b16 %v802
    %v2889 = vunpack.c.l.b16 %v803
    %v2890 = vunpack.c.h.b16 %v803
    %v2891 = vunpack.c.l.b16 %v804
    %v2892 = vunpack.c.h.b16 %v804
    %v2893 = vunpack.c.l.b16 %v805
    %v2894 = vunpack.c.h.b16 %v805
    %v2895 = vunpack.c.l.b16 %v806
    %v2896 = vunpack.c.h.b16 %v806
    %v2897 = vunpack.c.l.b16 %v807
    %v2898 = vunpack.c.h.b16 %v807
    %v2899 = vunpack.c.l.b16 %v808
    %v2900 = vunpack.c.h.b16 %v808
    %v2901 = vunpack.c.l.b16 %v809
    %v2902 = vunpack.c.h.b16 %v809
    %v2903 = vunpack.c.l.b16 %v810
    %v2904 = vunpack.c.h.b16 %v810
    %v2905 = vunpack.c.l.b16 %v811
    %v2906 = vunpack.c.h.b16 %v811
    %v2907 = vunpack.c.l.b16 %v812
    %v2908 = vunpack.c.h.b16 %v812
    %v2909 = vunpack.c.l.b16 %v813
    %v2910 = vunpack.c.h.b16 %v813
    %v2911 = vunpack.c.l.b16 %v814
    %v2912 = vunpack.c.h.b16 %v814
    %v2913 = vunpack.c.l.b16 %v815
    %v2914 = vunpack.c.h.b16 %v815
    %v2915 = vunpack.c.l.b16 %v816
    %v2916 = vunpack.c.h.b16 %v816
    %v2917 = vunpack.c.l.b16 %v817
    %v2918 = vunpack.c.h.b16 %v817
    %v2919 = vunpack.c.l.b16 %v818
    %v2920 = vunpack.c.h.b16 %v818
    %v2921 = vunpack.c.l.b16 %v819
    %v2922 = vunpack.c.h.b16 %v819
    %v2923 = vunpack.c.l.b16 %v820
    %v2924 = vunpack.c.h.b16 %v820
    %v2925 = vunpack.c.l.b16 %v821
    %v2926 = vunpack.c.h.b16 %v821
    %v2927 = vunpack.c.l.b16 %v822
    %v2928 = vunpack.c.h.b16 %v822
    %v2929 = vunpack.c.l.b16 %v823
    %v2930 = vunpack.c.h.b16 %v823
    %v2931 = vunpack.c.l.b16 %v824
    %v2932 = vunpack.c.h.b16 %v824
    %v2933 = vunpack.c.l.b16 %v825
    %v2934 = vunpack.c.h.b16 %v825
    %v2935 = vunpack.c.l.b16 %v826
    %v2936 = vunpack.c.h.b16 %v826
    %v2937 = vunpack.c.l.b16 %v827
    %v2938 = vunpack.c.h.b16 %v827
    %v2939 = vunpack.c.l.b16 %v828
    %v2940 = vunpack.c.h.b16 %v828
    %v2941 = vunpack.c.l.b16 %v829
    %v2942 = vunpack.c.h.b16 %v829
    %v2943 = vunpack.c.l.b16 %v830
    %v2944 = vunpack.c.h.b16 %v830
    %v2945 = vunpack.c.l.b16 %v831
    %v2946 = vunpack.c.h.b16 %v831
    %v2947 = vunpack.c.l.b16 %v832
    %v2948 = vunpack.c.h.b16 %v832
    %v2949 = vunpack.c.l.b16 %v833
    %v2950 = vunpack.c.h.b16 %v833
    %v2951 = vunpack.c.l.b16 %v834
    %v2952 = vunpack.c.h.b16 %v834
    %v2953 = vunpack.c.l.b16 %v835
    %v2954 = vunpack.c.h.b16 %v835
    %v2955 = vunpack.c.l.b16 %v836
    %v2956 = vunpack.c.h.b16 %v836
    %v2957 = vunpack.c.l.b16 %v837
    %v2958 = vunpack.c.h.b16 %v837
    %v2959 = vunpack.c.l.b16 %v838
    %v2960 = vunpack.c.h.b16 %v838
    %v2961 = vunpack.c.l.b16 %v839
    %v2962 = vunpack.c.h.b16 %v839
    %v2963 = vunpack.c.l.b16 %v840
    %v2964 = vunpack.c.h.b16 %v840
    %v2965 = vunpack.c.l.b16 %v841
    %v2966 = vunpack.c.h.b16 %v841
    %v2967 = vunpack.c.l.b16 %v842
    %v2968 = vunpack.c.h.b16 %v842
    %v2969 = vunpack.c.l.b16 %v843
    %v2970 = vunpack.c.h.b16 %v843
    %v2971 = vunpack.c.l.b16 %v844
    %v2972 = vunpack.c.h.b16 %v844
    %v2973 = vunpack.c.l.b16 %v845
    %v2974 = vunpack.c.h.b16 %v845
    %v2975 = vunpack.c.l.b16 %v846
    %v2976 = vunpack.c.h.b16 %v846
    %v2977 = vunpack.c.l.b16 %v847
    %v2978 = vunpack.c.h.b16 %v847
    %v2979 = vunpack.c.l.b16 %v848
    %v2980 = vunpack.c.h.b16 %v848
    %v2981 = vunpack.c.l.b16 %v849
    %v2982 = vunpack.c.h.b16 %v849
    %v2983 = vunpack.c.l.b16 %v850
    %v2984 = vunpack.c.h.b16 %v850
    %v2985 = vunpack.c.l.b16 %v851
    %v2986 = vunpack.c.h.b16 %v851
    %v2987 = vunpack.c.l.b16 %v852
    %v2988 = vunpack.c.h.b16 %v852
    %v2989 = vunpack.c.l.b16 %v853
    %v2990 = vunpack.c.h.b16 %v853
    %v2991 = vunpack.c.l.b16 %v854
    %v2992 = vunpack.c.h.b16 %v854
    %v2993 = vunpack.c.l.b16 %v855
    %v2994 = vunpack.c.h.b16 %v855
    %v2995 = vunpack.c.l.b16 %v856
    %v2996 = vunpack.c.h.b16 %v856
    %v2997 = vunpack.c.l.b16 %v857
    %v2998 = vunpack.c.h.b16 %v857
    %v2999 = vunpack.c.l.b16 %v858
    %v3000 = vunpack.c.h.b16 %v858
    %v3001 = vunpack.c.l.b16 %v859
    %v3002 = vunpack.c.h.b16 %v859
    %v3003 = vunpack.c.l.b16 %v860
    %v3004 = vunpack.c.h.b16 %v860
    %v3005 = vunpack.c.l.b16 %v861
    %v3006 = vunpack.c.h.b16 %v861
    %v3007 = vunpack.c.l.b16 %v862
    %v3008 = vunpack.c.h.b16 %v862
    %v3009 = vunpack.c.l.b16 %v863
    %v3010 = vunpack.c.h.b16 %v863
    %v3011 = vunpack.c.l.b16 %v864
    %v3012 = vunpack.c.h.b16 %v864
    %v3013 = vunpack.c.l.b16 %v865
    %v3014 = vunpack.c.h.b16 %v865
    %v3015 = vunpack.c.l.b16 %v866
    %v3016 = vunpack.c.h.b16 %v866
    %v3017 = vunpack.c.l.b16 %v867
    %v3018 = vunpack.c.h.b16 %v867
    %v3019 = vunpack.c.l.b16 %v868
    %v3020 = vunpack.c.h.b16 %v868
    %v3021 = vunpack.c.l.b16 %v869
    %v3022 = vunpack.c.h.b16 %v869
    %v3023 = vunpack.c.l.b16 %v870
    %v3024 = vunpack.c.h.b16 %v870
    %v3025 = vunpack.c.l.b16 %v871
    %v3026 = vunpack.c.h.b16 %v871
    %v3027 = vunpack.c.l.b16 %v872
    %v3028 = vunpack.c.h.b16 %v872
    %v3029 = vunpack.c.l.b16 %v873
    %v3030 = vunpack.c.h.b16 %v873
    %v3031 = vunpack.c.l.b16 %v874
    %v3032 = vunpack.c.h.b16 %v874
    %v3033 = vunpack.c.l.b16 %v875
    %v3034 = vunpack.c.h.b16 %v875
    %v3035 = vunpack.c.l.b16 %v876
    %v3036 = vunpack.c.h.b16 %v876
    %v3037 = vunpack.c.l.b16 %v877
    %v3038 = vunpack.c.h.b16 %v877
    %v3039 = vunpack.c.l.b16 %v878
    %v3040 = vunpack.c.h.b16 %v878
    %v3041 = vunpack.c.l.b16 %v879
    %v3042 = vunpack.c.h.b16 %v879
    %v3043 = vunpack.c.l.b16 %v880
    %v3044 = vunpack.c.h.b16 %v880
    %v3045 = vunpack.c.l.b16 %v881
    %v3046 = vunpack.c.h.b16 %v881
    %v3047 = vunpack.c.l.b16 %v882
    %v3048 = vunpack.c.h.b16 %v882
    %v3049 = vunpack.c.l.b16 %v883
    %v3050 = vunpack.c.h.b16 %v883
    %v3051 = vunpack.c.l.b16 %v884
    %v3052 = vunpack.c.h.b16 %v884
    %v3053 = vunpack.c.l.b16 %v885
    %v3054 = vunpack.c.h.b16 %v885
    %v3055 = vunpack.c.l.b16 %v886
    %v3056 = vunpack.c.h.b16 %v886
    %v3057 = vunpack.c.l.b16 %v887
    %v3058 = vunpack.c.h.b16 %v887
    %v3059 = vunpack.c.l.b16 %v888
    %v3060 = vunpack.c.h.b16 %v888
    %v3061 = vunpack.c.l.b16 %v889
    %v3062 = vunpack.c.h.b16 %v889
    %v3063 = vunpack.c.l.b16 %v890
    %v3064 = vunpack.c.h.b16 %v890
    %v3065 = vunpack.c.l.b16 %v891
    %v3066 = vunpack.c.h.b16 %v891
    %v3067 = vunpack.c.l.b16 %v892
    %v3068 = vunpack.c.h.b16 %v892
    %v3069 = vunpack.c.l.b16 %v893
    %v3070 = vunpack.c.h.b16 %v893
    %v3071 = vunpack.c.l.b16 %v894
    %v3072 = vunpack.c.h.b16 %v894
    %v3073 = vunpack.c.l.b16 %v895
    %v3074 = vunpack.c.h.b16 %v895
    %v3075 = vunpack.c.l.b16 %v896
    %v3076 = vunpack.c.h.b16 %v896
    %v3077 = vunpack.c.l.b16 %v897
    %v3078 = vunpack.c.h.b16 %v897
    %v3079 = vunpack.c.l.b16 %v898
    %v3080 = vunpack.c.h.b16 %v898
    %v3081 = vunpack.c.l.b16 %v899
    %v3082 = vunpack.c.h.b16 %v899
    %v3083 = vunpack.c.l.b16 %v900
    %v3084 = vunpack.c.h.b16 %v900
    %v3085 = vunpack.c.l.b16 %v901
    %v3086 = vunpack.c.h.b16 %v901
    %v3087 = vunpack.c.l.b16 %v902
    %v3088 = vunpack.c.h.b16 %v902
    %v3089 = vunpack.c.l.b16 %v903
    %v3090 = vunpack.c.h.b16 %v903
    %v3091 = vunpack.c.l.b16 %v904
    %v3092 = vunpack.c.h.b16 %v904
    %v3093 = vunpack.c.l.b16 %v905
    %v3094 = vunpack.c.h.b16 %v905
    %v3095 = vunpack.c.l.b16 %v906
    %v3096 = vunpack.c.h.b16 %v906
    %v3097 = vunpack.c.l.b16 %v907
    %v3098 = vunpack.c.h.b16 %v907
    %v3099 = vunpack.c.l.b16 %v908
    %v3100 = vunpack.c.h.b16 %v908
    %v3101 = vunpack.c.l.b16 %v909
    %v3102 = vunpack.c.h.b16 %v909
    %v3103 = vunpack.c.l.b16 %v910
    %v3104 = vunpack.c.h.b16 %v910
    %v3105 = vunpack.c.l.b16 %v911
    %v3106 = vunpack.c.h.b16 %v911
    %v3107 = vunpack.c.l.b16 %v912
    %v3108 = vunpack.c.h.b16 %v912
    %v3109 = vunpack.c.l.b16 %v913
    %v3110 = vunpack.c.h.b16 %v913
    %v3111 = vunpack.c.l.b16 %v914
    %v3112 = vunpack.c.h.b16 %v914
    %v3113 = vunpack.c.l.b16 %v915
    %v3114 = vunpack.c.h.b16 %v915
    %v3115 = vunpack.c.l.b16 %v916
    %v3116 = vunpack.c.h.b16 %v916
    %v3117 = vunpack.c.l.b16 %v917
    %v3118 = vunpack.c.h.b16 %v917
    %v3119 = vunpack.c.l.b16 %v918
    %v3120 = vunpack.c.h.b16 %v918
    %v3121 = vunpack.c.l.b16 %v919
    %v3122 = vunpack.c.h.b16 %v919
    %v3123 = vunpack.c.l.b16 %v920
    %v3124 = vunpack.c.h.b16 %v920
    %v3125 = vunpack.c.l.b16 %v921
    %v3126 = vunpack.c.h.b16 %v921
    %v3127 = vunpack.c.l.b16 %v922
    %v3128 = vunpack.c.h.b16 %v922
    %v3129 = vunpack.c.l.b16 %v923
    %v3130 = vunpack.c.h.b16 %v923
    %v3131 = vunpack.c.l.b16 %v924
    %v3132 = vunpack.c.h.b16 %v924
    %v3133 = vunpack.c.l.b16 %v925
    %v3134 = vunpack.c.h.b16 %v925
    %v3135 = vunpack.c.l.b16 %v926
    %v3136 = vunpack.c.h.b16 %v926
    %v3137 = vunpack.c.l.b16 %v927
    %v3138 = vunpack.c.h.b16 %v927
    %v3139 = vunpack.c.l.b16 %v928
    %v3140 = vunpack.c.h.b16 %v928
    %v3141 = vunpack.c.l.b16 %v929
    %v3142 = vunpack.c.h.b16 %v929
    %v3143 = vunpack.c.l.b16 %v930
    %v3144 = vunpack.c.h.b16 %v930
    %v3145 = vunpack.c.l.b16 %v931
    %v3146 = vunpack.c.h.b16 %v931
    %v3147 = vunpack.c.l.b16 %v932
    %v3148 = vunpack.c.h.b16 %v932
    %v3149 = vunpack.c.l.b16 %v933
    %v3150 = vunpack.c.h.b16 %v933
    %v3151 = vunpack.c.l.b16 %v934
    %v3152 = vunpack.c.h.b16 %v934
    %v3153 = vunpack.c.l.b16 %v935
    %v3154 = vunpack.c.h.b16 %v935
    %v3155 = vunpack.c.l.b16 %v936
    %v3156 = vunpack.c.h.b16 %v936
    %v3157 = vunpack.c.l.b16 %v937
    %v3158 = vunpack.c.h.b16 %v937
    %v3159 = vunpack.c.l.b16 %v938
    %v3160 = vunpack.c.h.b16 %v938
    %v3161 = vunpack.c.l.b16 %v939
    %v3162 = vunpack.c.h.b16 %v939
    %v3163 = vunpack.c.l.b16 %v940
    %v3164 = vunpack.c.h.b16 %v940
    %v3165 = vunpack.c.l.b16 %v941
    %v3166 = vunpack.c.h.b16 %v941
    %v3167 = vunpack.c.l.b16 %v942
    %v3168 = vunpack.c.h.b16 %v942
    %v3169 = vunpack.c.l.b16 %v943
    %v3170 = vunpack.c.h.b16 %v943
    %v3171 = vunpack.c.l.b16 %v944
    %v3172 = vunpack.c.h.b16 %v944
    %v3173 = vunpack.c.l.b16 %v945
    %v3174 = vunpack.c.h.b16 %v945
    %v3175 = vunpack.c.l.b16 %v946
    %v3176 = vunpack.c.h.b16 %v946
    %v3177 = vunpack.c.l.b16 %v947
    %v3178 = vunpack.c.h.b16 %v947
    %v3179 = vunpack.c.l.b16 %v948
    %v3180 = vunpack.c.h.b16 %v948
    %v3181 = vunpack.c.l.b16 %v949
    %v3182 = vunpack.c.h.b16 %v949
    %v3183 = vunpack.c.l.b16 %v950
    %v3184 = vunpack.c.h.b16 %v950
    %v3185 = vunpack.c.l.b16 %v951
    %v3186 = vunpack.c.h.b16 %v951
    %v3187 = vunpack.c.l.b16 %v952
    %v3188 = vunpack.c.h.b16 %v952
    %v3189 = vunpack.c.l.b16 %v953
    %v3190 = vunpack.c.h.b16 %v953
    %v3191 = vunpack.c.l.b16 %v954
    %v3192 = vunpack.c.h.b16 %v954
    %v3193 = vunpack.c.l.b16 %v955
    %v3194 = vunpack.c.h.b16 %v955
    %v3195 = vunpack.c.l.b16 %v956
    %v3196 = vunpack.c.h.b16 %v956
    %v3197 = vunpack.c.l.b16 %v957
    %v3198 = vunpack.c.h.b16 %v957
    %v3199 = vunpack.c.l.b16 %v958
    %v3200 = vunpack.c.h.b16 %v958
    %v3201 = vunpack.c.l.b16 %v959
    %v3202 = vunpack.c.h.b16 %v959
    %v3203 = vunpack.c.l.b16 %v960
    %v3204 = vunpack.c.h.b16 %v960
    %v3205 = vunpack.c.l.b16 %v961
    %v3206 = vunpack.c.h.b16 %v961
    %v3207 = vunpack.c.l.b16 %v962
    %v3208 = vunpack.c.h.b16 %v962
    %v3209 = vunpack.c.l.b16 %v963
    %v3210 = vunpack.c.h.b16 %v963
    %v3211 = vunpack.c.l.b16 %v964
    %v3212 = vunpack.c.h.b16 %v964
    %v3213 = vunpack.c.l.b16 %v965
    %v3214 = vunpack.c.h.b16 %v965
    %v3215 = vunpack.c.l.b16 %v966
    %v3216 = vunpack.c.h.b16 %v966
    %v3217 = vunpack.c.l.b16 %v967
    %v3218 = vunpack.c.h.b16 %v967
    %v3219 = vunpack.c.l.b16 %v968
    %v3220 = vunpack.c.h.b16 %v968
    %v3221 = vunpack.c.l.b16 %v969
    %v3222 = vunpack.c.h.b16 %v969
    %v3223 = vunpack.c.l.b16 %v970
    %v3224 = vunpack.c.h.b16 %v970
    %v3225 = vunpack.c.l.b16 %v971
    %v3226 = vunpack.c.h.b16 %v971
    %v3227 = vunpack.c.l.b16 %v972
    %v3228 = vunpack.c.h.b16 %v972
    %v3229 = vunpack.c.l.b16 %v973
    %v3230 = vunpack.c.h.b16 %v973
    %v3231 = vunpack.c.l.b16 %v974
    %v3232 = vunpack.c.h.b16 %v974
    %v3233 = vunpack.c.l.b16 %v975
    %v3234 = vunpack.c.h.b16 %v975
    %v3235 = vunpack.c.l.b16 %v976
    %v3236 = vunpack.c.h.b16 %v976
    %v3237 = vunpack.c.l.b16 %v977
    %v3238 = vunpack.c.h.b16 %v977
    %v3239 = vunpack.c.l.b16 %v978
    %v3240 = vunpack.c.h.b16 %v978
    %v3241 = vunpack.c.l.b16 %v979
    %v3242 = vunpack.c.h.b16 %v979
    %v3243 = vunpack.c.l.b16 %v980
    %v3244 = vunpack.c.h.b16 %v980
    %v3245 = vunpack.c.l.b16 %v981
    %v3246 = vunpack.c.h.b16 %v981
    %v3247 = vunpack.c.l.b16 %v982
    %v3248 = vunpack.c.h.b16 %v982
    %v3249 = vunpack.c.l.b16 %v983
    %v3250 = vunpack.c.h.b16 %v983
    %v3251 = vunpack.c.l.b16 %v984
    %v3252 = vunpack.c.h.b16 %v984
    %v3253 = vunpack.c.l.b16 %v985
    %v3254 = vunpack.c.h.b16 %v985
    %v3255 = vunpack.c.l.b16 %v986
    %v3256 = vunpack.c.h.b16 %v986
    %v3257 = vunpack.c.l.b16 %v987
    %v3258 = vunpack.c.h.b16 %v987
    %v3259 = vunpack.c.l.b16 %v988
    %v3260 = vunpack.c.h.b16 %v988
    %v3261 = vunpack.c.l.b16 %v989
    %v3262 = vunpack.c.h.b16 %v989
    %v3263 = vunpack.c.l.b16 %v990
    %v3264 = vunpack.c.h.b16 %v990
    %v3265 = vunpack.c.l.b16 %v991
    %v3266 = vunpack.c.h.b16 %v991
    %v3267 = vunpack.c.l.b16 %v992
    %v3268 = vunpack.c.h.b16 %v992
    %v3269 = vunpack.c.l.b16 %v993
    %v3270 = vunpack.c.h.b16 %v993
    %v3271 = vunpack.c.l.b16 %v994
    %v3272 = vunpack.c.h.b16 %v994
    %v3273 = vunpack.c.l.b16 %v995
    %v3274 = vunpack.c.h.b16 %v995
    %v3275 = vunpack.c.l.b16 %v996
    %v3276 = vunpack.c.h.b16 %v996
    %v3277 = vunpack.c.l.b16 %v997
    %v3278 = vunpack.c.h.b16 %v997
    %v3279 = vunpack.c.l.b16 %v998
    %v3280 = vunpack.c.h.b16 %v998
    %v3281 = vunpack.c.l.b16 %v999
    %v3282 = vunpack.c.h.b16 %v999
    %v3283 = vunpack.c.l.b16 %v1000
    %v3284 = vunpack.c.h.b16 %v1000
    %v3285 = vunpack.c.l.b16 %v1001
    %v3286 = vunpack.c.h.b16 %v1001
    %v3287 = vunpack.c.l.b16 %v1002
    %v3288 = vunpack.c.h.b16 %v1002
    %v3289 = vunpack.c.l.b16 %v1003
    %v3290 = vunpack.c.h.b16 %v1003
    %v3291 = vunpack.c.l.b16 %v1004
    %v3292 = vunpack.c.h.b16 %v1004
    %v3293 = vunpack.c.l.b16 %v1005
    %v3294 = vunpack.c.h.b16 %v1005
    %v3295 = vunpack.c.l.b16 %v1006
    %v3296 = vunpack.c.h.b16 %v1006
    %v3297 = vunpack.c.l.b16 %v1007
    %v3298 = vunpack.c.h.b16 %v1007
    %v3299 = vunpack.c.l.b16 %v1008
    %v3300 = vunpack.c.h.b16 %v1008
    %v3301 = vunpack.c.l.b16 %v1009
    %v3302 = vunpack.c.h.b16 %v1009
    %v3303 = vunpack.c.l.b16 %v1010
    %v3304 = vunpack.c.h.b16 %v1010
    %v3305 = vunpack.c.l.b16 %v1011
    %v3306 = vunpack.c.h.b16 %v1011
    %v3307 = vunpack.c.l.b16 %v1012
    %v3308 = vunpack.c.h.b16 %v1012
    %v3309 = vunpack.c.l.b16 %v1013
    %v3310 = vunpack.c.h.b16 %v1013
    %v3311 = vunpack.c.l.b16 %v1014
    %v3312 = vunpack.c.h.b16 %v1014
    %v3313 = vunpack.c.l.b16 %v1015
    %v3314 = vunpack.c.h.b16 %v1015
    %v3315 = vunpack.c.l.b16 %v1016
    %v3316 = vunpack.c.h.b16 %v1016
    %v3317 = vunpack.c.l.b16 %v1017
    %v3318 = vunpack.c.h.b16 %v1017
    %v3319 = vunpack.c.l.b16 %v1018
    %v3320 = vunpack.c.h.b16 %v1018
    %v3321 = vunpack.c.l.b16 %v1019
    %v3322 = vunpack.c.h.b16 %v1019
    %v3323 = vunpack.c.l.b16 %v1020
    %v3324 = vunpack.c.h.b16 %v1020
    %v3325 = vunpack.c.l.b16 %v1021
    %v3326 = vunpack.c.h.b16 %v1021
    %v3327 = vunpack.c.l.b16 %v1022
    %v3328 = vunpack.c.h.b16 %v1022
    %v3329 = vunpack.c.l.b16 %v1023
    %v3330 = vunpack.c.h.b16 %v1023
    %v3331 = vunpack.c.l.b16 %v1024
    %v3332 = vunpack.c.h.b16 %v1024
    %v3333 = vunpack.c.l.b16 %v1025
    %v3334 = vunpack.c.h.b16 %v1025
    %v3335 = vunpack.c.l.b16 %v1026
    %v3336 = vunpack.c.h.b16 %v1026
    %v3337 = vunpack.c.l.b16 %v1027
    %v3338 = vunpack.c.h.b16 %v1027
    %v3339 = vunpack.c.l.b16 %v1028
    %v3340 = vunpack.c.h.b16 %v1028
    %v3341 = vunpack.c.l.b16 %v1029
    %v3342 = vunpack.c.h.b16 %v1029
    %v3343 = vunpack.c.l.b16 %v1030
    %v3344 = vunpack.c.h.b16 %v1030
    %v3345 = vunpack.c.l.b16 %v1031
    %v3346 = vunpack.c.h.b16 %v1031
    %v3347 = vunpack.c.l.b16 %v1032
    %v3348 = vunpack.c.h.b16 %v1032
    %v3349 = vunpack.c.l.b16 %v1033
    %v3350 = vunpack.c.h.b16 %v1033
    %v3351 = vunpack.c.l.b16 %v1034
    %v3352 = vunpack.c.h.b16 %v1034
    %v3353 = vunpack.c.l.b16 %v1035
    %v3354 = vunpack.c.h.b16 %v1035
    %v3355 = vunpack.c.l.b16 %v1036
    %v3356 = vunpack.c.h.b16 %v1036
    %v3357 = vunpack.c.l.b16 %v1037
    %v3358 = vunpack.c.h.b16 %v1037
    %v3359 = vunpack.c.l.b16 %v1038
    %v3360 = vunpack.c.h.b16 %v1038
    %v3361 = vunpack.c.l.b16 %v1039
    %v3362 = vunpack.c.h.b16 %v1039
    %v3363 = vunpack.c.l.b16 %v1040
    %v3364 = vunpack.c.h.b16 %v1040
    %v3365 = vunpack.c.l.b16 %v1041
    %v3366 = vunpack.c.h.b16 %v1041
    %v3367 = vunpack.c.l.b16 %v1042
    %v3368 = vunpack.c.h.b16 %v1042
    %v3369 = vunpack.c.l.b16 %v1043
    %v3370 = vunpack.c.h.b16 %v1043
    %v3371 = vunpack.c.l.b16 %v1044
    %v3372 = vunpack.c.h.b16 %v1044
    %v3373 = vunpack.c.l.b16 %v1045
    %v3374 = vunpack.c.h.b16 %v1045
    %v3375 = vunpack.c.l.b16 %v1046
    %v3376 = vunpack.c.h.b16 %v1046
    %v3377 = vunpack.c.l.b16 %v1047
    %v3378 = vunpack.c.h.b16 %v1047
    %v3379 = vunpack.c.l.b16 %v1048
    %v3380 = vunpack.c.h.b16 %v1048
    %v3381 = vunpack.c.l.b16 %v1049
    %v3382 = vunpack.c.h.b16 %v1049
    %v3383 = vunpack.c.l.b16 %v1050
    %v3384 = vunpack.c.h.b16 %v1050
    %v3385 = vunpack.c.l.b16 %v1051
    %v3386 = vunpack.c.h.b16 %v1051
    %v3387 = vunpack.c.l.b16 %v1052
    %v3388 = vunpack.c.h.b16 %v1052
    %v3389 = vunpack.c.l.b16 %v1053
    %v3390 = vunpack.c.h.b16 %v1053
    %v3391 = vunpack.c.l.b16 %v1054
    %v3392 = vunpack.c.h.b16 %v1054
    %v3393 = vunpack.c.l.b16 %v1055
    %v3394 = vunpack.c.h.b16 %v1055
    %v3395 = vunpack.c.l.b16 %v1056
    %v3396 = vunpack.c.h.b16 %v1056
    %v3397 = vunpack.c.l.b16 %v1057
    %v3398 = vunpack.c.h.b16 %v1057
    %v3399 = vunpack.c.l.b16 %v1058
    %v3400 = vunpack.c.h.b16 %v1058
    %v3401 = vunpack.c.l.b16 %v1059
    %v3402 = vunpack.c.h.b16 %v1059
    %v3403 = vunpack.c.l.b16 %v1060
    %v3404 = vunpack.c.h.b16 %v1060
    %v3405 = vunpack.c.l.b16 %v1061
    %v3406 = vunpack.c.h.b16 %v1061
    %v3407 = vunpack.c.l.b16 %v1062
    %v3408 = vunpack.c.h.b16 %v1062
    %v3409 = vunpack.c.l.b16 %v1063
    %v3410 = vunpack.c.h.b16 %v1063
    %v3411 = vunpack.c.l.b16 %v1064
    %v3412 = vunpack.c.h.b16 %v1064
    %v3413 = vunpack.c.l.b16 %v1065
    %v3414 = vunpack.c.h.b16 %v1065
    %v3415 = vunpack.c.l.b16 %v1066
    %v3416 = vunpack.c.h.b16 %v1066
    %v3417 = vunpack.c.l.b16 %v1067
    %v3418 = vunpack.c.h.b16 %v1067
    %v3419 = vunpack.c.l.b16 %v1068
    %v3420 = vunpack.c.h.b16 %v1068
    %v3421 = vunpack.c.l.b16 %v1069
    %v3422 = vunpack.c.h.b16 %v1069
    %v3423 = vunpack.c.l.b16 %v1070
    %v3424 = vunpack.c.h.b16 %v1070
    %v3425 = vunpack.c.l.b16 %v1071
    %v3426 = vunpack.c.h.b16 %v1071
    %v3427 = vunpack.c.l.b16 %v1072
    %v3428 = vunpack.c.h.b16 %v1072
    %v3429 = vunpack.c.l.b16 %v1073
    %v3430 = vunpack.c.h.b16 %v1073
    %v3431 = vunpack.c.l.b16 %v1074
    %v3432 = vunpack.c.h.b16 %v1074
    %v3433 = vunpack.c.l.b16 %v1075
    %v3434 = vunpack.c.h.b16 %v1075
    %v3435 = vunpack.c.l.b16 %v1076
    %v3436 = vunpack.c.h.b16 %v1076
    %v3437 = vunpack.c.l.b16 %v1077
    %v3438 = vunpack.c.h.b16 %v1077
    %v3439 = vunpack.c.l.b16 %v1078
    %v3440 = vunpack.c.h.b16 %v1078
    %v3441 = vunpack.c.l.b16 %v1079
    %v3442 = vunpack.c.h.b16 %v1079
    %v3443 = vunpack.c.l.b16 %v1080
    %v3444 = vunpack.c.h.b16 %v1080
    %v3445 = vunpack.c.l.b16 %v1081
    %v3446 = vunpack.c.h.b16 %v1081
    %v3447 = vunpack.c.l.b16 %v1082
    %v3448 = vunpack.c.h.b16 %v1082
    %v3449 = vunpack.c.l.b16 %v1083
    %v3450 = vunpack.c.h.b16 %v1083
    %v3451 = vunpack.c.l.b16 %v1084
    %v3452 = vunpack.c.h.b16 %v1084
    %v3453 = vunpack.c.l.b16 %v1085
    %v3454 = vunpack.c.h.b16 %v1085
    %v3455 = vunpack.c.l.b16 %v1086
    %v3456 = vunpack.c.h.b16 %v1086
    %v3457 = vunpack.c.l.b16 %v1087
    %v3458 = vunpack.c.h.b16 %v1087
    %v3459 = vunpack.c.l.b16 %v1088
    %v3460 = vunpack.c.h.b16 %v1088
    %v3461 = vunpack.c.l.b16 %v1089
    %v3462 = vunpack.c.h.b16 %v1089
    %v3463 = vunpack.c.l.b16 %v1090
    %v3464 = vunpack.c.h.b16 %v1090
    %v3465 = vunpack.c.l.b16 %v1091
    %v3466 = vunpack.c.h.b16 %v1091
    %v3467 = vunpack.c.l.b16 %v1092
    %v3468 = vunpack.c.h.b16 %v1092
    %v3469 = vunpack.c.l.b16 %v1093
    %v3470 = vunpack.c.h.b16 %v1093
    %v3471 = vunpack.c.l.b16 %v1094
    %v3472 = vunpack.c.h.b16 %v1094
    %v3473 = vunpack.c.l.b16 %v1095
    %v3474 = vunpack.c.h.b16 %v1095
    %v3475 = vunpack.c.l.b16 %v1096
    %v3476 = vunpack.c.h.b16 %v1096
    %v3477 = vunpack.c.l.b16 %v1097
    %v3478 = vunpack.c.h.b16 %v1097
    %v3479 = vunpack.c.l.b16 %v1098
    %v3480 = vunpack.c.h.b16 %v1098
    %v3481 = vpack.c.b16 %v1953, %v1945
    %v3482 = vpack.c.b16 %v1954, %v1946
    %v3483 = vpack.c.b16 %v1955, %v1947
    %v3484 = vpack.c.b16 %v1956, %v1948
    %v3485 = vpack.c.b16 %v1957, %v1949
    %v3486 = vpack.c.b16 %v1958, %v1950
    %v3487 = vpack.c.b16 %v1959, %v1951
    %v3488 = vpack.c.b16 %v1960, %v1952
    %v3489 = vpack.c.b16 %v1969, %v1961
    %v3490 = vpack.c.b16 %v1970, %v1962
    %v3491 = vpack.c.b16 %v1971, %v1963
    %v3492 = vpack.c.b16 %v1972, %v1964
    %v3493 = vpack.c.b16 %v1973, %v1965
    %v3494 = vpack.c.b16 %v1974, %v1966
    %v3495 = vpack.c.b16 %v1975, %v1967
    %v3496 = vpack.c.b16 %v1976, %v1968
    %v3497 = vpack.c.b16 %v1985, %v1977
    %v3498 = vpack.c.b16 %v1986, %v1978
    %v3499 = vpack.c.b16 %v1987, %v1979
    %v3500 = vpack.c.b16 %v1988, %v1980
    %v3501 = vpack.c.b16 %v1989, %v1981
    %v3502 = vpack.c.b16 %v1990, %v1982
    %v3503 = vpack.c.b16 %v1991, %v1983
    %v3504 = vpack.c.b16 %v1992, %v1984
    %v3505 = vpack.c.b16 %v2001, %v1993
    %v3506 = vpack.c.b16 %v2002, %v1994
    %v3507 = vpack.c.b16 %v2003, %v1995
    %v3508 = vpack.c.b16 %v2004, %v1996
    %v3509 = vpack.c.b16 %v2005, %v1997
    %v3510 = vpack.c.b16 %v2006, %v1998
    %v3511 = vpack.c.b16 %v2007, %v1999
    %v3512 = vpack.c.b16 %v2008, %v2000
    %v3513 = vpack.c.b16 %v2017, %v2009
    %v3514 = vpack.c.b16 %v2018, %v2010
    %v3515 = vpack.c.b16 %v2019, %v2011
    %v3516 = vpack.c.b16 %v2020, %v2012
    %v3517 = vpack.c.b16 %v2021, %v2013
    %v3518 = vpack.c.b16 %v2022, %v2014
    %v3519 = vpack.c.b16 %v2023, %v2015
    %v3520 = vpack.c.b16 %v2024, %v2016
    %v3521 = vpack.c.b16 %v2033, %v2025
    %v3522 = vpack.c.b16 %v2034, %v2026
    %v3523 = vpack.c.b16 %v2035, %v2027
    %v3524 = vpack.c.b16 %v2036, %v2028
    %v3525 = vpack.c.b16 %v2037, %v2029
    %v3526 = vpack.c.b16 %v2038, %v2030
    %v3527 = vpack.c.b16 %v2039, %v2031
    %v3528 = vpack.c.b16 %v2040, %v2032
    %v3529 = vpack.c.b16 %v2049, %v2041
    %v3530 = vpack.c.b16 %v2050, %v2042
    %v3531 = vpack.c.b16 %v2051, %v2043
    %v3532 = vpack.c.b16 %v2052, %v2044
    %v3533 = vpack.c.b16 %v2053, %v2045
    %v3534 = vpack.c.b16 %v2054, %v2046
    %v3535 = vpack.c.b16 %v2055, %v2047
    %v3536 = vpack.c.b16 %v2056, %v2048
    %v3537 = vpack.c.b16 %v2065, %v2057
    %v3538 = vpack.c.b16 %v2066, %v2058
    %v3539 = vpack.c.b16 %v2067, %v2059
    %v3540 = vpack.c.b16 %v2068, %v2060
    %v3541 = vpack.c.b16 %v2069, %v2061
    %v3542 = vpack.c.b16 %v2070, %v2062
    %v3543 = vpack.c.b16 %v2071, %v2063
    %v3544 = vpack.c.b16 %v2072, %v2064
    %v3545 = vpack.c.b16 %v2081, %v2073
    %v3546 = vpack.c.b16 %v2082, %v2074
    %v3547 = vpack.c.b16 %v2083, %v2075
    %v3548 = vpack.c.b16 %v2084, %v2076
    %v3549 = vpack.c.b16 %v2085, %v2077
    %v3550 = vpack.c.b16 %v2086, %v2078
    %v3551 = vpack.c.b16 %v2087, %v2079
    %v3552 = vpack.c.b16 %v2088, %v2080
    %v3553 = vpack.c.b16 %v2097, %v2089
    %v3554 = vpack.c.b16 %v2098, %v2090
    %v3555 = vpack.c.b16 %v2099, %v2091
    %v3556 = vpack.c.b16 %v2100, %v2092
    %v3557 = vpack.c.b16 %v2101, %v2093
    %v3558 = vpack.c.b16 %v2102, %v2094
    %v3559 = vpack.c.b16 %v2103, %v2095
    %v3560 = vpack.c.b16 %v2104, %v2096
    %v3561 = vpack.c.b16 %v2113, %v2105
    %v3562 = vpack.c.b16 %v2114, %v2106
    %v3563 = vpack.c.b16 %v2115, %v2107
    %v3564 = vpack.c.b16 %v2116, %v2108
    %v3565 = vpack.c.b16 %v2117, %v2109
    %v3566 = vpack.c.b16 %v2118, %v2110
    %v3567 = vpack.c.b16 %v2119, %v2111
    %v3568 = vpack.c.b16 %v2120, %v2112
    %v3569 = vpack.c.b16 %v2129, %v2121
    %v3570 = vpack.c.b16 %v2130, %v2122
    %v3571 = vpack.c.b16 %v2131, %v2123
    %v3572 = vpack.c.b16 %v2132, %v2124
    %v3573 = vpack.c.b16 %v2133, %v2125
    %v3574 = vpack.c.b16 %v2134, %v2126
    %v3575 = vpack.c.b16 %v2135, %v2127
    %v3576 = vpack.c.b16 %v2136, %v2128
    %v3577 = vpack.c.b16 %v2145, %v2137
    %v3578 = vpack.c.b16 %v2146, %v2138
    %v3579 = vpack.c.b16 %v2147, %v2139
    %v3580 = vpack.c.b16 %v2148, %v2140
    %v3581 = vpack.c.b16 %v2149, %v2141
    %v3582 = vpack.c.b16 %v2150, %v2142
    %v3583 = vpack.c.b16 %v2151, %v2143
    %v3584 = vpack.c.b16 %v2152, %v2144
    %v3585 = vpack.c.b16 %v2161, %v2153
    %v3586 = vpack.c.b16 %v2162, %v2154
    %v3587 = vpack.c.b16 %v2163, %v2155
    %v3588 = vpack.c.b16 %v2164, %v2156
    %v3589 = vpack.c.b16 %v2165, %v2157
    %v3590 = vpack.c.b16 %v2166, %v2158
    %v3591 = vpack.c.b16 %v2167, %v2159
    %v3592 = vpack.c.b16 %v2168, %v2160
    %v3593 = vpack.c.b16 %v2177, %v2169
    %v3594 = vpack.c.b16 %v2178, %v2170
    %v3595 = vpack.c.b16 %v2179, %v2171
    %v3596 = vpack.c.b16 %v2180, %v2172
    %v3597 = vpack.c.b16 %v2181, %v2173
    %v3598 = vpack.c.b16 %v2182, %v2174
    %v3599 = vpack.c.b16 %v2183, %v2175
    %v3600 = vpack.c.b16 %v2184, %v2176
    %v3601 = vpack.c.b16 %v2193, %v2185
    %v3602 = vpack.c.b16 %v2194, %v2186
    %v3603 = vpack.c.b16 %v2195, %v2187
    %v3604 = vpack.c.b16 %v2196, %v2188
    %v3605 = vpack.c.b16 %v2197, %v2189
    %v3606 = vpack.c.b16 %v2198, %v2190
    %v3607 = vpack.c.b16 %v2199, %v2191
    %v3608 = vpack.c.b16 %v2200, %v2192
    %v3609 = vpack.c.b16 %v2209, %v2201
    %v3610 = vpack.c.b16 %v2210, %v2202
    %v3611 = vpack.c.b16 %v2211, %v2203
    %v3612 = vpack.c.b16 %v2212, %v2204
    %v3613 = vpack.c.b16 %v2213, %v2205
    %v3614 = vpack.c.b16 %v2214, %v2206
    %v3615 = vpack.c.b16 %v2215, %v2207
    %v3616 = vpack.c.b16 %v2216, %v2208
    %v3617 = vpack.c.b16 %v2225, %v2217
    %v3618 = vpack.c.b16 %v2226, %v2218
    %v3619 = vpack.c.b16 %v2227, %v2219
    %v3620 = vpack.c.b16 %v2228, %v2220
    %v3621 = vpack.c.b16 %v2229, %v2221
    %v3622 = vpack.c.b16 %v2230, %v2222
    %v3623 = vpack.c.b16 %v2231, %v2223
    %v3624 = vpack.c.b16 %v2232, %v2224
    %v3625 = vpack.c.b16 %v2241, %v2233
    %v3626 = vpack.c.b16 %v2242, %v2234
    %v3627 = vpack.c.b16 %v2243, %v2235
    %v3628 = vpack.c.b16 %v2244, %v2236
    %v3629 = vpack.c.b16 %v2245, %v2237
    %v3630 = vpack.c.b16 %v2246, %v2238
    %v3631 = vpack.c.b16 %v2247, %v2239
    %v3632 = vpack.c.b16 %v2248, %v2240
    %v3633 = vpack.c.b16 %v2257, %v2249
    %v3634 = vpack.c.b16 %v2258, %v2250
    %v3635 = vpack.c.b16 %v2259, %v2251
    %v3636 = vpack.c.b16 %v2260, %v2252
    %v3637 = vpack.c.b16 %v2261, %v2253
    %v3638 = vpack.c.b16 %v2262, %v2254
    %v3639 = vpack.c.b16 %v2263, %v2255
    %v3640 = vpack.c.b16 %v2264, %v2256
    %v3641 = vpack.c.b16 %v2273, %v2265
    %v3642 = vpack.c.b16 %v2274, %v2266
    %v3643 = vpack.c.b16 %v2275, %v2267
    %v3644 = vpack.c.b16 %v2276, %v2268
    %v3645 = vpack.c.b16 %v2277, %v2269
    %v3646 = vpack.c.b16 %v2278, %v2270
    %v3647 = vpack.c.b16 %v2279, %v2271
    %v3648 = vpack.c.b16 %v2280, %v2272
    %v3649 = vpack.c.b16 %v2289, %v2281
    %v3650 = vpack.c.b16 %v2290, %v2282
    %v3651 = vpack.c.b16 %v2291, %v2283
    %v3652 = vpack.c.b16 %v2292, %v2284
    %v3653 = vpack.c.b16 %v2293, %v2285
    %v3654 = vpack.c.b16 %v2294, %v2286
    %v3655 = vpack.c.b16 %v2295, %v2287
    %v3656 = vpack.c.b16 %v2296, %v2288
    %v3657 = vpack.c.b16 %v2305, %v2297
    %v3658 = vpack.c.b16 %v2306, %v2298
    %v3659 = vpack.c.b16 %v2307, %v2299
    %v3660 = vpack.c.b16 %v2308, %v2300
    %v3661 = vpack.c.b16 %v2309, %v2301
    %v3662 = vpack.c.b16 %v2310, %v2302
    %v3663 = vpack.c.b16 %v2311, %v2303
    %v3664 = vpack.c.b16 %v2312, %v2304
    %v3665 = vpack.c.b16 %v2321, %v2313
    %v3666 = vpack.c.b16 %v2322, %v2314
    %v3667 = vpack.c.b16 %v2323, %v2315
    %v3668 = vpack.c.b16 %v2324, %v2316
    %v3669 = vpack.c.b16 %v2325, %v2317
    %v3670 = vpack.c.b16 %v2326, %v2318
    %v3671 = vpack.c.b16 %v2327, %v2319
    %v3672 = vpack.c.b16 %v2328, %v2320
    %v3673 = vpack.c.b16 %v2337, %v2329
    %v3674 = vpack.c.b16 %v2338, %v2330
    %v3675 = vpack.c.b16 %v2339, %v2331
    %v3676 = vpack.c.b16 %v2340, %v2332
    %v3677 = vpack.c.b16 %v2341, %v2333
    %v3678 = vpack.c.b16 %v2342, %v2334
    %v3679 = vpack.c.b16 %v2343, %v2335
    %v3680 = vpack.c.b16 %v2344, %v2336
    %v3681 = vpack.c.b16 %v2353, %v2345
    %v3682 = vpack.c.b16 %v2354, %v2346
    %v3683 = vpack.c.b16 %v2355, %v2347
    %v3684 = vpack.c.b16 %v2356, %v2348
    %v3685 = vpack.c.b16 %v2357, %v2349
    %v3686 = vpack.c.b16 %v2358, %v2350
    %v3687 = vpack.c.b16 %v2359, %v2351
    %v3688 = vpack.c.b16 %v2360, %v2352
    %v3689 = vpack.c.b16 %v2369, %v2361
    %v3690 = vpack.c.b16 %v2370, %v2362
    %v3691 = vpack.c.b16 %v2371, %v2363
    %v3692 = vpack.c.b16 %v2372, %v2364
    %v3693 = vpack.c.b16 %v2373, %v2365
    %v3694 = vpack.c.b16 %v2374, %v2366
    %v3695 = vpack.c.b16 %v2375, %v2367
    %v3696 = vpack.c.b16 %v2376, %v2368
    %v3697 = vpack.c.b16 %v2385, %v2377
    %v3698 = vpack.c.b16 %v2386, %v2378
    %v3699 = vpack.c.b16 %v2387, %v2379
    %v3700 = vpack.c.b16 %v2388, %v2380
    %v3701 = vpack.c.b16 %v2389, %v2381
    %v3702 = vpack.c.b16 %v2390, %v2382
    %v3703 = vpack.c.b16 %v2391, %v2383
    %v3704 = vpack.c.b16 %v2392, %v2384
    %v3705 = vpack.c.b16 %v2401, %v2393
    %v3706 = vpack.c.b16 %v2402, %v2394
    %v3707 = vpack.c.b16 %v2403, %v2395
    %v3708 = vpack.c.b16 %v2404, %v2396
    %v3709 = vpack.c.b16 %v2405, %v2397
    %v3710 = vpack.c.b16 %v2406, %v2398
    %v3711 = vpack.c.b16 %v2407, %v2399
    %v3712 = vpack.c.b16 %v2408, %v2400
    %v3713 = vpack.c.b16 %v2417, %v2409
    %v3714 = vpack.c.b16 %v2418, %v2410
    %v3715 = vpack.c.b16 %v2419, %v2411
    %v3716 = vpack.c.b16 %v2420, %v2412
    %v3717 = vpack.c.b16 %v2421, %v2413
    %v3718 = vpack.c.b16 %v2422, %v2414
    %v3719 = vpack.c.b16 %v2423, %v2415
    %v3720 = vpack.c.b16 %v2424, %v2416
    %v3721 = vpack.c.b16 %v2433, %v2425
    %v3722 = vpack.c.b16 %v2434, %v2426
    %v3723 = vpack.c.b16 %v2435, %v2427
    %v3724 = vpack.c.b16 %v2436, %v2428
    %v3725 = vpack.c.b16 %v2437, %v2429
    %v3726 = vpack.c.b16 %v2438, %v2430
    %v3727 = vpack.c.b16 %v2439, %v2431
    %v3728 = vpack.c.b16 %v2440, %v2432
    %v3729 = vpack.c.b16 %v2449, %v2441
    %v3730 = vpack.c.b16 %v2450, %v2442
    %v3731 = vpack.c.b16 %v2451, %v2443
    %v3732 = vpack.c.b16 %v2452, %v2444
    %v3733 = vpack.c.b16 %v2453, %v2445
    %v3734 = vpack.c.b16 %v2454, %v2446
    %v3735 = vpack.c.b16 %v2455, %v2447
    %v3736 = vpack.c.b16 %v2456, %v2448
    %v3737 = vpack.c.b16 %v2465, %v2457
    %v3738 = vpack.c.b16 %v2466, %v2458
    %v3739 = vpack.c.b16 %v2467, %v2459
    %v3740 = vpack.c.b16 %v2468, %v2460
    %v3741 = vpack.c.b16 %v2469, %v2461
    %v3742 = vpack.c.b16 %v2470, %v2462
    %v3743 = vpack.c.b16 %v2471, %v2463
    %v3744 = vpack.c.b16 %v2472, %v2464
    %v3745 = vpack.c.b16 %v2481, %v2473
    %v3746 = vpack.c.b16 %v2482, %v2474
    %v3747 = vpack.c.b16 %v2483, %v2475
    %v3748 = vpack.c.b16 %v2484, %v2476
    %v3749 = vpack.c.b16 %v2485, %v2477
    %v3750 = vpack.c.b16 %v2486, %v2478
    %v3751 = vpack.c.b16 %v2487, %v2479
    %v3752 = vpack.c.b16 %v2488, %v2480
    %v3753 = vpack.c.b16 %v2497, %v2489
    %v3754 = vpack.c.b16 %v2498, %v2490
    %v3755 = vpack.c.b16 %v2499, %v2491
    %v3756 = vpack.c.b16 %v2500, %v2492
    %v3757 = vpack.c.b16 %v2501, %v2493
    %v3758 = vpack.c.b16 %v2502, %v2494
    %v3759 = vpack.c.b16 %v2503, %v2495
    %v3760 = vpack.c.b16 %v2504, %v2496
    %v3761 = vpack.c.b16 %v2513, %v2505
    %v3762 = vpack.c.b16 %v2514, %v2506
    %v3763 = vpack.c.b16 %v2515, %v2507
    %v3764 = vpack.c.b16 %v2516, %v2508
    %v3765 = vpack.c.b16 %v2517, %v2509
    %v3766 = vpack.c.b16 %v2518, %v2510
    %v3767 = vpack.c.b16 %v2519, %v2511
    %v3768 = vpack.c.b16 %v2520, %v2512
    %v3769 = vpack.c.b16 %v2529, %v2521
    %v3770 = vpack.c.b16 %v2530, %v2522
    %v3771 = vpack.c.b16 %v2531, %v2523
    %v3772 = vpack.c.b16 %v2532, %v2524
    %v3773 = vpack.c.b16 %v2533, %v2525
    %v3774 = vpack.c.b16 %v2534, %v2526
    %v3775 = vpack.c.b16 %v2535, %v2527
    %v3776 = vpack.c.b16 %v2536, %v2528
    %v3777 = vpack.c.b16 %v2545, %v2537
    %v3778 = vpack.c.b16 %v2546, %v2538
    %v3779 = vpack.c.b16 %v2547, %v2539
    %v3780 = vpack.c.b16 %v2548, %v2540
    %v3781 = vpack.c.b16 %v2549, %v2541
    %v3782 = vpack.c.b16 %v2550, %v2542
    %v3783 = vpack.c.b16 %v2551, %v2543
    %v3784 = vpack.c.b16 %v2552, %v2544
    %v3785 = vpack.c.b16 %v2561, %v2553
    %v3786 = vpack.c.b16 %v2562, %v2554
    %v3787 = vpack.c.b16 %v2563, %v2555
    %v3788 = vpack.c.b16 %v2564, %v2556
    %v3789 = vpack.c.b16 %v2565, %v2557
    %v3790 = vpack.c.b16 %v2566, %v2558
    %v3791 = vpack.c.b16 %v2567, %v2559
    %v3792 = vpack.c.b16 %v2568, %v2560
    %v3793 = vpack.c.b16 %v2577, %v2569
    %v3794 = vpack.c.b16 %v2578, %v2570
    %v3795 = vpack.c.b16 %v2579, %v2571
    %v3796 = vpack.c.b16 %v2580, %v2572
    %v3797 = vpack.c.b16 %v2581, %v2573
    %v3798 = vpack.c.b16 %v2582, %v2574
    %v3799 = vpack.c.b16 %v2583, %v2575
    %v3800 = vpack.c.b16 %v2584, %v2576
    %v3801 = vpack.c.b16 %v2593, %v2585
    %v3802 = vpack.c.b16 %v2594, %v2586
    %v3803 = vpack.c.b16 %v2595, %v2587
    %v3804 = vpack.c.b16 %v2596, %v2588
    %v3805 = vpack.c.b16 %v2597, %v2589
    %v3806 = vpack.c.b16 %v2598, %v2590
    %v3807 = vpack.c.b16 %v2599, %v2591
    %v3808 = vpack.c.b16 %v2600, %v2592
    %v3809 = vpack.c.b16 %v2609, %v2601
    %v3810 = vpack.c.b16 %v2610, %v2602
    %v3811 = vpack.c.b16 %v2611, %v2603
    %v3812 = vpack.c.b16 %v2612, %v2604
    %v3813 = vpack.c.b16 %v2613, %v2605
    %v3814 = vpack.c.b16 %v2614, %v2606
    %v3815 = vpack.c.b16 %v2615, %v2607
    %v3816 = vpack.c.b16 %v2616, %v2608
    %v3817 = vpack.c.b16 %v2625, %v2617
    %v3818 = vpack.c.b16 %v2626, %v2618
    %v3819 = vpack.c.b16 %v2627, %v2619
    %v3820 = vpack.c.b16 %v2628, %v2620
    %v3821 = vpack.c.b16 %v2629, %v2621
    %v3822 = vpack.c.b16 %v2630, %v2622
    %v3823 = vpack.c.b16 %v2631, %v2623
    %v3824 = vpack.c.b16 %v2632, %v2624
    %v3825 = vpack.c.b16 %v2641, %v2633
    %v3826 = vpack.c.b16 %v2642, %v2634
    %v3827 = vpack.c.b16 %v2643, %v2635
    %v3828 = vpack.c.b16 %v2644, %v2636
    %v3829 = vpack.c.b16 %v2645, %v2637
    %v3830 = vpack.c.b16 %v2646, %v2638
    %v3831 = vpack.c.b16 %v2647, %v2639
    %v3832 = vpack.c.b16 %v2648, %v2640
    %v3833 = vpack.c.b16 %v2657, %v2649
    %v3834 = vpack.c.b16 %v2658, %v2650
    %v3835 = vpack.c.b16 %v2659, %v2651
    %v3836 = vpack.c.b16 %v2660, %v2652
    %v3837 = vpack.c.b16 %v2661, %v2653
    %v3838 = vpack.c.b16 %v2662, %v2654
    %v3839 = vpack.c.b16 %v2663, %v2655
    %v3840 = vpack.c.b16 %v2664, %v2656
    %v3841 = vpack.c.b16 %v2673, %v2665
    %v3842 = vpack.c.b16 %v2674, %v2666
    %v3843 = vpack.c.b16 %v2675, %v2667
    %v3844 = vpack.c.b16 %v2676, %v2668
    %v3845 = vpack.c.b16 %v2677, %v2669
    %v3846 = vpack.c.b16 %v2678, %v2670
    %v3847 = vpack.c.b16 %v2679, %v2671
    %v3848 = vpack.c.b16 %v2680, %v2672
    %v3849 = vpack.c.b16 %v2689, %v2681
    %v3850 = vpack.c.b16 %v2690, %v2682
    %v3851 = vpack.c.b16 %v2691, %v2683
    %v3852 = vpack.c.b16 %v2692, %v2684
    %v3853 = vpack.c.b16 %v2693, %v2685
    %v3854 = vpack.c.b16 %v2694, %v2686
    %v3855 = vpack.c.b16 %v2695, %v2687
    %v3856 = vpack.c.b16 %v2696, %v2688
    %v3857 = vpack.c.b16 %v2705, %v2697
    %v3858 = vpack.c.b16 %v2706, %v2698
    %v3859 = vpack.c.b16 %v2707, %v2699
    %v3860 = vpack.c.b16 %v2708, %v2700
    %v3861 = vpack.c.b16 %v2709, %v2701
    %v3862 = vpack.c.b16 %v2710, %v2702
    %v3863 = vpack.c.b16 %v2711, %v2703
    %v3864 = vpack.c.b16 %v2712, %v2704
    %v3865 = vpack.c.b16 %v2721, %v2713
    %v3866 = vpack.c.b16 %v2722, %v2714
    %v3867 = vpack.c.b16 %v2723, %v2715
    %v3868 = vpack.c.b16 %v2724, %v2716
    %v3869 = vpack.c.b16 %v2725, %v2717
    %v3870 = vpack.c.b16 %v2726, %v2718
    %v3871 = vpack.c.b16 %v2727, %v2719
    %v3872 = vpack.c.b16 %v2728, %v2720
    %v3873 = vpack.c.b16 %v2737, %v2729
    %v3874 = vpack.c.b16 %v2738, %v2730
    %v3875 = vpack.c.b16 %v2739, %v2731
    %v3876 = vpack.c.b16 %v2740, %v2732
    %v3877 = vpack.c.b16 %v2741, %v2733
    %v3878 = vpack.c.b16 %v2742, %v2734
    %v3879 = vpack.c.b16 %v2743, %v2735
    %v3880 = vpack.c.b16 %v2744, %v2736
    %v3881 = vpack.c.b16 %v2753, %v2745
    %v3882 = vpack.c.b16 %v2754, %v2746
    %v3883 = vpack.c.b16 %v2755, %v2747
    %v3884 = vpack.c.b16 %v2756, %v2748
    %v3885 = vpack.c.b16 %v2757, %v2749
    %v3886 = vpack.c.b16 %v2758, %v2750
    %v3887 = vpack.c.b16 %v2759, %v2751
    %v3888 = vpack.c.b16 %v2760, %v2752
    %v3889 = vpack.c.b16 %v2769, %v2761
    %v3890 = vpack.c.b16 %v2770, %v2762
    %v3891 = vpack.c.b16 %v2771, %v2763
    %v3892 = vpack.c.b16 %v2772, %v2764
    %v3893 = vpack.c.b16 %v2773, %v2765
    %v3894 = vpack.c.b16 %v2774, %v2766
    %v3895 = vpack.c.b16 %v2775, %v2767
    %v3896 = vpack.c.b16 %v2776, %v2768
    %v3897 = vpack.c.b16 %v2785, %v2777
    %v3898 = vpack.c.b16 %v2786, %v2778
    %v3899 = vpack.c.b16 %v2787, %v2779
    %v3900 = vpack.c.b16 %v2788, %v2780
    %v3901 = vpack.c.b16 %v2789, %v2781
    %v3902 = vpack.c.b16 %v2790, %v2782
    %v3903 = vpack.c.b16 %v2791, %v2783
    %v3904 = vpack.c.b16 %v2792, %v2784
    %v3905 = vpack.c.b16 %v2801, %v2793
    %v3906 = vpack.c.b16 %v2802, %v2794
    %v3907 = vpack.c.b16 %v2803, %v2795
    %v3908 = vpack.c.b16 %v2804, %v2796
    %v3909 = vpack.c.b16 %v2805, %v2797
    %v3910 = vpack.c.b16 %v2806, %v2798
    %v3911 = vpack.c.b16 %v2807, %v2799
    %v3912 = vpack.c.b16 %v2808, %v2800
    %v3913 = vpack.c.b16 %v2817, %v2809
    %v3914 = vpack.c.b16 %v2818, %v2810
    %v3915 = vpack.c.b16 %v2819, %v2811
    %v3916 = vpack.c.b16 %v2820, %v2812
    %v3917 = vpack.c.b16 %v2821, %v2813
    %v3918 = vpack.c.b16 %v2822, %v2814
    %v3919 = vpack.c.b16 %v2823, %v2815
    %v3920 = vpack.c.b16 %v2824, %v2816
    %v3921 = vpack.c.b16 %v2833, %v2825
    %v3922 = vpack.c.b16 %v2834, %v2826
    %v3923 = vpack.c.b16 %v2835, %v2827
    %v3924 = vpack.c.b16 %v2836, %v2828
    %v3925 = vpack.c.b16 %v2837, %v2829
    %v3926 = vpack.c.b16 %v2838, %v2830
    %v3927 = vpack.c.b16 %v2839, %v2831
    %v3928 = vpack.c.b16 %v2840, %v2832
    %v3929 = vpack.c.b16 %v2849, %v2841
    %v3930 = vpack.c.b16 %v2850, %v2842
    %v3931 = vpack.c.b16 %v2851, %v2843
    %v3932 = vpack.c.b16 %v2852, %v2844
    %v3933 = vpack.c.b16 %v2853, %v2845
    %v3934 = vpack.c.b16 %v2854, %v2846
    %v3935 = vpack.c.b16 %v2855, %v2847
    %v3936 = vpack.c.b16 %v2856, %v2848
    %v3937 = vpack.c.b16 %v2865, %v2857
    %v3938 = vpack.c.b16 %v2866, %v2858
    %v3939 = vpack.c.b16 %v2867, %v2859
    %v3940 = vpack.c.b16 %v2868, %v2860
    %v3941 = vpack.c.b16 %v2869, %v2861
    %v3942 = vpack.c.b16 %v2870, %v2862
    %v3943 = vpack.c.b16 %v2871, %v2863
    %v3944 = vpack.c.b16 %v2872, %v2864
    %v3945 = vpack.c.b16 %v2881, %v2873
    %v3946 = vpack.c.b16 %v2882, %v2874
    %v3947 = vpack.c.b16 %v2883, %v2875
    %v3948 = vpack.c.b16 %v2884, %v2876
    %v3949 = vpack.c.b16 %v2885, %v2877
    %v3950 = vpack.c.b16 %v2886, %v2878
    %v3951 = vpack.c.b16 %v2887, %v2879
    %v3952 = vpack.c.b16 %v2888, %v2880
    %v3953 = vpack.c.b16 %v2897, %v2889
    %v3954 = vpack.c.b16 %v2898, %v2890
    %v3955 = vpack.c.b16 %v2899, %v2891
    %v3956 = vpack.c.b16 %v2900, %v2892
    %v3957 = vpack.c.b16 %v2901, %v2893
    %v3958 = vpack.c.b16 %v2902, %v2894
    %v3959 = vpack.c.b16 %v2903, %v2895
    %v3960 = vpack.c.b16 %v2904, %v2896
    %v3961 = vpack.c.b16 %v2913, %v2905
    %v3962 = vpack.c.b16 %v2914, %v2906
    %v3963 = vpack.c.b16 %v2915, %v2907
    %v3964 = vpack.c.b16 %v2916, %v2908
    %v3965 = vpack.c.b16 %v2917, %v2909
    %v3966 = vpack.c.b16 %v2918, %v2910
    %v3967 = vpack.c.b16 %v2919, %v2911
    %v3968 = vpack.c.b16 %v2920, %v2912
    %v3969 = vpack.c.b16 %v2929, %v2921
    %v3970 = vpack.c.b16 %v2930, %v2922
    %v3971 = vpack.c.b16 %v2931, %v2923
    %v3972 = vpack.c.b16 %v2932, %v2924
    %v3973 = vpack.c.b16 %v2933, %v2925
    %v3974 = vpack.c.b16 %v2934, %v2926
    %v3975 = vpack.c.b16 %v2935, %v2927
    %v3976 = vpack.c.b16 %v2936, %v2928
    %v3977 = vpack.c.b16 %v2945, %v2937
    %v3978 = vpack.c.b16 %v2946, %v2938
    %v3979 = vpack.c.b16 %v2947, %v2939
    %v3980 = vpack.c.b16 %v2948, %v2940
    %v3981 = vpack.c.b16 %v2949, %v2941
    %v3982 = vpack.c.b16 %v2950, %v2942
    %v3983 = vpack.c.b16 %v2951, %v2943
    %v3984 = vpack.c.b16 %v2952, %v2944
    %v3985 = vpack.c.b16 %v2961, %v2953
    %v3986 = vpack.c.b16 %v2962, %v2954
    %v3987 = vpack.c.b16 %v2963, %v2955
    %v3988 = vpack.c.b16 %v2964, %v2956
    %v3989 = vpack.c.b16 %v2965, %v2957
    %v3990 = vpack.c.b16 %v2966, %v2958
    %v3991 = vpack.c.b16 %v2967, %v2959
    %v3992 = vpack.c.b16 %v2968, %v2960
    %v3993 = vpack.c.b16 %v2977, %v2969
    %v3994 = vpack.c.b16 %v2978, %v2970
    %v3995 = vpack.c.b16 %v2979, %v2971
    %v3996 = vpack.c.b16 %v2980, %v2972
    %v3997 = vpack.c.b16 %v2981, %v2973
    %v3998 = vpack.c.b16 %v2982, %v2974
    %v3999 = vpack.c.b16 %v2983, %v2975
    %v4000 = vpack.c.b16 %v2984, %v2976
    %v4001 = vpack.c.b16 %v2993, %v2985
    %v4002 = vpack.c.b16 %v2994, %v2986
    %v4003 = vpack.c.b16 %v2995, %v2987
    %v4004 = vpack.c.b16 %v2996, %v2988
    %v4005 = vpack.c.b16 %v2997, %v2989
    %v4006 = vpack.c.b16 %v2998, %v2990
    %v4007 = vpack.c.b16 %v2999, %v2991
    %v4008 = vpack.c.b16 %v3000, %v2992
    %v4009 = vpack.c.b16 %v3009, %v3001
    %v4010 = vpack.c.b16 %v3010, %v3002
    %v4011 = vpack.c.b16 %v3011, %v3003
    %v4012 = vpack.c.b16 %v3012, %v3004
    %v4013 = vpack.c.b16 %v3013, %v3005
    %v4014 = vpack.c.b16 %v3014, %v3006
    %v4015 = vpack.c.b16 %v3015, %v3007
    %v4016 = vpack.c.b16 %v3016, %v3008
    %v4017 = vpack.c.b16 %v3025, %v3017
    %v4018 = vpack.c.b16 %v3026, %v3018
    %v4019 = vpack.c.b16 %v3027, %v3019
    %v4020 = vpack.c.b16 %v3028, %v3020
    %v4021 = vpack.c.b16 %v3029, %v3021
    %v4022 = vpack.c.b16 %v3030, %v3022
    %v4023 = vpack.c.b16 %v3031, %v3023
    %v4024 = vpack.c.b16 %v3032, %v3024
    %v4025 = vpack.c.b16 %v3041, %v3033
    %v4026 = vpack.c.b16 %v3042, %v3034
    %v4027 = vpack.c.b16 %v3043, %v3035
    %v4028 = vpack.c.b16 %v3044, %v3036
    %v4029 = vpack.c.b16 %v3045, %v3037
    %v4030 = vpack.c.b16 %v3046, %v3038
    %v4031 = vpack.c.b16 %v3047, %v3039
    %v4032 = vpack.c.b16 %v3048, %v3040
    %v4033 = vpack.c.b16 %v3057, %v3049
    %v4034 = vpack.c.b16 %v3058, %v3050
    %v4035 = vpack.c.b16 %v3059, %v3051
    %v4036 = vpack.c.b16 %v3060, %v3052
    %v4037 = vpack.c.b16 %v3061, %v3053
    %v4038 = vpack.c.b16 %v3062, %v3054
    %v4039 = vpack.c.b16 %v3063, %v3055
    %v4040 = vpack.c.b16 %v3064, %v3056
    %v4041 = vpack.c.b16 %v3073, %v3065
    %v4042 = vpack.c.b16 %v3074, %v3066
    %v4043 = vpack.c.b16 %v3075, %v3067
    %v4044 = vpack.c.b16 %v3076, %v3068
    %v4045 = vpack.c.b16 %v3077, %v3069
    %v4046 = vpack.c.b16 %v3078, %v3070
    %v4047 = vpack.c.b16 %v3079, %v3071
    %v4048 = vpack.c.b16 %v3080, %v3072
    %v4049 = vpack.c.b16 %v3089, %v3081
    %v4050 = vpack.c.b16 %v3090, %v3082
    %v4051 = vpack.c.b16 %v3091, %v3083
    %v4052 = vpack.c.b16 %v3092, %v3084
    %v4053 = vpack.c.b16 %v3093, %v3085
    %v4054 = vpack.c.b16 %v3094, %v3086
    %v4055 = vpack.c.b16 %v3095, %v3087
    %v4056 = vpack.c.b16 %v3096, %v3088
    %v4057 = vpack.c.b16 %v3105, %v3097
    %v4058 = vpack.c.b16 %v3106, %v3098
    %v4059 = vpack.c.b16 %v3107, %v3099
    %v4060 = vpack.c.b16 %v3108, %v3100
    %v4061 = vpack.c.b16 %v3109, %v3101
    %v4062 = vpack.c.b16 %v3110, %v3102
    %v4063 = vpack.c.b16 %v3111, %v3103
    %v4064 = vpack.c.b16 %v3112, %v3104
    %v4065 = vpack.c.b16 %v3121, %v3113
    %v4066 = vpack.c.b16 %v3122, %v3114
    %v4067 = vpack.c.b16 %v3123, %v3115
    %v4068 = vpack.c.b16 %v3124, %v3116
    %v4069 = vpack.c.b16 %v3125, %v3117
    %v4070 = vpack.c.b16 %v3126, %v3118
    %v4071 = vpack.c.b16 %v3127, %v3119
    %v4072 = vpack.c.b16 %v3128, %v3120
    %v4073 = vpack.c.b16 %v3137, %v3129
    %v4074 = vpack.c.b16 %v3138, %v3130
    %v4075 = vpack.c.b16 %v3139, %v3131
    %v4076 = vpack.c.b16 %v3140, %v3132
    %v4077 = vpack.c.b16 %v3141, %v3133
    %v4078 = vpack.c.b16 %v3142, %v3134
    %v4079 = vpack.c.b16 %v3143, %v3135
    %v4080 = vpack.c.b16 %v3144, %v3136
    %v4081 = vpack.c.b16 %v3153, %v3145
    %v4082 = vpack.c.b16 %v3154, %v3146
    %v4083 = vpack.c.b16 %v3155, %v3147
    %v4084 = vpack.c.b16 %v3156, %v3148
    %v4085 = vpack.c.b16 %v3157, %v3149
    %v4086 = vpack.c.b16 %v3158, %v3150
    %v4087 = vpack.c.b16 %v3159, %v3151
    %v4088 = vpack.c.b16 %v3160, %v3152
    %v4089 = vpack.c.b16 %v3169, %v3161
    %v4090 = vpack.c.b16 %v3170, %v3162
    %v4091 = vpack.c.b16 %v3171, %v3163
    %v4092 = vpack.c.b16 %v3172, %v3164
    %v4093 = vpack.c.b16 %v3173, %v3165
    %v4094 = vpack.c.b16 %v3174, %v3166
    %v4095 = vpack.c.b16 %v3175, %v3167
    %v4096 = vpack.c.b16 %v3176, %v3168
    %v4097 = vpack.c.b16 %v3185, %v3177
    %v4098 = vpack.c.b16 %v3186, %v3178
    %v4099 = vpack.c.b16 %v3187, %v3179
    %v4100 = vpack.c.b16 %v3188, %v3180
    %v4101 = vpack.c.b16 %v3189, %v3181
    %v4102 = vpack.c.b16 %v3190, %v3182
    %v4103 = vpack.c.b16 %v3191, %v3183
    %v4104 = vpack.c.b16 %v3192, %v3184
    %v4105 = vpack.c.b16 %v3201, %v3193
    %v4106 = vpack.c.b16 %v3202, %v3194
    %v4107 = vpack.c.b16 %v3203, %v3195
    %v4108 = vpack.c.b16 %v3204, %v3196
    %v4109 = vpack.c.b16 %v3205, %v3197
    %v4110 = vpack.c.b16 %v3206, %v3198
    %v4111 = vpack.c.b16 %v3207, %v3199
    %v4112 = vpack.c.b16 %v3208, %v3200
    %v4113 = vpack.c.b16 %v3217, %v3209
    %v4114 = vpack.c.b16 %v3218, %v3210
    %v4115 = vpack.c.b16 %v3219, %v3211
    %v4116 = vpack.c.b16 %v3220, %v3212
    %v4117 = vpack.c.b16 %v3221, %v3213
    %v4118 = vpack.c.b16 %v3222, %v3214
    %v4119 = vpack.c.b16 %v3223, %v3215
    %v4120 = vpack.c.b16 %v3224, %v3216
    %v4121 = vpack.c.b16 %v3233, %v3225
    %v4122 = vpack.c.b16 %v3234, %v3226
    %v4123 = vpack.c.b16 %v3235, %v3227
    %v4124 = vpack.c.b16 %v3236, %v3228
    %v4125 = vpack.c.b16 %v3237, %v3229
    %v4126 = vpack.c.b16 %v3238, %v3230
    %v4127 = vpack.c.b16 %v3239, %v3231
    %v4128 = vpack.c.b16 %v3240, %v3232
    %v4129 = vpack.c.b16 %v3249, %v3241
    %v4130 = vpack.c.b16 %v3250, %v3242
    %v4131 = vpack.c.b16 %v3251, %v3243
    %v4132 = vpack.c.b16 %v3252, %v3244
    %v4133 = vpack.c.b16 %v3253, %v3245
    %v4134 = vpack.c.b16 %v3254, %v3246
    %v4135 = vpack.c.b16 %v3255, %v3247
    %v4136 = vpack.c.b16 %v3256, %v3248
    %v4137 = vpack.c.b16 %v3265, %v3257
    %v4138 = vpack.c.b16 %v3266, %v3258
    %v4139 = vpack.c.b16 %v3267, %v3259
    %v4140 = vpack.c.b16 %v3268, %v3260
    %v4141 = vpack.c.b16 %v3269, %v3261
    %v4142 = vpack.c.b16 %v3270, %v3262
    %v4143 = vpack.c.b16 %v3271, %v3263
    %v4144 = vpack.c.b16 %v3272, %v3264
    %v4145 = vpack.c.b16 %v3281, %v3273
    %v4146 = vpack.c.b16 %v3282, %v3274
    %v4147 = vpack.c.b16 %v3283, %v3275
    %v4148 = vpack.c.b16 %v3284, %v3276
    %v4149 = vpack.c.b16 %v3285, %v3277
    %v4150 = vpack.c.b16 %v3286, %v3278
    %v4151 = vpack.c.b16 %v3287, %v3279
    %v4152 = vpack.c.b16 %v3288, %v3280
    %v4153 = vpack.c.b16 %v3297, %v3289
    %v4154 = vpack.c.b16 %v3298, %v3290
    %v4155 = vpack.c.b16 %v3299, %v3291
    %v4156 = vpack.c.b16 %v3300, %v3292
    %v4157 = vpack.c.b16 %v3301, %v3293
    %v4158 = vpack.c.b16 %v3302, %v3294
    %v4159 = vpack.c.b16 %v3303, %v3295
    %v4160 = vpack.c.b16 %v3304, %v3296
    %v4161 = vpack.c.b16 %v3313, %v3305
    %v4162 = vpack.c.b16 %v3314, %v3306
    %v4163 = vpack.c.b16 %v3315, %v3307
    %v4164 = vpack.c.b16 %v3316, %v3308
    %v4165 = vpack.c.b16 %v3317, %v3309
    %v4166 = vpack.c.b16 %v3318, %v3310
    %v4167 = vpack.c.b16 %v3319, %v3311
    %v4168 = vpack.c.b16 %v3320, %v3312
    %v4169 = vpack.c.b16 %v3329, %v3321
    %v4170 = vpack.c.b16 %v3330, %v3322
    %v4171 = vpack.c.b16 %v3331, %v3323
    %v4172 = vpack.c.b16 %v3332, %v3324
    %v4173 = vpack.c.b16 %v3333, %v3325
    %v4174 = vpack.c.b16 %v3334, %v3326
    %v4175 = vpack.c.b16 %v3335, %v3327
    %v4176 = vpack.c.b16 %v3336, %v3328
    %v4177 = vpack.c.b16 %v3345, %v3337
    %v4178 = vpack.c.b16 %v3346, %v3338
    %v4179 = vpack.c.b16 %v3347, %v3339
    %v4180 = vpack.c.b16 %v3348, %v3340
    %v4181 = vpack.c.b16 %v3349, %v3341
    %v4182 = vpack.c.b16 %v3350, %v3342
    %v4183 = vpack.c.b16 %v3351, %v3343
    %v4184 = vpack.c.b16 %v3352, %v3344
    %v4185 = vpack.c.b16 %v3361, %v3353
    %v4186 = vpack.c.b16 %v3362, %v3354
    %v4187 = vpack.c.b16 %v3363, %v3355
    %v4188 = vpack.c.b16 %v3364, %v3356
    %v4189 = vpack.c.b16 %v3365, %v3357
    %v4190 = vpack.c.b16 %v3366, %v3358
    %v4191 = vpack.c.b16 %v3367, %v3359
    %v4192 = vpack.c.b16 %v3368, %v3360
    %v4193 = vpack.c.b16 %v3377, %v3369
    %v4194 = vpack.c.b16 %v3378, %v3370
    %v4195 = vpack.c.b16 %v3379, %v3371
    %v4196 = vpack.c.b16 %v3380, %v3372
    %v4197 = vpack.c.b16 %v3381, %v3373
    %v4198 = vpack.c.b16 %v3382, %v3374
    %v4199 = vpack.c.b16 %v3383, %v3375
    %v4200 = vpack.c.b16 %v3384, %v3376
    %v4201 = vpack.c.b16 %v3393, %v3385
    %v4202 = vpack.c.b16 %v3394, %v3386
    %v4203 = vpack.c.b16 %v3395, %v3387
    %v4204 = vpack.c.b16 %v3396, %v3388
    %v4205 = vpack.c.b16 %v3397, %v3389
    %v4206 = vpack.c.b16 %v3398, %v3390
    %v4207 = vpack.c.b16 %v3399, %v3391
    %v4208 = vpack.c.b16 %v3400, %v3392
    %v4209 = vpack.c.b16 %v3409, %v3401
    %v4210 = vpack.c.b16 %v3410, %v3402
    %v4211 = vpack.c.b16 %v3411, %v3403
    %v4212 = vpack.c.b16 %v3412, %v3404
    %v4213 = vpack.c.b16 %v3413, %v3405
    %v4214 = vpack.c.b16 %v3414, %v3406
    %v4215 = vpack.c.b16 %v3415, %v3407
    %v4216 = vpack.c.b16 %v3416, %v3408
    %v4217 = vpack.c.b16 %v3425, %v3417
    %v4218 = vpack.c.b16 %v3426, %v3418
    %v4219 = vpack.c.b16 %v3427, %v3419
    %v4220 = vpack.c.b16 %v3428, %v3420
    %v4221 = vpack.c.b16 %v3429, %v3421
    %v4222 = vpack.c.b16 %v3430, %v3422
    %v4223 = vpack.c.b16 %v3431, %v3423
    %v4224 = vpack.c.b16 %v3432, %v3424
    %v4225 = vpack.c.b16 %v3441, %v3433
    %v4226 = vpack.c.b16 %v3442, %v3434
    %v4227 = vpack.c.b16 %v3443, %v3435
    %v4228 = vpack.c.b16 %v3444, %v3436
    %v4229 = vpack.c.b16 %v3445, %v3437
    %v4230 = vpack.c.b16 %v3446, %v3438
    %v4231 = vpack.c.b16 %v3447, %v3439
    %v4232 = vpack.c.b16 %v3448, %v3440
    %v4233 = vpack.c.b16 %v3457, %v3449
    %v4234 = vpack.c.b16 %v3458, %v3450
    %v4235 = vpack.c.b16 %v3459, %v3451
    %v4236 = vpack.c.b16 %v3460, %v3452
    %v4237 = vpack.c.b16 %v3461, %v3453
    %v4238 = vpack.c.b16 %v3462, %v3454
    %v4239 = vpack.c.b16 %v3463, %v3455
    %v4240 = vpack.c.b16 %v3464, %v3456
    %v4241 = vpack.c.b16 %v3473, %v3465
    %v4242 = vpack.c.b16 %v3474, %v3466
    %v4243 = vpack.c.b16 %v3475, %v3467
    %v4244 = vpack.c.b16 %v3476, %v3468
    %v4245 = vpack.c.b16 %v3477, %v3469
    %v4246 = vpack.c.b16 %v3478, %v3470
    %v4247 = vpack.c.b16 %v3479, %v3471
    %v4248 = vpack.c.b16 %v3480, %v3472
    %5017 = vmatpush.bf16.msra.mxu0 %v3537
    %5018 = vmatpush.bf16.msra.mxu0 %v3529
    %5019 = vmatpush.bf16.msra.mxu0 %v3521
    %5020 = vmatpush.bf16.msra.mxu0 %v3513
    %5021 = vmatpush.bf16.msra.mxu0 %v3505
    %5022 = vmatpush.bf16.msra.mxu0 %v3497
    %5023 = vmatpush.bf16.msra.mxu0 %v3489
    %5024 = vmatpush.bf16.msra.mxu0 %v3481
    %5025 = vmatmul.bf16.gmra.mxu0 %v1153
    %v5026 = vpop.f32.mrf.mxu0
    %v5027 = vadd.f32 %v1101, %v5026
    %v5028 = vpop.f32.mrf.mxu0
    %v5029 = vadd.f32 %v1101, %v5028
    %5030 = vdwg.mxu0
    %5031 = vmatpush.bf16.msra.mxu0 %v3601
    %5032 = vmatpush.bf16.msra.mxu0 %v3593
    %5033 = vmatpush.bf16.msra.mxu0 %v3585
    %5034 = vmatpush.bf16.msra.mxu0 %v3577
    %5035 = vmatpush.bf16.msra.mxu0 %v3569
    %5036 = vmatpush.bf16.msra.mxu0 %v3561
    %5037 = vmatpush.bf16.msra.mxu0 %v3553
    %5038 = vmatpush.bf16.msra.mxu0 %v3545
    %5039 = vmatmul.bf16.gmra.mxu0 %v1154
    %v5040 = vpop.f32.mrf.mxu0
    %v5041 = vadd.f32 %v5027, %v5040
    %v5042 = vpop.f32.mrf.mxu0
    %v5043 = vadd.f32 %v5029, %v5042
    %5044 = vdwg.mxu0
    %5045 = vmatpush.bf16.msra.mxu0 %v3665
    %5046 = vmatpush.bf16.msra.mxu0 %v3657
    %5047 = vmatpush.bf16.msra.mxu0 %v3649
    %5048 = vmatpush.bf16.msra.mxu0 %v3641
    %5049 = vmatpush.bf16.msra.mxu0 %v3633
    %5050 = vmatpush.bf16.msra.mxu0 %v3625
    %5051 = vmatpush.bf16.msra.mxu0 %v3617
    %5052 = vmatpush.bf16.msra.mxu0 %v3609
    %5053 = vmatmul.bf16.gmra.mxu0 %v1155
    %v5054 = vpop.f32.mrf.mxu0
    %v5055 = vadd.f32 %v5041, %v5054
    %v5056 = vpop.f32.mrf.mxu0
    %v5057 = vadd.f32 %v5043, %v5056
    %5058 = vdwg.mxu0
    %5059 = vmatpush.bf16.msra.mxu0 %v3729
    %5060 = vmatpush.bf16.msra.mxu0 %v3721
    %5061 = vmatpush.bf16.msra.mxu0 %v3713
    %5062 = vmatpush.bf16.msra.mxu0 %v3705
    %5063 = vmatpush.bf16.msra.mxu0 %v3697
    %5064 = vmatpush.bf16.msra.mxu0 %v3689
    %5065 = vmatpush.bf16.msra.mxu0 %v3681
    %5066 = vmatpush.bf16.msra.mxu0 %v3673
    %5067 = vmatmul.bf16.gmra.mxu0 %v1156
    %v5068 = vpop.f32.mrf.mxu0
    %v5069 = vadd.f32 %v5055, %v5068
    %v5070 = vpop.f32.mrf.mxu0
    %v5071 = vadd.f32 %v5057, %v5070
    %5072 = vdwg.mxu0
    %5073 = vmatpush.bf16.msra.mxu0 %v3793
    %5074 = vmatpush.bf16.msra.mxu0 %v3785
    %5075 = vmatpush.bf16.msra.mxu0 %v3777
    %5076 = vmatpush.bf16.msra.mxu0 %v3769
    %5077 = vmatpush.bf16.msra.mxu0 %v3761
    %5078 = vmatpush.bf16.msra.mxu0 %v3753
    %5079 = vmatpush.bf16.msra.mxu0 %v3745
    %5080 = vmatpush.bf16.msra.mxu0 %v3737
    %5081 = vmatmul.bf16.gmra.mxu0 %v1157
    %v5082 = vpop.f32.mrf.mxu0
    %v5083 = vadd.f32 %v5069, %v5082
    %v5084 = vpop.f32.mrf.mxu0
    %v5085 = vadd.f32 %v5071, %v5084
    %5086 = vdwg.mxu0
    %5087 = vmatpush.bf16.msra.mxu0 %v3857
    %5088 = vmatpush.bf16.msra.mxu0 %v3849
    %5089 = vmatpush.bf16.msra.mxu0 %v3841
    %5090 = vmatpush.bf16.msra.mxu0 %v3833
    %5091 = vmatpush.bf16.msra.mxu0 %v3825
    %5092 = vmatpush.bf16.msra.mxu0 %v3817
    %5093 = vmatpush.bf16.msra.mxu0 %v3809
    %5094 = vmatpush.bf16.msra.mxu0 %v3801
    %5095 = vmatmul.bf16.gmra.mxu0 %v1158
    %v5096 = vpop.f32.mrf.mxu0
    %v5097 = vadd.f32 %v5083, %v5096
    %v5098 = vpop.f32.mrf.mxu0
    %v5099 = vadd.f32 %v5085, %v5098
    %5100 = vdwg.mxu0
    %5101 = vmatpush.bf16.msra.mxu0 %v3921
    %5102 = vmatpush.bf16.msra.mxu0 %v3913
    %5103 = vmatpush.bf16.msra.mxu0 %v3905
    %5104 = vmatpush.bf16.msra.mxu0 %v3897
    %5105 = vmatpush.bf16.msra.mxu0 %v3889
    %5106 = vmatpush.bf16.msra.mxu0 %v3881
    %5107 = vmatpush.bf16.msra.mxu0 %v3873
    %5108 = vmatpush.bf16.msra.mxu0 %v3865
    %5109 = vmatmul.bf16.gmra.mxu0 %v1159
    %v5110 = vpop.f32.mrf.mxu0
    %v5111 = vadd.f32 %v5097, %v5110
    %v5112 = vpop.f32.mrf.mxu0
    %v5113 = vadd.f32 %v5099, %v5112
    %5114 = vdwg.mxu0
    %5115 = vmatpush.bf16.msra.mxu0 %v3985
    %5116 = vmatpush.bf16.msra.mxu0 %v3977
    %5117 = vmatpush.bf16.msra.mxu0 %v3969
    %5118 = vmatpush.bf16.msra.mxu0 %v3961
    %5119 = vmatpush.bf16.msra.mxu0 %v3953
    %5120 = vmatpush.bf16.msra.mxu0 %v3945
    %5121 = vmatpush.bf16.msra.mxu0 %v3937
    %5122 = vmatpush.bf16.msra.mxu0 %v3929
    %5123 = vmatmul.bf16.gmra.mxu0 %v1160
    %v5124 = vpop.f32.mrf.mxu0
    %v5125 = vadd.f32 %v5111, %v5124
    %v5126 = vpop.f32.mrf.mxu0
    %v5127 = vadd.f32 %v5113, %v5126
    %5128 = vdwg.mxu0
    %5129 = vmatpush.bf16.msra.mxu0 %v4049
    %5130 = vmatpush.bf16.msra.mxu0 %v4041
    %5131 = vmatpush.bf16.msra.mxu0 %v4033
    %5132 = vmatpush.bf16.msra.mxu0 %v4025
    %5133 = vmatpush.bf16.msra.mxu0 %v4017
    %5134 = vmatpush.bf16.msra.mxu0 %v4009
    %5135 = vmatpush.bf16.msra.mxu0 %v4001
    %5136 = vmatpush.bf16.msra.mxu0 %v3993
    %5137 = vmatmul.bf16.gmra.mxu0 %v1161
    %v5138 = vpop.f32.mrf.mxu0
    %v5139 = vadd.f32 %v5125, %v5138
    %v5140 = vpop.f32.mrf.mxu0
    %v5141 = vadd.f32 %v5127, %v5140
    %5142 = vdwg.mxu0
    %5143 = vmatpush.bf16.msra.mxu0 %v4113
    %5144 = vmatpush.bf16.msra.mxu0 %v4105
    %5145 = vmatpush.bf16.msra.mxu0 %v4097
    %5146 = vmatpush.bf16.msra.mxu0 %v4089
    %5147 = vmatpush.bf16.msra.mxu0 %v4081
    %5148 = vmatpush.bf16.msra.mxu0 %v4073
    %5149 = vmatpush.bf16.msra.mxu0 %v4065
    %5150 = vmatpush.bf16.msra.mxu0 %v4057
    %5151 = vmatmul.bf16.gmra.mxu0 %v1162
    %v5152 = vpop.f32.mrf.mxu0
    %v5153 = vadd.f32 %v5139, %v5152
    %v5154 = vpop.f32.mrf.mxu0
    %v5155 = vadd.f32 %v5141, %v5154
    %5156 = vdwg.mxu0
    %5157 = vmatpush.bf16.msra.mxu0 %v4177
    %5158 = vmatpush.bf16.msra.mxu0 %v4169
    %5159 = vmatpush.bf16.msra.mxu0 %v4161
    %5160 = vmatpush.bf16.msra.mxu0 %v4153
    %5161 = vmatpush.bf16.msra.mxu0 %v4145
    %5162 = vmatpush.bf16.msra.mxu0 %v4137
    %5163 = vmatpush.bf16.msra.mxu0 %v4129
    %5164 = vmatpush.bf16.msra.mxu0 %v4121
    %5165 = vmatmul.bf16.gmra.mxu0 %v1163
    %v5166 = vpop.f32.mrf.mxu0
    %v5167 = vadd.f32 %v5153, %v5166
    %v5168 = vpop.f32.mrf.mxu0
    %v5169 = vadd.f32 %v5155, %v5168
    %5170 = vdwg.mxu0
    %5171 = vmatpush.bf16.msra.mxu0 %v4241
    %5172 = vmatpush.bf16.msra.mxu0 %v4233
    %5173 = vmatpush.bf16.msra.mxu0 %v4225
    %5174 = vmatpush.bf16.msra.mxu0 %v4217
    %5175 = vmatpush.bf16.msra.mxu0 %v4209
    %5176 = vmatpush.bf16.msra.mxu0 %v4201
    %5177 = vmatpush.bf16.msra.mxu0 %v4193
    %5178 = vmatpush.bf16.msra.mxu0 %v4185
    %5179 = vmatmul.bf16.gmra.mxu0 %v1164
    %v5180 = vpop.f32.mrf.mxu0
    %v5181 = vadd.f32 %v5167, %v5180
    %v5182 = vpop.f32.mrf.mxu0
    %v5183 = vadd.f32 %v5169, %v5182
    %5184 = vdwg.mxu0
    %5185 = vmatpush.bf16.msra.mxu0 %v3538
    %5186 = vmatpush.bf16.msra.mxu0 %v3530
    %5187 = vmatpush.bf16.msra.mxu0 %v3522
    %5188 = vmatpush.bf16.msra.mxu0 %v3514
    %5189 = vmatpush.bf16.msra.mxu0 %v3506
    %5190 = vmatpush.bf16.msra.mxu0 %v3498
    %5191 = vmatpush.bf16.msra.mxu0 %v3490
    %5192 = vmatpush.bf16.msra.mxu0 %v3482
    %5193 = vmatmul.bf16.gmra.mxu0 %v1153
    %v5194 = vpop.f32.mrf.mxu0
    %v5195 = vadd.f32 %v1102, %v5194
    %v5196 = vpop.f32.mrf.mxu0
    %v5197 = vadd.f32 %v1102, %v5196
    %5198 = vdwg.mxu0
    %5199 = vmatpush.bf16.msra.mxu0 %v3602
    %5200 = vmatpush.bf16.msra.mxu0 %v3594
    %5201 = vmatpush.bf16.msra.mxu0 %v3586
    %5202 = vmatpush.bf16.msra.mxu0 %v3578
    %5203 = vmatpush.bf16.msra.mxu0 %v3570
    %5204 = vmatpush.bf16.msra.mxu0 %v3562
    %5205 = vmatpush.bf16.msra.mxu0 %v3554
    %5206 = vmatpush.bf16.msra.mxu0 %v3546
    %5207 = vmatmul.bf16.gmra.mxu0 %v1154
    %v5208 = vpop.f32.mrf.mxu0
    %v5209 = vadd.f32 %v5195, %v5208
    %v5210 = vpop.f32.mrf.mxu0
    %v5211 = vadd.f32 %v5197, %v5210
    %5212 = vdwg.mxu0
    %5213 = vmatpush.bf16.msra.mxu0 %v3666
    %5214 = vmatpush.bf16.msra.mxu0 %v3658
    %5215 = vmatpush.bf16.msra.mxu0 %v3650
    %5216 = vmatpush.bf16.msra.mxu0 %v3642
    %5217 = vmatpush.bf16.msra.mxu0 %v3634
    %5218 = vmatpush.bf16.msra.mxu0 %v3626
    %5219 = vmatpush.bf16.msra.mxu0 %v3618
    %5220 = vmatpush.bf16.msra.mxu0 %v3610
    %5221 = vmatmul.bf16.gmra.mxu0 %v1155
    %v5222 = vpop.f32.mrf.mxu0
    %v5223 = vadd.f32 %v5209, %v5222
    %v5224 = vpop.f32.mrf.mxu0
    %v5225 = vadd.f32 %v5211, %v5224
    %5226 = vdwg.mxu0
    %5227 = vmatpush.bf16.msra.mxu0 %v3730
    %5228 = vmatpush.bf16.msra.mxu0 %v3722
    %5229 = vmatpush.bf16.msra.mxu0 %v3714
    %5230 = vmatpush.bf16.msra.mxu0 %v3706
    %5231 = vmatpush.bf16.msra.mxu0 %v3698
    %5232 = vmatpush.bf16.msra.mxu0 %v3690
    %5233 = vmatpush.bf16.msra.mxu0 %v3682
    %5234 = vmatpush.bf16.msra.mxu0 %v3674
    %5235 = vmatmul.bf16.gmra.mxu0 %v1156
    %v5236 = vpop.f32.mrf.mxu0
    %v5237 = vadd.f32 %v5223, %v5236
    %v5238 = vpop.f32.mrf.mxu0
    %v5239 = vadd.f32 %v5225, %v5238
    %5240 = vdwg.mxu0
    %5241 = vmatpush.bf16.msra.mxu0 %v3794
    %5242 = vmatpush.bf16.msra.mxu0 %v3786
    %5243 = vmatpush.bf16.msra.mxu0 %v3778
    %5244 = vmatpush.bf16.msra.mxu0 %v3770
    %5245 = vmatpush.bf16.msra.mxu0 %v3762
    %5246 = vmatpush.bf16.msra.mxu0 %v3754
    %5247 = vmatpush.bf16.msra.mxu0 %v3746
    %5248 = vmatpush.bf16.msra.mxu0 %v3738
    %5249 = vmatmul.bf16.gmra.mxu0 %v1157
    %v5250 = vpop.f32.mrf.mxu0
    %v5251 = vadd.f32 %v5237, %v5250
    %v5252 = vpop.f32.mrf.mxu0
    %v5253 = vadd.f32 %v5239, %v5252
    %5254 = vdwg.mxu0
    %5255 = vmatpush.bf16.msra.mxu0 %v3858
    %5256 = vmatpush.bf16.msra.mxu0 %v3850
    %5257 = vmatpush.bf16.msra.mxu0 %v3842
    %5258 = vmatpush.bf16.msra.mxu0 %v3834
    %5259 = vmatpush.bf16.msra.mxu0 %v3826
    %5260 = vmatpush.bf16.msra.mxu0 %v3818
    %5261 = vmatpush.bf16.msra.mxu0 %v3810
    %5262 = vmatpush.bf16.msra.mxu0 %v3802
    %5263 = vmatmul.bf16.gmra.mxu0 %v1158
    %v5264 = vpop.f32.mrf.mxu0
    %v5265 = vadd.f32 %v5251, %v5264
    %v5266 = vpop.f32.mrf.mxu0
    %v5267 = vadd.f32 %v5253, %v5266
    %5268 = vdwg.mxu0
    %5269 = vmatpush.bf16.msra.mxu0 %v3922
    %5270 = vmatpush.bf16.msra.mxu0 %v3914
    %5271 = vmatpush.bf16.msra.mxu0 %v3906
    %5272 = vmatpush.bf16.msra.mxu0 %v3898
    %5273 = vmatpush.bf16.msra.mxu0 %v3890
    %5274 = vmatpush.bf16.msra.mxu0 %v3882
    %5275 = vmatpush.bf16.msra.mxu0 %v3874
    %5276 = vmatpush.bf16.msra.mxu0 %v3866
    %5277 = vmatmul.bf16.gmra.mxu0 %v1159
    %v5278 = vpop.f32.mrf.mxu0
    %v5279 = vadd.f32 %v5265, %v5278
    %v5280 = vpop.f32.mrf.mxu0
    %v5281 = vadd.f32 %v5267, %v5280
    %5282 = vdwg.mxu0
    %5283 = vmatpush.bf16.msra.mxu0 %v3986
    %5284 = vmatpush.bf16.msra.mxu0 %v3978
    %5285 = vmatpush.bf16.msra.mxu0 %v3970
    %5286 = vmatpush.bf16.msra.mxu0 %v3962
    %5287 = vmatpush.bf16.msra.mxu0 %v3954
    %5288 = vmatpush.bf16.msra.mxu0 %v3946
    %5289 = vmatpush.bf16.msra.mxu0 %v3938
    %5290 = vmatpush.bf16.msra.mxu0 %v3930
    %5291 = vmatmul.bf16.gmra.mxu0 %v1160
    %v5292 = vpop.f32.mrf.mxu0
    %v5293 = vadd.f32 %v5279, %v5292
    %v5294 = vpop.f32.mrf.mxu0
    %v5295 = vadd.f32 %v5281, %v5294
    %5296 = vdwg.mxu0
    %5297 = vmatpush.bf16.msra.mxu0 %v4050
    %5298 = vmatpush.bf16.msra.mxu0 %v4042
    %5299 = vmatpush.bf16.msra.mxu0 %v4034
    %5300 = vmatpush.bf16.msra.mxu0 %v4026
    %5301 = vmatpush.bf16.msra.mxu0 %v4018
    %5302 = vmatpush.bf16.msra.mxu0 %v4010
    %5303 = vmatpush.bf16.msra.mxu0 %v4002
    %5304 = vmatpush.bf16.msra.mxu0 %v3994
    %5305 = vmatmul.bf16.gmra.mxu0 %v1161
    %v5306 = vpop.f32.mrf.mxu0
    %v5307 = vadd.f32 %v5293, %v5306
    %v5308 = vpop.f32.mrf.mxu0
    %v5309 = vadd.f32 %v5295, %v5308
    %5310 = vdwg.mxu0
    %5311 = vmatpush.bf16.msra.mxu0 %v4114
    %5312 = vmatpush.bf16.msra.mxu0 %v4106
    %5313 = vmatpush.bf16.msra.mxu0 %v4098
    %5314 = vmatpush.bf16.msra.mxu0 %v4090
    %5315 = vmatpush.bf16.msra.mxu0 %v4082
    %5316 = vmatpush.bf16.msra.mxu0 %v4074
    %5317 = vmatpush.bf16.msra.mxu0 %v4066
    %5318 = vmatpush.bf16.msra.mxu0 %v4058
    %5319 = vmatmul.bf16.gmra.mxu0 %v1162
    %v5320 = vpop.f32.mrf.mxu0
    %v5321 = vadd.f32 %v5307, %v5320
    %v5322 = vpop.f32.mrf.mxu0
    %v5323 = vadd.f32 %v5309, %v5322
    %5324 = vdwg.mxu0
    %5325 = vmatpush.bf16.msra.mxu0 %v4178
    %5326 = vmatpush.bf16.msra.mxu0 %v4170
    %5327 = vmatpush.bf16.msra.mxu0 %v4162
    %5328 = vmatpush.bf16.msra.mxu0 %v4154
    %5329 = vmatpush.bf16.msra.mxu0 %v4146
    %5330 = vmatpush.bf16.msra.mxu0 %v4138
    %5331 = vmatpush.bf16.msra.mxu0 %v4130
    %5332 = vmatpush.bf16.msra.mxu0 %v4122
    %5333 = vmatmul.bf16.gmra.mxu0 %v1163
    %v5334 = vpop.f32.mrf.mxu0
    %v5335 = vadd.f32 %v5321, %v5334
    %v5336 = vpop.f32.mrf.mxu0
    %v5337 = vadd.f32 %v5323, %v5336
    %5338 = vdwg.mxu0
    %5339 = vmatpush.bf16.msra.mxu0 %v4242
    %5340 = vmatpush.bf16.msra.mxu0 %v4234
    %5341 = vmatpush.bf16.msra.mxu0 %v4226
    %5342 = vmatpush.bf16.msra.mxu0 %v4218
    %5343 = vmatpush.bf16.msra.mxu0 %v4210
    %5344 = vmatpush.bf16.msra.mxu0 %v4202
    %5345 = vmatpush.bf16.msra.mxu0 %v4194
    %5346 = vmatpush.bf16.msra.mxu0 %v4186
    %5347 = vmatmul.bf16.gmra.mxu0 %v1164
    %v5348 = vpop.f32.mrf.mxu0
    %v5349 = vadd.f32 %v5335, %v5348
    %v5350 = vpop.f32.mrf.mxu0
    %v5351 = vadd.f32 %v5337, %v5350
    %5352 = vdwg.mxu0
    %5353 = vmatpush.bf16.msra.mxu0 %v3539
    %5354 = vmatpush.bf16.msra.mxu0 %v3531
    %5355 = vmatpush.bf16.msra.mxu0 %v3523
    %5356 = vmatpush.bf16.msra.mxu0 %v3515
    %5357 = vmatpush.bf16.msra.mxu0 %v3507
    %5358 = vmatpush.bf16.msra.mxu0 %v3499
    %5359 = vmatpush.bf16.msra.mxu0 %v3491
    %5360 = vmatpush.bf16.msra.mxu0 %v3483
    %5361 = vmatmul.bf16.gmra.mxu0 %v1153
    %v5362 = vpop.f32.mrf.mxu0
    %v5363 = vadd.f32 %v1103, %v5362
    %v5364 = vpop.f32.mrf.mxu0
    %v5365 = vadd.f32 %v1103, %v5364
    %5366 = vdwg.mxu0
    %5367 = vmatpush.bf16.msra.mxu0 %v3603
    %5368 = vmatpush.bf16.msra.mxu0 %v3595
    %5369 = vmatpush.bf16.msra.mxu0 %v3587
    %5370 = vmatpush.bf16.msra.mxu0 %v3579
    %5371 = vmatpush.bf16.msra.mxu0 %v3571
    %5372 = vmatpush.bf16.msra.mxu0 %v3563
    %5373 = vmatpush.bf16.msra.mxu0 %v3555
    %5374 = vmatpush.bf16.msra.mxu0 %v3547
    %5375 = vmatmul.bf16.gmra.mxu0 %v1154
    %v5376 = vpop.f32.mrf.mxu0
    %v5377 = vadd.f32 %v5363, %v5376
    %v5378 = vpop.f32.mrf.mxu0
    %v5379 = vadd.f32 %v5365, %v5378
    %5380 = vdwg.mxu0
    %5381 = vmatpush.bf16.msra.mxu0 %v3667
    %5382 = vmatpush.bf16.msra.mxu0 %v3659
    %5383 = vmatpush.bf16.msra.mxu0 %v3651
    %5384 = vmatpush.bf16.msra.mxu0 %v3643
    %5385 = vmatpush.bf16.msra.mxu0 %v3635
    %5386 = vmatpush.bf16.msra.mxu0 %v3627
    %5387 = vmatpush.bf16.msra.mxu0 %v3619
    %5388 = vmatpush.bf16.msra.mxu0 %v3611
    %5389 = vmatmul.bf16.gmra.mxu0 %v1155
    %v5390 = vpop.f32.mrf.mxu0
    %v5391 = vadd.f32 %v5377, %v5390
    %v5392 = vpop.f32.mrf.mxu0
    %v5393 = vadd.f32 %v5379, %v5392
    %5394 = vdwg.mxu0
    %5395 = vmatpush.bf16.msra.mxu0 %v3731
    %5396 = vmatpush.bf16.msra.mxu0 %v3723
    %5397 = vmatpush.bf16.msra.mxu0 %v3715
    %5398 = vmatpush.bf16.msra.mxu0 %v3707
    %5399 = vmatpush.bf16.msra.mxu0 %v3699
    %5400 = vmatpush.bf16.msra.mxu0 %v3691
    %5401 = vmatpush.bf16.msra.mxu0 %v3683
    %5402 = vmatpush.bf16.msra.mxu0 %v3675
    %5403 = vmatmul.bf16.gmra.mxu0 %v1156
    %v5404 = vpop.f32.mrf.mxu0
    %v5405 = vadd.f32 %v5391, %v5404
    %v5406 = vpop.f32.mrf.mxu0
    %v5407 = vadd.f32 %v5393, %v5406
    %5408 = vdwg.mxu0
    %5409 = vmatpush.bf16.msra.mxu0 %v3795
    %5410 = vmatpush.bf16.msra.mxu0 %v3787
    %5411 = vmatpush.bf16.msra.mxu0 %v3779
    %5412 = vmatpush.bf16.msra.mxu0 %v3771
    %5413 = vmatpush.bf16.msra.mxu0 %v3763
    %5414 = vmatpush.bf16.msra.mxu0 %v3755
    %5415 = vmatpush.bf16.msra.mxu0 %v3747
    %5416 = vmatpush.bf16.msra.mxu0 %v3739
    %5417 = vmatmul.bf16.gmra.mxu0 %v1157
    %v5418 = vpop.f32.mrf.mxu0
    %v5419 = vadd.f32 %v5405, %v5418
    %v5420 = vpop.f32.mrf.mxu0
    %v5421 = vadd.f32 %v5407, %v5420
    %5422 = vdwg.mxu0
    %5423 = vmatpush.bf16.msra.mxu0 %v3859
    %5424 = vmatpush.bf16.msra.mxu0 %v3851
    %5425 = vmatpush.bf16.msra.mxu0 %v3843
    %5426 = vmatpush.bf16.msra.mxu0 %v3835
    %5427 = vmatpush.bf16.msra.mxu0 %v3827
    %5428 = vmatpush.bf16.msra.mxu0 %v3819
    %5429 = vmatpush.bf16.msra.mxu0 %v3811
    %5430 = vmatpush.bf16.msra.mxu0 %v3803
    %5431 = vmatmul.bf16.gmra.mxu0 %v1158
    %v5432 = vpop.f32.mrf.mxu0
    %v5433 = vadd.f32 %v5419, %v5432
    %v5434 = vpop.f32.mrf.mxu0
    %v5435 = vadd.f32 %v5421, %v5434
    %5436 = vdwg.mxu0
    %5437 = vmatpush.bf16.msra.mxu0 %v3923
    %5438 = vmatpush.bf16.msra.mxu0 %v3915
    %5439 = vmatpush.bf16.msra.mxu0 %v3907
    %5440 = vmatpush.bf16.msra.mxu0 %v3899
    %5441 = vmatpush.bf16.msra.mxu0 %v3891
    %5442 = vmatpush.bf16.msra.mxu0 %v3883
    %5443 = vmatpush.bf16.msra.mxu0 %v3875
    %5444 = vmatpush.bf16.msra.mxu0 %v3867
    %5445 = vmatmul.bf16.gmra.mxu0 %v1159
    %v5446 = vpop.f32.mrf.mxu0
    %v5447 = vadd.f32 %v5433, %v5446
    %v5448 = vpop.f32.mrf.mxu0
    %v5449 = vadd.f32 %v5435, %v5448
    %5450 = vdwg.mxu0
    %5451 = vmatpush.bf16.msra.mxu0 %v3987
    %5452 = vmatpush.bf16.msra.mxu0 %v3979
    %5453 = vmatpush.bf16.msra.mxu0 %v3971
    %5454 = vmatpush.bf16.msra.mxu0 %v3963
    %5455 = vmatpush.bf16.msra.mxu0 %v3955
    %5456 = vmatpush.bf16.msra.mxu0 %v3947
    %5457 = vmatpush.bf16.msra.mxu0 %v3939
    %5458 = vmatpush.bf16.msra.mxu0 %v3931
    %5459 = vmatmul.bf16.gmra.mxu0 %v1160
    %v5460 = vpop.f32.mrf.mxu0
    %v5461 = vadd.f32 %v5447, %v5460
    %v5462 = vpop.f32.mrf.mxu0
    %v5463 = vadd.f32 %v5449, %v5462
    %5464 = vdwg.mxu0
    %5465 = vmatpush.bf16.msra.mxu0 %v4051
    %5466 = vmatpush.bf16.msra.mxu0 %v4043
    %5467 = vmatpush.bf16.msra.mxu0 %v4035
    %5468 = vmatpush.bf16.msra.mxu0 %v4027
    %5469 = vmatpush.bf16.msra.mxu0 %v4019
    %5470 = vmatpush.bf16.msra.mxu0 %v4011
    %5471 = vmatpush.bf16.msra.mxu0 %v4003
    %5472 = vmatpush.bf16.msra.mxu0 %v3995
    %5473 = vmatmul.bf16.gmra.mxu0 %v1161
    %v5474 = vpop.f32.mrf.mxu0
    %v5475 = vadd.f32 %v5461, %v5474
    %v5476 = vpop.f32.mrf.mxu0
    %v5477 = vadd.f32 %v5463, %v5476
    %5478 = vdwg.mxu0
    %5479 = vmatpush.bf16.msra.mxu0 %v4115
    %5480 = vmatpush.bf16.msra.mxu0 %v4107
    %5481 = vmatpush.bf16.msra.mxu0 %v4099
    %5482 = vmatpush.bf16.msra.mxu0 %v4091
    %5483 = vmatpush.bf16.msra.mxu0 %v4083
    %5484 = vmatpush.bf16.msra.mxu0 %v4075
    %5485 = vmatpush.bf16.msra.mxu0 %v4067
    %5486 = vmatpush.bf16.msra.mxu0 %v4059
    %5487 = vmatmul.bf16.gmra.mxu0 %v1162
    %v5488 = vpop.f32.mrf.mxu0
    %v5489 = vadd.f32 %v5475, %v5488
    %v5490 = vpop.f32.mrf.mxu0
    %v5491 = vadd.f32 %v5477, %v5490
    %5492 = vdwg.mxu0
    %5493 = vmatpush.bf16.msra.mxu0 %v4179
    %5494 = vmatpush.bf16.msra.mxu0 %v4171
    %5495 = vmatpush.bf16.msra.mxu0 %v4163
    %5496 = vmatpush.bf16.msra.mxu0 %v4155
    %5497 = vmatpush.bf16.msra.mxu0 %v4147
    %5498 = vmatpush.bf16.msra.mxu0 %v4139
    %5499 = vmatpush.bf16.msra.mxu0 %v4131
    %5500 = vmatpush.bf16.msra.mxu0 %v4123
    %5501 = vmatmul.bf16.gmra.mxu0 %v1163
    %v5502 = vpop.f32.mrf.mxu0
    %v5503 = vadd.f32 %v5489, %v5502
    %v5504 = vpop.f32.mrf.mxu0
    %v5505 = vadd.f32 %v5491, %v5504
    %5506 = vdwg.mxu0
    %5507 = vmatpush.bf16.msra.mxu0 %v4243
    %5508 = vmatpush.bf16.msra.mxu0 %v4235
    %5509 = vmatpush.bf16.msra.mxu0 %v4227
    %5510 = vmatpush.bf16.msra.mxu0 %v4219
    %5511 = vmatpush.bf16.msra.mxu0 %v4211
    %5512 = vmatpush.bf16.msra.mxu0 %v4203
    %5513 = vmatpush.bf16.msra.mxu0 %v4195
    %5514 = vmatpush.bf16.msra.mxu0 %v4187
    %5515 = vmatmul.bf16.gmra.mxu0 %v1164
    %v5516 = vpop.f32.mrf.mxu0
    %v5517 = vadd.f32 %v5503, %v5516
    %v5518 = vpop.f32.mrf.mxu0
    %v5519 = vadd.f32 %v5505, %v5518
    %5520 = vdwg.mxu0
    %5521 = vmatpush.bf16.msra.mxu0 %v3540
    %5522 = vmatpush.bf16.msra.mxu0 %v3532
    %5523 = vmatpush.bf16.msra.mxu0 %v3524
    %5524 = vmatpush.bf16.msra.mxu0 %v3516
    %5525 = vmatpush.bf16.msra.mxu0 %v3508
    %5526 = vmatpush.bf16.msra.mxu0 %v3500
    %5527 = vmatpush.bf16.msra.mxu0 %v3492
    %5528 = vmatpush.bf16.msra.mxu0 %v3484
    %5529 = vmatmul.bf16.gmra.mxu0 %v1153
    %v5530 = vpop.f32.mrf.mxu0
    %v5531 = vadd.f32 %v1104, %v5530
    %v5532 = vpop.f32.mrf.mxu0
    %v5533 = vadd.f32 %v1104, %v5532
    %5534 = vdwg.mxu0
    %5535 = vmatpush.bf16.msra.mxu0 %v3604
    %5536 = vmatpush.bf16.msra.mxu0 %v3596
    %5537 = vmatpush.bf16.msra.mxu0 %v3588
    %5538 = vmatpush.bf16.msra.mxu0 %v3580
    %5539 = vmatpush.bf16.msra.mxu0 %v3572
    %5540 = vmatpush.bf16.msra.mxu0 %v3564
    %5541 = vmatpush.bf16.msra.mxu0 %v3556
    %5542 = vmatpush.bf16.msra.mxu0 %v3548
    %5543 = vmatmul.bf16.gmra.mxu0 %v1154
    %v5544 = vpop.f32.mrf.mxu0
    %v5545 = vadd.f32 %v5531, %v5544
    %v5546 = vpop.f32.mrf.mxu0
    %v5547 = vadd.f32 %v5533, %v5546
    %5548 = vdwg.mxu0
    %5549 = vmatpush.bf16.msra.mxu0 %v3668
    %5550 = vmatpush.bf16.msra.mxu0 %v3660
    %5551 = vmatpush.bf16.msra.mxu0 %v3652
    %5552 = vmatpush.bf16.msra.mxu0 %v3644
    %5553 = vmatpush.bf16.msra.mxu0 %v3636
    %5554 = vmatpush.bf16.msra.mxu0 %v3628
    %5555 = vmatpush.bf16.msra.mxu0 %v3620
    %5556 = vmatpush.bf16.msra.mxu0 %v3612
    %5557 = vmatmul.bf16.gmra.mxu0 %v1155
    %v5558 = vpop.f32.mrf.mxu0
    %v5559 = vadd.f32 %v5545, %v5558
    %v5560 = vpop.f32.mrf.mxu0
    %v5561 = vadd.f32 %v5547, %v5560
    %5562 = vdwg.mxu0
    %5563 = vmatpush.bf16.msra.mxu0 %v3732
    %5564 = vmatpush.bf16.msra.mxu0 %v3724
    %5565 = vmatpush.bf16.msra.mxu0 %v3716
    %5566 = vmatpush.bf16.msra.mxu0 %v3708
    %5567 = vmatpush.bf16.msra.mxu0 %v3700
    %5568 = vmatpush.bf16.msra.mxu0 %v3692
    %5569 = vmatpush.bf16.msra.mxu0 %v3684
    %5570 = vmatpush.bf16.msra.mxu0 %v3676
    %5571 = vmatmul.bf16.gmra.mxu0 %v1156
    %v5572 = vpop.f32.mrf.mxu0
    %v5573 = vadd.f32 %v5559, %v5572
    %v5574 = vpop.f32.mrf.mxu0
    %v5575 = vadd.f32 %v5561, %v5574
    %5576 = vdwg.mxu0
    %5577 = vmatpush.bf16.msra.mxu0 %v3796
    %5578 = vmatpush.bf16.msra.mxu0 %v3788
    %5579 = vmatpush.bf16.msra.mxu0 %v3780
    %5580 = vmatpush.bf16.msra.mxu0 %v3772
    %5581 = vmatpush.bf16.msra.mxu0 %v3764
    %5582 = vmatpush.bf16.msra.mxu0 %v3756
    %5583 = vmatpush.bf16.msra.mxu0 %v3748
    %5584 = vmatpush.bf16.msra.mxu0 %v3740
    %5585 = vmatmul.bf16.gmra.mxu0 %v1157
    %v5586 = vpop.f32.mrf.mxu0
    %v5587 = vadd.f32 %v5573, %v5586
    %v5588 = vpop.f32.mrf.mxu0
    %v5589 = vadd.f32 %v5575, %v5588
    %5590 = vdwg.mxu0
    %5591 = vmatpush.bf16.msra.mxu0 %v3860
    %5592 = vmatpush.bf16.msra.mxu0 %v3852
    %5593 = vmatpush.bf16.msra.mxu0 %v3844
    %5594 = vmatpush.bf16.msra.mxu0 %v3836
    %5595 = vmatpush.bf16.msra.mxu0 %v3828
    %5596 = vmatpush.bf16.msra.mxu0 %v3820
    %5597 = vmatpush.bf16.msra.mxu0 %v3812
    %5598 = vmatpush.bf16.msra.mxu0 %v3804
    %5599 = vmatmul.bf16.gmra.mxu0 %v1158
    %v5600 = vpop.f32.mrf.mxu0
    %v5601 = vadd.f32 %v5587, %v5600
    %v5602 = vpop.f32.mrf.mxu0
    %v5603 = vadd.f32 %v5589, %v5602
    %5604 = vdwg.mxu0
    %5605 = vmatpush.bf16.msra.mxu0 %v3924
    %5606 = vmatpush.bf16.msra.mxu0 %v3916
    %5607 = vmatpush.bf16.msra.mxu0 %v3908
    %5608 = vmatpush.bf16.msra.mxu0 %v3900
    %5609 = vmatpush.bf16.msra.mxu0 %v3892
    %5610 = vmatpush.bf16.msra.mxu0 %v3884
    %5611 = vmatpush.bf16.msra.mxu0 %v3876
    %5612 = vmatpush.bf16.msra.mxu0 %v3868
    %5613 = vmatmul.bf16.gmra.mxu0 %v1159
    %v5614 = vpop.f32.mrf.mxu0
    %v5615 = vadd.f32 %v5601, %v5614
    %v5616 = vpop.f32.mrf.mxu0
    %v5617 = vadd.f32 %v5603, %v5616
    %5618 = vdwg.mxu0
    %5619 = vmatpush.bf16.msra.mxu0 %v3988
    %5620 = vmatpush.bf16.msra.mxu0 %v3980
    %5621 = vmatpush.bf16.msra.mxu0 %v3972
    %5622 = vmatpush.bf16.msra.mxu0 %v3964
    %5623 = vmatpush.bf16.msra.mxu0 %v3956
    %5624 = vmatpush.bf16.msra.mxu0 %v3948
    %5625 = vmatpush.bf16.msra.mxu0 %v3940
    %5626 = vmatpush.bf16.msra.mxu0 %v3932
    %5627 = vmatmul.bf16.gmra.mxu0 %v1160
    %v5628 = vpop.f32.mrf.mxu0
    %v5629 = vadd.f32 %v5615, %v5628
    %v5630 = vpop.f32.mrf.mxu0
    %v5631 = vadd.f32 %v5617, %v5630
    %5632 = vdwg.mxu0
    %5633 = vmatpush.bf16.msra.mxu0 %v4052
    %5634 = vmatpush.bf16.msra.mxu0 %v4044
    %5635 = vmatpush.bf16.msra.mxu0 %v4036
    %5636 = vmatpush.bf16.msra.mxu0 %v4028
    %5637 = vmatpush.bf16.msra.mxu0 %v4020
    %5638 = vmatpush.bf16.msra.mxu0 %v4012
    %5639 = vmatpush.bf16.msra.mxu0 %v4004
    %5640 = vmatpush.bf16.msra.mxu0 %v3996
    %5641 = vmatmul.bf16.gmra.mxu0 %v1161
    %v5642 = vpop.f32.mrf.mxu0
    %v5643 = vadd.f32 %v5629, %v5642
    %v5644 = vpop.f32.mrf.mxu0
    %v5645 = vadd.f32 %v5631, %v5644
    %5646 = vdwg.mxu0
    %5647 = vmatpush.bf16.msra.mxu0 %v4116
    %5648 = vmatpush.bf16.msra.mxu0 %v4108
    %5649 = vmatpush.bf16.msra.mxu0 %v4100
    %5650 = vmatpush.bf16.msra.mxu0 %v4092
    %5651 = vmatpush.bf16.msra.mxu0 %v4084
    %5652 = vmatpush.bf16.msra.mxu0 %v4076
    %5653 = vmatpush.bf16.msra.mxu0 %v4068
    %5654 = vmatpush.bf16.msra.mxu0 %v4060
    %5655 = vmatmul.bf16.gmra.mxu0 %v1162
    %v5656 = vpop.f32.mrf.mxu0
    %v5657 = vadd.f32 %v5643, %v5656
    %v5658 = vpop.f32.mrf.mxu0
    %v5659 = vadd.f32 %v5645, %v5658
    %5660 = vdwg.mxu0
    %5661 = vmatpush.bf16.msra.mxu0 %v4180
    %5662 = vmatpush.bf16.msra.mxu0 %v4172
    %5663 = vmatpush.bf16.msra.mxu0 %v4164
    %5664 = vmatpush.bf16.msra.mxu0 %v4156
    %5665 = vmatpush.bf16.msra.mxu0 %v4148
    %5666 = vmatpush.bf16.msra.mxu0 %v4140
    %5667 = vmatpush.bf16.msra.mxu0 %v4132
    %5668 = vmatpush.bf16.msra.mxu0 %v4124
    %5669 = vmatmul.bf16.gmra.mxu0 %v1163
    %v5670 = vpop.f32.mrf.mxu0
    %v5671 = vadd.f32 %v5657, %v5670
    %v5672 = vpop.f32.mrf.mxu0
    %v5673 = vadd.f32 %v5659, %v5672
    %5674 = vdwg.mxu0
    %5675 = vmatpush.bf16.msra.mxu0 %v4244
    %5676 = vmatpush.bf16.msra.mxu0 %v4236
    %5677 = vmatpush.bf16.msra.mxu0 %v4228
    %5678 = vmatpush.bf16.msra.mxu0 %v4220
    %5679 = vmatpush.bf16.msra.mxu0 %v4212
    %5680 = vmatpush.bf16.msra.mxu0 %v4204
    %5681 = vmatpush.bf16.msra.mxu0 %v4196
    %5682 = vmatpush.bf16.msra.mxu0 %v4188
    %5683 = vmatmul.bf16.gmra.mxu0 %v1164
    %v5684 = vpop.f32.mrf.mxu0
    %v5685 = vadd.f32 %v5671, %v5684
    %v5686 = vpop.f32.mrf.mxu0
    %v5687 = vadd.f32 %v5673, %v5686
    %5688 = vdwg.mxu0
    %5689 = vmatpush.bf16.msra.mxu0 %v3541
    %5690 = vmatpush.bf16.msra.mxu0 %v3533
    %5691 = vmatpush.bf16.msra.mxu0 %v3525
    %5692 = vmatpush.bf16.msra.mxu0 %v3517
    %5693 = vmatpush.bf16.msra.mxu0 %v3509
    %5694 = vmatpush.bf16.msra.mxu0 %v3501
    %5695 = vmatpush.bf16.msra.mxu0 %v3493
    %5696 = vmatpush.bf16.msra.mxu0 %v3485
    %5697 = vmatmul.bf16.gmra.mxu0 %v1153
    %v5698 = vpop.f32.mrf.mxu0
    %v5699 = vadd.f32 %v1105, %v5698
    %v5700 = vpop.f32.mrf.mxu0
    %v5701 = vadd.f32 %v1105, %v5700
    %5702 = vdwg.mxu0
    %5703 = vmatpush.bf16.msra.mxu0 %v3605
    %5704 = vmatpush.bf16.msra.mxu0 %v3597
    %5705 = vmatpush.bf16.msra.mxu0 %v3589
    %5706 = vmatpush.bf16.msra.mxu0 %v3581
    %5707 = vmatpush.bf16.msra.mxu0 %v3573
    %5708 = vmatpush.bf16.msra.mxu0 %v3565
    %5709 = vmatpush.bf16.msra.mxu0 %v3557
    %5710 = vmatpush.bf16.msra.mxu0 %v3549
    %5711 = vmatmul.bf16.gmra.mxu0 %v1154
    %v5712 = vpop.f32.mrf.mxu0
    %v5713 = vadd.f32 %v5699, %v5712
    %v5714 = vpop.f32.mrf.mxu0
    %v5715 = vadd.f32 %v5701, %v5714
    %5716 = vdwg.mxu0
    %5717 = vmatpush.bf16.msra.mxu0 %v3669
    %5718 = vmatpush.bf16.msra.mxu0 %v3661
    %5719 = vmatpush.bf16.msra.mxu0 %v3653
    %5720 = vmatpush.bf16.msra.mxu0 %v3645
    %5721 = vmatpush.bf16.msra.mxu0 %v3637
    %5722 = vmatpush.bf16.msra.mxu0 %v3629
    %5723 = vmatpush.bf16.msra.mxu0 %v3621
    %5724 = vmatpush.bf16.msra.mxu0 %v3613
    %5725 = vmatmul.bf16.gmra.mxu0 %v1155
    %v5726 = vpop.f32.mrf.mxu0
    %v5727 = vadd.f32 %v5713, %v5726
    %v5728 = vpop.f32.mrf.mxu0
    %v5729 = vadd.f32 %v5715, %v5728
    %5730 = vdwg.mxu0
    %5731 = vmatpush.bf16.msra.mxu0 %v3733
    %5732 = vmatpush.bf16.msra.mxu0 %v3725
    %5733 = vmatpush.bf16.msra.mxu0 %v3717
    %5734 = vmatpush.bf16.msra.mxu0 %v3709
    %5735 = vmatpush.bf16.msra.mxu0 %v3701
    %5736 = vmatpush.bf16.msra.mxu0 %v3693
    %5737 = vmatpush.bf16.msra.mxu0 %v3685
    %5738 = vmatpush.bf16.msra.mxu0 %v3677
    %5739 = vmatmul.bf16.gmra.mxu0 %v1156
    %v5740 = vpop.f32.mrf.mxu0
    %v5741 = vadd.f32 %v5727, %v5740
    %v5742 = vpop.f32.mrf.mxu0
    %v5743 = vadd.f32 %v5729, %v5742
    %5744 = vdwg.mxu0
    %5745 = vmatpush.bf16.msra.mxu0 %v3797
    %5746 = vmatpush.bf16.msra.mxu0 %v3789
    %5747 = vmatpush.bf16.msra.mxu0 %v3781
    %5748 = vmatpush.bf16.msra.mxu0 %v3773
    %5749 = vmatpush.bf16.msra.mxu0 %v3765
    %5750 = vmatpush.bf16.msra.mxu0 %v3757
    %5751 = vmatpush.bf16.msra.mxu0 %v3749
    %5752 = vmatpush.bf16.msra.mxu0 %v3741
    %5753 = vmatmul.bf16.gmra.mxu0 %v1157
    %v5754 = vpop.f32.mrf.mxu0
    %v5755 = vadd.f32 %v5741, %v5754
    %v5756 = vpop.f32.mrf.mxu0
    %v5757 = vadd.f32 %v5743, %v5756
    %5758 = vdwg.mxu0
    %5759 = vmatpush.bf16.msra.mxu0 %v3861
    %5760 = vmatpush.bf16.msra.mxu0 %v3853
    %5761 = vmatpush.bf16.msra.mxu0 %v3845
    %5762 = vmatpush.bf16.msra.mxu0 %v3837
    %5763 = vmatpush.bf16.msra.mxu0 %v3829
    %5764 = vmatpush.bf16.msra.mxu0 %v3821
    %5765 = vmatpush.bf16.msra.mxu0 %v3813
    %5766 = vmatpush.bf16.msra.mxu0 %v3805
    %5767 = vmatmul.bf16.gmra.mxu0 %v1158
    %v5768 = vpop.f32.mrf.mxu0
    %v5769 = vadd.f32 %v5755, %v5768
    %v5770 = vpop.f32.mrf.mxu0
    %v5771 = vadd.f32 %v5757, %v5770
    %5772 = vdwg.mxu0
    %5773 = vmatpush.bf16.msra.mxu0 %v3925
    %5774 = vmatpush.bf16.msra.mxu0 %v3917
    %5775 = vmatpush.bf16.msra.mxu0 %v3909
    %5776 = vmatpush.bf16.msra.mxu0 %v3901
    %5777 = vmatpush.bf16.msra.mxu0 %v3893
    %5778 = vmatpush.bf16.msra.mxu0 %v3885
    %5779 = vmatpush.bf16.msra.mxu0 %v3877
    %5780 = vmatpush.bf16.msra.mxu0 %v3869
    %5781 = vmatmul.bf16.gmra.mxu0 %v1159
    %v5782 = vpop.f32.mrf.mxu0
    %v5783 = vadd.f32 %v5769, %v5782
    %v5784 = vpop.f32.mrf.mxu0
    %v5785 = vadd.f32 %v5771, %v5784
    %5786 = vdwg.mxu0
    %5787 = vmatpush.bf16.msra.mxu0 %v3989
    %5788 = vmatpush.bf16.msra.mxu0 %v3981
    %5789 = vmatpush.bf16.msra.mxu0 %v3973
    %5790 = vmatpush.bf16.msra.mxu0 %v3965
    %5791 = vmatpush.bf16.msra.mxu0 %v3957
    %5792 = vmatpush.bf16.msra.mxu0 %v3949
    %5793 = vmatpush.bf16.msra.mxu0 %v3941
    %5794 = vmatpush.bf16.msra.mxu0 %v3933
    %5795 = vmatmul.bf16.gmra.mxu0 %v1160
    %v5796 = vpop.f32.mrf.mxu0
    %v5797 = vadd.f32 %v5783, %v5796
    %v5798 = vpop.f32.mrf.mxu0
    %v5799 = vadd.f32 %v5785, %v5798
    %5800 = vdwg.mxu0
    %5801 = vmatpush.bf16.msra.mxu0 %v4053
    %5802 = vmatpush.bf16.msra.mxu0 %v4045
    %5803 = vmatpush.bf16.msra.mxu0 %v4037
    %5804 = vmatpush.bf16.msra.mxu0 %v4029
    %5805 = vmatpush.bf16.msra.mxu0 %v4021
    %5806 = vmatpush.bf16.msra.mxu0 %v4013
    %5807 = vmatpush.bf16.msra.mxu0 %v4005
    %5808 = vmatpush.bf16.msra.mxu0 %v3997
    %5809 = vmatmul.bf16.gmra.mxu0 %v1161
    %v5810 = vpop.f32.mrf.mxu0
    %v5811 = vadd.f32 %v5797, %v5810
    %v5812 = vpop.f32.mrf.mxu0
    %v5813 = vadd.f32 %v5799, %v5812
    %5814 = vdwg.mxu0
    %5815 = vmatpush.bf16.msra.mxu0 %v4117
    %5816 = vmatpush.bf16.msra.mxu0 %v4109
    %5817 = vmatpush.bf16.msra.mxu0 %v4101
    %5818 = vmatpush.bf16.msra.mxu0 %v4093
    %5819 = vmatpush.bf16.msra.mxu0 %v4085
    %5820 = vmatpush.bf16.msra.mxu0 %v4077
    %5821 = vmatpush.bf16.msra.mxu0 %v4069
    %5822 = vmatpush.bf16.msra.mxu0 %v4061
    %5823 = vmatmul.bf16.gmra.mxu0 %v1162
    %v5824 = vpop.f32.mrf.mxu0
    %v5825 = vadd.f32 %v5811, %v5824
    %v5826 = vpop.f32.mrf.mxu0
    %v5827 = vadd.f32 %v5813, %v5826
    %5828 = vdwg.mxu0
    %5829 = vmatpush.bf16.msra.mxu0 %v4181
    %5830 = vmatpush.bf16.msra.mxu0 %v4173
    %5831 = vmatpush.bf16.msra.mxu0 %v4165
    %5832 = vmatpush.bf16.msra.mxu0 %v4157
    %5833 = vmatpush.bf16.msra.mxu0 %v4149
    %5834 = vmatpush.bf16.msra.mxu0 %v4141
    %5835 = vmatpush.bf16.msra.mxu0 %v4133
    %5836 = vmatpush.bf16.msra.mxu0 %v4125
    %5837 = vmatmul.bf16.gmra.mxu0 %v1163
    %v5838 = vpop.f32.mrf.mxu0
    %v5839 = vadd.f32 %v5825, %v5838
    %v5840 = vpop.f32.mrf.mxu0
    %v5841 = vadd.f32 %v5827, %v5840
    %5842 = vdwg.mxu0
    %5843 = vmatpush.bf16.msra.mxu0 %v4245
    %5844 = vmatpush.bf16.msra.mxu0 %v4237
    %5845 = vmatpush.bf16.msra.mxu0 %v4229
    %5846 = vmatpush.bf16.msra.mxu0 %v4221
    %5847 = vmatpush.bf16.msra.mxu0 %v4213
    %5848 = vmatpush.bf16.msra.mxu0 %v4205
    %5849 = vmatpush.bf16.msra.mxu0 %v4197
    %5850 = vmatpush.bf16.msra.mxu0 %v4189
    %5851 = vmatmul.bf16.gmra.mxu0 %v1164
    %v5852 = vpop.f32.mrf.mxu0
    %v5853 = vadd.f32 %v5839, %v5852
    %v5854 = vpop.f32.mrf.mxu0
    %v5855 = vadd.f32 %v5841, %v5854
    %5856 = vdwg.mxu0
    %5857 = vmatpush.bf16.msra.mxu0 %v3542
    %5858 = vmatpush.bf16.msra.mxu0 %v3534
    %5859 = vmatpush.bf16.msra.mxu0 %v3526
    %5860 = vmatpush.bf16.msra.mxu0 %v3518
    %5861 = vmatpush.bf16.msra.mxu0 %v3510
    %5862 = vmatpush.bf16.msra.mxu0 %v3502
    %5863 = vmatpush.bf16.msra.mxu0 %v3494
    %5864 = vmatpush.bf16.msra.mxu0 %v3486
    %5865 = vmatmul.bf16.gmra.mxu0 %v1153
    %v5866 = vpop.f32.mrf.mxu0
    %v5867 = vadd.f32 %v1106, %v5866
    %v5868 = vpop.f32.mrf.mxu0
    %v5869 = vadd.f32 %v1106, %v5868
    %5870 = vdwg.mxu0
    %5871 = vmatpush.bf16.msra.mxu0 %v3606
    %5872 = vmatpush.bf16.msra.mxu0 %v3598
    %5873 = vmatpush.bf16.msra.mxu0 %v3590
    %5874 = vmatpush.bf16.msra.mxu0 %v3582
    %5875 = vmatpush.bf16.msra.mxu0 %v3574
    %5876 = vmatpush.bf16.msra.mxu0 %v3566
    %5877 = vmatpush.bf16.msra.mxu0 %v3558
    %5878 = vmatpush.bf16.msra.mxu0 %v3550
    %5879 = vmatmul.bf16.gmra.mxu0 %v1154
    %v5880 = vpop.f32.mrf.mxu0
    %v5881 = vadd.f32 %v5867, %v5880
    %v5882 = vpop.f32.mrf.mxu0
    %v5883 = vadd.f32 %v5869, %v5882
    %5884 = vdwg.mxu0
    %5885 = vmatpush.bf16.msra.mxu0 %v3670
    %5886 = vmatpush.bf16.msra.mxu0 %v3662
    %5887 = vmatpush.bf16.msra.mxu0 %v3654
    %5888 = vmatpush.bf16.msra.mxu0 %v3646
    %5889 = vmatpush.bf16.msra.mxu0 %v3638
    %5890 = vmatpush.bf16.msra.mxu0 %v3630
    %5891 = vmatpush.bf16.msra.mxu0 %v3622
    %5892 = vmatpush.bf16.msra.mxu0 %v3614
    %5893 = vmatmul.bf16.gmra.mxu0 %v1155
    %v5894 = vpop.f32.mrf.mxu0
    %v5895 = vadd.f32 %v5881, %v5894
    %v5896 = vpop.f32.mrf.mxu0
    %v5897 = vadd.f32 %v5883, %v5896
    %5898 = vdwg.mxu0
    %5899 = vmatpush.bf16.msra.mxu0 %v3734
    %5900 = vmatpush.bf16.msra.mxu0 %v3726
    %5901 = vmatpush.bf16.msra.mxu0 %v3718
    %5902 = vmatpush.bf16.msra.mxu0 %v3710
    %5903 = vmatpush.bf16.msra.mxu0 %v3702
    %5904 = vmatpush.bf16.msra.mxu0 %v3694
    %5905 = vmatpush.bf16.msra.mxu0 %v3686
    %5906 = vmatpush.bf16.msra.mxu0 %v3678
    %5907 = vmatmul.bf16.gmra.mxu0 %v1156
    %v5908 = vpop.f32.mrf.mxu0
    %v5909 = vadd.f32 %v5895, %v5908
    %v5910 = vpop.f32.mrf.mxu0
    %v5911 = vadd.f32 %v5897, %v5910
    %5912 = vdwg.mxu0
    %5913 = vmatpush.bf16.msra.mxu0 %v3798
    %5914 = vmatpush.bf16.msra.mxu0 %v3790
    %5915 = vmatpush.bf16.msra.mxu0 %v3782
    %5916 = vmatpush.bf16.msra.mxu0 %v3774
    %5917 = vmatpush.bf16.msra.mxu0 %v3766
    %5918 = vmatpush.bf16.msra.mxu0 %v3758
    %5919 = vmatpush.bf16.msra.mxu0 %v3750
    %5920 = vmatpush.bf16.msra.mxu0 %v3742
    %5921 = vmatmul.bf16.gmra.mxu0 %v1157
    %v5922 = vpop.f32.mrf.mxu0
    %v5923 = vadd.f32 %v5909, %v5922
    %v5924 = vpop.f32.mrf.mxu0
    %v5925 = vadd.f32 %v5911, %v5924
    %5926 = vdwg.mxu0
    %5927 = vmatpush.bf16.msra.mxu0 %v3862
    %5928 = vmatpush.bf16.msra.mxu0 %v3854
    %5929 = vmatpush.bf16.msra.mxu0 %v3846
    %5930 = vmatpush.bf16.msra.mxu0 %v3838
    %5931 = vmatpush.bf16.msra.mxu0 %v3830
    %5932 = vmatpush.bf16.msra.mxu0 %v3822
    %5933 = vmatpush.bf16.msra.mxu0 %v3814
    %5934 = vmatpush.bf16.msra.mxu0 %v3806
    %5935 = vmatmul.bf16.gmra.mxu0 %v1158
    %v5936 = vpop.f32.mrf.mxu0
    %v5937 = vadd.f32 %v5923, %v5936
    %v5938 = vpop.f32.mrf.mxu0
    %v5939 = vadd.f32 %v5925, %v5938
    %5940 = vdwg.mxu0
    %5941 = vmatpush.bf16.msra.mxu0 %v3926
    %5942 = vmatpush.bf16.msra.mxu0 %v3918
    %5943 = vmatpush.bf16.msra.mxu0 %v3910
    %5944 = vmatpush.bf16.msra.mxu0 %v3902
    %5945 = vmatpush.bf16.msra.mxu0 %v3894
    %5946 = vmatpush.bf16.msra.mxu0 %v3886
    %5947 = vmatpush.bf16.msra.mxu0 %v3878
    %5948 = vmatpush.bf16.msra.mxu0 %v3870
    %5949 = vmatmul.bf16.gmra.mxu0 %v1159
    %v5950 = vpop.f32.mrf.mxu0
    %v5951 = vadd.f32 %v5937, %v5950
    %v5952 = vpop.f32.mrf.mxu0
    %v5953 = vadd.f32 %v5939, %v5952
    %5954 = vdwg.mxu0
    %5955 = vmatpush.bf16.msra.mxu0 %v3990
    %5956 = vmatpush.bf16.msra.mxu0 %v3982
    %5957 = vmatpush.bf16.msra.mxu0 %v3974
    %5958 = vmatpush.bf16.msra.mxu0 %v3966
    %5959 = vmatpush.bf16.msra.mxu0 %v3958
    %5960 = vmatpush.bf16.msra.mxu0 %v3950
    %5961 = vmatpush.bf16.msra.mxu0 %v3942
    %5962 = vmatpush.bf16.msra.mxu0 %v3934
    %5963 = vmatmul.bf16.gmra.mxu0 %v1160
    %v5964 = vpop.f32.mrf.mxu0
    %v5965 = vadd.f32 %v5951, %v5964
    %v5966 = vpop.f32.mrf.mxu0
    %v5967 = vadd.f32 %v5953, %v5966
    %5968 = vdwg.mxu0
    %5969 = vmatpush.bf16.msra.mxu0 %v4054
    %5970 = vmatpush.bf16.msra.mxu0 %v4046
    %5971 = vmatpush.bf16.msra.mxu0 %v4038
    %5972 = vmatpush.bf16.msra.mxu0 %v4030
    %5973 = vmatpush.bf16.msra.mxu0 %v4022
    %5974 = vmatpush.bf16.msra.mxu0 %v4014
    %5975 = vmatpush.bf16.msra.mxu0 %v4006
    %5976 = vmatpush.bf16.msra.mxu0 %v3998
    %5977 = vmatmul.bf16.gmra.mxu0 %v1161
    %v5978 = vpop.f32.mrf.mxu0
    %v5979 = vadd.f32 %v5965, %v5978
    %v5980 = vpop.f32.mrf.mxu0
    %v5981 = vadd.f32 %v5967, %v5980
    %5982 = vdwg.mxu0
    %5983 = vmatpush.bf16.msra.mxu0 %v4118
    %5984 = vmatpush.bf16.msra.mxu0 %v4110
    %5985 = vmatpush.bf16.msra.mxu0 %v4102
    %5986 = vmatpush.bf16.msra.mxu0 %v4094
    %5987 = vmatpush.bf16.msra.mxu0 %v4086
    %5988 = vmatpush.bf16.msra.mxu0 %v4078
    %5989 = vmatpush.bf16.msra.mxu0 %v4070
    %5990 = vmatpush.bf16.msra.mxu0 %v4062
    %5991 = vmatmul.bf16.gmra.mxu0 %v1162
    %v5992 = vpop.f32.mrf.mxu0
    %v5993 = vadd.f32 %v5979, %v5992
    %v5994 = vpop.f32.mrf.mxu0
    %v5995 = vadd.f32 %v5981, %v5994
    %5996 = vdwg.mxu0
    %5997 = vmatpush.bf16.msra.mxu0 %v4182
    %5998 = vmatpush.bf16.msra.mxu0 %v4174
    %5999 = vmatpush.bf16.msra.mxu0 %v4166
    %6000 = vmatpush.bf16.msra.mxu0 %v4158
    %6001 = vmatpush.bf16.msra.mxu0 %v4150
    %6002 = vmatpush.bf16.msra.mxu0 %v4142
    %6003 = vmatpush.bf16.msra.mxu0 %v4134
    %6004 = vmatpush.bf16.msra.mxu0 %v4126
    %6005 = vmatmul.bf16.gmra.mxu0 %v1163
    %v6006 = vpop.f32.mrf.mxu0
    %v6007 = vadd.f32 %v5993, %v6006
    %v6008 = vpop.f32.mrf.mxu0
    %v6009 = vadd.f32 %v5995, %v6008
    %6010 = vdwg.mxu0
    %6011 = vmatpush.bf16.msra.mxu0 %v4246
    %6012 = vmatpush.bf16.msra.mxu0 %v4238
    %6013 = vmatpush.bf16.msra.mxu0 %v4230
    %6014 = vmatpush.bf16.msra.mxu0 %v4222
    %6015 = vmatpush.bf16.msra.mxu0 %v4214
    %6016 = vmatpush.bf16.msra.mxu0 %v4206
    %6017 = vmatpush.bf16.msra.mxu0 %v4198
    %6018 = vmatpush.bf16.msra.mxu0 %v4190
    %6019 = vmatmul.bf16.gmra.mxu0 %v1164
    %v6020 = vpop.f32.mrf.mxu0
    %v6021 = vadd.f32 %v6007, %v6020
    %v6022 = vpop.f32.mrf.mxu0
    %v6023 = vadd.f32 %v6009, %v6022
    %6024 = vdwg.mxu0
    %6025 = vmatpush.bf16.msra.mxu0 %v3543
    %6026 = vmatpush.bf16.msra.mxu0 %v3535
    %6027 = vmatpush.bf16.msra.mxu0 %v3527
    %6028 = vmatpush.bf16.msra.mxu0 %v3519
    %6029 = vmatpush.bf16.msra.mxu0 %v3511
    %6030 = vmatpush.bf16.msra.mxu0 %v3503
    %6031 = vmatpush.bf16.msra.mxu0 %v3495
    %6032 = vmatpush.bf16.msra.mxu0 %v3487
    %6033 = vmatmul.bf16.gmra.mxu0 %v1153
    %v6034 = vpop.f32.mrf.mxu0
    %v6035 = vadd.f32 %v1107, %v6034
    %v6036 = vpop.f32.mrf.mxu0
    %v6037 = vadd.f32 %v1107, %v6036
    %6038 = vdwg.mxu0
    %6039 = vmatpush.bf16.msra.mxu0 %v3607
    %6040 = vmatpush.bf16.msra.mxu0 %v3599
    %6041 = vmatpush.bf16.msra.mxu0 %v3591
    %6042 = vmatpush.bf16.msra.mxu0 %v3583
    %6043 = vmatpush.bf16.msra.mxu0 %v3575
    %6044 = vmatpush.bf16.msra.mxu0 %v3567
    %6045 = vmatpush.bf16.msra.mxu0 %v3559
    %6046 = vmatpush.bf16.msra.mxu0 %v3551
    %6047 = vmatmul.bf16.gmra.mxu0 %v1154
    %v6048 = vpop.f32.mrf.mxu0
    %v6049 = vadd.f32 %v6035, %v6048
    %v6050 = vpop.f32.mrf.mxu0
    %v6051 = vadd.f32 %v6037, %v6050
    %6052 = vdwg.mxu0
    %6053 = vmatpush.bf16.msra.mxu0 %v3671
    %6054 = vmatpush.bf16.msra.mxu0 %v3663
    %6055 = vmatpush.bf16.msra.mxu0 %v3655
    %6056 = vmatpush.bf16.msra.mxu0 %v3647
    %6057 = vmatpush.bf16.msra.mxu0 %v3639
    %6058 = vmatpush.bf16.msra.mxu0 %v3631
    %6059 = vmatpush.bf16.msra.mxu0 %v3623
    %6060 = vmatpush.bf16.msra.mxu0 %v3615
    %6061 = vmatmul.bf16.gmra.mxu0 %v1155
    %v6062 = vpop.f32.mrf.mxu0
    %v6063 = vadd.f32 %v6049, %v6062
    %v6064 = vpop.f32.mrf.mxu0
    %v6065 = vadd.f32 %v6051, %v6064
    %6066 = vdwg.mxu0
    %6067 = vmatpush.bf16.msra.mxu0 %v3735
    %6068 = vmatpush.bf16.msra.mxu0 %v3727
    %6069 = vmatpush.bf16.msra.mxu0 %v3719
    %6070 = vmatpush.bf16.msra.mxu0 %v3711
    %6071 = vmatpush.bf16.msra.mxu0 %v3703
    %6072 = vmatpush.bf16.msra.mxu0 %v3695
    %6073 = vmatpush.bf16.msra.mxu0 %v3687
    %6074 = vmatpush.bf16.msra.mxu0 %v3679
    %6075 = vmatmul.bf16.gmra.mxu0 %v1156
    %v6076 = vpop.f32.mrf.mxu0
    %v6077 = vadd.f32 %v6063, %v6076
    %v6078 = vpop.f32.mrf.mxu0
    %v6079 = vadd.f32 %v6065, %v6078
    %6080 = vdwg.mxu0
    %6081 = vmatpush.bf16.msra.mxu0 %v3799
    %6082 = vmatpush.bf16.msra.mxu0 %v3791
    %6083 = vmatpush.bf16.msra.mxu0 %v3783
    %6084 = vmatpush.bf16.msra.mxu0 %v3775
    %6085 = vmatpush.bf16.msra.mxu0 %v3767
    %6086 = vmatpush.bf16.msra.mxu0 %v3759
    %6087 = vmatpush.bf16.msra.mxu0 %v3751
    %6088 = vmatpush.bf16.msra.mxu0 %v3743
    %6089 = vmatmul.bf16.gmra.mxu0 %v1157
    %v6090 = vpop.f32.mrf.mxu0
    %v6091 = vadd.f32 %v6077, %v6090
    %v6092 = vpop.f32.mrf.mxu0
    %v6093 = vadd.f32 %v6079, %v6092
    %6094 = vdwg.mxu0
    %6095 = vmatpush.bf16.msra.mxu0 %v3863
    %6096 = vmatpush.bf16.msra.mxu0 %v3855
    %6097 = vmatpush.bf16.msra.mxu0 %v3847
    %6098 = vmatpush.bf16.msra.mxu0 %v3839
    %6099 = vmatpush.bf16.msra.mxu0 %v3831
    %6100 = vmatpush.bf16.msra.mxu0 %v3823
    %6101 = vmatpush.bf16.msra.mxu0 %v3815
    %6102 = vmatpush.bf16.msra.mxu0 %v3807
    %6103 = vmatmul.bf16.gmra.mxu0 %v1158
    %v6104 = vpop.f32.mrf.mxu0
    %v6105 = vadd.f32 %v6091, %v6104
    %v6106 = vpop.f32.mrf.mxu0
    %v6107 = vadd.f32 %v6093, %v6106
    %6108 = vdwg.mxu0
    %6109 = vmatpush.bf16.msra.mxu0 %v3927
    %6110 = vmatpush.bf16.msra.mxu0 %v3919
    %6111 = vmatpush.bf16.msra.mxu0 %v3911
    %6112 = vmatpush.bf16.msra.mxu0 %v3903
    %6113 = vmatpush.bf16.msra.mxu0 %v3895
    %6114 = vmatpush.bf16.msra.mxu0 %v3887
    %6115 = vmatpush.bf16.msra.mxu0 %v3879
    %6116 = vmatpush.bf16.msra.mxu0 %v3871
    %6117 = vmatmul.bf16.gmra.mxu0 %v1159
    %v6118 = vpop.f32.mrf.mxu0
    %v6119 = vadd.f32 %v6105, %v6118
    %v6120 = vpop.f32.mrf.mxu0
    %v6121 = vadd.f32 %v6107, %v6120
    %6122 = vdwg.mxu0
    %6123 = vmatpush.bf16.msra.mxu0 %v3991
    %6124 = vmatpush.bf16.msra.mxu0 %v3983
    %6125 = vmatpush.bf16.msra.mxu0 %v3975
    %6126 = vmatpush.bf16.msra.mxu0 %v3967
    %6127 = vmatpush.bf16.msra.mxu0 %v3959
    %6128 = vmatpush.bf16.msra.mxu0 %v3951
    %6129 = vmatpush.bf16.msra.mxu0 %v3943
    %6130 = vmatpush.bf16.msra.mxu0 %v3935
    %6131 = vmatmul.bf16.gmra.mxu0 %v1160
    %v6132 = vpop.f32.mrf.mxu0
    %v6133 = vadd.f32 %v6119, %v6132
    %v6134 = vpop.f32.mrf.mxu0
    %v6135 = vadd.f32 %v6121, %v6134
    %6136 = vdwg.mxu0
    %6137 = vmatpush.bf16.msra.mxu0 %v4055
    %6138 = vmatpush.bf16.msra.mxu0 %v4047
    %6139 = vmatpush.bf16.msra.mxu0 %v4039
    %6140 = vmatpush.bf16.msra.mxu0 %v4031
    %6141 = vmatpush.bf16.msra.mxu0 %v4023
    %6142 = vmatpush.bf16.msra.mxu0 %v4015
    %6143 = vmatpush.bf16.msra.mxu0 %v4007
    %6144 = vmatpush.bf16.msra.mxu0 %v3999
    %6145 = vmatmul.bf16.gmra.mxu0 %v1161
    %v6146 = vpop.f32.mrf.mxu0
    %v6147 = vadd.f32 %v6133, %v6146
    %v6148 = vpop.f32.mrf.mxu0
    %v6149 = vadd.f32 %v6135, %v6148
    %6150 = vdwg.mxu0
    %6151 = vmatpush.bf16.msra.mxu0 %v4119
    %6152 = vmatpush.bf16.msra.mxu0 %v4111
    %6153 = vmatpush.bf16.msra.mxu0 %v4103
    %6154 = vmatpush.bf16.msra.mxu0 %v4095
    %6155 = vmatpush.bf16.msra.mxu0 %v4087
    %6156 = vmatpush.bf16.msra.mxu0 %v4079
    %6157 = vmatpush.bf16.msra.mxu0 %v4071
    %6158 = vmatpush.bf16.msra.mxu0 %v4063
    %6159 = vmatmul.bf16.gmra.mxu0 %v1162
    %v6160 = vpop.f32.mrf.mxu0
    %v6161 = vadd.f32 %v6147, %v6160
    %v6162 = vpop.f32.mrf.mxu0
    %v6163 = vadd.f32 %v6149, %v6162
    %6164 = vdwg.mxu0
    %6165 = vmatpush.bf16.msra.mxu0 %v4183
    %6166 = vmatpush.bf16.msra.mxu0 %v4175
    %6167 = vmatpush.bf16.msra.mxu0 %v4167
    %6168 = vmatpush.bf16.msra.mxu0 %v4159
    %6169 = vmatpush.bf16.msra.mxu0 %v4151
    %6170 = vmatpush.bf16.msra.mxu0 %v4143
    %6171 = vmatpush.bf16.msra.mxu0 %v4135
    %6172 = vmatpush.bf16.msra.mxu0 %v4127
    %6173 = vmatmul.bf16.gmra.mxu0 %v1163
    %v6174 = vpop.f32.mrf.mxu0
    %v6175 = vadd.f32 %v6161, %v6174
    %v6176 = vpop.f32.mrf.mxu0
    %v6177 = vadd.f32 %v6163, %v6176
    %6178 = vdwg.mxu0
    %6179 = vmatpush.bf16.msra.mxu0 %v4247
    %6180 = vmatpush.bf16.msra.mxu0 %v4239
    %6181 = vmatpush.bf16.msra.mxu0 %v4231
    %6182 = vmatpush.bf16.msra.mxu0 %v4223
    %6183 = vmatpush.bf16.msra.mxu0 %v4215
    %6184 = vmatpush.bf16.msra.mxu0 %v4207
    %6185 = vmatpush.bf16.msra.mxu0 %v4199
    %6186 = vmatpush.bf16.msra.mxu0 %v4191
    %6187 = vmatmul.bf16.gmra.mxu0 %v1164
    %v6188 = vpop.f32.mrf.mxu0
    %v6189 = vadd.f32 %v6175, %v6188
    %v6190 = vpop.f32.mrf.mxu0
    %v6191 = vadd.f32 %v6177, %v6190
    %6192 = vdwg.mxu0
    %6193 = vmatpush.bf16.msra.mxu0 %v3544
    %6194 = vmatpush.bf16.msra.mxu0 %v3536
    %6195 = vmatpush.bf16.msra.mxu0 %v3528
    %6196 = vmatpush.bf16.msra.mxu0 %v3520
    %6197 = vmatpush.bf16.msra.mxu0 %v3512
    %6198 = vmatpush.bf16.msra.mxu0 %v3504
    %6199 = vmatpush.bf16.msra.mxu0 %v3496
    %6200 = vmatpush.bf16.msra.mxu0 %v3488
    %6201 = vmatmul.bf16.gmra.mxu0 %v1153
    %v6202 = vpop.f32.mrf.mxu0
    %v6203 = vadd.f32 %v1108, %v6202
    %v6204 = vpop.f32.mrf.mxu0
    %v6205 = vadd.f32 %v1108, %v6204
    %6206 = vdwg.mxu0
    %6207 = vmatpush.bf16.msra.mxu0 %v3608
    %6208 = vmatpush.bf16.msra.mxu0 %v3600
    %6209 = vmatpush.bf16.msra.mxu0 %v3592
    %6210 = vmatpush.bf16.msra.mxu0 %v3584
    %6211 = vmatpush.bf16.msra.mxu0 %v3576
    %6212 = vmatpush.bf16.msra.mxu0 %v3568
    %6213 = vmatpush.bf16.msra.mxu0 %v3560
    %6214 = vmatpush.bf16.msra.mxu0 %v3552
    %6215 = vmatmul.bf16.gmra.mxu0 %v1154
    %v6216 = vpop.f32.mrf.mxu0
    %v6217 = vadd.f32 %v6203, %v6216
    %v6218 = vpop.f32.mrf.mxu0
    %v6219 = vadd.f32 %v6205, %v6218
    %6220 = vdwg.mxu0
    %6221 = vmatpush.bf16.msra.mxu0 %v3672
    %6222 = vmatpush.bf16.msra.mxu0 %v3664
    %6223 = vmatpush.bf16.msra.mxu0 %v3656
    %6224 = vmatpush.bf16.msra.mxu0 %v3648
    %6225 = vmatpush.bf16.msra.mxu0 %v3640
    %6226 = vmatpush.bf16.msra.mxu0 %v3632
    %6227 = vmatpush.bf16.msra.mxu0 %v3624
    %6228 = vmatpush.bf16.msra.mxu0 %v3616
    %6229 = vmatmul.bf16.gmra.mxu0 %v1155
    %v6230 = vpop.f32.mrf.mxu0
    %v6231 = vadd.f32 %v6217, %v6230
    %v6232 = vpop.f32.mrf.mxu0
    %v6233 = vadd.f32 %v6219, %v6232
    %6234 = vdwg.mxu0
    %6235 = vmatpush.bf16.msra.mxu0 %v3736
    %6236 = vmatpush.bf16.msra.mxu0 %v3728
    %6237 = vmatpush.bf16.msra.mxu0 %v3720
    %6238 = vmatpush.bf16.msra.mxu0 %v3712
    %6239 = vmatpush.bf16.msra.mxu0 %v3704
    %6240 = vmatpush.bf16.msra.mxu0 %v3696
    %6241 = vmatpush.bf16.msra.mxu0 %v3688
    %6242 = vmatpush.bf16.msra.mxu0 %v3680
    %6243 = vmatmul.bf16.gmra.mxu0 %v1156
    %v6244 = vpop.f32.mrf.mxu0
    %v6245 = vadd.f32 %v6231, %v6244
    %v6246 = vpop.f32.mrf.mxu0
    %v6247 = vadd.f32 %v6233, %v6246
    %6248 = vdwg.mxu0
    %6249 = vmatpush.bf16.msra.mxu0 %v3800
    %6250 = vmatpush.bf16.msra.mxu0 %v3792
    %6251 = vmatpush.bf16.msra.mxu0 %v3784
    %6252 = vmatpush.bf16.msra.mxu0 %v3776
    %6253 = vmatpush.bf16.msra.mxu0 %v3768
    %6254 = vmatpush.bf16.msra.mxu0 %v3760
    %6255 = vmatpush.bf16.msra.mxu0 %v3752
    %6256 = vmatpush.bf16.msra.mxu0 %v3744
    %6257 = vmatmul.bf16.gmra.mxu0 %v1157
    %v6258 = vpop.f32.mrf.mxu0
    %v6259 = vadd.f32 %v6245, %v6258
    %v6260 = vpop.f32.mrf.mxu0
    %v6261 = vadd.f32 %v6247, %v6260
    %6262 = vdwg.mxu0
    %6263 = vmatpush.bf16.msra.mxu0 %v3864
    %6264 = vmatpush.bf16.msra.mxu0 %v3856
    %6265 = vmatpush.bf16.msra.mxu0 %v3848
    %6266 = vmatpush.bf16.msra.mxu0 %v3840
    %6267 = vmatpush.bf16.msra.mxu0 %v3832
    %6268 = vmatpush.bf16.msra.mxu0 %v3824
    %6269 = vmatpush.bf16.msra.mxu0 %v3816
    %6270 = vmatpush.bf16.msra.mxu0 %v3808
    %6271 = vmatmul.bf16.gmra.mxu0 %v1158
    %v6272 = vpop.f32.mrf.mxu0
    %v6273 = vadd.f32 %v6259, %v6272
    %v6274 = vpop.f32.mrf.mxu0
    %v6275 = vadd.f32 %v6261, %v6274
    %6276 = vdwg.mxu0
    %6277 = vmatpush.bf16.msra.mxu0 %v3928
    %6278 = vmatpush.bf16.msra.mxu0 %v3920
    %6279 = vmatpush.bf16.msra.mxu0 %v3912
    %6280 = vmatpush.bf16.msra.mxu0 %v3904
    %6281 = vmatpush.bf16.msra.mxu0 %v3896
    %6282 = vmatpush.bf16.msra.mxu0 %v3888
    %6283 = vmatpush.bf16.msra.mxu0 %v3880
    %6284 = vmatpush.bf16.msra.mxu0 %v3872
    %6285 = vmatmul.bf16.gmra.mxu0 %v1159
    %v6286 = vpop.f32.mrf.mxu0
    %v6287 = vadd.f32 %v6273, %v6286
    %v6288 = vpop.f32.mrf.mxu0
    %v6289 = vadd.f32 %v6275, %v6288
    %6290 = vdwg.mxu0
    %6291 = vmatpush.bf16.msra.mxu0 %v3992
    %6292 = vmatpush.bf16.msra.mxu0 %v3984
    %6293 = vmatpush.bf16.msra.mxu0 %v3976
    %6294 = vmatpush.bf16.msra.mxu0 %v3968
    %6295 = vmatpush.bf16.msra.mxu0 %v3960
    %6296 = vmatpush.bf16.msra.mxu0 %v3952
    %6297 = vmatpush.bf16.msra.mxu0 %v3944
    %6298 = vmatpush.bf16.msra.mxu0 %v3936
    %6299 = vmatmul.bf16.gmra.mxu0 %v1160
    %v6300 = vpop.f32.mrf.mxu0
    %v6301 = vadd.f32 %v6287, %v6300
    %v6302 = vpop.f32.mrf.mxu0
    %v6303 = vadd.f32 %v6289, %v6302
    %6304 = vdwg.mxu0
    %6305 = vmatpush.bf16.msra.mxu0 %v4056
    %6306 = vmatpush.bf16.msra.mxu0 %v4048
    %6307 = vmatpush.bf16.msra.mxu0 %v4040
    %6308 = vmatpush.bf16.msra.mxu0 %v4032
    %6309 = vmatpush.bf16.msra.mxu0 %v4024
    %6310 = vmatpush.bf16.msra.mxu0 %v4016
    %6311 = vmatpush.bf16.msra.mxu0 %v4008
    %6312 = vmatpush.bf16.msra.mxu0 %v4000
    %6313 = vmatmul.bf16.gmra.mxu0 %v1161
    %v6314 = vpop.f32.mrf.mxu0
    %v6315 = vadd.f32 %v6301, %v6314
    %v6316 = vpop.f32.mrf.mxu0
    %v6317 = vadd.f32 %v6303, %v6316
    %6318 = vdwg.mxu0
    %6319 = vmatpush.bf16.msra.mxu0 %v4120
    %6320 = vmatpush.bf16.msra.mxu0 %v4112
    %6321 = vmatpush.bf16.msra.mxu0 %v4104
    %6322 = vmatpush.bf16.msra.mxu0 %v4096
    %6323 = vmatpush.bf16.msra.mxu0 %v4088
    %6324 = vmatpush.bf16.msra.mxu0 %v4080
    %6325 = vmatpush.bf16.msra.mxu0 %v4072
    %6326 = vmatpush.bf16.msra.mxu0 %v4064
    %6327 = vmatmul.bf16.gmra.mxu0 %v1162
    %v6328 = vpop.f32.mrf.mxu0
    %v6329 = vadd.f32 %v6315, %v6328
    %v6330 = vpop.f32.mrf.mxu0
    %v6331 = vadd.f32 %v6317, %v6330
    %6332 = vdwg.mxu0
    %6333 = vmatpush.bf16.msra.mxu0 %v4184
    %6334 = vmatpush.bf16.msra.mxu0 %v4176
    %6335 = vmatpush.bf16.msra.mxu0 %v4168
    %6336 = vmatpush.bf16.msra.mxu0 %v4160
    %6337 = vmatpush.bf16.msra.mxu0 %v4152
    %6338 = vmatpush.bf16.msra.mxu0 %v4144
    %6339 = vmatpush.bf16.msra.mxu0 %v4136
    %6340 = vmatpush.bf16.msra.mxu0 %v4128
    %6341 = vmatmul.bf16.gmra.mxu0 %v1163
    %v6342 = vpop.f32.mrf.mxu0
    %v6343 = vadd.f32 %v6329, %v6342
    %v6344 = vpop.f32.mrf.mxu0
    %v6345 = vadd.f32 %v6331, %v6344
    %6346 = vdwg.mxu0
    %6347 = vmatpush.bf16.msra.mxu0 %v4248
    %6348 = vmatpush.bf16.msra.mxu0 %v4240
    %6349 = vmatpush.bf16.msra.mxu0 %v4232
    %6350 = vmatpush.bf16.msra.mxu0 %v4224
    %6351 = vmatpush.bf16.msra.mxu0 %v4216
    %6352 = vmatpush.bf16.msra.mxu0 %v4208
    %6353 = vmatpush.bf16.msra.mxu0 %v4200
    %6354 = vmatpush.bf16.msra.mxu0 %v4192
    %6355 = vmatmul.bf16.gmra.mxu0 %v1164
    %v6356 = vpop.f32.mrf.mxu0
    %v6357 = vadd.f32 %v6343, %v6356
    %v6358 = vpop.f32.mrf.mxu0
    %v6359 = vadd.f32 %v6345, %v6358
    %6360 = vdwg.mxu0
    %vm6361 = vcmp.ge.f32.partialorder %v5181, 0.0
    %vm6362 = vcmp.ge.f32.partialorder %v5349, 0.0
    %vm6363 = vcmp.ge.f32.partialorder %v5517, 0.0
    %vm6364 = vcmp.ge.f32.partialorder %v5685, 0.0
    %vm6365 = vcmp.ge.f32.partialorder %v5853, 0.0
    %vm6366 = vcmp.ge.f32.partialorder %v6021, 0.0
    %vm6367 = vcmp.ge.f32.partialorder %v6189, 0.0
    %vm6368 = vcmp.ge.f32.partialorder %v6357, 0.0
    %vm6369 = vcmp.ge.f32.partialorder %v5183, 0.0
    %vm6370 = vcmp.ge.f32.partialorder %v5351, 0.0
    %vm6371 = vcmp.ge.f32.partialorder %v5519, 0.0
    %vm6372 = vcmp.ge.f32.partialorder %v5687, 0.0
    %vm6373 = vcmp.ge.f32.partialorder %v5855, 0.0
    %vm6374 = vcmp.ge.f32.partialorder %v6023, 0.0
    %vm6375 = vcmp.ge.f32.partialorder %v6191, 0.0
    %vm6376 = vcmp.ge.f32.partialorder %v6359, 0.0
    %v6377 = vmul.f32 %v5181, 0.1
    %v6378 = vmul.f32 %v5349, 0.1
    %v6379 = vmul.f32 %v5517, 0.1
    %v6380 = vmul.f32 %v5685, 0.1
    %v6381 = vmul.f32 %v5853, 0.1
    %v6382 = vmul.f32 %v6021, 0.1
    %v6383 = vmul.f32 %v6189, 0.1
    %v6384 = vmul.f32 %v6357, 0.1
    %v6385 = vmul.f32 %v5183, 0.1
    %v6386 = vmul.f32 %v5351, 0.1
    %v6387 = vmul.f32 %v5519, 0.1
    %v6388 = vmul.f32 %v5687, 0.1
    %v6389 = vmul.f32 %v5855, 0.1
    %v6390 = vmul.f32 %v6023, 0.1
    %v6391 = vmul.f32 %v6191, 0.1
    %v6392 = vmul.f32 %v6359, 0.1
    %v6393 = vsel %vm6361, %v5181, %v6377
    %v6394 = vsel %vm6362, %v5349, %v6378
    %v6395 = vsel %vm6363, %v5517, %v6379
    %v6396 = vsel %vm6364, %v5685, %v6380
    %v6397 = vsel %vm6365, %v5853, %v6381
    %v6398 = vsel %vm6366, %v6021, %v6382
    %v6399 = vsel %vm6367, %v6189, %v6383
    %v6400 = vsel %vm6368, %v6357, %v6384
    %v6401 = vsel %vm6369, %v5183, %v6385
    %v6402 = vsel %vm6370, %v5351, %v6386
    %v6403 = vsel %vm6371, %v5519, %v6387
    %v6404 = vsel %vm6372, %v5687, %v6388
    %v6405 = vsel %vm6373, %v5855, %v6389
    %v6406 = vsel %vm6374, %v6023, %v6390
    %v6407 = vsel %vm6375, %v6191, %v6391
    %v6408 = vsel %vm6376, %v6359, %v6392
    %v6409 = vpack.c.bf16 %v6401, %v6393
    %v6410 = vpack.c.bf16 %v6402, %v6394
    %v6411 = vpack.c.bf16 %v6403, %v6395
    %v6412 = vpack.c.bf16 %v6404, %v6396
    %v6413 = vpack.c.bf16 %v6405, %v6397
    %v6414 = vpack.c.bf16 %v6406, %v6398
    %v6415 = vpack.c.bf16 %v6407, %v6399
    %v6416 = vpack.c.bf16 %v6408, %v6400
    %v6417 = vld [vmem:[#allocation6] sm:$0xff]
    %v6418 = vld [vmem:[#allocation6 + $0x8] sm:$0xff]
    %v6419 = vld [vmem:[#allocation6 + $0x10] sm:$0xff]
    %v6420 = vld [vmem:[#allocation6 + $0x18] sm:$0xff]
    %v6421 = vld [vmem:[#allocation6 + $0x20] sm:$0xff]
    %v6422 = vld [vmem:[#allocation6 + $0x28] sm:$0xff]
    %v6423 = vld [vmem:[#allocation6 + $0x30] sm:$0xff]
    %v6424 = vld [vmem:[#allocation6 + $0x38] sm:$0xff]
    %v6425 = vld [vmem:[#allocation6 + $0x40] sm:$0xff]
    %v6426 = vld [vmem:[#allocation6 + $0x48] sm:$0xff]
    %v6427 = vld [vmem:[#allocation6 + $0x50] sm:$0xff]
    %v6428 = vld [vmem:[#allocation6 + $0x58] sm:$0xff]
    %v6429 = vld [vmem:[#allocation6 + $0x60] sm:$0xff]
    %v6430 = vld [vmem:[#allocation6 + $0x68] sm:$0xff]
    %v6431 = vld [vmem:[#allocation6 + $0x70] sm:$0xff]
    %v6432 = vld [vmem:[#allocation6 + $0x78] sm:$0xff]
    %v6433 = vld [vmem:[#allocation6 + $0x80] sm:$0xff]
    %v6434 = vld [vmem:[#allocation6 + $0x88] sm:$0xff]
    %v6435 = vld [vmem:[#allocation6 + $0x90] sm:$0xff]
    %v6436 = vld [vmem:[#allocation6 + $0x98] sm:$0xff]
    %v6437 = vld [vmem:[#allocation6 + $0xa0] sm:$0xff]
    %v6438 = vld [vmem:[#allocation6 + $0xa8] sm:$0xff]
    %v6439 = vld [vmem:[#allocation6 + $0xb0] sm:$0xff]
    %v6440 = vld [vmem:[#allocation6 + $0xb8] sm:$0xff]
    %v6441 = vld [vmem:[#allocation6 + $0xc0] sm:$0xff]
    %v6442 = vld [vmem:[#allocation6 + $0xc8] sm:$0xff]
    %v6443 = vld [vmem:[#allocation6 + $0xd0] sm:$0xff]
    %v6444 = vld [vmem:[#allocation6 + $0xd8] sm:$0xff]
    %v6445 = vld [vmem:[#allocation6 + $0xe0] sm:$0xff]
    %v6446 = vld [vmem:[#allocation6 + $0xe8] sm:$0xff]
    %v6447 = vld [vmem:[#allocation6 + $0xf0] sm:$0xff]
    %v6448 = vld [vmem:[#allocation6 + $0xf8] sm:$0xff]
    %v6449 = vld [vmem:[#allocation6 + $0x100] sm:$0xff]
    %v6450 = vld [vmem:[#allocation6 + $0x108] sm:$0xff]
    %v6451 = vld [vmem:[#allocation6 + $0x110] sm:$0xff]
    %v6452 = vld [vmem:[#allocation6 + $0x118] sm:$0xff]
    %v6453 = vld [vmem:[#allocation6 + $0x120] sm:$0xff]
    %v6454 = vld [vmem:[#allocation6 + $0x128] sm:$0xff]
    %v6455 = vld [vmem:[#allocation6 + $0x130] sm:$0xff]
    %v6456 = vld [vmem:[#allocation6 + $0x138] sm:$0xff]
    %v6457 = vld [vmem:[#allocation6 + $0x140] sm:$0xff]
    %v6458 = vld [vmem:[#allocation6 + $0x148] sm:$0xff]
    %v6459 = vld [vmem:[#allocation6 + $0x150] sm:$0xff]
    %v6460 = vld [vmem:[#allocation6 + $0x158] sm:$0xff]
    %v6461 = vld [vmem:[#allocation6 + $0x160] sm:$0xff]
    %v6462 = vld [vmem:[#allocation6 + $0x168] sm:$0xff]
    %v6463 = vld [vmem:[#allocation6 + $0x170] sm:$0xff]
    %v6464 = vld [vmem:[#allocation6 + $0x178] sm:$0xff]
    %v6465 = vld [vmem:[#allocation6 + $0x180] sm:$0xff]
    %v6466 = vld [vmem:[#allocation6 + $0x188] sm:$0xff]
    %v6467 = vld [vmem:[#allocation6 + $0x190] sm:$0xff]
    %v6468 = vld [vmem:[#allocation6 + $0x198] sm:$0xff]
    %v6469 = vld [vmem:[#allocation6 + $0x1a0] sm:$0xff]
    %v6470 = vld [vmem:[#allocation6 + $0x1a8] sm:$0xff]
    %v6471 = vld [vmem:[#allocation6 + $0x1b0] sm:$0xff]
    %v6472 = vld [vmem:[#allocation6 + $0x1b8] sm:$0xff]
    %v6473 = vld [vmem:[#allocation6 + $0x1c0] sm:$0xff]
    %v6474 = vld [vmem:[#allocation6 + $0x1c8] sm:$0xff]
    %v6475 = vld [vmem:[#allocation6 + $0x1d0] sm:$0xff]
    %v6476 = vld [vmem:[#allocation6 + $0x1d8] sm:$0xff]
    %v6477 = vld [vmem:[#allocation6 + $0x1e0] sm:$0xff]
    %v6478 = vld [vmem:[#allocation6 + $0x1e8] sm:$0xff]
    %v6479 = vld [vmem:[#allocation6 + $0x1f0] sm:$0xff]
    %v6480 = vld [vmem:[#allocation6 + $0x1f8] sm:$0xff]
    %v6481 = vld [vmem:[#allocation6 + $0x200] sm:$0xff]
    %v6482 = vld [vmem:[#allocation6 + $0x208] sm:$0xff]
    %v6483 = vld [vmem:[#allocation6 + $0x210] sm:$0xff]
    %v6484 = vld [vmem:[#allocation6 + $0x218] sm:$0xff]
    %v6485 = vld [vmem:[#allocation6 + $0x220] sm:$0xff]
    %v6486 = vld [vmem:[#allocation6 + $0x228] sm:$0xff]
    %v6487 = vld [vmem:[#allocation6 + $0x230] sm:$0xff]
    %v6488 = vld [vmem:[#allocation6 + $0x238] sm:$0xff]
    %v6489 = vld [vmem:[#allocation6 + $0x240] sm:$0xff]
    %v6490 = vld [vmem:[#allocation6 + $0x248] sm:$0xff]
    %v6491 = vld [vmem:[#allocation6 + $0x250] sm:$0xff]
    %v6492 = vld [vmem:[#allocation6 + $0x258] sm:$0xff]
    %v6493 = vld [vmem:[#allocation6 + $0x260] sm:$0xff]
    %v6494 = vld [vmem:[#allocation6 + $0x268] sm:$0xff]
    %v6495 = vld [vmem:[#allocation6 + $0x270] sm:$0xff]
    %v6496 = vld [vmem:[#allocation6 + $0x278] sm:$0xff]
    %v6497 = vld [vmem:[#allocation6 + $0x280] sm:$0xff]
    %v6498 = vld [vmem:[#allocation6 + $0x288] sm:$0xff]
    %v6499 = vld [vmem:[#allocation6 + $0x290] sm:$0xff]
    %v6500 = vld [vmem:[#allocation6 + $0x298] sm:$0xff]
    %v6501 = vld [vmem:[#allocation6 + $0x2a0] sm:$0xff]
    %v6502 = vld [vmem:[#allocation6 + $0x2a8] sm:$0xff]
    %v6503 = vld [vmem:[#allocation6 + $0x2b0] sm:$0xff]
    %v6504 = vld [vmem:[#allocation6 + $0x2b8] sm:$0xff]
    %v6505 = vld [vmem:[#allocation6 + $0x2c0] sm:$0xff]
    %v6506 = vld [vmem:[#allocation6 + $0x2c8] sm:$0xff]
    %v6507 = vld [vmem:[#allocation6 + $0x2d0] sm:$0xff]
    %v6508 = vld [vmem:[#allocation6 + $0x2d8] sm:$0xff]
    %v6509 = vld [vmem:[#allocation6 + $0x2e0] sm:$0xff]
    %v6510 = vld [vmem:[#allocation6 + $0x2e8] sm:$0xff]
    %v6511 = vld [vmem:[#allocation6 + $0x2f0] sm:$0xff]
    %v6512 = vld [vmem:[#allocation6 + $0x2f8] sm:$0xff]
    %v6513 = vld [vmem:[#allocation6 + $0x300] sm:$0xff]
    %v6514 = vld [vmem:[#allocation6 + $0x308] sm:$0xff]
    %v6515 = vld [vmem:[#allocation6 + $0x310] sm:$0xff]
    %v6516 = vld [vmem:[#allocation6 + $0x318] sm:$0xff]
    %v6517 = vld [vmem:[#allocation6 + $0x320] sm:$0xff]
    %v6518 = vld [vmem:[#allocation6 + $0x328] sm:$0xff]
    %v6519 = vld [vmem:[#allocation6 + $0x330] sm:$0xff]
    %v6520 = vld [vmem:[#allocation6 + $0x338] sm:$0xff]
    %v6521 = vld [vmem:[#allocation6 + $0x340] sm:$0xff]
    %v6522 = vld [vmem:[#allocation6 + $0x348] sm:$0xff]
    %v6523 = vld [vmem:[#allocation6 + $0x350] sm:$0xff]
    %v6524 = vld [vmem:[#allocation6 + $0x358] sm:$0xff]
    %v6525 = vld [vmem:[#allocation6 + $0x360] sm:$0xff]
    %v6526 = vld [vmem:[#allocation6 + $0x368] sm:$0xff]
    %v6527 = vld [vmem:[#allocation6 + $0x370] sm:$0xff]
    %v6528 = vld [vmem:[#allocation6 + $0x378] sm:$0xff]
    %v6529 = vld [vmem:[#allocation6 + $0x380] sm:$0xff]
    %v6530 = vld [vmem:[#allocation6 + $0x388] sm:$0xff]
    %v6531 = vld [vmem:[#allocation6 + $0x390] sm:$0xff]
    %v6532 = vld [vmem:[#allocation6 + $0x398] sm:$0xff]
    %v6533 = vld [vmem:[#allocation6 + $0x3a0] sm:$0xff]
    %v6534 = vld [vmem:[#allocation6 + $0x3a8] sm:$0xff]
    %v6535 = vld [vmem:[#allocation6 + $0x3b0] sm:$0xff]
    %v6536 = vld [vmem:[#allocation6 + $0x3b8] sm:$0xff]
    %v6537 = vld [vmem:[#allocation6 + $0x3c0] sm:$0xff]
    %v6538 = vld [vmem:[#allocation6 + $0x3c8] sm:$0xff]
    %v6539 = vld [vmem:[#allocation6 + $0x3d0] sm:$0xff]
    %v6540 = vld [vmem:[#allocation6 + $0x3d8] sm:$0xff]
    %v6541 = vld [vmem:[#allocation6 + $0x3e0] sm:$0xff]
    %v6542 = vld [vmem:[#allocation6 + $0x3e8] sm:$0xff]
    %v6543 = vld [vmem:[#allocation6 + $0x3f0] sm:$0xff]
    %v6544 = vld [vmem:[#allocation6 + $0x3f8] sm:$0xff]
    %v6545 = vld [vmem:[#allocation6 + $0x400] sm:$0xff]
    %v6546 = vld [vmem:[#allocation6 + $0x408] sm:$0xff]
    %v6547 = vld [vmem:[#allocation6 + $0x410] sm:$0xff]
    %v6548 = vld [vmem:[#allocation6 + $0x418] sm:$0xff]
    %v6549 = vld [vmem:[#allocation6 + $0x420] sm:$0xff]
    %v6550 = vld [vmem:[#allocation6 + $0x428] sm:$0xff]
    %v6551 = vld [vmem:[#allocation6 + $0x430] sm:$0xff]
    %v6552 = vld [vmem:[#allocation6 + $0x438] sm:$0xff]
    %v6553 = vld [vmem:[#allocation6 + $0x440] sm:$0xff]
    %v6554 = vld [vmem:[#allocation6 + $0x448] sm:$0xff]
    %v6555 = vld [vmem:[#allocation6 + $0x450] sm:$0xff]
    %v6556 = vld [vmem:[#allocation6 + $0x458] sm:$0xff]
    %v6557 = vld [vmem:[#allocation6 + $0x460] sm:$0xff]
    %v6558 = vld [vmem:[#allocation6 + $0x468] sm:$0xff]
    %v6559 = vld [vmem:[#allocation6 + $0x470] sm:$0xff]
    %v6560 = vld [vmem:[#allocation6 + $0x478] sm:$0xff]
    %v6561 = vld [vmem:[#allocation6 + $0x480] sm:$0xff]
    %v6562 = vld [vmem:[#allocation6 + $0x488] sm:$0xff]
    %v6563 = vld [vmem:[#allocation6 + $0x490] sm:$0xff]
    %v6564 = vld [vmem:[#allocation6 + $0x498] sm:$0xff]
    %v6565 = vld [vmem:[#allocation6 + $0x4a0] sm:$0xff]
    %v6566 = vld [vmem:[#allocation6 + $0x4a8] sm:$0xff]
    %v6567 = vld [vmem:[#allocation6 + $0x4b0] sm:$0xff]
    %v6568 = vld [vmem:[#allocation6 + $0x4b8] sm:$0xff]
    %v6569 = vld [vmem:[#allocation6 + $0x4c0] sm:$0xff]
    %v6570 = vld [vmem:[#allocation6 + $0x4c8] sm:$0xff]
    %v6571 = vld [vmem:[#allocation6 + $0x4d0] sm:$0xff]
    %v6572 = vld [vmem:[#allocation6 + $0x4d8] sm:$0xff]
    %v6573 = vld [vmem:[#allocation6 + $0x4e0] sm:$0xff]
    %v6574 = vld [vmem:[#allocation6 + $0x4e8] sm:$0xff]
    %v6575 = vld [vmem:[#allocation6 + $0x4f0] sm:$0xff]
    %v6576 = vld [vmem:[#allocation6 + $0x4f8] sm:$0xff]
    %v6577 = vld [vmem:[#allocation6 + $0x500] sm:$0xff]
    %v6578 = vld [vmem:[#allocation6 + $0x508] sm:$0xff]
    %v6579 = vld [vmem:[#allocation6 + $0x510] sm:$0xff]
    %v6580 = vld [vmem:[#allocation6 + $0x518] sm:$0xff]
    %v6581 = vld [vmem:[#allocation6 + $0x520] sm:$0xff]
    %v6582 = vld [vmem:[#allocation6 + $0x528] sm:$0xff]
    %v6583 = vld [vmem:[#allocation6 + $0x530] sm:$0xff]
    %v6584 = vld [vmem:[#allocation6 + $0x538] sm:$0xff]
    %v6585 = vld [vmem:[#allocation6 + $0x540] sm:$0xff]
    %v6586 = vld [vmem:[#allocation6 + $0x548] sm:$0xff]
    %v6587 = vld [vmem:[#allocation6 + $0x550] sm:$0xff]
    %v6588 = vld [vmem:[#allocation6 + $0x558] sm:$0xff]
    %v6589 = vld [vmem:[#allocation6 + $0x560] sm:$0xff]
    %v6590 = vld [vmem:[#allocation6 + $0x568] sm:$0xff]
    %v6591 = vld [vmem:[#allocation6 + $0x570] sm:$0xff]
    %v6592 = vld [vmem:[#allocation6 + $0x578] sm:$0xff]
    %v6593 = vld [vmem:[#allocation6 + $0x580] sm:$0xff]
    %v6594 = vld [vmem:[#allocation6 + $0x588] sm:$0xff]
    %v6595 = vld [vmem:[#allocation6 + $0x590] sm:$0xff]
    %v6596 = vld [vmem:[#allocation6 + $0x598] sm:$0xff]
    %v6597 = vld [vmem:[#allocation6 + $0x5a0] sm:$0xff]
    %v6598 = vld [vmem:[#allocation6 + $0x5a8] sm:$0xff]
    %v6599 = vld [vmem:[#allocation6 + $0x5b0] sm:$0xff]
    %v6600 = vld [vmem:[#allocation6 + $0x5b8] sm:$0xff]
    %v6601 = vld [vmem:[#allocation6 + $0x5c0] sm:$0xff]
    %v6602 = vld [vmem:[#allocation6 + $0x5c8] sm:$0xff]
    %v6603 = vld [vmem:[#allocation6 + $0x5d0] sm:$0xff]
    %v6604 = vld [vmem:[#allocation6 + $0x5d8] sm:$0xff]
    %v6605 = vld [vmem:[#allocation6 + $0x5e0] sm:$0xff]
    %v6606 = vld [vmem:[#allocation6 + $0x5e8] sm:$0xff]
    %v6607 = vld [vmem:[#allocation6 + $0x5f0] sm:$0xff]
    %v6608 = vld [vmem:[#allocation6 + $0x5f8] sm:$0xff]
    %v6609 = vld [vmem:[#allocation6 + $0x600] sm:$0xff]
    %v6610 = vld [vmem:[#allocation6 + $0x608] sm:$0xff]
    %v6611 = vld [vmem:[#allocation6 + $0x610] sm:$0xff]
    %v6612 = vld [vmem:[#allocation6 + $0x618] sm:$0xff]
    %v6613 = vld [vmem:[#allocation6 + $0x620] sm:$0xff]
    %v6614 = vld [vmem:[#allocation6 + $0x628] sm:$0xff]
    %v6615 = vld [vmem:[#allocation6 + $0x630] sm:$0xff]
    %v6616 = vld [vmem:[#allocation6 + $0x638] sm:$0xff]
    %v6617 = vld [vmem:[#allocation6 + $0x640] sm:$0xff]
    %v6618 = vld [vmem:[#allocation6 + $0x648] sm:$0xff]
    %v6619 = vld [vmem:[#allocation6 + $0x650] sm:$0xff]
    %v6620 = vld [vmem:[#allocation6 + $0x658] sm:$0xff]
    %v6621 = vld [vmem:[#allocation6 + $0x660] sm:$0xff]
    %v6622 = vld [vmem:[#allocation6 + $0x668] sm:$0xff]
    %v6623 = vld [vmem:[#allocation6 + $0x670] sm:$0xff]
    %v6624 = vld [vmem:[#allocation6 + $0x678] sm:$0xff]
    %v6625 = vld [vmem:[#allocation6 + $0x680] sm:$0xff]
    %v6626 = vld [vmem:[#allocation6 + $0x688] sm:$0xff]
    %v6627 = vld [vmem:[#allocation6 + $0x690] sm:$0xff]
    %v6628 = vld [vmem:[#allocation6 + $0x698] sm:$0xff]
    %v6629 = vld [vmem:[#allocation6 + $0x6a0] sm:$0xff]
    %v6630 = vld [vmem:[#allocation6 + $0x6a8] sm:$0xff]
    %v6631 = vld [vmem:[#allocation6 + $0x6b0] sm:$0xff]
    %v6632 = vld [vmem:[#allocation6 + $0x6b8] sm:$0xff]
    %v6633 = vld [vmem:[#allocation6 + $0x6c0] sm:$0xff]
    %v6634 = vld [vmem:[#allocation6 + $0x6c8] sm:$0xff]
    %v6635 = vld [vmem:[#allocation6 + $0x6d0] sm:$0xff]
    %v6636 = vld [vmem:[#allocation6 + $0x6d8] sm:$0xff]
    %v6637 = vld [vmem:[#allocation6 + $0x6e0] sm:$0xff]
    %v6638 = vld [vmem:[#allocation6 + $0x6e8] sm:$0xff]
    %v6639 = vld [vmem:[#allocation6 + $0x6f0] sm:$0xff]
    %v6640 = vld [vmem:[#allocation6 + $0x6f8] sm:$0xff]
    %v6641 = vld [vmem:[#allocation6 + $0x700] sm:$0xff]
    %v6642 = vld [vmem:[#allocation6 + $0x708] sm:$0xff]
    %v6643 = vld [vmem:[#allocation6 + $0x710] sm:$0xff]
    %v6644 = vld [vmem:[#allocation6 + $0x718] sm:$0xff]
    %v6645 = vld [vmem:[#allocation6 + $0x720] sm:$0xff]
    %v6646 = vld [vmem:[#allocation6 + $0x728] sm:$0xff]
    %v6647 = vld [vmem:[#allocation6 + $0x730] sm:$0xff]
    %v6648 = vld [vmem:[#allocation6 + $0x738] sm:$0xff]
    %v6649 = vld [vmem:[#allocation6 + $0x740] sm:$0xff]
    %v6650 = vld [vmem:[#allocation6 + $0x748] sm:$0xff]
    %v6651 = vld [vmem:[#allocation6 + $0x750] sm:$0xff]
    %v6652 = vld [vmem:[#allocation6 + $0x758] sm:$0xff]
    %v6653 = vld [vmem:[#allocation6 + $0x760] sm:$0xff]
    %v6654 = vld [vmem:[#allocation6 + $0x768] sm:$0xff]
    %v6655 = vld [vmem:[#allocation6 + $0x770] sm:$0xff]
    %v6656 = vld [vmem:[#allocation6 + $0x778] sm:$0xff]
    %v6657 = vld [vmem:[#allocation6 + $0x780] sm:$0xff]
    %v6658 = vld [vmem:[#allocation6 + $0x788] sm:$0xff]
    %v6659 = vld [vmem:[#allocation6 + $0x790] sm:$0xff]
    %v6660 = vld [vmem:[#allocation6 + $0x798] sm:$0xff]
    %v6661 = vld [vmem:[#allocation6 + $0x7a0] sm:$0xff]
    %v6662 = vld [vmem:[#allocation6 + $0x7a8] sm:$0xff]
    %v6663 = vld [vmem:[#allocation6 + $0x7b0] sm:$0xff]
    %v6664 = vld [vmem:[#allocation6 + $0x7b8] sm:$0xff]
    %v6665 = vld [vmem:[#allocation6 + $0x7c0] sm:$0xff]
    %v6666 = vld [vmem:[#allocation6 + $0x7c8] sm:$0xff]
    %v6667 = vld [vmem:[#allocation6 + $0x7d0] sm:$0xff]
    %v6668 = vld [vmem:[#allocation6 + $0x7d8] sm:$0xff]
    %v6669 = vld [vmem:[#allocation6 + $0x7e0] sm:$0xff]
    %v6670 = vld [vmem:[#allocation6 + $0x7e8] sm:$0xff]
    %v6671 = vld [vmem:[#allocation6 + $0x7f0] sm:$0xff]
    %v6672 = vld [vmem:[#allocation6 + $0x7f8] sm:$0xff]
    %v6673 = vld [vmem:[#allocation7] sm:$0xf]
    %v6675 = vperm.slane %v6673, 0
    %v6676 = vperm.slane %v6673, 1
    %v6677 = vperm.slane %v6673, 2
    %v6678 = vperm.slane %v6673, 3
    %v6939 = vunpack.c.l.b16 %v6417
    %v6940 = vunpack.c.h.b16 %v6417
    %v6941 = vunpack.c.l.b16 %v6418
    %v6942 = vunpack.c.h.b16 %v6418
    %v6943 = vunpack.c.l.b16 %v6419
    %v6944 = vunpack.c.h.b16 %v6419
    %v6945 = vunpack.c.l.b16 %v6420
    %v6946 = vunpack.c.h.b16 %v6420
    %v6947 = vunpack.c.l.b16 %v6421
    %v6948 = vunpack.c.h.b16 %v6421
    %v6949 = vunpack.c.l.b16 %v6422
    %v6950 = vunpack.c.h.b16 %v6422
    %v6951 = vunpack.c.l.b16 %v6423
    %v6952 = vunpack.c.h.b16 %v6423
    %v6953 = vunpack.c.l.b16 %v6424
    %v6954 = vunpack.c.h.b16 %v6424
    %v6955 = vunpack.c.l.b16 %v6425
    %v6956 = vunpack.c.h.b16 %v6425
    %v6957 = vunpack.c.l.b16 %v6426
    %v6958 = vunpack.c.h.b16 %v6426
    %v6959 = vunpack.c.l.b16 %v6427
    %v6960 = vunpack.c.h.b16 %v6427
    %v6961 = vunpack.c.l.b16 %v6428
    %v6962 = vunpack.c.h.b16 %v6428
    %v6963 = vunpack.c.l.b16 %v6429
    %v6964 = vunpack.c.h.b16 %v6429
    %v6965 = vunpack.c.l.b16 %v6430
    %v6966 = vunpack.c.h.b16 %v6430
    %v6967 = vunpack.c.l.b16 %v6431
    %v6968 = vunpack.c.h.b16 %v6431
    %v6969 = vunpack.c.l.b16 %v6432
    %v6970 = vunpack.c.h.b16 %v6432
    %v6971 = vunpack.c.l.b16 %v6433
    %v6972 = vunpack.c.h.b16 %v6433
    %v6973 = vunpack.c.l.b16 %v6434
    %v6974 = vunpack.c.h.b16 %v6434
    %v6975 = vunpack.c.l.b16 %v6435
    %v6976 = vunpack.c.h.b16 %v6435
    %v6977 = vunpack.c.l.b16 %v6436
    %v6978 = vunpack.c.h.b16 %v6436
    %v6979 = vunpack.c.l.b16 %v6437
    %v6980 = vunpack.c.h.b16 %v6437
    %v6981 = vunpack.c.l.b16 %v6438
    %v6982 = vunpack.c.h.b16 %v6438
    %v6983 = vunpack.c.l.b16 %v6439
    %v6984 = vunpack.c.h.b16 %v6439
    %v6985 = vunpack.c.l.b16 %v6440
    %v6986 = vunpack.c.h.b16 %v6440
    %v6987 = vunpack.c.l.b16 %v6441
    %v6988 = vunpack.c.h.b16 %v6441
    %v6989 = vunpack.c.l.b16 %v6442
    %v6990 = vunpack.c.h.b16 %v6442
    %v6991 = vunpack.c.l.b16 %v6443
    %v6992 = vunpack.c.h.b16 %v6443
    %v6993 = vunpack.c.l.b16 %v6444
    %v6994 = vunpack.c.h.b16 %v6444
    %v6995 = vunpack.c.l.b16 %v6445
    %v6996 = vunpack.c.h.b16 %v6445
    %v6997 = vunpack.c.l.b16 %v6446
    %v6998 = vunpack.c.h.b16 %v6446
    %v6999 = vunpack.c.l.b16 %v6447
    %v7000 = vunpack.c.h.b16 %v6447
    %v7001 = vunpack.c.l.b16 %v6448
    %v7002 = vunpack.c.h.b16 %v6448
    %v7003 = vunpack.c.l.b16 %v6449
    %v7004 = vunpack.c.h.b16 %v6449
    %v7005 = vunpack.c.l.b16 %v6450
    %v7006 = vunpack.c.h.b16 %v6450
    %v7007 = vunpack.c.l.b16 %v6451
    %v7008 = vunpack.c.h.b16 %v6451
    %v7009 = vunpack.c.l.b16 %v6452
    %v7010 = vunpack.c.h.b16 %v6452
    %v7011 = vunpack.c.l.b16 %v6453
    %v7012 = vunpack.c.h.b16 %v6453
    %v7013 = vunpack.c.l.b16 %v6454
    %v7014 = vunpack.c.h.b16 %v6454
    %v7015 = vunpack.c.l.b16 %v6455
    %v7016 = vunpack.c.h.b16 %v6455
    %v7017 = vunpack.c.l.b16 %v6456
    %v7018 = vunpack.c.h.b16 %v6456
    %v7019 = vunpack.c.l.b16 %v6457
    %v7020 = vunpack.c.h.b16 %v6457
    %v7021 = vunpack.c.l.b16 %v6458
    %v7022 = vunpack.c.h.b16 %v6458
    %v7023 = vunpack.c.l.b16 %v6459
    %v7024 = vunpack.c.h.b16 %v6459
    %v7025 = vunpack.c.l.b16 %v6460
    %v7026 = vunpack.c.h.b16 %v6460
    %v7027 = vunpack.c.l.b16 %v6461
    %v7028 = vunpack.c.h.b16 %v6461
    %v7029 = vunpack.c.l.b16 %v6462
    %v7030 = vunpack.c.h.b16 %v6462
    %v7031 = vunpack.c.l.b16 %v6463
    %v7032 = vunpack.c.h.b16 %v6463
    %v7033 = vunpack.c.l.b16 %v6464
    %v7034 = vunpack.c.h.b16 %v6464
    %v7035 = vunpack.c.l.b16 %v6465
    %v7036 = vunpack.c.h.b16 %v6465
    %v7037 = vunpack.c.l.b16 %v6466
    %v7038 = vunpack.c.h.b16 %v6466
    %v7039 = vunpack.c.l.b16 %v6467
    %v7040 = vunpack.c.h.b16 %v6467
    %v7041 = vunpack.c.l.b16 %v6468
    %v7042 = vunpack.c.h.b16 %v6468
    %v7043 = vunpack.c.l.b16 %v6469
    %v7044 = vunpack.c.h.b16 %v6469
    %v7045 = vunpack.c.l.b16 %v6470
    %v7046 = vunpack.c.h.b16 %v6470
    %v7047 = vunpack.c.l.b16 %v6471
    %v7048 = vunpack.c.h.b16 %v6471
    %v7049 = vunpack.c.l.b16 %v6472
    %v7050 = vunpack.c.h.b16 %v6472
    %v7051 = vunpack.c.l.b16 %v6473
    %v7052 = vunpack.c.h.b16 %v6473
    %v7053 = vunpack.c.l.b16 %v6474
    %v7054 = vunpack.c.h.b16 %v6474
    %v7055 = vunpack.c.l.b16 %v6475
    %v7056 = vunpack.c.h.b16 %v6475
    %v7057 = vunpack.c.l.b16 %v6476
    %v7058 = vunpack.c.h.b16 %v6476
    %v7059 = vunpack.c.l.b16 %v6477
    %v7060 = vunpack.c.h.b16 %v6477
    %v7061 = vunpack.c.l.b16 %v6478
    %v7062 = vunpack.c.h.b16 %v6478
    %v7063 = vunpack.c.l.b16 %v6479
    %v7064 = vunpack.c.h.b16 %v6479
    %v7065 = vunpack.c.l.b16 %v6480
    %v7066 = vunpack.c.h.b16 %v6480
    %v7067 = vunpack.c.l.b16 %v6481
    %v7068 = vunpack.c.h.b16 %v6481
    %v7069 = vunpack.c.l.b16 %v6482
    %v7070 = vunpack.c.h.b16 %v6482
    %v7071 = vunpack.c.l.b16 %v6483
    %v7072 = vunpack.c.h.b16 %v6483
    %v7073 = vunpack.c.l.b16 %v6484
    %v7074 = vunpack.c.h.b16 %v6484
    %v7075 = vunpack.c.l.b16 %v6485
    %v7076 = vunpack.c.h.b16 %v6485
    %v7077 = vunpack.c.l.b16 %v6486
    %v7078 = vunpack.c.h.b16 %v6486
    %v7079 = vunpack.c.l.b16 %v6487
    %v7080 = vunpack.c.h.b16 %v6487
    %v7081 = vunpack.c.l.b16 %v6488
    %v7082 = vunpack.c.h.b16 %v6488
    %v7083 = vunpack.c.l.b16 %v6489
    %v7084 = vunpack.c.h.b16 %v6489
    %v7085 = vunpack.c.l.b16 %v6490
    %v7086 = vunpack.c.h.b16 %v6490
    %v7087 = vunpack.c.l.b16 %v6491
    %v7088 = vunpack.c.h.b16 %v6491
    %v7089 = vunpack.c.l.b16 %v6492
    %v7090 = vunpack.c.h.b16 %v6492
    %v7091 = vunpack.c.l.b16 %v6493
    %v7092 = vunpack.c.h.b16 %v6493
    %v7093 = vunpack.c.l.b16 %v6494
    %v7094 = vunpack.c.h.b16 %v6494
    %v7095 = vunpack.c.l.b16 %v6495
    %v7096 = vunpack.c.h.b16 %v6495
    %v7097 = vunpack.c.l.b16 %v6496
    %v7098 = vunpack.c.h.b16 %v6496
    %v7099 = vunpack.c.l.b16 %v6497
    %v7100 = vunpack.c.h.b16 %v6497
    %v7101 = vunpack.c.l.b16 %v6498
    %v7102 = vunpack.c.h.b16 %v6498
    %v7103 = vunpack.c.l.b16 %v6499
    %v7104 = vunpack.c.h.b16 %v6499
    %v7105 = vunpack.c.l.b16 %v6500
    %v7106 = vunpack.c.h.b16 %v6500
    %v7107 = vunpack.c.l.b16 %v6501
    %v7108 = vunpack.c.h.b16 %v6501
    %v7109 = vunpack.c.l.b16 %v6502
    %v7110 = vunpack.c.h.b16 %v6502
    %v7111 = vunpack.c.l.b16 %v6503
    %v7112 = vunpack.c.h.b16 %v6503
    %v7113 = vunpack.c.l.b16 %v6504
    %v7114 = vunpack.c.h.b16 %v6504
    %v7115 = vunpack.c.l.b16 %v6505
    %v7116 = vunpack.c.h.b16 %v6505
    %v7117 = vunpack.c.l.b16 %v6506
    %v7118 = vunpack.c.h.b16 %v6506
    %v7119 = vunpack.c.l.b16 %v6507
    %v7120 = vunpack.c.h.b16 %v6507
    %v7121 = vunpack.c.l.b16 %v6508
    %v7122 = vunpack.c.h.b16 %v6508
    %v7123 = vunpack.c.l.b16 %v6509
    %v7124 = vunpack.c.h.b16 %v6509
    %v7125 = vunpack.c.l.b16 %v6510
    %v7126 = vunpack.c.h.b16 %v6510
    %v7127 = vunpack.c.l.b16 %v6511
    %v7128 = vunpack.c.h.b16 %v6511
    %v7129 = vunpack.c.l.b16 %v6512
    %v7130 = vunpack.c.h.b16 %v6512
    %v7131 = vunpack.c.l.b16 %v6513
    %v7132 = vunpack.c.h.b16 %v6513
    %v7133 = vunpack.c.l.b16 %v6514
    %v7134 = vunpack.c.h.b16 %v6514
    %v7135 = vunpack.c.l.b16 %v6515
    %v7136 = vunpack.c.h.b16 %v6515
    %v7137 = vunpack.c.l.b16 %v6516
    %v7138 = vunpack.c.h.b16 %v6516
    %v7139 = vunpack.c.l.b16 %v6517
    %v7140 = vunpack.c.h.b16 %v6517
    %v7141 = vunpack.c.l.b16 %v6518
    %v7142 = vunpack.c.h.b16 %v6518
    %v7143 = vunpack.c.l.b16 %v6519
    %v7144 = vunpack.c.h.b16 %v6519
    %v7145 = vunpack.c.l.b16 %v6520
    %v7146 = vunpack.c.h.b16 %v6520
    %v7147 = vunpack.c.l.b16 %v6521
    %v7148 = vunpack.c.h.b16 %v6521
    %v7149 = vunpack.c.l.b16 %v6522
    %v7150 = vunpack.c.h.b16 %v6522
    %v7151 = vunpack.c.l.b16 %v6523
    %v7152 = vunpack.c.h.b16 %v6523
    %v7153 = vunpack.c.l.b16 %v6524
    %v7154 = vunpack.c.h.b16 %v6524
    %v7155 = vunpack.c.l.b16 %v6525
    %v7156 = vunpack.c.h.b16 %v6525
    %v7157 = vunpack.c.l.b16 %v6526
    %v7158 = vunpack.c.h.b16 %v6526
    %v7159 = vunpack.c.l.b16 %v6527
    %v7160 = vunpack.c.h.b16 %v6527
    %v7161 = vunpack.c.l.b16 %v6528
    %v7162 = vunpack.c.h.b16 %v6528
    %v7163 = vunpack.c.l.b16 %v6529
    %v7164 = vunpack.c.h.b16 %v6529
    %v7165 = vunpack.c.l.b16 %v6530
    %v7166 = vunpack.c.h.b16 %v6530
    %v7167 = vunpack.c.l.b16 %v6531
    %v7168 = vunpack.c.h.b16 %v6531
    %v7169 = vunpack.c.l.b16 %v6532
    %v7170 = vunpack.c.h.b16 %v6532
    %v7171 = vunpack.c.l.b16 %v6533
    %v7172 = vunpack.c.h.b16 %v6533
    %v7173 = vunpack.c.l.b16 %v6534
    %v7174 = vunpack.c.h.b16 %v6534
    %v7175 = vunpack.c.l.b16 %v6535
    %v7176 = vunpack.c.h.b16 %v6535
    %v7177 = vunpack.c.l.b16 %v6536
    %v7178 = vunpack.c.h.b16 %v6536
    %v7179 = vunpack.c.l.b16 %v6537
    %v7180 = vunpack.c.h.b16 %v6537
    %v7181 = vunpack.c.l.b16 %v6538
    %v7182 = vunpack.c.h.b16 %v6538
    %v7183 = vunpack.c.l.b16 %v6539
    %v7184 = vunpack.c.h.b16 %v6539
    %v7185 = vunpack.c.l.b16 %v6540
    %v7186 = vunpack.c.h.b16 %v6540
    %v7187 = vunpack.c.l.b16 %v6541
    %v7188 = vunpack.c.h.b16 %v6541
    %v7189 = vunpack.c.l.b16 %v6542
    %v7190 = vunpack.c.h.b16 %v6542
    %v7191 = vunpack.c.l.b16 %v6543
    %v7192 = vunpack.c.h.b16 %v6543
    %v7193 = vunpack.c.l.b16 %v6544
    %v7194 = vunpack.c.h.b16 %v6544
    %v7195 = vunpack.c.l.b16 %v6545
    %v7196 = vunpack.c.h.b16 %v6545
    %v7197 = vunpack.c.l.b16 %v6546
    %v7198 = vunpack.c.h.b16 %v6546
    %v7199 = vunpack.c.l.b16 %v6547
    %v7200 = vunpack.c.h.b16 %v6547
    %v7201 = vunpack.c.l.b16 %v6548
    %v7202 = vunpack.c.h.b16 %v6548
    %v7203 = vunpack.c.l.b16 %v6549
    %v7204 = vunpack.c.h.b16 %v6549
    %v7205 = vunpack.c.l.b16 %v6550
    %v7206 = vunpack.c.h.b16 %v6550
    %v7207 = vunpack.c.l.b16 %v6551
    %v7208 = vunpack.c.h.b16 %v6551
    %v7209 = vunpack.c.l.b16 %v6552
    %v7210 = vunpack.c.h.b16 %v6552
    %v7211 = vunpack.c.l.b16 %v6553
    %v7212 = vunpack.c.h.b16 %v6553
    %v7213 = vunpack.c.l.b16 %v6554
    %v7214 = vunpack.c.h.b16 %v6554
    %v7215 = vunpack.c.l.b16 %v6555
    %v7216 = vunpack.c.h.b16 %v6555
    %v7217 = vunpack.c.l.b16 %v6556
    %v7218 = vunpack.c.h.b16 %v6556
    %v7219 = vunpack.c.l.b16 %v6557
    %v7220 = vunpack.c.h.b16 %v6557
    %v7221 = vunpack.c.l.b16 %v6558
    %v7222 = vunpack.c.h.b16 %v6558
    %v7223 = vunpack.c.l.b16 %v6559
    %v7224 = vunpack.c.h.b16 %v6559
    %v7225 = vunpack.c.l.b16 %v6560
    %v7226 = vunpack.c.h.b16 %v6560
    %v7227 = vunpack.c.l.b16 %v6561
    %v7228 = vunpack.c.h.b16 %v6561
    %v7229 = vunpack.c.l.b16 %v6562
    %v7230 = vunpack.c.h.b16 %v6562
    %v7231 = vunpack.c.l.b16 %v6563
    %v7232 = vunpack.c.h.b16 %v6563
    %v7233 = vunpack.c.l.b16 %v6564
    %v7234 = vunpack.c.h.b16 %v6564
    %v7235 = vunpack.c.l.b16 %v6565
    %v7236 = vunpack.c.h.b16 %v6565
    %v7237 = vunpack.c.l.b16 %v6566
    %v7238 = vunpack.c.h.b16 %v6566
    %v7239 = vunpack.c.l.b16 %v6567
    %v7240 = vunpack.c.h.b16 %v6567
    %v7241 = vunpack.c.l.b16 %v6568
    %v7242 = vunpack.c.h.b16 %v6568
    %v7243 = vunpack.c.l.b16 %v6569
    %v7244 = vunpack.c.h.b16 %v6569
    %v7245 = vunpack.c.l.b16 %v6570
    %v7246 = vunpack.c.h.b16 %v6570
    %v7247 = vunpack.c.l.b16 %v6571
    %v7248 = vunpack.c.h.b16 %v6571
    %v7249 = vunpack.c.l.b16 %v6572
    %v7250 = vunpack.c.h.b16 %v6572
    %v7251 = vunpack.c.l.b16 %v6573
    %v7252 = vunpack.c.h.b16 %v6573
    %v7253 = vunpack.c.l.b16 %v6574
    %v7254 = vunpack.c.h.b16 %v6574
    %v7255 = vunpack.c.l.b16 %v6575
    %v7256 = vunpack.c.h.b16 %v6575
    %v7257 = vunpack.c.l.b16 %v6576
    %v7258 = vunpack.c.h.b16 %v6576
    %v7259 = vunpack.c.l.b16 %v6577
    %v7260 = vunpack.c.h.b16 %v6577
    %v7261 = vunpack.c.l.b16 %v6578
    %v7262 = vunpack.c.h.b16 %v6578
    %v7263 = vunpack.c.l.b16 %v6579
    %v7264 = vunpack.c.h.b16 %v6579
    %v7265 = vunpack.c.l.b16 %v6580
    %v7266 = vunpack.c.h.b16 %v6580
    %v7267 = vunpack.c.l.b16 %v6581
    %v7268 = vunpack.c.h.b16 %v6581
    %v7269 = vunpack.c.l.b16 %v6582
    %v7270 = vunpack.c.h.b16 %v6582
    %v7271 = vunpack.c.l.b16 %v6583
    %v7272 = vunpack.c.h.b16 %v6583
    %v7273 = vunpack.c.l.b16 %v6584
    %v7274 = vunpack.c.h.b16 %v6584
    %v7275 = vunpack.c.l.b16 %v6585
    %v7276 = vunpack.c.h.b16 %v6585
    %v7277 = vunpack.c.l.b16 %v6586
    %v7278 = vunpack.c.h.b16 %v6586
    %v7279 = vunpack.c.l.b16 %v6587
    %v7280 = vunpack.c.h.b16 %v6587
    %v7281 = vunpack.c.l.b16 %v6588
    %v7282 = vunpack.c.h.b16 %v6588
    %v7283 = vunpack.c.l.b16 %v6589
    %v7284 = vunpack.c.h.b16 %v6589
    %v7285 = vunpack.c.l.b16 %v6590
    %v7286 = vunpack.c.h.b16 %v6590
    %v7287 = vunpack.c.l.b16 %v6591
    %v7288 = vunpack.c.h.b16 %v6591
    %v7289 = vunpack.c.l.b16 %v6592
    %v7290 = vunpack.c.h.b16 %v6592
    %v7291 = vunpack.c.l.b16 %v6593
    %v7292 = vunpack.c.h.b16 %v6593
    %v7293 = vunpack.c.l.b16 %v6594
    %v7294 = vunpack.c.h.b16 %v6594
    %v7295 = vunpack.c.l.b16 %v6595
    %v7296 = vunpack.c.h.b16 %v6595
    %v7297 = vunpack.c.l.b16 %v6596
    %v7298 = vunpack.c.h.b16 %v6596
    %v7299 = vunpack.c.l.b16 %v6597
    %v7300 = vunpack.c.h.b16 %v6597
    %v7301 = vunpack.c.l.b16 %v6598
    %v7302 = vunpack.c.h.b16 %v6598
    %v7303 = vunpack.c.l.b16 %v6599
    %v7304 = vunpack.c.h.b16 %v6599
    %v7305 = vunpack.c.l.b16 %v6600
    %v7306 = vunpack.c.h.b16 %v6600
    %v7307 = vunpack.c.l.b16 %v6601
    %v7308 = vunpack.c.h.b16 %v6601
    %v7309 = vunpack.c.l.b16 %v6602
    %v7310 = vunpack.c.h.b16 %v6602
    %v7311 = vunpack.c.l.b16 %v6603
    %v7312 = vunpack.c.h.b16 %v6603
    %v7313 = vunpack.c.l.b16 %v6604
    %v7314 = vunpack.c.h.b16 %v6604
    %v7315 = vunpack.c.l.b16 %v6605
    %v7316 = vunpack.c.h.b16 %v6605
    %v7317 = vunpack.c.l.b16 %v6606
    %v7318 = vunpack.c.h.b16 %v6606
    %v7319 = vunpack.c.l.b16 %v6607
    %v7320 = vunpack.c.h.b16 %v6607
    %v7321 = vunpack.c.l.b16 %v6608
    %v7322 = vunpack.c.h.b16 %v6608
    %v7323 = vunpack.c.l.b16 %v6609
    %v7324 = vunpack.c.h.b16 %v6609
    %v7325 = vunpack.c.l.b16 %v6610
    %v7326 = vunpack.c.h.b16 %v6610
    %v7327 = vunpack.c.l.b16 %v6611
    %v7328 = vunpack.c.h.b16 %v6611
    %v7329 = vunpack.c.l.b16 %v6612
    %v7330 = vunpack.c.h.b16 %v6612
    %v7331 = vunpack.c.l.b16 %v6613
    %v7332 = vunpack.c.h.b16 %v6613
    %v7333 = vunpack.c.l.b16 %v6614
    %v7334 = vunpack.c.h.b16 %v6614
    %v7335 = vunpack.c.l.b16 %v6615
    %v7336 = vunpack.c.h.b16 %v6615
    %v7337 = vunpack.c.l.b16 %v6616
    %v7338 = vunpack.c.h.b16 %v6616
    %v7339 = vunpack.c.l.b16 %v6617
    %v7340 = vunpack.c.h.b16 %v6617
    %v7341 = vunpack.c.l.b16 %v6618
    %v7342 = vunpack.c.h.b16 %v6618
    %v7343 = vunpack.c.l.b16 %v6619
    %v7344 = vunpack.c.h.b16 %v6619
    %v7345 = vunpack.c.l.b16 %v6620
    %v7346 = vunpack.c.h.b16 %v6620
    %v7347 = vunpack.c.l.b16 %v6621
    %v7348 = vunpack.c.h.b16 %v6621
    %v7349 = vunpack.c.l.b16 %v6622
    %v7350 = vunpack.c.h.b16 %v6622
    %v7351 = vunpack.c.l.b16 %v6623
    %v7352 = vunpack.c.h.b16 %v6623
    %v7353 = vunpack.c.l.b16 %v6624
    %v7354 = vunpack.c.h.b16 %v6624
    %v7355 = vunpack.c.l.b16 %v6625
    %v7356 = vunpack.c.h.b16 %v6625
    %v7357 = vunpack.c.l.b16 %v6626
    %v7358 = vunpack.c.h.b16 %v6626
    %v7359 = vunpack.c.l.b16 %v6627
    %v7360 = vunpack.c.h.b16 %v6627
    %v7361 = vunpack.c.l.b16 %v6628
    %v7362 = vunpack.c.h.b16 %v6628
    %v7363 = vunpack.c.l.b16 %v6629
    %v7364 = vunpack.c.h.b16 %v6629
    %v7365 = vunpack.c.l.b16 %v6630
    %v7366 = vunpack.c.h.b16 %v6630
    %v7367 = vunpack.c.l.b16 %v6631
    %v7368 = vunpack.c.h.b16 %v6631
    %v7369 = vunpack.c.l.b16 %v6632
    %v7370 = vunpack.c.h.b16 %v6632
    %v7371 = vunpack.c.l.b16 %v6633
    %v7372 = vunpack.c.h.b16 %v6633
    %v7373 = vunpack.c.l.b16 %v6634
    %v7374 = vunpack.c.h.b16 %v6634
    %v7375 = vunpack.c.l.b16 %v6635
    %v7376 = vunpack.c.h.b16 %v6635
    %v7377 = vunpack.c.l.b16 %v6636
    %v7378 = vunpack.c.h.b16 %v6636
    %v7379 = vunpack.c.l.b16 %v6637
    %v7380 = vunpack.c.h.b16 %v6637
    %v7381 = vunpack.c.l.b16 %v6638
    %v7382 = vunpack.c.h.b16 %v6638
    %v7383 = vunpack.c.l.b16 %v6639
    %v7384 = vunpack.c.h.b16 %v6639
    %v7385 = vunpack.c.l.b16 %v6640
    %v7386 = vunpack.c.h.b16 %v6640
    %v7387 = vunpack.c.l.b16 %v6641
    %v7388 = vunpack.c.h.b16 %v6641
    %v7389 = vunpack.c.l.b16 %v6642
    %v7390 = vunpack.c.h.b16 %v6642
    %v7391 = vunpack.c.l.b16 %v6643
    %v7392 = vunpack.c.h.b16 %v6643
    %v7393 = vunpack.c.l.b16 %v6644
    %v7394 = vunpack.c.h.b16 %v6644
    %v7395 = vunpack.c.l.b16 %v6645
    %v7396 = vunpack.c.h.b16 %v6645
    %v7397 = vunpack.c.l.b16 %v6646
    %v7398 = vunpack.c.h.b16 %v6646
    %v7399 = vunpack.c.l.b16 %v6647
    %v7400 = vunpack.c.h.b16 %v6647
    %v7401 = vunpack.c.l.b16 %v6648
    %v7402 = vunpack.c.h.b16 %v6648
    %v7403 = vunpack.c.l.b16 %v6649
    %v7404 = vunpack.c.h.b16 %v6649
    %v7405 = vunpack.c.l.b16 %v6650
    %v7406 = vunpack.c.h.b16 %v6650
    %v7407 = vunpack.c.l.b16 %v6651
    %v7408 = vunpack.c.h.b16 %v6651
    %v7409 = vunpack.c.l.b16 %v6652
    %v7410 = vunpack.c.h.b16 %v6652
    %v7411 = vunpack.c.l.b16 %v6653
    %v7412 = vunpack.c.h.b16 %v6653
    %v7413 = vunpack.c.l.b16 %v6654
    %v7414 = vunpack.c.h.b16 %v6654
    %v7415 = vunpack.c.l.b16 %v6655
    %v7416 = vunpack.c.h.b16 %v6655
    %v7417 = vunpack.c.l.b16 %v6656
    %v7418 = vunpack.c.h.b16 %v6656
    %v7419 = vunpack.c.l.b16 %v6657
    %v7420 = vunpack.c.h.b16 %v6657
    %v7421 = vunpack.c.l.b16 %v6658
    %v7422 = vunpack.c.h.b16 %v6658
    %v7423 = vunpack.c.l.b16 %v6659
    %v7424 = vunpack.c.h.b16 %v6659
    %v7425 = vunpack.c.l.b16 %v6660
    %v7426 = vunpack.c.h.b16 %v6660
    %v7427 = vunpack.c.l.b16 %v6661
    %v7428 = vunpack.c.h.b16 %v6661
    %v7429 = vunpack.c.l.b16 %v6662
    %v7430 = vunpack.c.h.b16 %v6662
    %v7431 = vunpack.c.l.b16 %v6663
    %v7432 = vunpack.c.h.b16 %v6663
    %v7433 = vunpack.c.l.b16 %v6664
    %v7434 = vunpack.c.h.b16 %v6664
    %v7435 = vunpack.c.l.b16 %v6665
    %v7436 = vunpack.c.h.b16 %v6665
    %v7437 = vunpack.c.l.b16 %v6666
    %v7438 = vunpack.c.h.b16 %v6666
    %v7439 = vunpack.c.l.b16 %v6667
    %v7440 = vunpack.c.h.b16 %v6667
    %v7441 = vunpack.c.l.b16 %v6668
    %v7442 = vunpack.c.h.b16 %v6668
    %v7443 = vunpack.c.l.b16 %v6669
    %v7444 = vunpack.c.h.b16 %v6669
    %v7445 = vunpack.c.l.b16 %v6670
    %v7446 = vunpack.c.h.b16 %v6670
    %v7447 = vunpack.c.l.b16 %v6671
    %v7448 = vunpack.c.h.b16 %v6671
    %v7449 = vunpack.c.l.b16 %v6672
    %v7450 = vunpack.c.h.b16 %v6672
    %v7451 = vpack.c.b16 %v6943, %v6939
    %v7452 = vpack.c.b16 %v6944, %v6940
    %v7453 = vpack.c.b16 %v6945, %v6941
    %v7454 = vpack.c.b16 %v6946, %v6942
    %v7455 = vpack.c.b16 %v6951, %v6947
    %v7456 = vpack.c.b16 %v6952, %v6948
    %v7457 = vpack.c.b16 %v6953, %v6949
    %v7458 = vpack.c.b16 %v6954, %v6950
    %v7459 = vpack.c.b16 %v6959, %v6955
    %v7460 = vpack.c.b16 %v6960, %v6956
    %v7461 = vpack.c.b16 %v6961, %v6957
    %v7462 = vpack.c.b16 %v6962, %v6958
    %v7463 = vpack.c.b16 %v6967, %v6963
    %v7464 = vpack.c.b16 %v6968, %v6964
    %v7465 = vpack.c.b16 %v6969, %v6965
    %v7466 = vpack.c.b16 %v6970, %v6966
    %v7467 = vpack.c.b16 %v6975, %v6971
    %v7468 = vpack.c.b16 %v6976, %v6972
    %v7469 = vpack.c.b16 %v6977, %v6973
    %v7470 = vpack.c.b16 %v6978, %v6974
    %v7471 = vpack.c.b16 %v6983, %v6979
    %v7472 = vpack.c.b16 %v6984, %v6980
    %v7473 = vpack.c.b16 %v6985, %v6981
    %v7474 = vpack.c.b16 %v6986, %v6982
    %v7475 = vpack.c.b16 %v6991, %v6987
    %v7476 = vpack.c.b16 %v6992, %v6988
    %v7477 = vpack.c.b16 %v6993, %v6989
    %v7478 = vpack.c.b16 %v6994, %v6990
    %v7479 = vpack.c.b16 %v6999, %v6995
    %v7480 = vpack.c.b16 %v7000, %v6996
    %v7481 = vpack.c.b16 %v7001, %v6997
    %v7482 = vpack.c.b16 %v7002, %v6998
    %v7483 = vpack.c.b16 %v7007, %v7003
    %v7484 = vpack.c.b16 %v7008, %v7004
    %v7485 = vpack.c.b16 %v7009, %v7005
    %v7486 = vpack.c.b16 %v7010, %v7006
    %v7487 = vpack.c.b16 %v7015, %v7011
    %v7488 = vpack.c.b16 %v7016, %v7012
    %v7489 = vpack.c.b16 %v7017, %v7013
    %v7490 = vpack.c.b16 %v7018, %v7014
    %v7491 = vpack.c.b16 %v7023, %v7019
    %v7492 = vpack.c.b16 %v7024, %v7020
    %v7493 = vpack.c.b16 %v7025, %v7021
    %v7494 = vpack.c.b16 %v7026, %v7022
    %v7495 = vpack.c.b16 %v7031, %v7027
    %v7496 = vpack.c.b16 %v7032, %v7028
    %v7497 = vpack.c.b16 %v7033, %v7029
    %v7498 = vpack.c.b16 %v7034, %v7030
    %v7499 = vpack.c.b16 %v7039, %v7035
    %v7500 = vpack.c.b16 %v7040, %v7036
    %v7501 = vpack.c.b16 %v7041, %v7037
    %v7502 = vpack.c.b16 %v7042, %v7038
    %v7503 = vpack.c.b16 %v7047, %v7043
    %v7504 = vpack.c.b16 %v7048, %v7044
    %v7505 = vpack.c.b16 %v7049, %v7045
    %v7506 = vpack.c.b16 %v7050, %v7046
    %v7507 = vpack.c.b16 %v7055, %v7051
    %v7508 = vpack.c.b16 %v7056, %v7052
    %v7509 = vpack.c.b16 %v7057, %v7053
    %v7510 = vpack.c.b16 %v7058, %v7054
    %v7511 = vpack.c.b16 %v7063, %v7059
    %v7512 = vpack.c.b16 %v7064, %v7060
    %v7513 = vpack.c.b16 %v7065, %v7061
    %v7514 = vpack.c.b16 %v7066, %v7062
    %v7515 = vpack.c.b16 %v7071, %v7067
    %v7516 = vpack.c.b16 %v7072, %v7068
    %v7517 = vpack.c.b16 %v7073, %v7069
    %v7518 = vpack.c.b16 %v7074, %v7070
    %v7519 = vpack.c.b16 %v7079, %v7075
    %v7520 = vpack.c.b16 %v7080, %v7076
    %v7521 = vpack.c.b16 %v7081, %v7077
    %v7522 = vpack.c.b16 %v7082, %v7078
    %v7523 = vpack.c.b16 %v7087, %v7083
    %v7524 = vpack.c.b16 %v7088, %v7084
    %v7525 = vpack.c.b16 %v7089, %v7085
    %v7526 = vpack.c.b16 %v7090, %v7086
    %v7527 = vpack.c.b16 %v7095, %v7091
    %v7528 = vpack.c.b16 %v7096, %v7092
    %v7529 = vpack.c.b16 %v7097, %v7093
    %v7530 = vpack.c.b16 %v7098, %v7094
    %v7531 = vpack.c.b16 %v7103, %v7099
    %v7532 = vpack.c.b16 %v7104, %v7100
    %v7533 = vpack.c.b16 %v7105, %v7101
    %v7534 = vpack.c.b16 %v7106, %v7102
    %v7535 = vpack.c.b16 %v7111, %v7107
    %v7536 = vpack.c.b16 %v7112, %v7108
    %v7537 = vpack.c.b16 %v7113, %v7109
    %v7538 = vpack.c.b16 %v7114, %v7110
    %v7539 = vpack.c.b16 %v7119, %v7115
    %v7540 = vpack.c.b16 %v7120, %v7116
    %v7541 = vpack.c.b16 %v7121, %v7117
    %v7542 = vpack.c.b16 %v7122, %v7118
    %v7543 = vpack.c.b16 %v7127, %v7123
    %v7544 = vpack.c.b16 %v7128, %v7124
    %v7545 = vpack.c.b16 %v7129, %v7125
    %v7546 = vpack.c.b16 %v7130, %v7126
    %v7547 = vpack.c.b16 %v7135, %v7131
    %v7548 = vpack.c.b16 %v7136, %v7132
    %v7549 = vpack.c.b16 %v7137, %v7133
    %v7550 = vpack.c.b16 %v7138, %v7134
    %v7551 = vpack.c.b16 %v7143, %v7139
    %v7552 = vpack.c.b16 %v7144, %v7140
    %v7553 = vpack.c.b16 %v7145, %v7141
    %v7554 = vpack.c.b16 %v7146, %v7142
    %v7555 = vpack.c.b16 %v7151, %v7147
    %v7556 = vpack.c.b16 %v7152, %v7148
    %v7557 = vpack.c.b16 %v7153, %v7149
    %v7558 = vpack.c.b16 %v7154, %v7150
    %v7559 = vpack.c.b16 %v7159, %v7155
    %v7560 = vpack.c.b16 %v7160, %v7156
    %v7561 = vpack.c.b16 %v7161, %v7157
    %v7562 = vpack.c.b16 %v7162, %v7158
    %v7563 = vpack.c.b16 %v7167, %v7163
    %v7564 = vpack.c.b16 %v7168, %v7164
    %v7565 = vpack.c.b16 %v7169, %v7165
    %v7566 = vpack.c.b16 %v7170, %v7166
    %v7567 = vpack.c.b16 %v7175, %v7171
    %v7568 = vpack.c.b16 %v7176, %v7172
    %v7569 = vpack.c.b16 %v7177, %v7173
    %v7570 = vpack.c.b16 %v7178, %v7174
    %v7571 = vpack.c.b16 %v7183, %v7179
    %v7572 = vpack.c.b16 %v7184, %v7180
    %v7573 = vpack.c.b16 %v7185, %v7181
    %v7574 = vpack.c.b16 %v7186, %v7182
    %v7575 = vpack.c.b16 %v7191, %v7187
    %v7576 = vpack.c.b16 %v7192, %v7188
    %v7577 = vpack.c.b16 %v7193, %v7189
    %v7578 = vpack.c.b16 %v7194, %v7190
    %v7579 = vpack.c.b16 %v7199, %v7195
    %v7580 = vpack.c.b16 %v7200, %v7196
    %v7581 = vpack.c.b16 %v7201, %v7197
    %v7582 = vpack.c.b16 %v7202, %v7198
    %v7583 = vpack.c.b16 %v7207, %v7203
    %v7584 = vpack.c.b16 %v7208, %v7204
    %v7585 = vpack.c.b16 %v7209, %v7205
    %v7586 = vpack.c.b16 %v7210, %v7206
    %v7587 = vpack.c.b16 %v7215, %v7211
    %v7588 = vpack.c.b16 %v7216, %v7212
    %v7589 = vpack.c.b16 %v7217, %v7213
    %v7590 = vpack.c.b16 %v7218, %v7214
    %v7591 = vpack.c.b16 %v7223, %v7219
    %v7592 = vpack.c.b16 %v7224, %v7220
    %v7593 = vpack.c.b16 %v7225, %v7221
    %v7594 = vpack.c.b16 %v7226, %v7222
    %v7595 = vpack.c.b16 %v7231, %v7227
    %v7596 = vpack.c.b16 %v7232, %v7228
    %v7597 = vpack.c.b16 %v7233, %v7229
    %v7598 = vpack.c.b16 %v7234, %v7230
    %v7599 = vpack.c.b16 %v7239, %v7235
    %v7600 = vpack.c.b16 %v7240, %v7236
    %v7601 = vpack.c.b16 %v7241, %v7237
    %v7602 = vpack.c.b16 %v7242, %v7238
    %v7603 = vpack.c.b16 %v7247, %v7243
    %v7604 = vpack.c.b16 %v7248, %v7244
    %v7605 = vpack.c.b16 %v7249, %v7245
    %v7606 = vpack.c.b16 %v7250, %v7246
    %v7607 = vpack.c.b16 %v7255, %v7251
    %v7608 = vpack.c.b16 %v7256, %v7252
    %v7609 = vpack.c.b16 %v7257, %v7253
    %v7610 = vpack.c.b16 %v7258, %v7254
    %v7611 = vpack.c.b16 %v7263, %v7259
    %v7612 = vpack.c.b16 %v7264, %v7260
    %v7613 = vpack.c.b16 %v7265, %v7261
    %v7614 = vpack.c.b16 %v7266, %v7262
    %v7615 = vpack.c.b16 %v7271, %v7267
    %v7616 = vpack.c.b16 %v7272, %v7268
    %v7617 = vpack.c.b16 %v7273, %v7269
    %v7618 = vpack.c.b16 %v7274, %v7270
    %v7619 = vpack.c.b16 %v7279, %v7275
    %v7620 = vpack.c.b16 %v7280, %v7276
    %v7621 = vpack.c.b16 %v7281, %v7277
    %v7622 = vpack.c.b16 %v7282, %v7278
    %v7623 = vpack.c.b16 %v7287, %v7283
    %v7624 = vpack.c.b16 %v7288, %v7284
    %v7625 = vpack.c.b16 %v7289, %v7285
    %v7626 = vpack.c.b16 %v7290, %v7286
    %v7627 = vpack.c.b16 %v7295, %v7291
    %v7628 = vpack.c.b16 %v7296, %v7292
    %v7629 = vpack.c.b16 %v7297, %v7293
    %v7630 = vpack.c.b16 %v7298, %v7294
    %v7631 = vpack.c.b16 %v7303, %v7299
    %v7632 = vpack.c.b16 %v7304, %v7300
    %v7633 = vpack.c.b16 %v7305, %v7301
    %v7634 = vpack.c.b16 %v7306, %v7302
    %v7635 = vpack.c.b16 %v7311, %v7307
    %v7636 = vpack.c.b16 %v7312, %v7308
    %v7637 = vpack.c.b16 %v7313, %v7309
    %v7638 = vpack.c.b16 %v7314, %v7310
    %v7639 = vpack.c.b16 %v7319, %v7315
    %v7640 = vpack.c.b16 %v7320, %v7316
    %v7641 = vpack.c.b16 %v7321, %v7317
    %v7642 = vpack.c.b16 %v7322, %v7318
    %v7643 = vpack.c.b16 %v7327, %v7323
    %v7644 = vpack.c.b16 %v7328, %v7324
    %v7645 = vpack.c.b16 %v7329, %v7325
    %v7646 = vpack.c.b16 %v7330, %v7326
    %v7647 = vpack.c.b16 %v7335, %v7331
    %v7648 = vpack.c.b16 %v7336, %v7332
    %v7649 = vpack.c.b16 %v7337, %v7333
    %v7650 = vpack.c.b16 %v7338, %v7334
    %v7651 = vpack.c.b16 %v7343, %v7339
    %v7652 = vpack.c.b16 %v7344, %v7340
    %v7653 = vpack.c.b16 %v7345, %v7341
    %v7654 = vpack.c.b16 %v7346, %v7342
    %v7655 = vpack.c.b16 %v7351, %v7347
    %v7656 = vpack.c.b16 %v7352, %v7348
    %v7657 = vpack.c.b16 %v7353, %v7349
    %v7658 = vpack.c.b16 %v7354, %v7350
    %v7659 = vpack.c.b16 %v7359, %v7355
    %v7660 = vpack.c.b16 %v7360, %v7356
    %v7661 = vpack.c.b16 %v7361, %v7357
    %v7662 = vpack.c.b16 %v7362, %v7358
    %v7663 = vpack.c.b16 %v7367, %v7363
    %v7664 = vpack.c.b16 %v7368, %v7364
    %v7665 = vpack.c.b16 %v7369, %v7365
    %v7666 = vpack.c.b16 %v7370, %v7366
    %v7667 = vpack.c.b16 %v7375, %v7371
    %v7668 = vpack.c.b16 %v7376, %v7372
    %v7669 = vpack.c.b16 %v7377, %v7373
    %v7670 = vpack.c.b16 %v7378, %v7374
    %v7671 = vpack.c.b16 %v7383, %v7379
    %v7672 = vpack.c.b16 %v7384, %v7380
    %v7673 = vpack.c.b16 %v7385, %v7381
    %v7674 = vpack.c.b16 %v7386, %v7382
    %v7675 = vpack.c.b16 %v7391, %v7387
    %v7676 = vpack.c.b16 %v7392, %v7388
    %v7677 = vpack.c.b16 %v7393, %v7389
    %v7678 = vpack.c.b16 %v7394, %v7390
    %v7679 = vpack.c.b16 %v7399, %v7395
    %v7680 = vpack.c.b16 %v7400, %v7396
    %v7681 = vpack.c.b16 %v7401, %v7397
    %v7682 = vpack.c.b16 %v7402, %v7398
    %v7683 = vpack.c.b16 %v7407, %v7403
    %v7684 = vpack.c.b16 %v7408, %v7404
    %v7685 = vpack.c.b16 %v7409, %v7405
    %v7686 = vpack.c.b16 %v7410, %v7406
    %v7687 = vpack.c.b16 %v7415, %v7411
    %v7688 = vpack.c.b16 %v7416, %v7412
    %v7689 = vpack.c.b16 %v7417, %v7413
    %v7690 = vpack.c.b16 %v7418, %v7414
    %v7691 = vpack.c.b16 %v7423, %v7419
    %v7692 = vpack.c.b16 %v7424, %v7420
    %v7693 = vpack.c.b16 %v7425, %v7421
    %v7694 = vpack.c.b16 %v7426, %v7422
    %v7695 = vpack.c.b16 %v7431, %v7427
    %v7696 = vpack.c.b16 %v7432, %v7428
    %v7697 = vpack.c.b16 %v7433, %v7429
    %v7698 = vpack.c.b16 %v7434, %v7430
    %v7699 = vpack.c.b16 %v7439, %v7435
    %v7700 = vpack.c.b16 %v7440, %v7436
    %v7701 = vpack.c.b16 %v7441, %v7437
    %v7702 = vpack.c.b16 %v7442, %v7438
    %v7703 = vpack.c.b16 %v7447, %v7443
    %v7704 = vpack.c.b16 %v7448, %v7444
    %v7705 = vpack.c.b16 %v7449, %v7445
    %v7706 = vpack.c.b16 %v7450, %v7446
    %7963 = vmatpush.bf16.msra.mxu0 %v7479
    %7964 = vmatpush.bf16.msra.mxu0 %v7475
    %7965 = vmatpush.bf16.msra.mxu0 %v7471
    %7966 = vmatpush.bf16.msra.mxu0 %v7467
    %7967 = vmatpush.bf16.msra.mxu0 %v7463
    %7968 = vmatpush.bf16.msra.mxu0 %v7459
    %7969 = vmatpush.bf16.msra.mxu0 %v7455
    %7970 = vmatpush.bf16.msra.mxu0 %v7451
    %7971 = vmatmul.bf16.gmra.mxu0 %v6409
    %v7972 = vpop.f32.mrf.mxu0
    %v7973 = vadd.f32 %v6675, %v7972
    %v7974 = vpop.f32.mrf.mxu0
    %v7975 = vadd.f32 %v6675, %v7974
    %7976 = vdwg.mxu0
    %7977 = vmatpush.bf16.msra.mxu0 %v7511
    %7978 = vmatpush.bf16.msra.mxu0 %v7507
    %7979 = vmatpush.bf16.msra.mxu0 %v7503
    %7980 = vmatpush.bf16.msra.mxu0 %v7499
    %7981 = vmatpush.bf16.msra.mxu0 %v7495
    %7982 = vmatpush.bf16.msra.mxu0 %v7491
    %7983 = vmatpush.bf16.msra.mxu0 %v7487
    %7984 = vmatpush.bf16.msra.mxu0 %v7483
    %7985 = vmatmul.bf16.gmra.mxu0 %v6410
    %v7986 = vpop.f32.mrf.mxu0
    %v7987 = vadd.f32 %v7973, %v7986
    %v7988 = vpop.f32.mrf.mxu0
    %v7989 = vadd.f32 %v7975, %v7988
    %7990 = vdwg.mxu0
    %7991 = vmatpush.bf16.msra.mxu0 %v7543
    %7992 = vmatpush.bf16.msra.mxu0 %v7539
    %7993 = vmatpush.bf16.msra.mxu0 %v7535
    %7994 = vmatpush.bf16.msra.mxu0 %v7531
    %7995 = vmatpush.bf16.msra.mxu0 %v7527
    %7996 = vmatpush.bf16.msra.mxu0 %v7523
    %7997 = vmatpush.bf16.msra.mxu0 %v7519
    %7998 = vmatpush.bf16.msra.mxu0 %v7515
    %7999 = vmatmul.bf16.gmra.mxu0 %v6411
    %v8000 = vpop.f32.mrf.mxu0
    %v8001 = vadd.f32 %v7987, %v8000
    %v8002 = vpop.f32.mrf.mxu0
    %v8003 = vadd.f32 %v7989, %v8002
    %8004 = vdwg.mxu0
    %8005 = vmatpush.bf16.msra.mxu0 %v7575
    %8006 = vmatpush.bf16.msra.mxu0 %v7571
    %8007 = vmatpush.bf16.msra.mxu0 %v7567
    %8008 = vmatpush.bf16.msra.mxu0 %v7563
    %8009 = vmatpush.bf16.msra.mxu0 %v7559
    %8010 = vmatpush.bf16.msra.mxu0 %v7555
    %8011 = vmatpush.bf16.msra.mxu0 %v7551
    %8012 = vmatpush.bf16.msra.mxu0 %v7547
    %8013 = vmatmul.bf16.gmra.mxu0 %v6412
    %v8014 = vpop.f32.mrf.mxu0
    %v8015 = vadd.f32 %v8001, %v8014
    %v8016 = vpop.f32.mrf.mxu0
    %v8017 = vadd.f32 %v8003, %v8016
    %8018 = vdwg.mxu0
    %8019 = vmatpush.bf16.msra.mxu0 %v7607
    %8020 = vmatpush.bf16.msra.mxu0 %v7603
    %8021 = vmatpush.bf16.msra.mxu0 %v7599
    %8022 = vmatpush.bf16.msra.mxu0 %v7595
    %8023 = vmatpush.bf16.msra.mxu0 %v7591
    %8024 = vmatpush.bf16.msra.mxu0 %v7587
    %8025 = vmatpush.bf16.msra.mxu0 %v7583
    %8026 = vmatpush.bf16.msra.mxu0 %v7579
    %8027 = vmatmul.bf16.gmra.mxu0 %v6413
    %v8028 = vpop.f32.mrf.mxu0
    %v8029 = vadd.f32 %v8015, %v8028
    %v8030 = vpop.f32.mrf.mxu0
    %v8031 = vadd.f32 %v8017, %v8030
    %8032 = vdwg.mxu0
    %8033 = vmatpush.bf16.msra.mxu0 %v7639
    %8034 = vmatpush.bf16.msra.mxu0 %v7635
    %8035 = vmatpush.bf16.msra.mxu0 %v7631
    %8036 = vmatpush.bf16.msra.mxu0 %v7627
    %8037 = vmatpush.bf16.msra.mxu0 %v7623
    %8038 = vmatpush.bf16.msra.mxu0 %v7619
    %8039 = vmatpush.bf16.msra.mxu0 %v7615
    %8040 = vmatpush.bf16.msra.mxu0 %v7611
    %8041 = vmatmul.bf16.gmra.mxu0 %v6414
    %v8042 = vpop.f32.mrf.mxu0
    %v8043 = vadd.f32 %v8029, %v8042
    %v8044 = vpop.f32.mrf.mxu0
    %v8045 = vadd.f32 %v8031, %v8044
    %8046 = vdwg.mxu0
    %8047 = vmatpush.bf16.msra.mxu0 %v7671
    %8048 = vmatpush.bf16.msra.mxu0 %v7667
    %8049 = vmatpush.bf16.msra.mxu0 %v7663
    %8050 = vmatpush.bf16.msra.mxu0 %v7659
    %8051 = vmatpush.bf16.msra.mxu0 %v7655
    %8052 = vmatpush.bf16.msra.mxu0 %v7651
    %8053 = vmatpush.bf16.msra.mxu0 %v7647
    %8054 = vmatpush.bf16.msra.mxu0 %v7643
    %8055 = vmatmul.bf16.gmra.mxu0 %v6415
    %v8056 = vpop.f32.mrf.mxu0
    %v8057 = vadd.f32 %v8043, %v8056
    %v8058 = vpop.f32.mrf.mxu0
    %v8059 = vadd.f32 %v8045, %v8058
    %8060 = vdwg.mxu0
    %8061 = vmatpush.bf16.msra.mxu0 %v7703
    %8062 = vmatpush.bf16.msra.mxu0 %v7699
    %8063 = vmatpush.bf16.msra.mxu0 %v7695
    %8064 = vmatpush.bf16.msra.mxu0 %v7691
    %8065 = vmatpush.bf16.msra.mxu0 %v7687
    %8066 = vmatpush.bf16.msra.mxu0 %v7683
    %8067 = vmatpush.bf16.msra.mxu0 %v7679
    %8068 = vmatpush.bf16.msra.mxu0 %v7675
    %8069 = vmatmul.bf16.gmra.mxu0 %v6416
    %v8070 = vpop.f32.mrf.mxu0
    %v8071 = vadd.f32 %v8057, %v8070
    %v8072 = vpop.f32.mrf.mxu0
    %v8073 = vadd.f32 %v8059, %v8072
    %8074 = vdwg.mxu0
    %8075 = vmatpush.bf16.msra.mxu0 %v7480
    %8076 = vmatpush.bf16.msra.mxu0 %v7476
    %8077 = vmatpush.bf16.msra.mxu0 %v7472
    %8078 = vmatpush.bf16.msra.mxu0 %v7468
    %8079 = vmatpush.bf16.msra.mxu0 %v7464
    %8080 = vmatpush.bf16.msra.mxu0 %v7460
    %8081 = vmatpush.bf16.msra.mxu0 %v7456
    %8082 = vmatpush.bf16.msra.mxu0 %v7452
    %8083 = vmatmul.bf16.gmra.mxu0 %v6409
    %v8084 = vpop.f32.mrf.mxu0
    %v8085 = vadd.f32 %v6676, %v8084
    %v8086 = vpop.f32.mrf.mxu0
    %v8087 = vadd.f32 %v6676, %v8086
    %8088 = vdwg.mxu0
    %8089 = vmatpush.bf16.msra.mxu0 %v7512
    %8090 = vmatpush.bf16.msra.mxu0 %v7508
    %8091 = vmatpush.bf16.msra.mxu0 %v7504
    %8092 = vmatpush.bf16.msra.mxu0 %v7500
    %8093 = vmatpush.bf16.msra.mxu0 %v7496
    %8094 = vmatpush.bf16.msra.mxu0 %v7492
    %8095 = vmatpush.bf16.msra.mxu0 %v7488
    %8096 = vmatpush.bf16.msra.mxu0 %v7484
    %8097 = vmatmul.bf16.gmra.mxu0 %v6410
    %v8098 = vpop.f32.mrf.mxu0
    %v8099 = vadd.f32 %v8085, %v8098
    %v8100 = vpop.f32.mrf.mxu0
    %v8101 = vadd.f32 %v8087, %v8100
    %8102 = vdwg.mxu0
    %8103 = vmatpush.bf16.msra.mxu0 %v7544
    %8104 = vmatpush.bf16.msra.mxu0 %v7540
    %8105 = vmatpush.bf16.msra.mxu0 %v7536
    %8106 = vmatpush.bf16.msra.mxu0 %v7532
    %8107 = vmatpush.bf16.msra.mxu0 %v7528
    %8108 = vmatpush.bf16.msra.mxu0 %v7524
    %8109 = vmatpush.bf16.msra.mxu0 %v7520
    %8110 = vmatpush.bf16.msra.mxu0 %v7516
    %8111 = vmatmul.bf16.gmra.mxu0 %v6411
    %v8112 = vpop.f32.mrf.mxu0
    %v8113 = vadd.f32 %v8099, %v8112
    %v8114 = vpop.f32.mrf.mxu0
    %v8115 = vadd.f32 %v8101, %v8114
    %8116 = vdwg.mxu0
    %8117 = vmatpush.bf16.msra.mxu0 %v7576
    %8118 = vmatpush.bf16.msra.mxu0 %v7572
    %8119 = vmatpush.bf16.msra.mxu0 %v7568
    %8120 = vmatpush.bf16.msra.mxu0 %v7564
    %8121 = vmatpush.bf16.msra.mxu0 %v7560
    %8122 = vmatpush.bf16.msra.mxu0 %v7556
    %8123 = vmatpush.bf16.msra.mxu0 %v7552
    %8124 = vmatpush.bf16.msra.mxu0 %v7548
    %8125 = vmatmul.bf16.gmra.mxu0 %v6412
    %v8126 = vpop.f32.mrf.mxu0
    %v8127 = vadd.f32 %v8113, %v8126
    %v8128 = vpop.f32.mrf.mxu0
    %v8129 = vadd.f32 %v8115, %v8128
    %8130 = vdwg.mxu0
    %8131 = vmatpush.bf16.msra.mxu0 %v7608
    %8132 = vmatpush.bf16.msra.mxu0 %v7604
    %8133 = vmatpush.bf16.msra.mxu0 %v7600
    %8134 = vmatpush.bf16.msra.mxu0 %v7596
    %8135 = vmatpush.bf16.msra.mxu0 %v7592
    %8136 = vmatpush.bf16.msra.mxu0 %v7588
    %8137 = vmatpush.bf16.msra.mxu0 %v7584
    %8138 = vmatpush.bf16.msra.mxu0 %v7580
    %8139 = vmatmul.bf16.gmra.mxu0 %v6413
    %v8140 = vpop.f32.mrf.mxu0
    %v8141 = vadd.f32 %v8127, %v8140
    %v8142 = vpop.f32.mrf.mxu0
    %v8143 = vadd.f32 %v8129, %v8142
    %8144 = vdwg.mxu0
    %8145 = vmatpush.bf16.msra.mxu0 %v7640
    %8146 = vmatpush.bf16.msra.mxu0 %v7636
    %8147 = vmatpush.bf16.msra.mxu0 %v7632
    %8148 = vmatpush.bf16.msra.mxu0 %v7628
    %8149 = vmatpush.bf16.msra.mxu0 %v7624
    %8150 = vmatpush.bf16.msra.mxu0 %v7620
    %8151 = vmatpush.bf16.msra.mxu0 %v7616
    %8152 = vmatpush.bf16.msra.mxu0 %v7612
    %8153 = vmatmul.bf16.gmra.mxu0 %v6414
    %v8154 = vpop.f32.mrf.mxu0
    %v8155 = vadd.f32 %v8141, %v8154
    %v8156 = vpop.f32.mrf.mxu0
    %v8157 = vadd.f32 %v8143, %v8156
    %8158 = vdwg.mxu0
    %8159 = vmatpush.bf16.msra.mxu0 %v7672
    %8160 = vmatpush.bf16.msra.mxu0 %v7668
    %8161 = vmatpush.bf16.msra.mxu0 %v7664
    %8162 = vmatpush.bf16.msra.mxu0 %v7660
    %8163 = vmatpush.bf16.msra.mxu0 %v7656
    %8164 = vmatpush.bf16.msra.mxu0 %v7652
    %8165 = vmatpush.bf16.msra.mxu0 %v7648
    %8166 = vmatpush.bf16.msra.mxu0 %v7644
    %8167 = vmatmul.bf16.gmra.mxu0 %v6415
    %v8168 = vpop.f32.mrf.mxu0
    %v8169 = vadd.f32 %v8155, %v8168
    %v8170 = vpop.f32.mrf.mxu0
    %v8171 = vadd.f32 %v8157, %v8170
    %8172 = vdwg.mxu0
    %8173 = vmatpush.bf16.msra.mxu0 %v7704
    %8174 = vmatpush.bf16.msra.mxu0 %v7700
    %8175 = vmatpush.bf16.msra.mxu0 %v7696
    %8176 = vmatpush.bf16.msra.mxu0 %v7692
    %8177 = vmatpush.bf16.msra.mxu0 %v7688
    %8178 = vmatpush.bf16.msra.mxu0 %v7684
    %8179 = vmatpush.bf16.msra.mxu0 %v7680
    %8180 = vmatpush.bf16.msra.mxu0 %v7676
    %8181 = vmatmul.bf16.gmra.mxu0 %v6416
    %v8182 = vpop.f32.mrf.mxu0
    %v8183 = vadd.f32 %v8169, %v8182
    %v8184 = vpop.f32.mrf.mxu0
    %v8185 = vadd.f32 %v8171, %v8184
    %8186 = vdwg.mxu0
    %8187 = vmatpush.bf16.msra.mxu0 %v7481
    %8188 = vmatpush.bf16.msra.mxu0 %v7477
    %8189 = vmatpush.bf16.msra.mxu0 %v7473
    %8190 = vmatpush.bf16.msra.mxu0 %v7469
    %8191 = vmatpush.bf16.msra.mxu0 %v7465
    %8192 = vmatpush.bf16.msra.mxu0 %v7461
    %8193 = vmatpush.bf16.msra.mxu0 %v7457
    %8194 = vmatpush.bf16.msra.mxu0 %v7453
    %8195 = vmatmul.bf16.gmra.mxu0 %v6409
    %v8196 = vpop.f32.mrf.mxu0
    %v8197 = vadd.f32 %v6677, %v8196
    %v8198 = vpop.f32.mrf.mxu0
    %v8199 = vadd.f32 %v6677, %v8198
    %8200 = vdwg.mxu0
    %8201 = vmatpush.bf16.msra.mxu0 %v7513
    %8202 = vmatpush.bf16.msra.mxu0 %v7509
    %8203 = vmatpush.bf16.msra.mxu0 %v7505
    %8204 = vmatpush.bf16.msra.mxu0 %v7501
    %8205 = vmatpush.bf16.msra.mxu0 %v7497
    %8206 = vmatpush.bf16.msra.mxu0 %v7493
    %8207 = vmatpush.bf16.msra.mxu0 %v7489
    %8208 = vmatpush.bf16.msra.mxu0 %v7485
    %8209 = vmatmul.bf16.gmra.mxu0 %v6410
    %v8210 = vpop.f32.mrf.mxu0
    %v8211 = vadd.f32 %v8197, %v8210
    %v8212 = vpop.f32.mrf.mxu0
    %v8213 = vadd.f32 %v8199, %v8212
    %8214 = vdwg.mxu0
    %8215 = vmatpush.bf16.msra.mxu0 %v7545
    %8216 = vmatpush.bf16.msra.mxu0 %v7541
    %8217 = vmatpush.bf16.msra.mxu0 %v7537
    %8218 = vmatpush.bf16.msra.mxu0 %v7533
    %8219 = vmatpush.bf16.msra.mxu0 %v7529
    %8220 = vmatpush.bf16.msra.mxu0 %v7525
    %8221 = vmatpush.bf16.msra.mxu0 %v7521
    %8222 = vmatpush.bf16.msra.mxu0 %v7517
    %8223 = vmatmul.bf16.gmra.mxu0 %v6411
    %v8224 = vpop.f32.mrf.mxu0
    %v8225 = vadd.f32 %v8211, %v8224
    %v8226 = vpop.f32.mrf.mxu0
    %v8227 = vadd.f32 %v8213, %v8226
    %8228 = vdwg.mxu0
    %8229 = vmatpush.bf16.msra.mxu0 %v7577
    %8230 = vmatpush.bf16.msra.mxu0 %v7573
    %8231 = vmatpush.bf16.msra.mxu0 %v7569
    %8232 = vmatpush.bf16.msra.mxu0 %v7565
    %8233 = vmatpush.bf16.msra.mxu0 %v7561
    %8234 = vmatpush.bf16.msra.mxu0 %v7557
    %8235 = vmatpush.bf16.msra.mxu0 %v7553
    %8236 = vmatpush.bf16.msra.mxu0 %v7549
    %8237 = vmatmul.bf16.gmra.mxu0 %v6412
    %v8238 = vpop.f32.mrf.mxu0
    %v8239 = vadd.f32 %v8225, %v8238
    %v8240 = vpop.f32.mrf.mxu0
    %v8241 = vadd.f32 %v8227, %v8240
    %8242 = vdwg.mxu0
    %8243 = vmatpush.bf16.msra.mxu0 %v7609
    %8244 = vmatpush.bf16.msra.mxu0 %v7605
    %8245 = vmatpush.bf16.msra.mxu0 %v7601
    %8246 = vmatpush.bf16.msra.mxu0 %v7597
    %8247 = vmatpush.bf16.msra.mxu0 %v7593
    %8248 = vmatpush.bf16.msra.mxu0 %v7589
    %8249 = vmatpush.bf16.msra.mxu0 %v7585
    %8250 = vmatpush.bf16.msra.mxu0 %v7581
    %8251 = vmatmul.bf16.gmra.mxu0 %v6413
    %v8252 = vpop.f32.mrf.mxu0
    %v8253 = vadd.f32 %v8239, %v8252
    %v8254 = vpop.f32.mrf.mxu0
    %v8255 = vadd.f32 %v8241, %v8254
    %8256 = vdwg.mxu0
    %8257 = vmatpush.bf16.msra.mxu0 %v7641
    %8258 = vmatpush.bf16.msra.mxu0 %v7637
    %8259 = vmatpush.bf16.msra.mxu0 %v7633
    %8260 = vmatpush.bf16.msra.mxu0 %v7629
    %8261 = vmatpush.bf16.msra.mxu0 %v7625
    %8262 = vmatpush.bf16.msra.mxu0 %v7621
    %8263 = vmatpush.bf16.msra.mxu0 %v7617
    %8264 = vmatpush.bf16.msra.mxu0 %v7613
    %8265 = vmatmul.bf16.gmra.mxu0 %v6414
    %v8266 = vpop.f32.mrf.mxu0
    %v8267 = vadd.f32 %v8253, %v8266
    %v8268 = vpop.f32.mrf.mxu0
    %v8269 = vadd.f32 %v8255, %v8268
    %8270 = vdwg.mxu0
    %8271 = vmatpush.bf16.msra.mxu0 %v7673
    %8272 = vmatpush.bf16.msra.mxu0 %v7669
    %8273 = vmatpush.bf16.msra.mxu0 %v7665
    %8274 = vmatpush.bf16.msra.mxu0 %v7661
    %8275 = vmatpush.bf16.msra.mxu0 %v7657
    %8276 = vmatpush.bf16.msra.mxu0 %v7653
    %8277 = vmatpush.bf16.msra.mxu0 %v7649
    %8278 = vmatpush.bf16.msra.mxu0 %v7645
    %8279 = vmatmul.bf16.gmra.mxu0 %v6415
    %v8280 = vpop.f32.mrf.mxu0
    %v8281 = vadd.f32 %v8267, %v8280
    %v8282 = vpop.f32.mrf.mxu0
    %v8283 = vadd.f32 %v8269, %v8282
    %8284 = vdwg.mxu0
    %8285 = vmatpush.bf16.msra.mxu0 %v7705
    %8286 = vmatpush.bf16.msra.mxu0 %v7701
    %8287 = vmatpush.bf16.msra.mxu0 %v7697
    %8288 = vmatpush.bf16.msra.mxu0 %v7693
    %8289 = vmatpush.bf16.msra.mxu0 %v7689
    %8290 = vmatpush.bf16.msra.mxu0 %v7685
    %8291 = vmatpush.bf16.msra.mxu0 %v7681
    %8292 = vmatpush.bf16.msra.mxu0 %v7677
    %8293 = vmatmul.bf16.gmra.mxu0 %v6416
    %v8294 = vpop.f32.mrf.mxu0
    %v8295 = vadd.f32 %v8281, %v8294
    %v8296 = vpop.f32.mrf.mxu0
    %v8297 = vadd.f32 %v8283, %v8296
    %8298 = vdwg.mxu0
    %8299 = vmatpush.bf16.msra.mxu0 %v7482
    %8300 = vmatpush.bf16.msra.mxu0 %v7478
    %8301 = vmatpush.bf16.msra.mxu0 %v7474
    %8302 = vmatpush.bf16.msra.mxu0 %v7470
    %8303 = vmatpush.bf16.msra.mxu0 %v7466
    %8304 = vmatpush.bf16.msra.mxu0 %v7462
    %8305 = vmatpush.bf16.msra.mxu0 %v7458
    %8306 = vmatpush.bf16.msra.mxu0 %v7454
    %8307 = vmatmul.bf16.gmra.mxu0 %v6409
    %v8308 = vpop.f32.mrf.mxu0
    %v8309 = vadd.f32 %v6678, %v8308
    %v8310 = vpop.f32.mrf.mxu0
    %v8311 = vadd.f32 %v6678, %v8310
    %8312 = vdwg.mxu0
    %8313 = vmatpush.bf16.msra.mxu0 %v7514
    %8314 = vmatpush.bf16.msra.mxu0 %v7510
    %8315 = vmatpush.bf16.msra.mxu0 %v7506
    %8316 = vmatpush.bf16.msra.mxu0 %v7502
    %8317 = vmatpush.bf16.msra.mxu0 %v7498
    %8318 = vmatpush.bf16.msra.mxu0 %v7494
    %8319 = vmatpush.bf16.msra.mxu0 %v7490
    %8320 = vmatpush.bf16.msra.mxu0 %v7486
    %8321 = vmatmul.bf16.gmra.mxu0 %v6410
    %v8322 = vpop.f32.mrf.mxu0
    %v8323 = vadd.f32 %v8309, %v8322
    %v8324 = vpop.f32.mrf.mxu0
    %v8325 = vadd.f32 %v8311, %v8324
    %8326 = vdwg.mxu0
    %8327 = vmatpush.bf16.msra.mxu0 %v7546
    %8328 = vmatpush.bf16.msra.mxu0 %v7542
    %8329 = vmatpush.bf16.msra.mxu0 %v7538
    %8330 = vmatpush.bf16.msra.mxu0 %v7534
    %8331 = vmatpush.bf16.msra.mxu0 %v7530
    %8332 = vmatpush.bf16.msra.mxu0 %v7526
    %8333 = vmatpush.bf16.msra.mxu0 %v7522
    %8334 = vmatpush.bf16.msra.mxu0 %v7518
    %8335 = vmatmul.bf16.gmra.mxu0 %v6411
    %v8336 = vpop.f32.mrf.mxu0
    %v8337 = vadd.f32 %v8323, %v8336
    %v8338 = vpop.f32.mrf.mxu0
    %v8339 = vadd.f32 %v8325, %v8338
    %8340 = vdwg.mxu0
    %8341 = vmatpush.bf16.msra.mxu0 %v7578
    %8342 = vmatpush.bf16.msra.mxu0 %v7574
    %8343 = vmatpush.bf16.msra.mxu0 %v7570
    %8344 = vmatpush.bf16.msra.mxu0 %v7566
    %8345 = vmatpush.bf16.msra.mxu0 %v7562
    %8346 = vmatpush.bf16.msra.mxu0 %v7558
    %8347 = vmatpush.bf16.msra.mxu0 %v7554
    %8348 = vmatpush.bf16.msra.mxu0 %v7550
    %8349 = vmatmul.bf16.gmra.mxu0 %v6412
    %v8350 = vpop.f32.mrf.mxu0
    %v8351 = vadd.f32 %v8337, %v8350
    %v8352 = vpop.f32.mrf.mxu0
    %v8353 = vadd.f32 %v8339, %v8352
    %8354 = vdwg.mxu0
    %8355 = vmatpush.bf16.msra.mxu0 %v7610
    %8356 = vmatpush.bf16.msra.mxu0 %v7606
    %8357 = vmatpush.bf16.msra.mxu0 %v7602
    %8358 = vmatpush.bf16.msra.mxu0 %v7598
    %8359 = vmatpush.bf16.msra.mxu0 %v7594
    %8360 = vmatpush.bf16.msra.mxu0 %v7590
    %8361 = vmatpush.bf16.msra.mxu0 %v7586
    %8362 = vmatpush.bf16.msra.mxu0 %v7582
    %8363 = vmatmul.bf16.gmra.mxu0 %v6413
    %v8364 = vpop.f32.mrf.mxu0
    %v8365 = vadd.f32 %v8351, %v8364
    %v8366 = vpop.f32.mrf.mxu0
    %v8367 = vadd.f32 %v8353, %v8366
    %8368 = vdwg.mxu0
    %8369 = vmatpush.bf16.msra.mxu0 %v7642
    %8370 = vmatpush.bf16.msra.mxu0 %v7638
    %8371 = vmatpush.bf16.msra.mxu0 %v7634
    %8372 = vmatpush.bf16.msra.mxu0 %v7630
    %8373 = vmatpush.bf16.msra.mxu0 %v7626
    %8374 = vmatpush.bf16.msra.mxu0 %v7622
    %8375 = vmatpush.bf16.msra.mxu0 %v7618
    %8376 = vmatpush.bf16.msra.mxu0 %v7614
    %8377 = vmatmul.bf16.gmra.mxu0 %v6414
    %v8378 = vpop.f32.mrf.mxu0
    %v8379 = vadd.f32 %v8365, %v8378
    %v8380 = vpop.f32.mrf.mxu0
    %v8381 = vadd.f32 %v8367, %v8380
    %8382 = vdwg.mxu0
    %8383 = vmatpush.bf16.msra.mxu0 %v7674
    %8384 = vmatpush.bf16.msra.mxu0 %v7670
    %8385 = vmatpush.bf16.msra.mxu0 %v7666
    %8386 = vmatpush.bf16.msra.mxu0 %v7662
    %8387 = vmatpush.bf16.msra.mxu0 %v7658
    %8388 = vmatpush.bf16.msra.mxu0 %v7654
    %8389 = vmatpush.bf16.msra.mxu0 %v7650
    %8390 = vmatpush.bf16.msra.mxu0 %v7646
    %8391 = vmatmul.bf16.gmra.mxu0 %v6415
    %v8392 = vpop.f32.mrf.mxu0
    %v8393 = vadd.f32 %v8379, %v8392
    %v8394 = vpop.f32.mrf.mxu0
    %v8395 = vadd.f32 %v8381, %v8394
    %8396 = vdwg.mxu0
    %8397 = vmatpush.bf16.msra.mxu0 %v7706
    %8398 = vmatpush.bf16.msra.mxu0 %v7702
    %8399 = vmatpush.bf16.msra.mxu0 %v7698
    %8400 = vmatpush.bf16.msra.mxu0 %v7694
    %8401 = vmatpush.bf16.msra.mxu0 %v7690
    %8402 = vmatpush.bf16.msra.mxu0 %v7686
    %8403 = vmatpush.bf16.msra.mxu0 %v7682
    %8404 = vmatpush.bf16.msra.mxu0 %v7678
    %8405 = vmatmul.bf16.gmra.mxu0 %v6416
    %v8406 = vpop.f32.mrf.mxu0
    %v8407 = vadd.f32 %v8393, %v8406
    %v8408 = vpop.f32.mrf.mxu0
    %v8409 = vadd.f32 %v8395, %v8408
    %8410 = vdwg.mxu0
    %vm8411 = vcmp.ge.f32.partialorder %v8071, 0.0
    %vm8412 = vcmp.ge.f32.partialorder %v8183, 0.0
    %vm8413 = vcmp.ge.f32.partialorder %v8295, 0.0
    %vm8414 = vcmp.ge.f32.partialorder %v8407, 0.0
    %vm8415 = vcmp.ge.f32.partialorder %v8073, 0.0
    %vm8416 = vcmp.ge.f32.partialorder %v8185, 0.0
    %vm8417 = vcmp.ge.f32.partialorder %v8297, 0.0
    %vm8418 = vcmp.ge.f32.partialorder %v8409, 0.0
    %v8419 = vmul.f32 %v8071, 0.1
    %v8420 = vmul.f32 %v8183, 0.1
    %v8421 = vmul.f32 %v8295, 0.1
    %v8422 = vmul.f32 %v8407, 0.1
    %v8423 = vmul.f32 %v8073, 0.1
    %v8424 = vmul.f32 %v8185, 0.1
    %v8425 = vmul.f32 %v8297, 0.1
    %v8426 = vmul.f32 %v8409, 0.1
    %v8427 = vsel %vm8411, %v8071, %v8419
    %v8428 = vsel %vm8412, %v8183, %v8420
    %v8429 = vsel %vm8413, %v8295, %v8421
    %v8430 = vsel %vm8414, %v8407, %v8422
    %v8431 = vsel %vm8415, %v8073, %v8423
    %v8432 = vsel %vm8416, %v8185, %v8424
    %v8433 = vsel %vm8417, %v8297, %v8425
    %v8434 = vsel %vm8418, %v8409, %v8426
    %v8435 = vld [vmem:[%s5] sm:$0xff]
    %v8436 = vld [vmem:[%s5 + $0x8] sm:$0xff]
    %v8437 = vld [vmem:[%s5 + $0x10] sm:$0xff]
    %v8438 = vld [vmem:[%s5 + $0x18] sm:$0xff]
    %v8439 = vld [vmem:[%s5 + $0x20] sm:$0xff]
    %v8440 = vld [vmem:[%s5 + $0x28] sm:$0xff]
    %v8441 = vld [vmem:[%s5 + $0x30] sm:$0xff]
    %v8442 = vld [vmem:[%s5 + $0x38] sm:$0xff]
    %v8443 = vld [vmem:[%s5 + $0x40] sm:$0xff]
    %v8444 = vld [vmem:[%s5 + $0x48] sm:$0xff]
    %v8445 = vld [vmem:[%s5 + $0x50] sm:$0xff]
    %v8446 = vld [vmem:[%s5 + $0x58] sm:$0xff]
    %v8447 = vld [vmem:[%s5 + $0x60] sm:$0xff]
    %v8448 = vld [vmem:[%s5 + $0x68] sm:$0xff]
    %v8449 = vld [vmem:[%s5 + $0x70] sm:$0xff]
    %v8450 = vld [vmem:[%s5 + $0x78] sm:$0xff]
    %v8451 = vld [vmem:[%s5 + $0x80] sm:$0xff]
    %v8452 = vld [vmem:[%s5 + $0x88] sm:$0xff]
    %v8453 = vld [vmem:[%s5 + $0x90] sm:$0xff]
    %v8454 = vld [vmem:[%s5 + $0x98] sm:$0xff]
    %v8455 = vld [vmem:[%s5 + $0xa0] sm:$0xff]
    %v8456 = vld [vmem:[%s5 + $0xa8] sm:$0xff]
    %v8457 = vld [vmem:[%s5 + $0xb0] sm:$0xff]
    %v8458 = vld [vmem:[%s5 + $0xb8] sm:$0xff]
    %v8459 = vld [vmem:[%s5 + $0xc0] sm:$0xff]
    %v8460 = vld [vmem:[%s5 + $0xc8] sm:$0xff]
    %v8461 = vld [vmem:[%s5 + $0xd0] sm:$0xff]
    %v8462 = vld [vmem:[%s5 + $0xd8] sm:$0xff]
    %v8463 = vld [vmem:[%s5 + $0xe0] sm:$0xff]
    %v8464 = vld [vmem:[%s5 + $0xe8] sm:$0xff]
    %v8465 = vld [vmem:[%s5 + $0xf0] sm:$0xff]
    %v8466 = vld [vmem:[%s5 + $0xf8] sm:$0xff]
    %v8467 = vld [vmem:[%s5 + $0x100] sm:$0xff]
    %v8468 = vld [vmem:[%s5 + $0x108] sm:$0xff]
    %v8469 = vld [vmem:[%s5 + $0x110] sm:$0xff]
    %v8470 = vld [vmem:[%s5 + $0x118] sm:$0xff]
    %v8471 = vld [vmem:[%s5 + $0x120] sm:$0xff]
    %v8472 = vld [vmem:[%s5 + $0x128] sm:$0xff]
    %v8473 = vld [vmem:[%s5 + $0x130] sm:$0xff]
    %v8474 = vld [vmem:[%s5 + $0x138] sm:$0xff]
    %v8475 = vld [vmem:[%s5 + $0x140] sm:$0xff]
    %v8476 = vld [vmem:[%s5 + $0x148] sm:$0xff]
    %v8477 = vld [vmem:[%s5 + $0x150] sm:$0xff]
    %v8478 = vld [vmem:[%s5 + $0x158] sm:$0xff]
    %v8479 = vld [vmem:[%s5 + $0x160] sm:$0xff]
    %v8480 = vld [vmem:[%s5 + $0x168] sm:$0xff]
    %v8481 = vld [vmem:[%s5 + $0x170] sm:$0xff]
    %v8482 = vld [vmem:[%s5 + $0x178] sm:$0xff]
    %v8483 = vld [vmem:[%s5 + $0x180] sm:$0xff]
    %v8484 = vld [vmem:[%s5 + $0x188] sm:$0xff]
    %v8485 = vld [vmem:[%s5 + $0x190] sm:$0xff]
    %v8486 = vld [vmem:[%s5 + $0x198] sm:$0xff]
    %v8487 = vld [vmem:[%s5 + $0x1a0] sm:$0xff]
    %v8488 = vld [vmem:[%s5 + $0x1a8] sm:$0xff]
    %v8489 = vld [vmem:[%s5 + $0x1b0] sm:$0xff]
    %v8490 = vld [vmem:[%s5 + $0x1b8] sm:$0xff]
    %v8491 = vld [vmem:[%s5 + $0x1c0] sm:$0xff]
    %v8492 = vld [vmem:[%s5 + $0x1c8] sm:$0xff]
    %v8493 = vld [vmem:[%s5 + $0x1d0] sm:$0xff]
    %v8494 = vld [vmem:[%s5 + $0x1d8] sm:$0xff]
    %v8495 = vld [vmem:[%s5 + $0x1e0] sm:$0xff]
    %v8496 = vld [vmem:[%s5 + $0x1e8] sm:$0xff]
    %v8497 = vld [vmem:[%s5 + $0x1f0] sm:$0xff]
    %v8498 = vld [vmem:[%s5 + $0x1f8] sm:$0xff]
    %v8499 = vld [vmem:[%s6] sm:$0xf]
    %v8500 = vld [vmem:[%s6 + $0x4] sm:$0xf]
    %v8501 = vld [vmem:[#allocation9] sm:$0xff]
    %v8502 = vld [vmem:[#allocation9 + $0x8] sm:$0xf]
    %v8503 = vld [vmem:[#allocation9 + $0xc] sm:$0xff]
    %v8504 = vld [vmem:[#allocation9 + $0x14] sm:$0xf]
    %v8505 = vld [vmem:[#allocation9 + $0x18] sm:$0xff]
    %v8506 = vld [vmem:[#allocation9 + $0x20] sm:$0xf]
    %v8507 = vld [vmem:[#allocation9 + $0x24] sm:$0xff]
    %v8508 = vld [vmem:[#allocation9 + $0x2c] sm:$0xf]
    %v8509 = vld [vmem:[#allocation9 + $0x30] sm:$0xff]
    %v8510 = vld [vmem:[#allocation9 + $0x38] sm:$0xf]
    %v8511 = vld [vmem:[#allocation9 + $0x3c] sm:$0xff]
    %v8512 = vld [vmem:[#allocation9 + $0x44] sm:$0xf]
    %v8513 = vld [vmem:[#allocation9 + $0x48] sm:$0xff]
    %v8514 = vld [vmem:[#allocation9 + $0x50] sm:$0xf]
    %v8515 = vld [vmem:[#allocation9 + $0x54] sm:$0xff]
    %v8516 = vld [vmem:[#allocation9 + $0x5c] sm:$0xf]
    %v8517 = vld [vmem:[#allocation9 + $0x60] sm:$0xff]
    %v8518 = vld [vmem:[#allocation9 + $0x68] sm:$0xf]
    %v8519 = vld [vmem:[#allocation9 + $0x6c] sm:$0xff]
    %v8520 = vld [vmem:[#allocation9 + $0x74] sm:$0xf]
    %v8521 = vld [vmem:[#allocation9 + $0x78] sm:$0xff]
    %v8522 = vld [vmem:[#allocation9 + $0x80] sm:$0xf]
    %v8523 = vld [vmem:[#allocation9 + $0x84] sm:$0xff]
    %v8524 = vld [vmem:[#allocation9 + $0x8c] sm:$0xf]
    %v8525 = vld [vmem:[#allocation9 + $0x90] sm:$0xff]
    %v8526 = vld [vmem:[#allocation9 + $0x98] sm:$0xf]
    %v8527 = vld [vmem:[#allocation9 + $0x9c] sm:$0xff]
    %v8528 = vld [vmem:[#allocation9 + $0xa4] sm:$0xf]
    %v8529 = vld [vmem:[#allocation9 + $0xa8] sm:$0xff]
    %v8530 = vld [vmem:[#allocation9 + $0xb0] sm:$0xf]
    %v8531 = vld [vmem:[#allocation9 + $0xb4] sm:$0xff]
    %v8532 = vld [vmem:[#allocation9 + $0xbc] sm:$0xf]
    %v8533 = vld [vmem:[#allocation10] sm:$0x7]
    %v8535 = vperm.slane %v8533, 0
    %v8536 = vperm.slane %v8533, 1
    %v8537 = vperm.slane %v8533, 2
    %v8543 = vunpack.c.l.b16 %v8499
    %v8544 = vunpack.c.l.b16 %v8500
    %v8545 = vpack.c.b16 %v8544, %v8543
    %v8579 = vunpack.c.l.b16 %v8501
    %v8580 = vunpack.c.h.b16 %v8501
    %v8581 = vunpack.c.l.b16 %v8502
    %v8582 = vunpack.c.l.b16 %v8503
    %v8583 = vunpack.c.h.b16 %v8503
    %v8584 = vunpack.c.l.b16 %v8504
    %v8585 = vunpack.c.l.b16 %v8505
    %v8586 = vunpack.c.h.b16 %v8505
    %v8587 = vunpack.c.l.b16 %v8506
    %v8588 = vunpack.c.l.b16 %v8507
    %v8589 = vunpack.c.h.b16 %v8507
    %v8590 = vunpack.c.l.b16 %v8508
    %v8591 = vunpack.c.l.b16 %v8509
    %v8592 = vunpack.c.h.b16 %v8509
    %v8593 = vunpack.c.l.b16 %v8510
    %v8594 = vunpack.c.l.b16 %v8511
    %v8595 = vunpack.c.h.b16 %v8511
    %v8596 = vunpack.c.l.b16 %v8512
    %v8597 = vunpack.c.l.b16 %v8513
    %v8598 = vunpack.c.h.b16 %v8513
    %v8599 = vunpack.c.l.b16 %v8514
    %v8600 = vunpack.c.l.b16 %v8515
    %v8601 = vunpack.c.h.b16 %v8515
    %v8602 = vunpack.c.l.b16 %v8516
    %v8603 = vunpack.c.l.b16 %v8517
    %v8604 = vunpack.c.h.b16 %v8517
    %v8605 = vunpack.c.l.b16 %v8518
    %v8606 = vunpack.c.l.b16 %v8519
    %v8607 = vunpack.c.h.b16 %v8519
    %v8608 = vunpack.c.l.b16 %v8520
    %v8609 = vunpack.c.l.b16 %v8521
    %v8610 = vunpack.c.h.b16 %v8521
    %v8611 = vunpack.c.l.b16 %v8522
    %v8612 = vunpack.c.l.b16 %v8523
    %v8613 = vunpack.c.h.b16 %v8523
    %v8614 = vunpack.c.l.b16 %v8524
    %v8615 = vunpack.c.l.b16 %v8525
    %v8616 = vunpack.c.h.b16 %v8525
    %v8617 = vunpack.c.l.b16 %v8526
    %v8618 = vunpack.c.l.b16 %v8527
    %v8619 = vunpack.c.h.b16 %v8527
    %v8620 = vunpack.c.l.b16 %v8528
    %v8621 = vunpack.c.l.b16 %v8529
    %v8622 = vunpack.c.h.b16 %v8529
    %v8623 = vunpack.c.l.b16 %v8530
    %v8624 = vunpack.c.l.b16 %v8531
    %v8625 = vunpack.c.h.b16 %v8531
    %v8626 = vunpack.c.l.b16 %v8532
    %v8627 = vpack.c.b16 %v8582, %v8579
    %v8628 = vpack.c.b16 %v8583, %v8580
    %v8629 = vpack.c.b16 %v8584, %v8581
    %v8630 = vpack.c.b16 %v8588, %v8585
    %v8631 = vpack.c.b16 %v8589, %v8586
    %v8632 = vpack.c.b16 %v8590, %v8587
    %v8633 = vpack.c.b16 %v8594, %v8591
    %v8634 = vpack.c.b16 %v8595, %v8592
    %v8635 = vpack.c.b16 %v8596, %v8593
    %v8636 = vpack.c.b16 %v8600, %v8597
    %v8637 = vpack.c.b16 %v8601, %v8598
    %v8638 = vpack.c.b16 %v8602, %v8599
    %v8639 = vpack.c.b16 %v8606, %v8603
    %v8640 = vpack.c.b16 %v8607, %v8604
    %v8641 = vpack.c.b16 %v8608, %v8605
    %v8642 = vpack.c.b16 %v8612, %v8609
    %v8643 = vpack.c.b16 %v8613, %v8610
    %v8644 = vpack.c.b16 %v8614, %v8611
    %v8645 = vpack.c.b16 %v8618, %v8615
    %v8646 = vpack.c.b16 %v8619, %v8616
    %v8647 = vpack.c.b16 %v8620, %v8617
    %v8648 = vpack.c.b16 %v8624, %v8621
    %v8649 = vpack.c.b16 %v8625, %v8622
    %v8650 = vpack.c.b16 %v8626, %v8623
    %8675 = vmatpush.bf16.msra.mxu0 %v8648
    %8676 = vmatpush.bf16.msra.mxu0 %v8645
    %8677 = vmatpush.bf16.msra.mxu0 %v8642
    %8678 = vmatpush.bf16.msra.mxu0 %v8639
    %8679 = vmatpush.bf16.msra.mxu0 %v8636
    %8680 = vmatpush.bf16.msra.mxu0 %v8633
    %8681 = vmatpush.bf16.msra.mxu0 %v8630
    %8682 = vmatpush.bf16.msra.mxu0 %v8627
    %8683 = vmatmul.bf16.gmra.mxu0 %v8545
    %v8684 = vpop.f32.mrf.mxu0
    %v8685 = vadd.f32 %v8535, %v8684
    %v8686 = vpop.f32.mrf.mxu0
    %v8687 = vadd.f32 %v8535, %v8686
    %8688 = vdwg.mxu0
    %8689 = vmatpush.bf16.msra.mxu0 %v8649
    %8690 = vmatpush.bf16.msra.mxu0 %v8646
    %8691 = vmatpush.bf16.msra.mxu0 %v8643
    %8692 = vmatpush.bf16.msra.mxu0 %v8640
    %8693 = vmatpush.bf16.msra.mxu0 %v8637
    %8694 = vmatpush.bf16.msra.mxu0 %v8634
    %8695 = vmatpush.bf16.msra.mxu0 %v8631
    %8696 = vmatpush.bf16.msra.mxu0 %v8628
    %8697 = vmatmul.bf16.gmra.mxu0 %v8545
    %v8698 = vpop.f32.mrf.mxu0
    %v8699 = vadd.f32 %v8536, %v8698
    %v8700 = vpop.f32.mrf.mxu0
    %v8701 = vadd.f32 %v8536, %v8700
    %8702 = vdwg.mxu0
    %8703 = vmatpush.bf16.msra.mxu0 %v8650
    %8704 = vmatpush.bf16.msra.mxu0 %v8647
    %8705 = vmatpush.bf16.msra.mxu0 %v8644
    %8706 = vmatpush.bf16.msra.mxu0 %v8641
    %8707 = vmatpush.bf16.msra.mxu0 %v8638
    %8708 = vmatpush.bf16.msra.mxu0 %v8635
    %8709 = vmatpush.bf16.msra.mxu0 %v8632
    %8710 = vmatpush.bf16.msra.mxu0 %v8629
    %8711 = vmatmul.bf16.gmra.mxu0 %v8545
    %v8712 = vpop.f32.mrf.mxu0
    %v8713 = vadd.f32 %v8537, %v8712
    %v8714 = vpop.f32.mrf.mxu0
    %v8715 = vadd.f32 %v8537, %v8714
    %8716 = vdwg.mxu0
    %vm8717 = vcmp.ge.f32.partialorder %v8685, 0.0
    %vm8718 = vcmp.ge.f32.partialorder %v8699, 0.0
    %vm8719 = vcmp.ge.f32.partialorder %v8713, 0.0
    %vm8720 = vcmp.ge.f32.partialorder %v8687, 0.0
    %vm8721 = vcmp.ge.f32.partialorder %v8701, 0.0
    %vm8722 = vcmp.ge.f32.partialorder %v8715, 0.0
    %v8723 = vmul.f32 %v8685, 0.1
    %v8724 = vmul.f32 %v8699, 0.1
    %v8725 = vmul.f32 %v8713, 0.1
    %v8726 = vmul.f32 %v8687, 0.1
    %v8727 = vmul.f32 %v8701, 0.1
    %v8728 = vmul.f32 %v8715, 0.1
    %v8729 = vsel %vm8717, %v8685, %v8723
    %v8730 = vsel %vm8718, %v8699, %v8724
    %v8731 = vsel %vm8719, %v8713, %v8725
    %v8732 = vsel %vm8720, %v8687, %v8726
    %v8733 = vsel %vm8721, %v8701, %v8727
    %v8734 = vsel %vm8722, %v8715, %v8728
    %v8735 = vpack.c.bf16 %v8732, %v8729
    %v8736 = vpack.c.bf16 %v8733, %v8730
    %v8737 = vpack.c.bf16 %v8734, %v8731
    %v8738 = vld [vmem:[#allocation12] sm:$0xff]
    %v8739 = vld [vmem:[#allocation12 + $0x8] sm:$0xf]
    %v8740 = vld [vmem:[#allocation12 + $0xc] sm:$0xff]
    %v8741 = vld [vmem:[#allocation12 + $0x14] sm:$0xf]
    %v8742 = vld [vmem:[#allocation12 + $0x18] sm:$0xff]
    %v8743 = vld [vmem:[#allocation12 + $0x20] sm:$0xf]
    %v8744 = vld [vmem:[#allocation12 + $0x24] sm:$0xff]
    %v8745 = vld [vmem:[#allocation12 + $0x2c] sm:$0xf]
    %v8746 = vld [vmem:[#allocation12 + $0x30] sm:$0xff]
    %v8747 = vld [vmem:[#allocation12 + $0x38] sm:$0xf]
    %v8748 = vld [vmem:[#allocation12 + $0x3c] sm:$0xff]
    %v8749 = vld [vmem:[#allocation12 + $0x44] sm:$0xf]
    %v8750 = vld [vmem:[#allocation12 + $0x48] sm:$0xff]
    %v8751 = vld [vmem:[#allocation12 + $0x50] sm:$0xf]
    %v8752 = vld [vmem:[#allocation12 + $0x54] sm:$0xff]
    %v8753 = vld [vmem:[#allocation12 + $0x5c] sm:$0xf]
    %v8754 = vld [vmem:[#allocation12 + $0x60] sm:$0xff]
    %v8755 = vld [vmem:[#allocation12 + $0x68] sm:$0xf]
    %v8756 = vld [vmem:[#allocation12 + $0x6c] sm:$0xff]
    %v8757 = vld [vmem:[#allocation12 + $0x74] sm:$0xf]
    %v8758 = vld [vmem:[#allocation12 + $0x78] sm:$0xff]
    %v8759 = vld [vmem:[#allocation12 + $0x80] sm:$0xf]
    %v8760 = vld [vmem:[#allocation12 + $0x84] sm:$0xff]
    %v8761 = vld [vmem:[#allocation12 + $0x8c] sm:$0xf]
    %v8762 = vld [vmem:[#allocation12 + $0x90] sm:$0xff]
    %v8763 = vld [vmem:[#allocation12 + $0x98] sm:$0xf]
    %v8764 = vld [vmem:[#allocation12 + $0x9c] sm:$0xff]
    %v8765 = vld [vmem:[#allocation12 + $0xa4] sm:$0xf]
    %v8766 = vld [vmem:[#allocation12 + $0xa8] sm:$0xff]
    %v8767 = vld [vmem:[#allocation12 + $0xb0] sm:$0xf]
    %v8768 = vld [vmem:[#allocation12 + $0xb4] sm:$0xff]
    %v8769 = vld [vmem:[#allocation12 + $0xbc] sm:$0xf]
    %v8770 = vld [vmem:[#allocation12 + $0xc0] sm:$0xff]
    %v8771 = vld [vmem:[#allocation12 + $0xc8] sm:$0xf]
    %v8772 = vld [vmem:[#allocation12 + $0xcc] sm:$0xff]
    %v8773 = vld [vmem:[#allocation12 + $0xd4] sm:$0xf]
    %v8774 = vld [vmem:[#allocation12 + $0xd8] sm:$0xff]
    %v8775 = vld [vmem:[#allocation12 + $0xe0] sm:$0xf]
    %v8776 = vld [vmem:[#allocation12 + $0xe4] sm:$0xff]
    %v8777 = vld [vmem:[#allocation12 + $0xec] sm:$0xf]
    %v8778 = vld [vmem:[#allocation12 + $0xf0] sm:$0xff]
    %v8779 = vld [vmem:[#allocation12 + $0xf8] sm:$0xf]
    %v8780 = vld [vmem:[#allocation12 + $0xfc] sm:$0xff]
    %v8781 = vld [vmem:[#allocation12 + $0x104] sm:$0xf]
    %v8782 = vld [vmem:[#allocation12 + $0x108] sm:$0xff]
    %v8783 = vld [vmem:[#allocation12 + $0x110] sm:$0xf]
    %v8784 = vld [vmem:[#allocation12 + $0x114] sm:$0xff]
    %v8785 = vld [vmem:[#allocation12 + $0x11c] sm:$0xf]
    %v8786 = vld [vmem:[#allocation12 + $0x120] sm:$0xff]
    %v8787 = vld [vmem:[#allocation12 + $0x128] sm:$0xf]
    %v8788 = vld [vmem:[#allocation12 + $0x12c] sm:$0xff]
    %v8789 = vld [vmem:[#allocation12 + $0x134] sm:$0xf]
    %v8790 = vld [vmem:[#allocation12 + $0x138] sm:$0xff]
    %v8791 = vld [vmem:[#allocation12 + $0x140] sm:$0xf]
    %v8792 = vld [vmem:[#allocation12 + $0x144] sm:$0xff]
    %v8793 = vld [vmem:[#allocation12 + $0x14c] sm:$0xf]
    %v8794 = vld [vmem:[#allocation12 + $0x150] sm:$0xff]
    %v8795 = vld [vmem:[#allocation12 + $0x158] sm:$0xf]
    %v8796 = vld [vmem:[#allocation12 + $0x15c] sm:$0xff]
    %v8797 = vld [vmem:[#allocation12 + $0x164] sm:$0xf]
    %v8798 = vld [vmem:[#allocation12 + $0x168] sm:$0xff]
    %v8799 = vld [vmem:[#allocation12 + $0x170] sm:$0xf]
    %v8800 = vld [vmem:[#allocation12 + $0x174] sm:$0xff]
    %v8801 = vld [vmem:[#allocation12 + $0x17c] sm:$0xf]
    %v8802 = vld [vmem:[#allocation12 + $0x180] sm:$0xff]
    %v8803 = vld [vmem:[#allocation12 + $0x188] sm:$0xf]
    %v8804 = vld [vmem:[#allocation12 + $0x18c] sm:$0xff]
    %v8805 = vld [vmem:[#allocation12 + $0x194] sm:$0xf]
    %v8806 = vld [vmem:[#allocation12 + $0x198] sm:$0xff]
    %v8807 = vld [vmem:[#allocation12 + $0x1a0] sm:$0xf]
    %v8808 = vld [vmem:[#allocation12 + $0x1a4] sm:$0xff]
    %v8809 = vld [vmem:[#allocation12 + $0x1ac] sm:$0xf]
    %v8810 = vld [vmem:[#allocation12 + $0x1b0] sm:$0xff]
    %v8811 = vld [vmem:[#allocation12 + $0x1b8] sm:$0xf]
    %v8812 = vld [vmem:[#allocation12 + $0x1bc] sm:$0xff]
    %v8813 = vld [vmem:[#allocation12 + $0x1c4] sm:$0xf]
    %v8814 = vld [vmem:[#allocation12 + $0x1c8] sm:$0xff]
    %v8815 = vld [vmem:[#allocation12 + $0x1d0] sm:$0xf]
    %v8816 = vld [vmem:[#allocation12 + $0x1d4] sm:$0xff]
    %v8817 = vld [vmem:[#allocation12 + $0x1dc] sm:$0xf]
    %v8818 = vld [vmem:[#allocation12 + $0x1e0] sm:$0xff]
    %v8819 = vld [vmem:[#allocation12 + $0x1e8] sm:$0xf]
    %v8820 = vld [vmem:[#allocation12 + $0x1ec] sm:$0xff]
    %v8821 = vld [vmem:[#allocation12 + $0x1f4] sm:$0xf]
    %v8822 = vld [vmem:[#allocation12 + $0x1f8] sm:$0xff]
    %v8823 = vld [vmem:[#allocation12 + $0x200] sm:$0xf]
    %v8824 = vld [vmem:[#allocation12 + $0x204] sm:$0xff]
    %v8825 = vld [vmem:[#allocation12 + $0x20c] sm:$0xf]
    %v8826 = vld [vmem:[#allocation12 + $0x210] sm:$0xff]
    %v8827 = vld [vmem:[#allocation12 + $0x218] sm:$0xf]
    %v8828 = vld [vmem:[#allocation12 + $0x21c] sm:$0xff]
    %v8829 = vld [vmem:[#allocation12 + $0x224] sm:$0xf]
    %v8830 = vld [vmem:[#allocation12 + $0x228] sm:$0xff]
    %v8831 = vld [vmem:[#allocation12 + $0x230] sm:$0xf]
    %v8832 = vld [vmem:[#allocation12 + $0x234] sm:$0xff]
    %v8833 = vld [vmem:[#allocation12 + $0x23c] sm:$0xf]
    %v8834 = vld [vmem:[#allocation13] sm:$0x7]
    %v8836 = vperm.slane %v8834, 0
    %v8837 = vperm.slane %v8834, 1
    %v8838 = vperm.slane %v8834, 2
    %v8938 = vunpack.c.l.b16 %v8738
    %v8939 = vunpack.c.h.b16 %v8738
    %v8940 = vunpack.c.l.b16 %v8739
    %v8941 = vunpack.c.l.b16 %v8740
    %v8942 = vunpack.c.h.b16 %v8740
    %v8943 = vunpack.c.l.b16 %v8741
    %v8944 = vunpack.c.l.b16 %v8742
    %v8945 = vunpack.c.h.b16 %v8742
    %v8946 = vunpack.c.l.b16 %v8743
    %v8947 = vunpack.c.l.b16 %v8744
    %v8948 = vunpack.c.h.b16 %v8744
    %v8949 = vunpack.c.l.b16 %v8745
    %v8950 = vunpack.c.l.b16 %v8746
    %v8951 = vunpack.c.h.b16 %v8746
    %v8952 = vunpack.c.l.b16 %v8747
    %v8953 = vunpack.c.l.b16 %v8748
    %v8954 = vunpack.c.h.b16 %v8748
    %v8955 = vunpack.c.l.b16 %v8749
    %v8956 = vunpack.c.l.b16 %v8750
    %v8957 = vunpack.c.h.b16 %v8750
    %v8958 = vunpack.c.l.b16 %v8751
    %v8959 = vunpack.c.l.b16 %v8752
    %v8960 = vunpack.c.h.b16 %v8752
    %v8961 = vunpack.c.l.b16 %v8753
    %v8962 = vunpack.c.l.b16 %v8754
    %v8963 = vunpack.c.h.b16 %v8754
    %v8964 = vunpack.c.l.b16 %v8755
    %v8965 = vunpack.c.l.b16 %v8756
    %v8966 = vunpack.c.h.b16 %v8756
    %v8967 = vunpack.c.l.b16 %v8757
    %v8968 = vunpack.c.l.b16 %v8758
    %v8969 = vunpack.c.h.b16 %v8758
    %v8970 = vunpack.c.l.b16 %v8759
    %v8971 = vunpack.c.l.b16 %v8760
    %v8972 = vunpack.c.h.b16 %v8760
    %v8973 = vunpack.c.l.b16 %v8761
    %v8974 = vunpack.c.l.b16 %v8762
    %v8975 = vunpack.c.h.b16 %v8762
    %v8976 = vunpack.c.l.b16 %v8763
    %v8977 = vunpack.c.l.b16 %v8764
    %v8978 = vunpack.c.h.b16 %v8764
    %v8979 = vunpack.c.l.b16 %v8765
    %v8980 = vunpack.c.l.b16 %v8766
    %v8981 = vunpack.c.h.b16 %v8766
    %v8982 = vunpack.c.l.b16 %v8767
    %v8983 = vunpack.c.l.b16 %v8768
    %v8984 = vunpack.c.h.b16 %v8768
    %v8985 = vunpack.c.l.b16 %v8769
    %v8986 = vunpack.c.l.b16 %v8770
    %v8987 = vunpack.c.h.b16 %v8770
    %v8988 = vunpack.c.l.b16 %v8771
    %v8989 = vunpack.c.l.b16 %v8772
    %v8990 = vunpack.c.h.b16 %v8772
    %v8991 = vunpack.c.l.b16 %v8773
    %v8992 = vunpack.c.l.b16 %v8774
    %v8993 = vunpack.c.h.b16 %v8774
    %v8994 = vunpack.c.l.b16 %v8775
    %v8995 = vunpack.c.l.b16 %v8776
    %v8996 = vunpack.c.h.b16 %v8776
    %v8997 = vunpack.c.l.b16 %v8777
    %v8998 = vunpack.c.l.b16 %v8778
    %v8999 = vunpack.c.h.b16 %v8778
    %v9000 = vunpack.c.l.b16 %v8779
    %v9001 = vunpack.c.l.b16 %v8780
    %v9002 = vunpack.c.h.b16 %v8780
    %v9003 = vunpack.c.l.b16 %v8781
    %v9004 = vunpack.c.l.b16 %v8782
    %v9005 = vunpack.c.h.b16 %v8782
    %v9006 = vunpack.c.l.b16 %v8783
    %v9007 = vunpack.c.l.b16 %v8784
    %v9008 = vunpack.c.h.b16 %v8784
    %v9009 = vunpack.c.l.b16 %v8785
    %v9010 = vunpack.c.l.b16 %v8786
    %v9011 = vunpack.c.h.b16 %v8786
    %v9012 = vunpack.c.l.b16 %v8787
    %v9013 = vunpack.c.l.b16 %v8788
    %v9014 = vunpack.c.h.b16 %v8788
    %v9015 = vunpack.c.l.b16 %v8789
    %v9016 = vunpack.c.l.b16 %v8790
    %v9017 = vunpack.c.h.b16 %v8790
    %v9018 = vunpack.c.l.b16 %v8791
    %v9019 = vunpack.c.l.b16 %v8792
    %v9020 = vunpack.c.h.b16 %v8792
    %v9021 = vunpack.c.l.b16 %v8793
    %v9022 = vunpack.c.l.b16 %v8794
    %v9023 = vunpack.c.h.b16 %v8794
    %v9024 = vunpack.c.l.b16 %v8795
    %v9025 = vunpack.c.l.b16 %v8796
    %v9026 = vunpack.c.h.b16 %v8796
    %v9027 = vunpack.c.l.b16 %v8797
    %v9028 = vunpack.c.l.b16 %v8798
    %v9029 = vunpack.c.h.b16 %v8798
    %v9030 = vunpack.c.l.b16 %v8799
    %v9031 = vunpack.c.l.b16 %v8800
    %v9032 = vunpack.c.h.b16 %v8800
    %v9033 = vunpack.c.l.b16 %v8801
    %v9034 = vunpack.c.l.b16 %v8802
    %v9035 = vunpack.c.h.b16 %v8802
    %v9036 = vunpack.c.l.b16 %v8803
    %v9037 = vunpack.c.l.b16 %v8804
    %v9038 = vunpack.c.h.b16 %v8804
    %v9039 = vunpack.c.l.b16 %v8805
    %v9040 = vunpack.c.l.b16 %v8806
    %v9041 = vunpack.c.h.b16 %v8806
    %v9042 = vunpack.c.l.b16 %v8807
    %v9043 = vunpack.c.l.b16 %v8808
    %v9044 = vunpack.c.h.b16 %v8808
    %v9045 = vunpack.c.l.b16 %v8809
    %v9046 = vunpack.c.l.b16 %v8810
    %v9047 = vunpack.c.h.b16 %v8810
    %v9048 = vunpack.c.l.b16 %v8811
    %v9049 = vunpack.c.l.b16 %v8812
    %v9050 = vunpack.c.h.b16 %v8812
    %v9051 = vunpack.c.l.b16 %v8813
    %v9052 = vunpack.c.l.b16 %v8814
    %v9053 = vunpack.c.h.b16 %v8814
    %v9054 = vunpack.c.l.b16 %v8815
    %v9055 = vunpack.c.l.b16 %v8816
    %v9056 = vunpack.c.h.b16 %v8816
    %v9057 = vunpack.c.l.b16 %v8817
    %v9058 = vunpack.c.l.b16 %v8818
    %v9059 = vunpack.c.h.b16 %v8818
    %v9060 = vunpack.c.l.b16 %v8819
    %v9061 = vunpack.c.l.b16 %v8820
    %v9062 = vunpack.c.h.b16 %v8820
    %v9063 = vunpack.c.l.b16 %v8821
    %v9064 = vunpack.c.l.b16 %v8822
    %v9065 = vunpack.c.h.b16 %v8822
    %v9066 = vunpack.c.l.b16 %v8823
    %v9067 = vunpack.c.l.b16 %v8824
    %v9068 = vunpack.c.h.b16 %v8824
    %v9069 = vunpack.c.l.b16 %v8825
    %v9070 = vunpack.c.l.b16 %v8826
    %v9071 = vunpack.c.h.b16 %v8826
    %v9072 = vunpack.c.l.b16 %v8827
    %v9073 = vunpack.c.l.b16 %v8828
    %v9074 = vunpack.c.h.b16 %v8828
    %v9075 = vunpack.c.l.b16 %v8829
    %v9076 = vunpack.c.l.b16 %v8830
    %v9077 = vunpack.c.h.b16 %v8830
    %v9078 = vunpack.c.l.b16 %v8831
    %v9079 = vunpack.c.l.b16 %v8832
    %v9080 = vunpack.c.h.b16 %v8832
    %v9081 = vunpack.c.l.b16 %v8833
    %v9082 = vpack.c.b16 %v8941, %v8938
    %v9083 = vpack.c.b16 %v8942, %v8939
    %v9084 = vpack.c.b16 %v8943, %v8940
    %v9085 = vpack.c.b16 %v8947, %v8944
    %v9086 = vpack.c.b16 %v8948, %v8945
    %v9087 = vpack.c.b16 %v8949, %v8946
    %v9088 = vpack.c.b16 %v8953, %v8950
    %v9089 = vpack.c.b16 %v8954, %v8951
    %v9090 = vpack.c.b16 %v8955, %v8952
    %v9091 = vpack.c.b16 %v8959, %v8956
    %v9092 = vpack.c.b16 %v8960, %v8957
    %v9093 = vpack.c.b16 %v8961, %v8958
    %v9094 = vpack.c.b16 %v8965, %v8962
    %v9095 = vpack.c.b16 %v8966, %v8963
    %v9096 = vpack.c.b16 %v8967, %v8964
    %v9097 = vpack.c.b16 %v8971, %v8968
    %v9098 = vpack.c.b16 %v8972, %v8969
    %v9099 = vpack.c.b16 %v8973, %v8970
    %v9100 = vpack.c.b16 %v8977, %v8974
    %v9101 = vpack.c.b16 %v8978, %v8975
    %v9102 = vpack.c.b16 %v8979, %v8976
    %v9103 = vpack.c.b16 %v8983, %v8980
    %v9104 = vpack.c.b16 %v8984, %v8981
    %v9105 = vpack.c.b16 %v8985, %v8982
    %v9106 = vpack.c.b16 %v8989, %v8986
    %v9107 = vpack.c.b16 %v8990, %v8987
    %v9108 = vpack.c.b16 %v8991, %v8988
    %v9109 = vpack.c.b16 %v8995, %v8992
    %v9110 = vpack.c.b16 %v8996, %v8993
    %v9111 = vpack.c.b16 %v8997, %v8994
    %v9112 = vpack.c.b16 %v9001, %v8998
    %v9113 = vpack.c.b16 %v9002, %v8999
    %v9114 = vpack.c.b16 %v9003, %v9000
    %v9115 = vpack.c.b16 %v9007, %v9004
    %v9116 = vpack.c.b16 %v9008, %v9005
    %v9117 = vpack.c.b16 %v9009, %v9006
    %v9118 = vpack.c.b16 %v9013, %v9010
    %v9119 = vpack.c.b16 %v9014, %v9011
    %v9120 = vpack.c.b16 %v9015, %v9012
    %v9121 = vpack.c.b16 %v9019, %v9016
    %v9122 = vpack.c.b16 %v9020, %v9017
    %v9123 = vpack.c.b16 %v9021, %v9018
    %v9124 = vpack.c.b16 %v9025, %v9022
    %v9125 = vpack.c.b16 %v9026, %v9023
    %v9126 = vpack.c.b16 %v9027, %v9024
    %v9127 = vpack.c.b16 %v9031, %v9028
    %v9128 = vpack.c.b16 %v9032, %v9029
    %v9129 = vpack.c.b16 %v9033, %v9030
    %v9130 = vpack.c.b16 %v9037, %v9034
    %v9131 = vpack.c.b16 %v9038, %v9035
    %v9132 = vpack.c.b16 %v9039, %v9036
    %v9133 = vpack.c.b16 %v9043, %v9040
    %v9134 = vpack.c.b16 %v9044, %v9041
    %v9135 = vpack.c.b16 %v9045, %v9042
    %v9136 = vpack.c.b16 %v9049, %v9046
    %v9137 = vpack.c.b16 %v9050, %v9047
    %v9138 = vpack.c.b16 %v9051, %v9048
    %v9139 = vpack.c.b16 %v9055, %v9052
    %v9140 = vpack.c.b16 %v9056, %v9053
    %v9141 = vpack.c.b16 %v9057, %v9054
    %v9142 = vpack.c.b16 %v9061, %v9058
    %v9143 = vpack.c.b16 %v9062, %v9059
    %v9144 = vpack.c.b16 %v9063, %v9060
    %v9145 = vpack.c.b16 %v9067, %v9064
    %v9146 = vpack.c.b16 %v9068, %v9065
    %v9147 = vpack.c.b16 %v9069, %v9066
    %v9148 = vpack.c.b16 %v9073, %v9070
    %v9149 = vpack.c.b16 %v9074, %v9071
    %v9150 = vpack.c.b16 %v9075, %v9072
    %v9151 = vpack.c.b16 %v9079, %v9076
    %v9152 = vpack.c.b16 %v9080, %v9077
    %v9153 = vpack.c.b16 %v9081, %v9078
    %9226 = vmatpush.bf16.msra.mxu0 %v9103
    %9227 = vmatpush.bf16.msra.mxu0 %v9100
    %9228 = vmatpush.bf16.msra.mxu0 %v9097
    %9229 = vmatpush.bf16.msra.mxu0 %v9094
    %9230 = vmatpush.bf16.msra.mxu0 %v9091
    %9231 = vmatpush.bf16.msra.mxu0 %v9088
    %9232 = vmatpush.bf16.msra.mxu0 %v9085
    %9233 = vmatpush.bf16.msra.mxu0 %v9082
    %9234 = vmatmul.bf16.gmra.mxu0 %v8735
    %v9235 = vpop.f32.mrf.mxu0
    %v9236 = vadd.f32 %v8836, %v9235
    %v9237 = vpop.f32.mrf.mxu0
    %v9238 = vadd.f32 %v8836, %v9237
    %9239 = vdwg.mxu0
    %9240 = vmatpush.bf16.msra.mxu0 %v9127
    %9241 = vmatpush.bf16.msra.mxu0 %v9124
    %9242 = vmatpush.bf16.msra.mxu0 %v9121
    %9243 = vmatpush.bf16.msra.mxu0 %v9118
    %9244 = vmatpush.bf16.msra.mxu0 %v9115
    %9245 = vmatpush.bf16.msra.mxu0 %v9112
    %9246 = vmatpush.bf16.msra.mxu0 %v9109
    %9247 = vmatpush.bf16.msra.mxu0 %v9106
    %9248 = vmatmul.bf16.gmra.mxu0 %v8736
    %v9249 = vpop.f32.mrf.mxu0
    %v9250 = vadd.f32 %v9236, %v9249
    %v9251 = vpop.f32.mrf.mxu0
    %v9252 = vadd.f32 %v9238, %v9251
    %9253 = vdwg.mxu0
    %9254 = vmatpush.bf16.msra.mxu0 %v9151
    %9255 = vmatpush.bf16.msra.mxu0 %v9148
    %9256 = vmatpush.bf16.msra.mxu0 %v9145
    %9257 = vmatpush.bf16.msra.mxu0 %v9142
    %9258 = vmatpush.bf16.msra.mxu0 %v9139
    %9259 = vmatpush.bf16.msra.mxu0 %v9136
    %9260 = vmatpush.bf16.msra.mxu0 %v9133
    %9261 = vmatpush.bf16.msra.mxu0 %v9130
    %9262 = vmatmul.bf16.gmra.mxu0 %v8737
    %v9263 = vpop.f32.mrf.mxu0
    %v9264 = vadd.f32 %v9250, %v9263
    %v9265 = vpop.f32.mrf.mxu0
    %v9266 = vadd.f32 %v9252, %v9265
    %9267 = vdwg.mxu0
    %9268 = vmatpush.bf16.msra.mxu0 %v9104
    %9269 = vmatpush.bf16.msra.mxu0 %v9101
    %9270 = vmatpush.bf16.msra.mxu0 %v9098
    %9271 = vmatpush.bf16.msra.mxu0 %v9095
    %9272 = vmatpush.bf16.msra.mxu0 %v9092
    %9273 = vmatpush.bf16.msra.mxu0 %v9089
    %9274 = vmatpush.bf16.msra.mxu0 %v9086
    %9275 = vmatpush.bf16.msra.mxu0 %v9083
    %9276 = vmatmul.bf16.gmra.mxu0 %v8735
    %v9277 = vpop.f32.mrf.mxu0
    %v9278 = vadd.f32 %v8837, %v9277
    %v9279 = vpop.f32.mrf.mxu0
    %v9280 = vadd.f32 %v8837, %v9279
    %9281 = vdwg.mxu0
    %9282 = vmatpush.bf16.msra.mxu0 %v9128
    %9283 = vmatpush.bf16.msra.mxu0 %v9125
    %9284 = vmatpush.bf16.msra.mxu0 %v9122
    %9285 = vmatpush.bf16.msra.mxu0 %v9119
    %9286 = vmatpush.bf16.msra.mxu0 %v9116
    %9287 = vmatpush.bf16.msra.mxu0 %v9113
    %9288 = vmatpush.bf16.msra.mxu0 %v9110
    %9289 = vmatpush.bf16.msra.mxu0 %v9107
    %9290 = vmatmul.bf16.gmra.mxu0 %v8736
    %v9291 = vpop.f32.mrf.mxu0
    %v9292 = vadd.f32 %v9278, %v9291
    %v9293 = vpop.f32.mrf.mxu0
    %v9294 = vadd.f32 %v9280, %v9293
    %9295 = vdwg.mxu0
    %9296 = vmatpush.bf16.msra.mxu0 %v9152
    %9297 = vmatpush.bf16.msra.mxu0 %v9149
    %9298 = vmatpush.bf16.msra.mxu0 %v9146
    %9299 = vmatpush.bf16.msra.mxu0 %v9143
    %9300 = vmatpush.bf16.msra.mxu0 %v9140
    %9301 = vmatpush.bf16.msra.mxu0 %v9137
    %9302 = vmatpush.bf16.msra.mxu0 %v9134
    %9303 = vmatpush.bf16.msra.mxu0 %v9131
    %9304 = vmatmul.bf16.gmra.mxu0 %v8737
    %v9305 = vpop.f32.mrf.mxu0
    %v9306 = vadd.f32 %v9292, %v9305
    %v9307 = vpop.f32.mrf.mxu0
    %v9308 = vadd.f32 %v9294, %v9307
    %9309 = vdwg.mxu0
    %9310 = vmatpush.bf16.msra.mxu0 %v9105
    %9311 = vmatpush.bf16.msra.mxu0 %v9102
    %9312 = vmatpush.bf16.msra.mxu0 %v9099
    %9313 = vmatpush.bf16.msra.mxu0 %v9096
    %9314 = vmatpush.bf16.msra.mxu0 %v9093
    %9315 = vmatpush.bf16.msra.mxu0 %v9090
    %9316 = vmatpush.bf16.msra.mxu0 %v9087
    %9317 = vmatpush.bf16.msra.mxu0 %v9084
    %9318 = vmatmul.bf16.gmra.mxu0 %v8735
    %v9319 = vpop.f32.mrf.mxu0
    %v9320 = vadd.f32 %v8838, %v9319
    %v9321 = vpop.f32.mrf.mxu0
    %v9322 = vadd.f32 %v8838, %v9321
    %9323 = vdwg.mxu0
    %9324 = vmatpush.bf16.msra.mxu0 %v9129
    %9325 = vmatpush.bf16.msra.mxu0 %v9126
    %9326 = vmatpush.bf16.msra.mxu0 %v9123
    %9327 = vmatpush.bf16.msra.mxu0 %v9120
    %9328 = vmatpush.bf16.msra.mxu0 %v9117
    %9329 = vmatpush.bf16.msra.mxu0 %v9114
    %9330 = vmatpush.bf16.msra.mxu0 %v9111
    %9331 = vmatpush.bf16.msra.mxu0 %v9108
    %9332 = vmatmul.bf16.gmra.mxu0 %v8736
    %v9333 = vpop.f32.mrf.mxu0
    %v9334 = vadd.f32 %v9320, %v9333
    %v9335 = vpop.f32.mrf.mxu0
    %v9336 = vadd.f32 %v9322, %v9335
    %9337 = vdwg.mxu0
    %9338 = vmatpush.bf16.msra.mxu0 %v9153
    %9339 = vmatpush.bf16.msra.mxu0 %v9150
    %9340 = vmatpush.bf16.msra.mxu0 %v9147
    %9341 = vmatpush.bf16.msra.mxu0 %v9144
    %9342 = vmatpush.bf16.msra.mxu0 %v9141
    %9343 = vmatpush.bf16.msra.mxu0 %v9138
    %9344 = vmatpush.bf16.msra.mxu0 %v9135
    %9345 = vmatpush.bf16.msra.mxu0 %v9132
    %9346 = vmatmul.bf16.gmra.mxu0 %v8737
    %v9347 = vpop.f32.mrf.mxu0
    %v9348 = vadd.f32 %v9334, %v9347
    %v9349 = vpop.f32.mrf.mxu0
    %v9350 = vadd.f32 %v9336, %v9349
    %9351 = vdwg.mxu0
    %vm9352 = vcmp.ge.f32.partialorder %v9264, 0.0
    %vm9353 = vcmp.ge.f32.partialorder %v9306, 0.0
    %vm9354 = vcmp.ge.f32.partialorder %v9348, 0.0
    %vm9355 = vcmp.ge.f32.partialorder %v9266, 0.0
    %vm9356 = vcmp.ge.f32.partialorder %v9308, 0.0
    %vm9357 = vcmp.ge.f32.partialorder %v9350, 0.0
    %v9358 = vmul.f32 %v9264, 0.1
    %v9359 = vmul.f32 %v9306, 0.1
    %v9360 = vmul.f32 %v9348, 0.1
    %v9361 = vmul.f32 %v9266, 0.1
    %v9362 = vmul.f32 %v9308, 0.1
    %v9363 = vmul.f32 %v9350, 0.1
    %v9364 = vsel %vm9352, %v9264, %v9358
    %v9365 = vsel %vm9353, %v9306, %v9359
    %v9366 = vsel %vm9354, %v9348, %v9360
    %v9367 = vsel %vm9355, %v9266, %v9361
    %v9368 = vsel %vm9356, %v9308, %v9362
    %v9369 = vsel %vm9357, %v9350, %v9363
    %v9370 = vld [vmem:[%s11] sm:$0xff]
    %v9371 = vld [vmem:[%s11 + $0x8] sm:$0xff]
    %v9372 = vld [vmem:[%s11 + $0x10] sm:$0xff]
    %v9373 = vld [vmem:[%s11 + $0x18] sm:$0xff]
    %v9374 = vld [vmem:[%s11 + $0x20] sm:$0xff]
    %v9375 = vld [vmem:[%s11 + $0x28] sm:$0xff]
    %v9376 = vld [vmem:[%s11 + $0x30] sm:$0xff]
    %v9377 = vld [vmem:[%s11 + $0x38] sm:$0xff]
    %v9378 = vld [vmem:[%s11 + $0x40] sm:$0xff]
    %v9379 = vld [vmem:[%s11 + $0x48] sm:$0xff]
    %v9380 = vld [vmem:[%s11 + $0x50] sm:$0xff]
    %v9381 = vld [vmem:[%s11 + $0x58] sm:$0xff]
    %v9382 = vld [vmem:[%s11 + $0x60] sm:$0xff]
    %v9383 = vld [vmem:[%s11 + $0x68] sm:$0xff]
    %v9384 = vld [vmem:[%s11 + $0x70] sm:$0xff]
    %v9385 = vld [vmem:[%s11 + $0x78] sm:$0xff]
    %v9386 = vld [vmem:[%s11 + $0x80] sm:$0xff]
    %v9387 = vld [vmem:[%s11 + $0x88] sm:$0xff]
    %v9388 = vld [vmem:[%s11 + $0x90] sm:$0xff]
    %v9389 = vld [vmem:[%s11 + $0x98] sm:$0xff]
    %v9390 = vld [vmem:[%s11 + $0xa0] sm:$0xff]
    %v9391 = vld [vmem:[%s11 + $0xa8] sm:$0xff]
    %v9392 = vld [vmem:[%s11 + $0xb0] sm:$0xff]
    %v9393 = vld [vmem:[%s11 + $0xb8] sm:$0xff]
    %v9394 = vld [vmem:[%s11 + $0xc0] sm:$0xff]
    %v9395 = vld [vmem:[%s11 + $0xc8] sm:$0xff]
    %v9396 = vld [vmem:[%s11 + $0xd0] sm:$0xff]
    %v9397 = vld [vmem:[%s11 + $0xd8] sm:$0xff]
    %v9398 = vld [vmem:[%s11 + $0xe0] sm:$0xff]
    %v9399 = vld [vmem:[%s11 + $0xe8] sm:$0xff]
    %v9400 = vld [vmem:[%s11 + $0xf0] sm:$0xff]
    %v9401 = vld [vmem:[%s11 + $0xf8] sm:$0xff]
    %v9402 = vld [vmem:[%s11 + $0x100] sm:$0xff]
    %v9403 = vld [vmem:[%s11 + $0x108] sm:$0xff]
    %v9404 = vld [vmem:[%s11 + $0x110] sm:$0xff]
    %v9405 = vld [vmem:[%s11 + $0x118] sm:$0xff]
    %v9406 = vld [vmem:[%s11 + $0x120] sm:$0xff]
    %v9407 = vld [vmem:[%s11 + $0x128] sm:$0xff]
    %v9408 = vld [vmem:[%s11 + $0x130] sm:$0xff]
    %v9409 = vld [vmem:[%s11 + $0x138] sm:$0xff]
    %v9410 = vld [vmem:[%s11 + $0x140] sm:$0xff]
    %v9411 = vld [vmem:[%s11 + $0x148] sm:$0xff]
    %v9412 = vld [vmem:[%s11 + $0x150] sm:$0xff]
    %v9413 = vld [vmem:[%s11 + $0x158] sm:$0xff]
    %v9414 = vld [vmem:[%s11 + $0x160] sm:$0xff]
    %v9415 = vld [vmem:[%s11 + $0x168] sm:$0xff]
    %v9416 = vld [vmem:[%s11 + $0x170] sm:$0xff]
    %v9417 = vld [vmem:[%s11 + $0x178] sm:$0xff]
    %9418 = vmatpush.msra.mxu0 %v9385
    %9419 = vmatpush.msra.mxu0 %v9384
    %9420 = vmatpush.msra.mxu0 %v9383
    %9421 = vmatpush.msra.mxu0 %v9382
    %9422 = vmatpush.msra.mxu0 %v9381
    %9423 = vmatpush.msra.mxu0 %v9380
    %9424 = vmatpush.msra.mxu0 %v9379
    %9425 = vmatpush.msra.mxu0 %v9378
    %9426 = vmatpush.msra.mxu0 %v9377
    %9427 = vmatpush.msra.mxu0 %v9376
    %9428 = vmatpush.msra.mxu0 %v9375
    %9429 = vmatpush.msra.mxu0 %v9374
    %9430 = vmatpush.msra.mxu0 %v9373
    %9431 = vmatpush.msra.mxu0 %v9372
    %9432 = vmatpush.msra.mxu0 %v9371
    %9433 = vmatpush.msra.mxu0 %v9370
    %9434 = vmatmul.f32.gmra.mxu0 %v9364
    %v9435 = vpop.f32.mrf.mxu0
    %v9436 = vadd.f32 0.0, %v9435
    %9437 = vmatmul.f32.gmra.mxu0 %v9367
    %v9438 = vpop.f32.mrf.mxu0
    %v9439 = vadd.f32 0.0, %v9438
    %9440 = vdwg.mxu0
    %9441 = vmatpush.msra.mxu0 %v9401
    %9442 = vmatpush.msra.mxu0 %v9400
    %9443 = vmatpush.msra.mxu0 %v9399
    %9444 = vmatpush.msra.mxu0 %v9398
    %9445 = vmatpush.msra.mxu0 %v9397
    %9446 = vmatpush.msra.mxu0 %v9396
    %9447 = vmatpush.msra.mxu0 %v9395
    %9448 = vmatpush.msra.mxu0 %v9394
    %9449 = vmatpush.msra.mxu0 %v9393
    %9450 = vmatpush.msra.mxu0 %v9392
    %9451 = vmatpush.msra.mxu0 %v9391
    %9452 = vmatpush.msra.mxu0 %v9390
    %9453 = vmatpush.msra.mxu0 %v9389
    %9454 = vmatpush.msra.mxu0 %v9388
    %9455 = vmatpush.msra.mxu0 %v9387
    %9456 = vmatpush.msra.mxu0 %v9386
    %9457 = vmatmul.f32.gmra.mxu0 %v9365
    %v9458 = vpop.f32.mrf.mxu0
    %v9459 = vadd.f32 %v9436, %v9458
    %9460 = vmatmul.f32.gmra.mxu0 %v9368
    %v9461 = vpop.f32.mrf.mxu0
    %v9462 = vadd.f32 %v9439, %v9461
    %9463 = vdwg.mxu0
    %9464 = vmatpush.msra.mxu0 %v9417
    %9465 = vmatpush.msra.mxu0 %v9416
    %9466 = vmatpush.msra.mxu0 %v9415
    %9467 = vmatpush.msra.mxu0 %v9414
    %9468 = vmatpush.msra.mxu0 %v9413
    %9469 = vmatpush.msra.mxu0 %v9412
    %9470 = vmatpush.msra.mxu0 %v9411
    %9471 = vmatpush.msra.mxu0 %v9410
    %9472 = vmatpush.msra.mxu0 %v9409
    %9473 = vmatpush.msra.mxu0 %v9408
    %9474 = vmatpush.msra.mxu0 %v9407
    %9475 = vmatpush.msra.mxu0 %v9406
    %9476 = vmatpush.msra.mxu0 %v9405
    %9477 = vmatpush.msra.mxu0 %v9404
    %9478 = vmatpush.msra.mxu0 %v9403
    %9479 = vmatpush.msra.mxu0 %v9402
    %9480 = vmatmul.f32.gmra.mxu0 %v9366
    %v9481 = vpop.f32.mrf.mxu0
    %v9482 = vadd.f32 %v9459, %v9481
    %9483 = vmatmul.f32.gmra.mxu0 %v9369
    %v9484 = vpop.f32.mrf.mxu0
    %v9485 = vadd.f32 %v9462, %v9484
    %9486 = vdwg.mxu0
    %9487 = vmatpush.msra.mxu0 %v8450
    %9488 = vmatpush.msra.mxu0 %v8449
    %9489 = vmatpush.msra.mxu0 %v8448
    %9490 = vmatpush.msra.mxu0 %v8447
    %9491 = vmatpush.msra.mxu0 %v8446
    %9492 = vmatpush.msra.mxu0 %v8445
    %9493 = vmatpush.msra.mxu0 %v8444
    %9494 = vmatpush.msra.mxu0 %v8443
    %9495 = vmatpush.msra.mxu0 %v8442
    %9496 = vmatpush.msra.mxu0 %v8441
    %9497 = vmatpush.msra.mxu0 %v8440
    %9498 = vmatpush.msra.mxu0 %v8439
    %9499 = vmatpush.msra.mxu0 %v8438
    %9500 = vmatpush.msra.mxu0 %v8437
    %9501 = vmatpush.msra.mxu0 %v8436
    %9502 = vmatpush.msra.mxu0 %v8435
    %9503 = vmatmul.f32.gmra.mxu0 %v8427
    %v9504 = vpop.f32.mrf.mxu0
    %v9505 = vadd.f32 %v9482, %v9504
    %9506 = vmatmul.f32.gmra.mxu0 %v8431
    %v9507 = vpop.f32.mrf.mxu0
    %v9508 = vadd.f32 %v9485, %v9507
    %9509 = vdwg.mxu0
    %9510 = vmatpush.msra.mxu0 %v8466
    %9511 = vmatpush.msra.mxu0 %v8465
    %9512 = vmatpush.msra.mxu0 %v8464
    %9513 = vmatpush.msra.mxu0 %v8463
    %9514 = vmatpush.msra.mxu0 %v8462
    %9515 = vmatpush.msra.mxu0 %v8461
    %9516 = vmatpush.msra.mxu0 %v8460
    %9517 = vmatpush.msra.mxu0 %v8459
    %9518 = vmatpush.msra.mxu0 %v8458
    %9519 = vmatpush.msra.mxu0 %v8457
    %9520 = vmatpush.msra.mxu0 %v8456
    %9521 = vmatpush.msra.mxu0 %v8455
    %9522 = vmatpush.msra.mxu0 %v8454
    %9523 = vmatpush.msra.mxu0 %v8453
    %9524 = vmatpush.msra.mxu0 %v8452
    %9525 = vmatpush.msra.mxu0 %v8451
    %9526 = vmatmul.f32.gmra.mxu0 %v8428
    %v9527 = vpop.f32.mrf.mxu0
    %v9528 = vadd.f32 %v9505, %v9527
    %9529 = vmatmul.f32.gmra.mxu0 %v8432
    %v9530 = vpop.f32.mrf.mxu0
    %v9531 = vadd.f32 %v9508, %v9530
    %9532 = vdwg.mxu0
    %9533 = vmatpush.msra.mxu0 %v8482
    %9534 = vmatpush.msra.mxu0 %v8481
    %9535 = vmatpush.msra.mxu0 %v8480
    %9536 = vmatpush.msra.mxu0 %v8479
    %9537 = vmatpush.msra.mxu0 %v8478
    %9538 = vmatpush.msra.mxu0 %v8477
    %9539 = vmatpush.msra.mxu0 %v8476
    %9540 = vmatpush.msra.mxu0 %v8475
    %9541 = vmatpush.msra.mxu0 %v8474
    %9542 = vmatpush.msra.mxu0 %v8473
    %9543 = vmatpush.msra.mxu0 %v8472
    %9544 = vmatpush.msra.mxu0 %v8471
    %9545 = vmatpush.msra.mxu0 %v8470
    %9546 = vmatpush.msra.mxu0 %v8469
    %9547 = vmatpush.msra.mxu0 %v8468
    %9548 = vmatpush.msra.mxu0 %v8467
    %9549 = vmatmul.f32.gmra.mxu0 %v8429
    %v9550 = vpop.f32.mrf.mxu0
    %v9551 = vadd.f32 %v9528, %v9550
    %9552 = vmatmul.f32.gmra.mxu0 %v8433
    %v9553 = vpop.f32.mrf.mxu0
    %v9554 = vadd.f32 %v9531, %v9553
    %9555 = vdwg.mxu0
    %9556 = vmatpush.msra.mxu0 %v8498
    %9557 = vmatpush.msra.mxu0 %v8497
    %9558 = vmatpush.msra.mxu0 %v8496
    %9559 = vmatpush.msra.mxu0 %v8495
    %9560 = vmatpush.msra.mxu0 %v8494
    %9561 = vmatpush.msra.mxu0 %v8493
    %9562 = vmatpush.msra.mxu0 %v8492
    %9563 = vmatpush.msra.mxu0 %v8491
    %9564 = vmatpush.msra.mxu0 %v8490
    %9565 = vmatpush.msra.mxu0 %v8489
    %9566 = vmatpush.msra.mxu0 %v8488
    %9567 = vmatpush.msra.mxu0 %v8487
    %9568 = vmatpush.msra.mxu0 %v8486
    %9569 = vmatpush.msra.mxu0 %v8485
    %9570 = vmatpush.msra.mxu0 %v8484
    %9571 = vmatpush.msra.mxu0 %v8483
    %9572 = vmatmul.f32.gmra.mxu0 %v8430
    %v9573 = vpop.f32.mrf.mxu0
    %v9574 = vadd.f32 %v9551, %v9573
    %9575 = vmatmul.f32.gmra.mxu0 %v8434
    %v9576 = vpop.f32.mrf.mxu0
    %v9577 = vadd.f32 %v9554, %v9576
    %9578 = vdwg.mxu0
    %v9579 = vld [vmem:[#allocation15] sm:$0x1]
    %v9581 = vperm.slane %v9579, 0
    %v9583 = vadd.f32 %v9574, %v9581
    %v9584 = vadd.f32 %v9577, %v9581
    %v9585 = vld [vmem:[#allocation16] sm:$0xff]
    %v9586 = vld [vmem:[#allocation16 + $0x8] sm:$0xff]
    %v9587 = vld [vmem:[#allocation16 + $0x10] sm:$0xff]
    %v9588 = vld [vmem:[#allocation16 + $0x18] sm:$0xff]
    %v9589 = vld [vmem:[#allocation16 + $0x20] sm:$0xff]
    %v9590 = vld [vmem:[#allocation16 + $0x28] sm:$0xff]
    %v9591 = vld [vmem:[#allocation16 + $0x30] sm:$0xff]
    %v9592 = vld [vmem:[#allocation16 + $0x38] sm:$0xff]
    %v9593 = vld [vmem:[#allocation19] sm:$0x1]
    %v9595 = vperm.slane %v9593, 0
    %vm9597 = vcmask 523264
    %v9599 = vsel %vm9597, %v9583, 0
    %v9602 = vsel %vm9597, %v9584, 0
    %9604 = vmatpush.msra.mxu0 0.0
    %9605 = vmatpush.msra.mxu0 0.0
    %9606 = vmatpush.msra.mxu0 0.0
    %9607 = vmatpush.msra.mxu0 0.0
    %9608 = vmatpush.msra.mxu0 0.0
    %9609 = vmatpush.msra.mxu0 0.0
    %9610 = vmatpush.msra.mxu0 0.0
    %9611 = vmatpush.msra.mxu0 0.0
    %9612 = vmatpush.msra.mxu0 %v9592
    %9613 = vmatpush.msra.mxu0 %v9591
    %9614 = vmatpush.msra.mxu0 %v9590
    %9615 = vmatpush.msra.mxu0 %v9589
    %9616 = vmatpush.msra.mxu0 %v9588
    %9617 = vmatpush.msra.mxu0 %v9587
    %9618 = vmatpush.msra.mxu0 %v9586
    %9619 = vmatpush.msra.mxu0 %v9585
    %9620 = vmatmul.f32.gmra.mxu0 %v9599
    %v9621 = vpop.f32.mrf.mxu0
    %v9622 = vadd.f32 %v9595, %v9621
    %9623 = vmatmul.f32.gmra.mxu0 %v9602
    %v9624 = vpop.f32.mrf.mxu0
    %v9625 = vadd.f32 %v9595, %v9624
    %9626 = vdwg.mxu0
    %v9627 = vld [vmem:[#allocation18] sm:$0xff]
    %v9628 = vld [vmem:[#allocation18 + $0x8] sm:$0xff]
    %v9629 = vld [vmem:[#allocation18 + $0x10] sm:$0xff]
    %v9630 = vld [vmem:[#allocation18 + $0x18] sm:$0xff]
    %v9631 = vld [vmem:[#allocation21] sm:$0xff]
    %v9632 = vld [vmem:[#allocation21 + $0x8] sm:$0xff]
    %v9633 = vld [vmem:[#allocation21 + $0x10] sm:$0xff]
    %v9634 = vld [vmem:[#allocation21 + $0x18] sm:$0xff]
    %v9635 = vld [vmem:[#allocation22] sm:$0xff]
    %v9636 = vld [vmem:[#allocation22 + $0x8] sm:$0xff]
    %v9637 = vld [vmem:[#allocation22 + $0x10] sm:$0xff]
    %v9638 = vld [vmem:[#allocation22 + $0x18] sm:$0xff]
    %v9639 = vld [vmem:[#allocation24] sm:$0x1]
    %v9640 = vld [vmem:[#allocation25] sm:$0xff]
    %v9641 = vld [vmem:[#allocation25 + $0x8] sm:$0xff]
    %v9642 = vld [vmem:[#allocation25 + $0x10] sm:$0xff]
    %v9643 = vld [vmem:[#allocation25 + $0x18] sm:$0xff]
    %v9644 = vld [vmem:[#allocation27] sm:$0x1]
    %vm9645 = vcmask 261120
    %v9647 = vsel %vm9645, 0.0, 0
    %9649 = vmatpush.msra.mxu0 0.0
    %9650 = vmatpush.msra.mxu0 0.0
    %9651 = vmatpush.msra.mxu0 0.0
    %9652 = vmatpush.msra.mxu0 0.0
    %9653 = vmatpush.msra.mxu0 0.0
    %9654 = vmatpush.msra.mxu0 0.0
    %9655 = vmatpush.msra.mxu0 0.0
    %9656 = vmatpush.msra.mxu0 0.0
    %9657 = vmatpush.msra.mxu0 0.0
    %9658 = vmatpush.msra.mxu0 0.0
    %9659 = vmatpush.msra.mxu0 0.0
    %9660 = vmatpush.msra.mxu0 0.0
    %9661 = vmatpush.msra.mxu0 %v9630
    %9662 = vmatpush.msra.mxu0 %v9629
    %9663 = vmatpush.msra.mxu0 %v9628
    %9664 = vmatpush.msra.mxu0 %v9627
    %9665 = vmatmul.f32.gmra.mxu0 %v9647
    %v9666 = vpop.f32.mrf.mxu0
    %v9667 = vadd.f32 0.0, %v9666
    %9668 = vdwg.mxu0
    %v9669 = vadd.f32 %v9622, %v9667
    %v9670 = vxor.u32 %v9669, 2147483648
    %v9671 = vmul.f32 %v9670, 1.442695
    %v9672 = vpow.pop %v9671
    %v9673 = vadd.f32 %v9672, 1.0
    %v9674 = vrcp.pop %v9673
    %v9675 = vmul.f32 %v9673, %v9674
    %v9676 = vsub.f32 1.0, %v9675
    %v9677 = vmul.f32 %v9674, %v9676
    %v9678 = vadd.f32 %v9674, %v9677
    %vm9679 = vweird.f32 %v9673
    %vm9680 = vweird.f32 %v9674
    %vm9681 = vmor %vm9679, %vm9680
    %v9682 = vsel %vm9681, %v9674, %v9678
    %v9683 = vand.u32 2147483647, %v9673
    %vm9684 = vcmp.eq.f32.partialorder %v9683, 8.507059e+37
    %v9685 = vand.u32 %v9673, 2147483648
    %v9686 = vor.u32 1.1754944e-38, %v9685
    %v9687 = vsel %vm9684, %v9686, %v9682
    %v9688 = vmul.f32 1.0, %v9687
    %v9689 = vtanh.pop %v9669
    %v9690 = vmul.f32 %v9688, 0.0
    %9692 = vrot.lane.b32.xlu0 %v9689, 64
    %v9693 = vpop.permute.xlu0 %9692
    %v9695 = vmul.f32 %v9688, %v9693
    %9697 = vrot.lane.b32.xlu0 %v9695, 32
    %v9698 = vpop.permute.xlu0 %9697
    %v9700 = vadd.f32 %v9690, %v9698
    %v9701 = vtanh.pop %v9700
    %9703 = vrot.lane.b32.xlu0 %v9701, 64
    %v9704 = vpop.permute.xlu0 %9703
    %v9706 = vmul.f32 %v9688, %v9704
    %9707 = vmatpush.msra.mxu0 0.0
    %9708 = vmatpush.msra.mxu0 0.0
    %9709 = vmatpush.msra.mxu0 0.0
    %9710 = vmatpush.msra.mxu0 0.0
    %9711 = vmatpush.msra.mxu0 0.0
    %9712 = vmatpush.msra.mxu0 0.0
    %9713 = vmatpush.msra.mxu0 0.0
    %9714 = vmatpush.msra.mxu0 0.0
    %9715 = vmatpush.msra.mxu0 0.0
    %9716 = vmatpush.msra.mxu0 0.0
    %9717 = vmatpush.msra.mxu0 0.0
    %9718 = vmatpush.msra.mxu0 0.0
    %9719 = vmatpush.msra.mxu0 %v9638
    %9720 = vmatpush.msra.mxu0 %v9637
    %9721 = vmatpush.msra.mxu0 %v9636
    %9722 = vmatpush.msra.mxu0 %v9635
    %9723 = vmatmul.f32.gmra.mxu0 %v9647
    %v9724 = vpop.f32.mrf.mxu0
    %v9725 = vadd.f32 0.0, %v9724
    %9726 = vdwg.mxu0
    %9728 = vrot.lane.b32.xlu0 %v9706, 32
    %v9729 = vpop.permute.xlu0 %9728
    %v9730 = vsel %vm9645, %v9729, 0
    %9732 = vmatpush.msra.mxu0 0.0
    %9733 = vmatpush.msra.mxu0 0.0
    %9734 = vmatpush.msra.mxu0 0.0
    %9735 = vmatpush.msra.mxu0 0.0
    %9736 = vmatpush.msra.mxu0 0.0
    %9737 = vmatpush.msra.mxu0 0.0
    %9738 = vmatpush.msra.mxu0 0.0
    %9739 = vmatpush.msra.mxu0 0.0
    %9740 = vmatpush.msra.mxu0 0.0
    %9741 = vmatpush.msra.mxu0 0.0
    %9742 = vmatpush.msra.mxu0 0.0
    %9743 = vmatpush.msra.mxu0 0.0
    %9744 = vmatpush.msra.mxu0 %v9634
    %9745 = vmatpush.msra.mxu0 %v9633
    %9746 = vmatpush.msra.mxu0 %v9632
    %9747 = vmatpush.msra.mxu0 %v9631
    %9748 = vmatmul.f32.gmra.mxu0 %v9730
    %v9749 = vpop.f32.mrf.mxu0
    %v9750 = vadd.f32 %v9725, %v9749
    %9751 = vdwg.mxu0
    %v9753 = vperm.slane %v9639, 0
    %v9755 = vadd.f32 %v9750, %v9753
    %v9756 = vxor.u32 %v9755, 2147483648
    %v9757 = vmul.f32 %v9756, 1.442695
    %v9758 = vpow.pop %v9757
    %v9759 = vadd.f32 %v9758, 1.0
    %v9760 = vrcp.pop %v9759
    %v9761 = vmul.f32 %v9759, %v9760
    %v9762 = vsub.f32 1.0, %v9761
    %v9763 = vmul.f32 %v9760, %v9762
    %v9764 = vadd.f32 %v9760, %v9763
    %vm9765 = vweird.f32 %v9759
    %vm9766 = vweird.f32 %v9760
    %vm9767 = vmor %vm9765, %vm9766
    %v9768 = vsel %vm9767, %v9760, %v9764
    %v9769 = vand.u32 2147483647, %v9759
    %vm9770 = vcmp.eq.f32.partialorder %v9769, 8.507059e+37
    %v9771 = vand.u32 %v9759, 2147483648
    %v9772 = vor.u32 1.1754944e-38, %v9771
    %v9773 = vsel %vm9770, %v9772, %v9768
    %v9774 = vmul.f32 1.0, %v9773
    %v9775 = vtanh.pop %v9755
    %v9776 = vmul.f32 %v9774, 0.0
    %9778 = vrot.lane.b32.xlu0 %v9775, 64
    %v9779 = vpop.permute.xlu0 %9778
    %v9781 = vmul.f32 %v9774, %v9779
    %9783 = vrot.lane.b32.xlu0 %v9781, 32
    %v9784 = vpop.permute.xlu0 %9783
    %v9786 = vadd.f32 %v9776, %v9784
    %v9787 = vtanh.pop %v9786
    %9789 = vrot.lane.b32.xlu0 %v9787, 64
    %v9790 = vpop.permute.xlu0 %9789
    %v9792 = vmul.f32 %v9774, %v9790
    %v9794 = vperm.slane %v9644, 0
    %9797 = vrot.lane.b32.xlu0 %v9792, 32
    %v9798 = vpop.permute.xlu0 %9797
    %v9799 = vsel %vm9645, %v9798, 0
    %9801 = vmatpush.msra.mxu0 0.0
    %9802 = vmatpush.msra.mxu0 0.0
    %9803 = vmatpush.msra.mxu0 0.0
    %9804 = vmatpush.msra.mxu0 0.0
    %9805 = vmatpush.msra.mxu0 0.0
    %9806 = vmatpush.msra.mxu0 0.0
    %9807 = vmatpush.msra.mxu0 0.0
    %9808 = vmatpush.msra.mxu0 0.0
    %9809 = vmatpush.msra.mxu0 0.0
    %9810 = vmatpush.msra.mxu0 0.0
    %9811 = vmatpush.msra.mxu0 0.0
    %9812 = vmatpush.msra.mxu0 0.0
    %9813 = vmatpush.msra.mxu0 %v9643
    %9814 = vmatpush.msra.mxu0 %v9642
    %9815 = vmatpush.msra.mxu0 %v9641
    %9816 = vmatpush.msra.mxu0 %v9640
    %9817 = vmatmul.f32.gmra.mxu0 %v9799
    %v9818 = vpop.f32.mrf.mxu0
    %v9819 = vadd.f32 %v9794, %v9818
    %9820 = vdwg.mxu0
    %9821 = vst [vmem:[%s21] sm:$0xff] %v9819
    %9822 = vmatpush.msra.mxu0 0.0
    %9823 = vmatpush.msra.mxu0 0.0
    %9824 = vmatpush.msra.mxu0 0.0
    %9825 = vmatpush.msra.mxu0 0.0
    %9826 = vmatpush.msra.mxu0 0.0
    %9827 = vmatpush.msra.mxu0 0.0
    %9828 = vmatpush.msra.mxu0 0.0
    %9829 = vmatpush.msra.mxu0 0.0
    %9830 = vmatpush.msra.mxu0 0.0
    %9831 = vmatpush.msra.mxu0 0.0
    %9832 = vmatpush.msra.mxu0 0.0
    %9833 = vmatpush.msra.mxu0 0.0
    %9834 = vmatpush.msra.mxu0 %v9630
    %9835 = vmatpush.msra.mxu0 %v9629
    %9836 = vmatpush.msra.mxu0 %v9628
    %9837 = vmatpush.msra.mxu0 %v9627
    %9838 = vmatmul.f32.gmra.mxu0 %v9730
    %v9839 = vpop.f32.mrf.mxu0
    %v9840 = vadd.f32 0.0, %v9839
    %9841 = vdwg.mxu0
    %v9842 = vadd.f32 %v9625, %v9840
    %v9843 = vxor.u32 %v9842, 2147483648
    %v9844 = vmul.f32 %v9843, 1.442695
    %v9845 = vpow.pop %v9844
    %v9846 = vadd.f32 %v9845, 1.0
    %v9847 = vrcp.pop %v9846
    %v9848 = vmul.f32 %v9846, %v9847
    %v9849 = vsub.f32 1.0, %v9848
    %v9850 = vmul.f32 %v9847, %v9849
    %v9851 = vadd.f32 %v9847, %v9850
    %vm9852 = vweird.f32 %v9846
    %vm9853 = vweird.f32 %v9847
    %vm9854 = vmor %vm9852, %vm9853
    %v9855 = vsel %vm9854, %v9847, %v9851
    %v9856 = vand.u32 2147483647, %v9846
    %vm9857 = vcmp.eq.f32.partialorder %v9856, 8.507059e+37
    %v9858 = vand.u32 %v9846, 2147483648
    %v9859 = vor.u32 1.1754944e-38, %v9858
    %v9860 = vsel %vm9857, %v9859, %v9855
    %v9861 = vmul.f32 1.0, %v9860
    %v9862 = vtanh.pop %v9842
    %v9863 = vmul.f32 %v9861, %v9700
    %9865 = vrot.lane.b32.xlu0 %v9862, 64
    %v9866 = vpop.permute.xlu0 %9865
    %v9868 = vmul.f32 %v9861, %v9866
    %9870 = vrot.lane.b32.xlu0 %v9868, 32
    %v9871 = vpop.permute.xlu0 %9870
    %v9873 = vadd.f32 %v9863, %v9871
    %v9874 = vtanh.pop %v9873
    %9876 = vrot.lane.b32.xlu0 %v9874, 64
    %v9877 = vpop.permute.xlu0 %9876
    %v9879 = vmul.f32 %v9861, %v9877
    %9880 = vmatpush.msra.mxu0 0.0
    %9881 = vmatpush.msra.mxu0 0.0
    %9882 = vmatpush.msra.mxu0 0.0
    %9883 = vmatpush.msra.mxu0 0.0
    %9884 = vmatpush.msra.mxu0 0.0
    %9885 = vmatpush.msra.mxu0 0.0
    %9886 = vmatpush.msra.mxu0 0.0
    %9887 = vmatpush.msra.mxu0 0.0
    %9888 = vmatpush.msra.mxu0 0.0
    %9889 = vmatpush.msra.mxu0 0.0
    %9890 = vmatpush.msra.mxu0 0.0
    %9891 = vmatpush.msra.mxu0 0.0
    %9892 = vmatpush.msra.mxu0 %v9638
    %9893 = vmatpush.msra.mxu0 %v9637
    %9894 = vmatpush.msra.mxu0 %v9636
    %9895 = vmatpush.msra.mxu0 %v9635
    %9896 = vmatmul.f32.gmra.mxu0 %v9799
    %v9897 = vpop.f32.mrf.mxu0
    %v9898 = vadd.f32 0.0, %v9897
    %9899 = vdwg.mxu0
    %9901 = vrot.lane.b32.xlu0 %v9879, 32
    %v9902 = vpop.permute.xlu0 %9901
    %v9903 = vsel %vm9645, %v9902, 0
    %9905 = vmatpush.msra.mxu0 0.0
    %9906 = vmatpush.msra.mxu0 0.0
    %9907 = vmatpush.msra.mxu0 0.0
    %9908 = vmatpush.msra.mxu0 0.0
    %9909 = vmatpush.msra.mxu0 0.0
    %9910 = vmatpush.msra.mxu0 0.0
    %9911 = vmatpush.msra.mxu0 0.0
    %9912 = vmatpush.msra.mxu0 0.0
    %9913 = vmatpush.msra.mxu0 0.0
    %9914 = vmatpush.msra.mxu0 0.0
    %9915 = vmatpush.msra.mxu0 0.0
    %9916 = vmatpush.msra.mxu0 0.0
    %9917 = vmatpush.msra.mxu0 %v9634
    %9918 = vmatpush.msra.mxu0 %v9633
    %9919 = vmatpush.msra.mxu0 %v9632
    %9920 = vmatpush.msra.mxu0 %v9631
    %9921 = vmatmul.f32.gmra.mxu0 %v9903
    %v9922 = vpop.f32.mrf.mxu0
    %v9923 = vadd.f32 %v9898, %v9922
    %9924 = vdwg.mxu0
    %v9925 = vadd.f32 %v9923, %v9753
    %v9926 = vxor.u32 %v9925, 2147483648
    %v9927 = vmul.f32 %v9926, 1.442695
    %v9928 = vpow.pop %v9927
    %v9929 = vadd.f32 %v9928, 1.0
    %v9930 = vrcp.pop %v9929
    %v9931 = vmul.f32 %v9929, %v9930
    %v9932 = vsub.f32 1.0, %v9931
    %v9933 = vmul.f32 %v9930, %v9932
    %v9934 = vadd.f32 %v9930, %v9933
    %vm9935 = vweird.f32 %v9929
    %vm9936 = vweird.f32 %v9930
    %vm9937 = vmor %vm9935, %vm9936
    %v9938 = vsel %vm9937, %v9930, %v9934
    %v9939 = vand.u32 2147483647, %v9929
    %vm9940 = vcmp.eq.f32.partialorder %v9939, 8.507059e+37
    %v9941 = vand.u32 %v9929, 2147483648
    %v9942 = vor.u32 1.1754944e-38, %v9941
    %v9943 = vsel %vm9940, %v9942, %v9938
    %v9944 = vmul.f32 1.0, %v9943
    %v9945 = vtanh.pop %v9925
    %v9946 = vmul.f32 %v9944, %v9786
    %9948 = vrot.lane.b32.xlu0 %v9945, 64
    %v9949 = vpop.permute.xlu0 %9948
    %v9951 = vmul.f32 %v9944, %v9949
    %9953 = vrot.lane.b32.xlu0 %v9951, 32
    %v9954 = vpop.permute.xlu0 %9953
    %v9956 = vadd.f32 %v9946, %v9954
    %v9957 = vtanh.pop %v9956
    %9959 = vrot.lane.b32.xlu0 %v9957, 64
    %v9960 = vpop.permute.xlu0 %9959
    %v9962 = vmul.f32 %v9944, %v9960
    %9964 = vrot.lane.b32.xlu0 %v9962, 32
    %v9965 = vpop.permute.xlu0 %9964
    %v9966 = vsel %vm9645, %v9965, 0
    %9968 = vmatpush.msra.mxu0 0.0
    %9969 = vmatpush.msra.mxu0 0.0
    %9970 = vmatpush.msra.mxu0 0.0
    %9971 = vmatpush.msra.mxu0 0.0
    %9972 = vmatpush.msra.mxu0 0.0
    %9973 = vmatpush.msra.mxu0 0.0
    %9974 = vmatpush.msra.mxu0 0.0
    %9975 = vmatpush.msra.mxu0 0.0
    %9976 = vmatpush.msra.mxu0 0.0
    %9977 = vmatpush.msra.mxu0 0.0
    %9978 = vmatpush.msra.mxu0 0.0
    %9979 = vmatpush.msra.mxu0 0.0
    %9980 = vmatpush.msra.mxu0 %v9643
    %9981 = vmatpush.msra.mxu0 %v9642
    %9982 = vmatpush.msra.mxu0 %v9641
    %9983 = vmatpush.msra.mxu0 %v9640
    %9984 = vmatmul.f32.gmra.mxu0 %v9966
    %v9985 = vpop.f32.mrf.mxu0
    %v9986 = vadd.f32 %v9794, %v9985
    %9987 = vdwg.mxu0
    %s9988 = scalar_lea.vmem %s21, 8
    %9989 = vst [vmem:[%s9988] sm:$0xff] %v9986
    %9991 = vst.msk [vmem:[%s22] sm:$0xff] %vm9645, %v9902
    %s9993 = scalar_lea.vmem %s22, 8
    %9994 = vst.msk [vmem:[%s9993] sm:$0xff] %vm9645, %v9965
    %9996 = vrot.lane.b32.xlu0 %v9873, 96
    %v9997 = vpop.permute.xlu0 %9996
    %9999 = vst.msk [vmem:[%s23] sm:$0xff] %vm9645, %v9997
    %10001 = vrot.lane.b32.xlu0 %v9956, 96
    %v10002 = vpop.permute.xlu0 %10001
    %s10004 = scalar_lea.vmem %s23, 8
    %10005 = vst.msk [vmem:[%s10004] sm:$0xff] %vm9645, %v10002
    // Predicated region
    $region154: #{deepvio_forward.1} parent=1 // pred_check
      _
    $region155: #{deepvio_forward.1} parent=1 // pred_check_branch
      %10007 = sbr.rel (0) target = $region157
    $region156: #{deepvio_forward.1} parent=1 // pred_region
      _
    $region157: #{deepvio_forward.1} parent=1 // pred_fallthru
      _
    // Predicated region
    $region158: #{deepvio_forward.1} parent=1 // pred_check
      _
    $region159: #{deepvio_forward.1} parent=1 // pred_check_branch
      %10009 = sbr.rel (0) target = $region161
    $region160: #{deepvio_forward.1} parent=1 // pred_region
      _
    $region161: #{deepvio_forward.1} parent=1 // pred_fallthru
      _
    // Predicated region
    $region162: #{deepvio_forward.1} parent=1 // pred_check
      _
    $region163: #{deepvio_forward.1} parent=1 // pred_check_branch
      %10011 = sbr.rel (0) target = $region165
    $region164: #{deepvio_forward.1} parent=1 // pred_region
      _
    $region165: #{deepvio_forward.1} parent=1 // pred_fallthru
      _
    // Predicated region
    $region166: #{deepvio_forward.1} parent=1 // pred_check
      _
    $region167: #{deepvio_forward.1} parent=1 // pred_check_branch
      %10013 = sbr.rel (0) target = $region169
    $region168: #{deepvio_forward.1} parent=1 // pred_region
      _
    $region169: #{deepvio_forward.1} parent=1 // pred_fallthru
      _
    // Predicated region
    $region170: #{deepvio_forward.1} parent=1 // pred_check
      _
    $region171: #{deepvio_forward.1} parent=1 // pred_check_branch
      %10015 = sbr.rel (0) target = $region173
    $region172: #{deepvio_forward.1} parent=1 // pred_region
      _
    $region173: #{deepvio_forward.1} parent=1 // pred_fallthru
      _
    // Predicated region
    $region174: #{deepvio_forward.1} parent=1 // pred_check
      _
    $region175: #{deepvio_forward.1} parent=1 // pred_check_branch
      %10017 = sbr.rel (0) target = $region177
    $region176: #{deepvio_forward.1} parent=1 // pred_region
      _
    $region177: #{deepvio_forward.1} parent=1 // pred_fallthru
      _
    %10018 = vsyncpa [#allocation3], 1
    %10019 = vsyncpa [#allocation5], 1
    %10020 = vsyncpa [#allocation8], 1
    %10021 = vsyncpa [#allocation11], 1
    %10022 = vsyncpa [#allocation14], 1
    %10023 = vsyncpa [#allocation17], 1
    %10024 = vsyncpa [#allocation20], 1
    %10025 = vsyncpa [#allocation23], 1
    %10026 = vsyncpa [#allocation26], 1

</llo_original>
